<compile_context>
chip_gen: v7x
topology: tpu7x:2x2x1
jax: 0.10.0
libtpu: 0.0.40
codegen_flags: <defaults>
</compile_context>

<pallas_src>
import functools
import math

import jax
import jax.numpy as jnp
from jax import lax
from jax.experimental import pallas as pl
from jax.experimental.pallas import tpu as pltpu


GP_ENC1 = 128   # per-gate lane padding for enc_lstm1 (H=64): whole-vreg gate slices
GP_DEC1 = 32    # per-gate lane padding for dec_lstm1 (H=16): 4 gates = exactly 1 vreg
SUBLANE = 8     # batch padded to a multiple of this (sublane-aligned per-step rows)


# ----------------------------------------------------------------------------
# LSTM cell helpers (traced inside the kernel)
# ----------------------------------------------------------------------------
def _lstm_cell(xp_t, h, c, whh_ref, gate_pad, split_eup):
    """One LSTM step with each gate zero-padded to `gate_pad` lanes.

    xp_t    : (Bp, 4*gate_pad)  hoisted input projection (+bias) for this step
    h, c    : (Bp, gate_pad)
    whh_ref : VMEM ref (gate_pad, 4*gate_pad), read in place each step
    split_eup: skip the sigmoid over the candidate-gate block (saves one EUP
               vreg pass per step when the gate row spans multiple vregs).
    PyTorch gate order: i | f | g | o.
    """
    G = gate_pad
    gates = xp_t + jnp.dot(h, whh_ref[...], preferred_element_type=jnp.float32)
    if split_eup:
        sig_if = jax.nn.sigmoid(gates[:, :2 * G])
        i = sig_if[:, :G]
        f = sig_if[:, G:]
        o = jax.nn.sigmoid(gates[:, 3 * G:4 * G])
    else:
        sig = jax.nn.sigmoid(gates)            # gate row is one vreg: one EUP pass
        i = sig[:, 0:G]
        f = sig[:, G:2 * G]
        o = sig[:, 3 * G:4 * G]
    g = jnp.tanh(gates[:, 2 * G:3 * G])
    c_new = f * c + i * g
    h_new = o * jnp.tanh(c_new)
    return h_new, c_new


def _lstm_cell_h1(xp_t, h, c, whh_row):
    """One step of a hidden-size-1 LSTM.  h @ W_hh is a VPU broadcast multiply.

    xp_t    : (Bp, 4)
    h, c    : (Bp, 1)
    whh_row : (1, 4)
    """
    gates = xp_t + h * whh_row
    sig = jax.nn.sigmoid(gates)
    i = sig[:, 0:1]
    f = sig[:, 1:2]
    o = sig[:, 3:4]
    g = jnp.tanh(gates[:, 2:3])
    c_new = f * c + i * g
    h_new = o * jnp.tanh(c_new)
    return h_new, c_new


# ----------------------------------------------------------------------------
# Fused Pallas kernel: entire VDEncoderDecoder forward
# ----------------------------------------------------------------------------
def _fused_kernel(
    x_flat_ref,     # (T*Bp, F)      time-major flattened input (row = t*Bp + b)
    x_aux_ref,      # (out*Bp, 1)    x[:, -out:, 0] time-major flattened
    wih1_ref, whh1_ref, b1_ref,      # enc lstm1 (F,4G1), (G1,4G1), (1,4G1)
    wih2_ref, whh2_ref, b2_ref,      # enc lstm2 (G1,4),  (1,4),    (1,4)
    wih3_ref, whh3_ref, b3_ref,      # dec lstm1 (1,4G3), (G3,4G3), (1,4G3)
    wih4_ref, whh4_ref, b4_ref,      # dec lstm2 (G3,4),  (1,4),    (1,4)
    wfc1_ref, bfc1_ref,              # (S,32), (1,32)
    wfc2_ref, bfc2_ref,              # (32,out), (1,out)
    out_ref,                         # (Bp, out)
    xp1_ref,                         # scratch (T*Bp, 4*G1)  hoisted enc1 input proj
    enc1_seq_ref,                    # scratch (T*Bp, G1)    enc_lstm1 output sequence
    xp2_ref,                         # scratch (T*Bp, 4)     hoisted enc2 input proj
    xp3_ref,                         # scratch (S*Bp, 4*G3)  hoisted dec1 input proj
    dec1_seq_ref,                    # scratch (S*Bp, G3)    dec_lstm1 output sequence
    xp4_ref,                         # scratch (S*Bp, 4)     hoisted dec2 input proj
    *, batch_pad, input_steps, output_steps,
):
    Bp = batch_pad
    T = input_steps
    S = input_steps + output_steps
    G1 = GP_ENC1
    G3 = GP_DEC1

    # ---- encoder LSTM1 (F -> 64, gates padded to 128 lanes each) -------------
    # hoisted input projection over all T*Bp rows (one MXU pass, bias folded in)
    xp1_ref[...] = jnp.dot(x_flat_ref[...], wih1_ref[...],
                           preferred_element_type=jnp.float32) + b1_ref[...]
    h = jnp.zeros((Bp, G1), jnp.float32)
    c = jnp.zeros((Bp, G1), jnp.float32)
    for t in range(T):                                  # fully unrolled (T static)
        h, c = _lstm_cell(xp1_ref[t * Bp:(t + 1) * Bp, :], h, c,
                          whh1_ref, G1, split_eup=True)
        enc1_seq_ref[t * Bp:(t + 1) * Bp, :] = h        # (8,128) aligned store

    # ---- encoder LSTM2 (64 -> 1); ReLU + dec_lstm1 input projection fused ----
    xp2_ref[...] = jnp.dot(enc1_seq_ref[...], wih2_ref[...],
                           preferred_element_type=jnp.float32) + b2_ref[...]
    whh2 = whh2_ref[...]
    wih3 = wih3_ref[...]                                # (1, 4*G3) = (1, 128)
    b3 = b3_ref[...]
    h = jnp.zeros((Bp, 1), jnp.float32)
    c = jnp.zeros((Bp, 1), jnp.float32)
    for t in range(T):
        h, c = _lstm_cell_h1(xp2_ref[t * Bp:(t + 1) * Bp, :], h, c, whh2)
        # decoder input at step t is relu(h) (ReLU only on the output stream);
        # fold it straight into dec_lstm1's hoisted input projection so the
        # store is a full (8,128) vreg — no (Bp,1) dec_in scratch at all.
        xp3_ref[t * Bp:(t + 1) * Bp, :] = jnp.maximum(h, 0.0) * wih3 + b3
    # tail of the decoder input: cat([..., x[:, -out:, 0:1]], dim=time)
    xp3_ref[T * Bp:S * Bp, :] = x_aux_ref[...] * wih3 + b3

    # ---- decoder LSTM1 (1 -> 16, gates padded to 32 lanes = one vreg total) --
    h = jnp.zeros((Bp, G3), jnp.float32)
    c = jnp.zeros((Bp, G3), jnp.float32)
    for t in range(S):
        h, c = _lstm_cell(xp3_ref[t * Bp:(t + 1) * Bp, :], h, c,
                          whh3_ref, G3, split_eup=False)
        dec1_seq_ref[t * Bp:(t + 1) * Bp, :] = h

    # ---- decoder LSTM2 (16 -> 1) ----------------------------------------------
    xp4_ref[...] = jnp.dot(dec1_seq_ref[...], wih4_ref[...],
                           preferred_element_type=jnp.float32) + b4_ref[...]
    whh4 = whh4_ref[...]
    h = jnp.zeros((Bp, 1), jnp.float32)
    c = jnp.zeros((Bp, 1), jnp.float32)
    outs = []
    for t in range(S):
        h, c = _lstm_cell_h1(xp4_ref[t * Bp:(t + 1) * Bp, :], h, c, whh4)
        outs.append(h)
    flat = jnp.concatenate(outs, axis=1)                # (Bp, S) lane-dense
    # (matches PyTorch out.view(-1, S) on the batch-first (B, S, 1) tensor)

    # ---- fc1 -> fc2 -----------------------------------------------------------
    hid = jnp.dot(flat, wfc1_ref[...],
                  preferred_element_type=jnp.float32) + bfc1_ref[...]
    out_ref[...] = jnp.dot(hid, wfc2_ref[...],
                           preferred_element_type=jnp.float32) + bfc2_ref[...]


# ----------------------------------------------------------------------------
# Weight preparation (PyTorch layout -> padded, MXU/VPU friendly layout)
# ----------------------------------------------------------------------------
def _pad_gate_cols(w, hidden, gate_pad):
    """(rows, 4*hidden) -> (rows, 4*gate_pad), zero-padding each gate block."""
    rows = w.shape[0]
    w4 = w.reshape(rows, 4, hidden)
    w4 = jnp.pad(w4, ((0, 0), (0, 0), (0, gate_pad - hidden)))
    return w4.reshape(rows, 4 * gate_pad)


def _pad_rows(w, target_rows):
    return jnp.pad(w, ((0, target_rows - w.shape[0]), (0, 0)))


def _prep_lstm_padded(w_ih, w_hh, b_ih, b_hh, hidden, gate_pad, pad_in_rows=None):
    """LSTM with hidden>1: gate blocks padded to gate_pad lanes.

    Returns wih (in[, padded], 4*gp), whh (gp, 4*gp), bias (1, 4*gp)."""
    wih = _pad_gate_cols(jnp.transpose(w_ih).astype(jnp.float32), hidden, gate_pad)
    if pad_in_rows is not None:
        wih = _pad_rows(wih, pad_in_rows)
    whh = _pad_gate_cols(jnp.transpose(w_hh).astype(jnp.float32), hidden, gate_pad)
    whh = _pad_rows(whh, gate_pad)
    bias = _pad_gate_cols((b_ih + b_hh).astype(jnp.float32).reshape(1, 4 * hidden),
                          hidden, gate_pad)
    return wih, whh, bias


def _prep_lstm_h1(w_ih, w_hh, b_ih, b_hh, pad_in_rows=None):
    """Hidden-size-1 LSTM. Returns wih (in[, padded], 4), whh_row (1,4), bias (1,4)."""
    wih = jnp.transpose(w_ih).astype(jnp.float32)
    if pad_in_rows is not None:
        wih = _pad_rows(wih, pad_in_rows)
    whh_row = jnp.transpose(w_hh).astype(jnp.float32)
    bias = (b_ih + b_hh).astype(jnp.float32).reshape(1, 4)
    return wih, whh_row, bias


# ----------------------------------------------------------------------------
# Forward wrapper (single pallas_call)
# ----------------------------------------------------------------------------
def vd_encoder_decoder_forward(x, params, input_steps, output_steps):
    """x: (B, input_steps, in_features), batch-first like the PyTorch module."""
    B, T_in, F = x.shape
    assert T_in == input_steps
    S = input_steps + output_steps
    Bp = ((B + SUBLANE - 1) // SUBLANE) * SUBLANE       # batch padded to sublanes

    x = x.astype(jnp.float32)
    x_t = jnp.transpose(x, (1, 0, 2))                   # (T, B, F) time-major
    x_t = jnp.pad(x_t, ((0, 0), (0, Bp - B), (0, 0)))   # (T, Bp, F)
    x_flat = x_t.reshape(T_in * Bp, F)                  # row = t*Bp + b
    x_aux = x_t[T_in - output_steps:, :, 0].reshape(output_steps * Bp, 1)

    wih1, whh1, b1 = _prep_lstm_padded(*params["enc_lstm1"], hidden=64,
                                       gate_pad=GP_ENC1)
    wih2, whh2, b2 = _prep_lstm_h1(*params["enc_lstm2"], pad_in_rows=GP_ENC1)
    wih3, whh3, b3 = _prep_lstm_padded(*params["dec_lstm1"], hidden=16,
                                       gate_pad=GP_DEC1)
    wih4, whh4, b4 = _prep_lstm_h1(*params["dec_lstm2"], pad_in_rows=GP_DEC1)

    w_fc1, b_fc1 = params["fc1"]
    w_fc2, b_fc2 = params["fc2"]
    wfc1 = jnp.transpose(w_fc1).astype(jnp.float32)     # (S, 32)
    bfc1 = b_fc1.reshape(1, -1).astype(jnp.float32)
    wfc2 = jnp.transpose(w_fc2).astype(jnp.float32)     # (32, out)
    bfc2 = b_fc2.reshape(1, -1).astype(jnp.float32)

    kernel = functools.partial(
        _fused_kernel, batch_pad=Bp,
        input_steps=input_steps, output_steps=output_steps)

    args = (x_flat, x_aux,
            wih1, whh1, b1, wih2, whh2, b2, wih3, whh3, b3, wih4, whh4, b4,
            wfc1, bfc1, wfc2, bfc2)

    out_padded = pl.pallas_call(
        kernel,
        out_shape=jax.ShapeDtypeStruct((Bp, output_steps), jnp.float32),
        in_specs=[pl.BlockSpec(memory_space=pltpu.MemorySpace.VMEM) for _ in args],
        out_specs=pl.BlockSpec(memory_space=pltpu.MemorySpace.VMEM),
        scratch_shapes=[
            pltpu.VMEM((T_in * Bp, 4 * GP_ENC1), jnp.float32),  # xp1
            pltpu.VMEM((T_in * Bp, GP_ENC1), jnp.float32),      # enc_lstm1 sequence
            pltpu.VMEM((T_in * Bp, 4), jnp.float32),            # xp2
            pltpu.VMEM((S * Bp, 4 * GP_DEC1), jnp.float32),     # xp3
            pltpu.VMEM((S * Bp, GP_DEC1), jnp.float32),         # dec_lstm1 sequence
            pltpu.VMEM((S * Bp, 4), jnp.float32),               # xp4
        ],
    )(*args)
    return out_padded[:B]


# ----------------------------------------------------------------------------
# Pure-JAX reference (for a correctness check)
# ----------------------------------------------------------------------------
def _lstm_ref(x_btf, w_ih, w_hh, b_ih, b_hh):
    B = x_btf.shape[0]
    H = w_hh.shape[1]

    def step(carry, x_t):
        h, c = carry
        gates = x_t @ w_ih.T + h @ w_hh.T + b_ih + b_hh
        i, f, g, o = jnp.split(gates, 4, axis=-1)
        i, f, o = jax.nn.sigmoid(i), jax.nn.sigmoid(f), jax.nn.sigmoid(o)
        g = jnp.tanh(g)
        c = f * c + i * g
        h = o * jnp.tanh(c)
        return (h, c), h

    init = (jnp.zeros((B, H), jnp.float32), jnp.zeros((B, H), jnp.float32))
    _, ys = lax.scan(step, init, jnp.transpose(x_btf, (1, 0, 2)))
    return jnp.transpose(ys, (1, 0, 2))


def reference_forward(x, params, input_steps, output_steps):
    x = x.astype(jnp.float32)
    enc = _lstm_ref(x, *params["enc_lstm1"])
    enc = jax.nn.relu(_lstm_ref(enc, *params["enc_lstm2"]))
    x_aux = x[:, -output_steps:, 0:1]
    dec_in = jnp.concatenate([enc, x_aux], axis=1)
    d = _lstm_ref(dec_in, *params["dec_lstm1"])
    d = _lstm_ref(d, *params["dec_lstm2"])
    flat = d.reshape(d.shape[0], -1)
    w1, b1 = params["fc1"]
    w2, b2 = params["fc2"]
    return (flat @ w1.T + b1) @ w2.T + b2


# ----------------------------------------------------------------------------
# Deterministic parameter construction (PyTorch-style shapes)
# ----------------------------------------------------------------------------
def _uniform(key, shape, bound):
    return jax.random.uniform(key, shape, jnp.float32, -bound, bound)


def make_lstm_params(key, in_f, hidden):
    k = 1.0 / math.sqrt(hidden)
    k1, k2, k3, k4 = jax.random.split(key, 4)
    return (
        _uniform(k1, (4 * hidden, in_f), k),    # weight_ih_l0
        _uniform(k2, (4 * hidden, hidden), k),  # weight_hh_l0
        _uniform(k3, (4 * hidden,), k),         # bias_ih_l0
        _uniform(k4, (4 * hidden,), k),         # bias_hh_l0
    )


def make_linear_params(key, in_f, out_f):
    k = 1.0 / math.sqrt(in_f)
    k1, k2 = jax.random.split(key)
    return (_uniform(k1, (out_f, in_f), k), _uniform(k2, (out_f,), k))


def make_params(key, in_features, input_steps, output_steps):
    ks = jax.random.split(key, 6)
    S = input_steps + output_steps
    return {
        "enc_lstm1": make_lstm_params(ks[0], in_features, 64),
        "enc_lstm2": make_lstm_params(ks[1], 64, 1),
        "dec_lstm1": make_lstm_params(ks[2], 1, 16),
        "dec_lstm2": make_lstm_params(ks[3], 16, 1),
        "fc1": make_linear_params(ks[4], S, 32),
        "fc2": make_linear_params(ks[5], 32, output_steps),
    }


# ----------------------------------------------------------------------------
if __name__ == "__main__":
    in_features = 4
    input_steps = 12
    output_steps = 4
    batch = 2

    root = jax.random.PRNGKey(0)
    k_params, k_x = jax.random.split(root)
    params = make_params(k_params, in_features, input_steps, output_steps)
    x = jax.random.normal(k_x, (batch, input_steps, in_features), jnp.float32)

    fwd = jax.jit(
        functools.partial(
            vd_encoder_decoder_forward,
            input_steps=input_steps,
            output_steps=output_steps,
        )
    )
    out = fwd(x, params)
    jax.block_until_ready(out)
    assert out.shape == (batch, output_steps), out.shape

    ref = reference_forward(x, params, input_steps, output_steps)
    assert jnp.allclose(out, ref, atol=1e-3, rtol=1e-3), (out, ref)

    print("KERNEL_OK")
</pallas_src>

<mosaic_0001>
module attributes {stable_mosaic.version = 11 : i64} {
  func.func @_fused_kernel(%arg0: memref<96x4xf32, #tpu.memory_space<vmem>>, %arg1: memref<32x1xf32, #tpu.memory_space<vmem>>, %arg2: memref<4x512xf32, #tpu.memory_space<vmem>>, %arg3: memref<128x512xf32, #tpu.memory_space<vmem>>, %arg4: memref<1x512xf32, #tpu.memory_space<vmem>>, %arg5: memref<128x4xf32, #tpu.memory_space<vmem>>, %arg6: memref<1x4xf32, #tpu.memory_space<vmem>>, %arg7: memref<1x4xf32, #tpu.memory_space<vmem>>, %arg8: memref<1x128xf32, #tpu.memory_space<vmem>>, %arg9: memref<32x128xf32, #tpu.memory_space<vmem>>, %arg10: memref<1x128xf32, #tpu.memory_space<vmem>>, %arg11: memref<32x4xf32, #tpu.memory_space<vmem>>, %arg12: memref<1x4xf32, #tpu.memory_space<vmem>>, %arg13: memref<1x4xf32, #tpu.memory_space<vmem>>, %arg14: memref<16x32xf32, #tpu.memory_space<vmem>>, %arg15: memref<1x32xf32, #tpu.memory_space<vmem>>, %arg16: memref<32x4xf32, #tpu.memory_space<vmem>>, %arg17: memref<1x4xf32, #tpu.memory_space<vmem>>, %arg18: memref<8x4xf32, #tpu.memory_space<vmem>>, %arg19: memref<96x512xf32, #tpu.memory_space<vmem>>, %arg20: memref<96x128xf32, #tpu.memory_space<vmem>>, %arg21: memref<96x4xf32, #tpu.memory_space<vmem>>, %arg22: memref<128x128xf32, #tpu.memory_space<vmem>>, %arg23: memref<128x32xf32, #tpu.memory_space<vmem>>, %arg24: memref<128x4xf32, #tpu.memory_space<vmem>>) attributes {dimension_semantics = [], scalar_prefetch = 0 : i64, scratch_operands = 6 : i64, tpu.core_type = #tpu.core_type<tc>} {
    %c0 = arith.constant 0 : index
    %c0_0 = arith.constant 0 : index
    %0 = vector.load %arg0[%c0, %c0_0] : memref<96x4xf32, #tpu.memory_space<vmem>>, vector<96x4xf32>
    %c0_1 = arith.constant 0 : index
    %c0_2 = arith.constant 0 : index
    %1 = vector.load %arg2[%c0_1, %c0_2] : memref<4x512xf32, #tpu.memory_space<vmem>>, vector<4x512xf32>
    %cst = arith.constant dense<0.000000e+00> : vector<96x512xf32>
    %2 = tpu.matmul %0, %1, %cst {dimension_numbers = #tpu.dot_dimension_numbers<[1], [0], [0], [1], [0, 0, 1, 1], [], []>} : vector<96x4xf32>, vector<4x512xf32>, vector<96x512xf32> -> vector<96x512xf32>
    %c0_3 = arith.constant 0 : index
    %c0_4 = arith.constant 0 : index
    %3 = vector.load %arg4[%c0_3, %c0_4] : memref<1x512xf32, #tpu.memory_space<vmem>>, vector<1x512xf32>
    %4 = vector.broadcast %3 : vector<1x512xf32> to vector<96x512xf32>
    %5 = arith.addf %2, %4 : vector<96x512xf32>
    %c0_5 = arith.constant 0 : index
    %c0_6 = arith.constant 0 : index
    %6 = vector.load %arg19[%c0_5, %c0_6] : memref<96x512xf32, #tpu.memory_space<vmem>>, vector<96x512xf32>
    tpu.vector_store %arg19[%c0_5, %c0_6], %5 {strides = array<i32>} : memref<96x512xf32, #tpu.memory_space<vmem>>, vector<96x512xf32>,
    %cst_7 = arith.constant 0.000000e+00 : f32
    %7 = vector.broadcast %cst_7 : f32 to vector<8x128xf32>
    %cst_8 = arith.constant 0.000000e+00 : f32
    %8 = vector.broadcast %cst_8 : f32 to vector<8x128xf32>
    %c0_9 = arith.constant 0 : index
    %c0_10 = arith.constant 0 : index
    %9 = vector.load %arg19[%c0_9, %c0_10] : memref<96x512xf32, #tpu.memory_space<vmem>>, vector<8x512xf32>
    %c0_11 = arith.constant 0 : index
    %c0_12 = arith.constant 0 : index
    %10 = vector.load %arg3[%c0_11, %c0_12] : memref<128x512xf32, #tpu.memory_space<vmem>>, vector<128x512xf32>
    %cst_13 = arith.constant dense<0.000000e+00> : vector<8x512xf32>
    %11 = tpu.matmul %7, %10, %cst_13 {dimension_numbers = #tpu.dot_dimension_numbers<[1], [0], [0], [1], [0, 0, 1, 1], [], []>} : vector<8x128xf32>, vector<128x512xf32>, vector<8x512xf32> -> vector<8x512xf32>
    %12 = arith.addf %9, %11 : vector<8x512xf32>
    %13 = vector.extract_strided_slice %12 {offsets = [0, 0], sizes = [8, 256], strides = [1, 1]} : vector<8x512xf32> to vector<8x256xf32>
    %14 = arith.negf %13 : vector<8x256xf32>
    %15 = math.exp %14 : vector<8x256xf32>
    %cst_14 = arith.constant 1.000000e+00 : f32
    %16 = vector.broadcast %cst_14 : f32 to vector<8x256xf32>
    %17 = arith.addf %16, %15 : vector<8x256xf32>
    %18 = arith.divf %16, %17 : vector<8x256xf32>
    %19 = vector.extract_strided_slice %18 {offsets = [0, 0], sizes = [8, 128], strides = [1, 1]} : vector<8x256xf32> to vector<8x128xf32>
    %20 = vector.extract_strided_slice %18 {offsets = [0, 128], sizes = [8, 128], strides = [1, 1]} : vector<8x256xf32> to vector<8x128xf32>
    %21 = vector.extract_strided_slice %12 {offsets = [0, 384], sizes = [8, 128], strides = [1, 1]} : vector<8x512xf32> to vector<8x128xf32>
    %22 = arith.negf %21 : vector<8x128xf32>
    %23 = math.exp %22 : vector<8x128xf32>
    %cst_15 = arith.constant 1.000000e+00 : f32
    %24 = vector.broadcast %cst_15 : f32 to vector<8x128xf32>
    %25 = arith.addf %24, %23 : vector<8x128xf32>
    %26 = arith.divf %24, %25 : vector<8x128xf32>
    %27 = vector.extract_strided_slice %12 {offsets = [0, 256], sizes = [8, 128], strides = [1, 1]} : vector<8x512xf32> to vector<8x128xf32>
    %28 = math.tanh %27 : vector<8x128xf32>
    %29 = arith.mulf %20, %8 : vector<8x128xf32>
    %30 = arith.mulf %19, %28 : vector<8x128xf32>
    %31 = arith.addf %29, %30 : vector<8x128xf32>
    %32 = math.tanh %31 : vector<8x128xf32>
    %33 = arith.mulf %26, %32 : vector<8x128xf32>
    %c0_16 = arith.constant 0 : index
    %c0_17 = arith.constant 0 : index
    %34 = vector.load %arg20[%c0_16, %c0_17] : memref<96x128xf32, #tpu.memory_space<vmem>>, vector<8x128xf32>
    tpu.vector_store %arg20[%c0_16, %c0_17], %33 {strides = array<i32>} : memref<96x128xf32, #tpu.memory_space<vmem>>, vector<8x128xf32>,
    %c8 = arith.constant 8 : index
    %c0_18 = arith.constant 0 : index
    %35 = vector.load %arg19[%c8, %c0_18] : memref<96x512xf32, #tpu.memory_space<vmem>>, vector<8x512xf32>
    %c0_19 = arith.constant 0 : index
    %c0_20 = arith.constant 0 : index
    %36 = vector.load %arg3[%c0_19, %c0_20] : memref<128x512xf32, #tpu.memory_space<vmem>>, vector<128x512xf32>
    %cst_21 = arith.constant dense<0.000000e+00> : vector<8x512xf32>
    %37 = tpu.matmul %33, %36, %cst_21 {dimension_numbers = #tpu.dot_dimension_numbers<[1], [0], [0], [1], [0, 0, 1, 1], [], []>} : vector<8x128xf32>, vector<128x512xf32>, vector<8x512xf32> -> vector<8x512xf32>
    %38 = arith.addf %35, %37 : vector<8x512xf32>
    %39 = vector.extract_strided_slice %38 {offsets = [0, 0], sizes = [8, 256], strides = [1, 1]} : vector<8x512xf32> to vector<8x256xf32>
    %40 = arith.negf %39 : vector<8x256xf32>
    %41 = math.exp %40 : vector<8x256xf32>
    %cst_22 = arith.constant 1.000000e+00 : f32
    %42 = vector.broadcast %cst_22 : f32 to vector<8x256xf32>
    %43 = arith.addf %42, %41 : vector<8x256xf32>
    %44 = arith.divf %42, %43 : vector<8x256xf32>
    %45 = vector.extract_strided_slice %44 {offsets = [0, 0], sizes = [8, 128], strides = [1, 1]} : vector<8x256xf32> to vector<8x128xf32>
    %46 = vector.extract_strided_slice %44 {offsets = [0, 128], sizes = [8, 128], strides = [1, 1]} : vector<8x256xf32> to vector<8x128xf32>
    %47 = vector.extract_strided_slice %38 {offsets = [0, 384], sizes = [8, 128], strides = [1, 1]} : vector<8x512xf32> to vector<8x128xf32>
    %48 = arith.negf %47 : vector<8x128xf32>
    %49 = math.exp %48 : vector<8x128xf32>
    %cst_23 = arith.constant 1.000000e+00 : f32
    %50 = vector.broadcast %cst_23 : f32 to vector<8x128xf32>
    %51 = arith.addf %50, %49 : vector<8x128xf32>
    %52 = arith.divf %50, %51 : vector<8x128xf32>
    %53 = vector.extract_strided_slice %38 {offsets = [0, 256], sizes = [8, 128], strides = [1, 1]} : vector<8x512xf32> to vector<8x128xf32>
    %54 = math.tanh %53 : vector<8x128xf32>
    %55 = arith.mulf %46, %31 : vector<8x128xf32>
    %56 = arith.mulf %45, %54 : vector<8x128xf32>
    %57 = arith.addf %55, %56 : vector<8x128xf32>
    %58 = math.tanh %57 : vector<8x128xf32>
    %59 = arith.mulf %52, %58 : vector<8x128xf32>
    %c8_24 = arith.constant 8 : index
    %c0_25 = arith.constant 0 : index
    %60 = vector.load %arg20[%c8_24, %c0_25] : memref<96x128xf32, #tpu.memory_space<vmem>>, vector<8x128xf32>
    tpu.vector_store %arg20[%c8_24, %c0_25], %59 {strides = array<i32>} : memref<96x128xf32, #tpu.memory_space<vmem>>, vector<8x128xf32>,
    %c16 = arith.constant 16 : index
    %c0_26 = arith.constant 0 : index
    %61 = vector.load %arg19[%c16, %c0_26] : memref<96x512xf32, #tpu.memory_space<vmem>>, vector<8x512xf32>
    %c0_27 = arith.constant 0 : index
    %c0_28 = arith.constant 0 : index
    %62 = vector.load %arg3[%c0_27, %c0_28] : memref<128x512xf32, #tpu.memory_space<vmem>>, vector<128x512xf32>
    %cst_29 = arith.constant dense<0.000000e+00> : vector<8x512xf32>
    %63 = tpu.matmul %59, %62, %cst_29 {dimension_numbers = #tpu.dot_dimension_numbers<[1], [0], [0], [1], [0, 0, 1, 1], [], []>} : vector<8x128xf32>, vector<128x512xf32>, vector<8x512xf32> -> vector<8x512xf32>
    %64 = arith.addf %61, %63 : vector<8x512xf32>
    %65 = vector.extract_strided_slice %64 {offsets = [0, 0], sizes = [8, 256], strides = [1, 1]} : vector<8x512xf32> to vector<8x256xf32>
    %66 = arith.negf %65 : vector<8x256xf32>
    %67 = math.exp %66 : vector<8x256xf32>
    %cst_30 = arith.constant 1.000000e+00 : f32
    %68 = vector.broadcast %cst_30 : f32 to vector<8x256xf32>
    %69 = arith.addf %68, %67 : vector<8x256xf32>
    %70 = arith.divf %68, %69 : vector<8x256xf32>
    %71 = vector.extract_strided_slice %70 {offsets = [0, 0], sizes = [8, 128], strides = [1, 1]} : vector<8x256xf32> to vector<8x128xf32>
    %72 = vector.extract_strided_slice %70 {offsets = [0, 128], sizes = [8, 128], strides = [1, 1]} : vector<8x256xf32> to vector<8x128xf32>
    %73 = vector.extract_strided_slice %64 {offsets = [0, 384], sizes = [8, 128], strides = [1, 1]} : vector<8x512xf32> to vector<8x128xf32>
    %74 = arith.negf %73 : vector<8x128xf32>
    %75 = math.exp %74 : vector<8x128xf32>
    %cst_31 = arith.constant 1.000000e+00 : f32
    %76 = vector.broadcast %cst_31 : f32 to vector<8x128xf32>
    %77 = arith.addf %76, %75 : vector<8x128xf32>
    %78 = arith.divf %76, %77 : vector<8x128xf32>
    %79 = vector.extract_strided_slice %64 {offsets = [0, 256], sizes = [8, 128], strides = [1, 1]} : vector<8x512xf32> to vector<8x128xf32>
    %80 = math.tanh %79 : vector<8x128xf32>
    %81 = arith.mulf %72, %57 : vector<8x128xf32>
    %82 = arith.mulf %71, %80 : vector<8x128xf32>
    %83 = arith.addf %81, %82 : vector<8x128xf32>
    %84 = math.tanh %83 : vector<8x128xf32>
    %85 = arith.mulf %78, %84 : vector<8x128xf32>
    %c16_32 = arith.constant 16 : index
    %c0_33 = arith.constant 0 : index
    %86 = vector.load %arg20[%c16_32, %c0_33] : memref<96x128xf32, #tpu.memory_space<vmem>>, vector<8x128xf32>
    tpu.vector_store %arg20[%c16_32, %c0_33], %85 {strides = array<i32>} : memref<96x128xf32, #tpu.memory_space<vmem>>, vector<8x128xf32>,
    %c24 = arith.constant 24 : index
    %c0_34 = arith.constant 0 : index
    %87 = vector.load %arg19[%c24, %c0_34] : memref<96x512xf32, #tpu.memory_space<vmem>>, vector<8x512xf32>
    %c0_35 = arith.constant 0 : index
    %c0_36 = arith.constant 0 : index
    %88 = vector.load %arg3[%c0_35, %c0_36] : memref<128x512xf32, #tpu.memory_space<vmem>>, vector<128x512xf32>
    %cst_37 = arith.constant dense<0.000000e+00> : vector<8x512xf32>
    %89 = tpu.matmul %85, %88, %cst_37 {dimension_numbers = #tpu.dot_dimension_numbers<[1], [0], [0], [1], [0, 0, 1, 1], [], []>} : vector<8x128xf32>, vector<128x512xf32>, vector<8x512xf32> -> vector<8x512xf32>
    %90 = arith.addf %87, %89 : vector<8x512xf32>
    %91 = vector.extract_strided_slice %90 {offsets = [0, 0], sizes = [8, 256], strides = [1, 1]} : vector<8x512xf32> to vector<8x256xf32>
    %92 = arith.negf %91 : vector<8x256xf32>
    %93 = math.exp %92 : vector<8x256xf32>
    %cst_38 = arith.constant 1.000000e+00 : f32
    %94 = vector.broadcast %cst_38 : f32 to vector<8x256xf32>
    %95 = arith.addf %94, %93 : vector<8x256xf32>
    %96 = arith.divf %94, %95 : vector<8x256xf32>
    %97 = vector.extract_strided_slice %96 {offsets = [0, 0], sizes = [8, 128], strides = [1, 1]} : vector<8x256xf32> to vector<8x128xf32>
    %98 = vector.extract_strided_slice %96 {offsets = [0, 128], sizes = [8, 128], strides = [1, 1]} : vector<8x256xf32> to vector<8x128xf32>
    %99 = vector.extract_strided_slice %90 {offsets = [0, 384], sizes = [8, 128], strides = [1, 1]} : vector<8x512xf32> to vector<8x128xf32>
    %100 = arith.negf %99 : vector<8x128xf32>
    %101 = math.exp %100 : vector<8x128xf32>
    %cst_39 = arith.constant 1.000000e+00 : f32
    %102 = vector.broadcast %cst_39 : f32 to vector<8x128xf32>
    %103 = arith.addf %102, %101 : vector<8x128xf32>
    %104 = arith.divf %102, %103 : vector<8x128xf32>
    %105 = vector.extract_strided_slice %90 {offsets = [0, 256], sizes = [8, 128], strides = [1, 1]} : vector<8x512xf32> to vector<8x128xf32>
    %106 = math.tanh %105 : vector<8x128xf32>
    %107 = arith.mulf %98, %83 : vector<8x128xf32>
    %108 = arith.mulf %97, %106 : vector<8x128xf32>
    %109 = arith.addf %107, %108 : vector<8x128xf32>
    %110 = math.tanh %109 : vector<8x128xf32>
    %111 = arith.mulf %104, %110 : vector<8x128xf32>
    %c24_40 = arith.constant 24 : index
    %c0_41 = arith.constant 0 : index
    %112 = vector.load %arg20[%c24_40, %c0_41] : memref<96x128xf32, #tpu.memory_space<vmem>>, vector<8x128xf32>
    tpu.vector_store %arg20[%c24_40, %c0_41], %111 {strides = array<i32>} : memref<96x128xf32, #tpu.memory_space<vmem>>, vector<8x128xf32>,
    %c32 = arith.constant 32 : index
    %c0_42 = arith.constant 0 : index
    %113 = vector.load %arg19[%c32, %c0_42] : memref<96x512xf32, #tpu.memory_space<vmem>>, vector<8x512xf32>
    %c0_43 = arith.constant 0 : index
    %c0_44 = arith.constant 0 : index
    %114 = vector.load %arg3[%c0_43, %c0_44] : memref<128x512xf32, #tpu.memory_space<vmem>>, vector<128x512xf32>
    %cst_45 = arith.constant dense<0.000000e+00> : vector<8x512xf32>
    %115 = tpu.matmul %111, %114, %cst_45 {dimension_numbers = #tpu.dot_dimension_numbers<[1], [0], [0], [1], [0, 0, 1, 1], [], []>} : vector<8x128xf32>, vector<128x512xf32>, vector<8x512xf32> -> vector<8x512xf32>
    %116 = arith.addf %113, %115 : vector<8x512xf32>
    %117 = vector.extract_strided_slice %116 {offsets = [0, 0], sizes = [8, 256], strides = [1, 1]} : vector<8x512xf32> to vector<8x256xf32>
    %118 = arith.negf %117 : vector<8x256xf32>
    %119 = math.exp %118 : vector<8x256xf32>
    %cst_46 = arith.constant 1.000000e+00 : f32
    %120 = vector.broadcast %cst_46 : f32 to vector<8x256xf32>
    %121 = arith.addf %120, %119 : vector<8x256xf32>
    %122 = arith.divf %120, %121 : vector<8x256xf32>
    %123 = vector.extract_strided_slice %122 {offsets = [0, 0], sizes = [8, 128], strides = [1, 1]} : vector<8x256xf32> to vector<8x128xf32>
    %124 = vector.extract_strided_slice %122 {offsets = [0, 128], sizes = [8, 128], strides = [1, 1]} : vector<8x256xf32> to vector<8x128xf32>
    %125 = vector.extract_strided_slice %116 {offsets = [0, 384], sizes = [8, 128], strides = [1, 1]} : vector<8x512xf32> to vector<8x128xf32>
    %126 = arith.negf %125 : vector<8x128xf32>
    %127 = math.exp %126 : vector<8x128xf32>
    %cst_47 = arith.constant 1.000000e+00 : f32
    %128 = vector.broadcast %cst_47 : f32 to vector<8x128xf32>
    %129 = arith.addf %128, %127 : vector<8x128xf32>
    %130 = arith.divf %128, %129 : vector<8x128xf32>
    %131 = vector.extract_strided_slice %116 {offsets = [0, 256], sizes = [8, 128], strides = [1, 1]} : vector<8x512xf32> to vector<8x128xf32>
    %132 = math.tanh %131 : vector<8x128xf32>
    %133 = arith.mulf %124, %109 : vector<8x128xf32>
    %134 = arith.mulf %123, %132 : vector<8x128xf32>
    %135 = arith.addf %133, %134 : vector<8x128xf32>
    %136 = math.tanh %135 : vector<8x128xf32>
    %137 = arith.mulf %130, %136 : vector<8x128xf32>
    %c32_48 = arith.constant 32 : index
    %c0_49 = arith.constant 0 : index
    %138 = vector.load %arg20[%c32_48, %c0_49] : memref<96x128xf32, #tpu.memory_space<vmem>>, vector<8x128xf32>
    tpu.vector_store %arg20[%c32_48, %c0_49], %137 {strides = array<i32>} : memref<96x128xf32, #tpu.memory_space<vmem>>, vector<8x128xf32>,
    %c40 = arith.constant 40 : index
    %c0_50 = arith.constant 0 : index
    %139 = vector.load %arg19[%c40, %c0_50] : memref<96x512xf32, #tpu.memory_space<vmem>>, vector<8x512xf32>
    %c0_51 = arith.constant 0 : index
    %c0_52 = arith.constant 0 : index
    %140 = vector.load %arg3[%c0_51, %c0_52] : memref<128x512xf32, #tpu.memory_space<vmem>>, vector<128x512xf32>
    %cst_53 = arith.constant dense<0.000000e+00> : vector<8x512xf32>
    %141 = tpu.matmul %137, %140, %cst_53 {dimension_numbers = #tpu.dot_dimension_numbers<[1], [0], [0], [1], [0, 0, 1, 1], [], []>} : vector<8x128xf32>, vector<128x512xf32>, vector<8x512xf32> -> vector<8x512xf32>
    %142 = arith.addf %139, %141 : vector<8x512xf32>
    %143 = vector.extract_strided_slice %142 {offsets = [0, 0], sizes = [8, 256], strides = [1, 1]} : vector<8x512xf32> to vector<8x256xf32>
    %144 = arith.negf %143 : vector<8x256xf32>
    %145 = math.exp %144 : vector<8x256xf32>
    %cst_54 = arith.constant 1.000000e+00 : f32
    %146 = vector.broadcast %cst_54 : f32 to vector<8x256xf32>
    %147 = arith.addf %146, %145 : vector<8x256xf32>
    %148 = arith.divf %146, %147 : vector<8x256xf32>
    %149 = vector.extract_strided_slice %148 {offsets = [0, 0], sizes = [8, 128], strides = [1, 1]} : vector<8x256xf32> to vector<8x128xf32>
    %150 = vector.extract_strided_slice %148 {offsets = [0, 128], sizes = [8, 128], strides = [1, 1]} : vector<8x256xf32> to vector<8x128xf32>
    %151 = vector.extract_strided_slice %142 {offsets = [0, 384], sizes = [8, 128], strides = [1, 1]} : vector<8x512xf32> to vector<8x128xf32>
    %152 = arith.negf %151 : vector<8x128xf32>
    %153 = math.exp %152 : vector<8x128xf32>
    %cst_55 = arith.constant 1.000000e+00 : f32
    %154 = vector.broadcast %cst_55 : f32 to vector<8x128xf32>
    %155 = arith.addf %154, %153 : vector<8x128xf32>
    %156 = arith.divf %154, %155 : vector<8x128xf32>
    %157 = vector.extract_strided_slice %142 {offsets = [0, 256], sizes = [8, 128], strides = [1, 1]} : vector<8x512xf32> to vector<8x128xf32>
    %158 = math.tanh %157 : vector<8x128xf32>
    %159 = arith.mulf %150, %135 : vector<8x128xf32>
    %160 = arith.mulf %149, %158 : vector<8x128xf32>
    %161 = arith.addf %159, %160 : vector<8x128xf32>
    %162 = math.tanh %161 : vector<8x128xf32>
    %163 = arith.mulf %156, %162 : vector<8x128xf32>
    %c40_56 = arith.constant 40 : index
    %c0_57 = arith.constant 0 : index
    %164 = vector.load %arg20[%c40_56, %c0_57] : memref<96x128xf32, #tpu.memory_space<vmem>>, vector<8x128xf32>
    tpu.vector_store %arg20[%c40_56, %c0_57], %163 {strides = array<i32>} : memref<96x128xf32, #tpu.memory_space<vmem>>, vector<8x128xf32>,
    %c48 = arith.constant 48 : index
    %c0_58 = arith.constant 0 : index
    %165 = vector.load %arg19[%c48, %c0_58] : memref<96x512xf32, #tpu.memory_space<vmem>>, vector<8x512xf32>
    %c0_59 = arith.constant 0 : index
    %c0_60 = arith.constant 0 : index
    %166 = vector.load %arg3[%c0_59, %c0_60] : memref<128x512xf32, #tpu.memory_space<vmem>>, vector<128x512xf32>
    %cst_61 = arith.constant dense<0.000000e+00> : vector<8x512xf32>
    %167 = tpu.matmul %163, %166, %cst_61 {dimension_numbers = #tpu.dot_dimension_numbers<[1], [0], [0], [1], [0, 0, 1, 1], [], []>} : vector<8x128xf32>, vector<128x512xf32>, vector<8x512xf32> -> vector<8x512xf32>
    %168 = arith.addf %165, %167 : vector<8x512xf32>
    %169 = vector.extract_strided_slice %168 {offsets = [0, 0], sizes = [8, 256], strides = [1, 1]} : vector<8x512xf32> to vector<8x256xf32>
    %170 = arith.negf %169 : vector<8x256xf32>
    %171 = math.exp %170 : vector<8x256xf32>
    %cst_62 = arith.constant 1.000000e+00 : f32
    %172 = vector.broadcast %cst_62 : f32 to vector<8x256xf32>
    %173 = arith.addf %172, %171 : vector<8x256xf32>
    %174 = arith.divf %172, %173 : vector<8x256xf32>
    %175 = vector.extract_strided_slice %174 {offsets = [0, 0], sizes = [8, 128], strides = [1, 1]} : vector<8x256xf32> to vector<8x128xf32>
    %176 = vector.extract_strided_slice %174 {offsets = [0, 128], sizes = [8, 128], strides = [1, 1]} : vector<8x256xf32> to vector<8x128xf32>
    %177 = vector.extract_strided_slice %168 {offsets = [0, 384], sizes = [8, 128], strides = [1, 1]} : vector<8x512xf32> to vector<8x128xf32>
    %178 = arith.negf %177 : vector<8x128xf32>
    %179 = math.exp %178 : vector<8x128xf32>
    %cst_63 = arith.constant 1.000000e+00 : f32
    %180 = vector.broadcast %cst_63 : f32 to vector<8x128xf32>
    %181 = arith.addf %180, %179 : vector<8x128xf32>
    %182 = arith.divf %180, %181 : vector<8x128xf32>
    %183 = vector.extract_strided_slice %168 {offsets = [0, 256], sizes = [8, 128], strides = [1, 1]} : vector<8x512xf32> to vector<8x128xf32>
    %184 = math.tanh %183 : vector<8x128xf32>
    %185 = arith.mulf %176, %161 : vector<8x128xf32>
    %186 = arith.mulf %175, %184 : vector<8x128xf32>
    %187 = arith.addf %185, %186 : vector<8x128xf32>
    %188 = math.tanh %187 : vector<8x128xf32>
    %189 = arith.mulf %182, %188 : vector<8x128xf32>
    %c48_64 = arith.constant 48 : index
    %c0_65 = arith.constant 0 : index
    %190 = vector.load %arg20[%c48_64, %c0_65] : memref<96x128xf32, #tpu.memory_space<vmem>>, vector<8x128xf32>
    tpu.vector_store %arg20[%c48_64, %c0_65], %189 {strides = array<i32>} : memref<96x128xf32, #tpu.memory_space<vmem>>, vector<8x128xf32>,
    %c56 = arith.constant 56 : index
    %c0_66 = arith.constant 0 : index
    %191 = vector.load %arg19[%c56, %c0_66] : memref<96x512xf32, #tpu.memory_space<vmem>>, vector<8x512xf32>
    %c0_67 = arith.constant 0 : index
    %c0_68 = arith.constant 0 : index
    %192 = vector.load %arg3[%c0_67, %c0_68] : memref<128x512xf32, #tpu.memory_space<vmem>>, vector<128x512xf32>
    %cst_69 = arith.constant dense<0.000000e+00> : vector<8x512xf32>
    %193 = tpu.matmul %189, %192, %cst_69 {dimension_numbers = #tpu.dot_dimension_numbers<[1], [0], [0], [1], [0, 0, 1, 1], [], []>} : vector<8x128xf32>, vector<128x512xf32>, vector<8x512xf32> -> vector<8x512xf32>
    %194 = arith.addf %191, %193 : vector<8x512xf32>
    %195 = vector.extract_strided_slice %194 {offsets = [0, 0], sizes = [8, 256], strides = [1, 1]} : vector<8x512xf32> to vector<8x256xf32>
    %196 = arith.negf %195 : vector<8x256xf32>
    %197 = math.exp %196 : vector<8x256xf32>
    %cst_70 = arith.constant 1.000000e+00 : f32
    %198 = vector.broadcast %cst_70 : f32 to vector<8x256xf32>
    %199 = arith.addf %198, %197 : vector<8x256xf32>
    %200 = arith.divf %198, %199 : vector<8x256xf32>
    %201 = vector.extract_strided_slice %200 {offsets = [0, 0], sizes = [8, 128], strides = [1, 1]} : vector<8x256xf32> to vector<8x128xf32>
    %202 = vector.extract_strided_slice %200 {offsets = [0, 128], sizes = [8, 128], strides = [1, 1]} : vector<8x256xf32> to vector<8x128xf32>
    %203 = vector.extract_strided_slice %194 {offsets = [0, 384], sizes = [8, 128], strides = [1, 1]} : vector<8x512xf32> to vector<8x128xf32>
    %204 = arith.negf %203 : vector<8x128xf32>
    %205 = math.exp %204 : vector<8x128xf32>
    %cst_71 = arith.constant 1.000000e+00 : f32
    %206 = vector.broadcast %cst_71 : f32 to vector<8x128xf32>
    %207 = arith.addf %206, %205 : vector<8x128xf32>
    %208 = arith.divf %206, %207 : vector<8x128xf32>
    %209 = vector.extract_strided_slice %194 {offsets = [0, 256], sizes = [8, 128], strides = [1, 1]} : vector<8x512xf32> to vector<8x128xf32>
    %210 = math.tanh %209 : vector<8x128xf32>
    %211 = arith.mulf %202, %187 : vector<8x128xf32>
    %212 = arith.mulf %201, %210 : vector<8x128xf32>
    %213 = arith.addf %211, %212 : vector<8x128xf32>
    %214 = math.tanh %213 : vector<8x128xf32>
    %215 = arith.mulf %208, %214 : vector<8x128xf32>
    %c56_72 = arith.constant 56 : index
    %c0_73 = arith.constant 0 : index
    %216 = vector.load %arg20[%c56_72, %c0_73] : memref<96x128xf32, #tpu.memory_space<vmem>>, vector<8x128xf32>
    tpu.vector_store %arg20[%c56_72, %c0_73], %215 {strides = array<i32>} : memref<96x128xf32, #tpu.memory_space<vmem>>, vector<8x128xf32>,
    %c64 = arith.constant 64 : index
    %c0_74 = arith.constant 0 : index
    %217 = vector.load %arg19[%c64, %c0_74] : memref<96x512xf32, #tpu.memory_space<vmem>>, vector<8x512xf32>
    %c0_75 = arith.constant 0 : index
    %c0_76 = arith.constant 0 : index
    %218 = vector.load %arg3[%c0_75, %c0_76] : memref<128x512xf32, #tpu.memory_space<vmem>>, vector<128x512xf32>
    %cst_77 = arith.constant dense<0.000000e+00> : vector<8x512xf32>
    %219 = tpu.matmul %215, %218, %cst_77 {dimension_numbers = #tpu.dot_dimension_numbers<[1], [0], [0], [1], [0, 0, 1, 1], [], []>} : vector<8x128xf32>, vector<128x512xf32>, vector<8x512xf32> -> vector<8x512xf32>
    %220 = arith.addf %217, %219 : vector<8x512xf32>
    %221 = vector.extract_strided_slice %220 {offsets = [0, 0], sizes = [8, 256], strides = [1, 1]} : vector<8x512xf32> to vector<8x256xf32>
    %222 = arith.negf %221 : vector<8x256xf32>
    %223 = math.exp %222 : vector<8x256xf32>
    %cst_78 = arith.constant 1.000000e+00 : f32
    %224 = vector.broadcast %cst_78 : f32 to vector<8x256xf32>
    %225 = arith.addf %224, %223 : vector<8x256xf32>
    %226 = arith.divf %224, %225 : vector<8x256xf32>
    %227 = vector.extract_strided_slice %226 {offsets = [0, 0], sizes = [8, 128], strides = [1, 1]} : vector<8x256xf32> to vector<8x128xf32>
    %228 = vector.extract_strided_slice %226 {offsets = [0, 128], sizes = [8, 128], strides = [1, 1]} : vector<8x256xf32> to vector<8x128xf32>
    %229 = vector.extract_strided_slice %220 {offsets = [0, 384], sizes = [8, 128], strides = [1, 1]} : vector<8x512xf32> to vector<8x128xf32>
    %230 = arith.negf %229 : vector<8x128xf32>
    %231 = math.exp %230 : vector<8x128xf32>
    %cst_79 = arith.constant 1.000000e+00 : f32
    %232 = vector.broadcast %cst_79 : f32 to vector<8x128xf32>
    %233 = arith.addf %232, %231 : vector<8x128xf32>
    %234 = arith.divf %232, %233 : vector<8x128xf32>
    %235 = vector.extract_strided_slice %220 {offsets = [0, 256], sizes = [8, 128], strides = [1, 1]} : vector<8x512xf32> to vector<8x128xf32>
    %236 = math.tanh %235 : vector<8x128xf32>
    %237 = arith.mulf %228, %213 : vector<8x128xf32>
    %238 = arith.mulf %227, %236 : vector<8x128xf32>
    %239 = arith.addf %237, %238 : vector<8x128xf32>
    %240 = math.tanh %239 : vector<8x128xf32>
    %241 = arith.mulf %234, %240 : vector<8x128xf32>
    %c64_80 = arith.constant 64 : index
    %c0_81 = arith.constant 0 : index
    %242 = vector.load %arg20[%c64_80, %c0_81] : memref<96x128xf32, #tpu.memory_space<vmem>>, vector<8x128xf32>
    tpu.vector_store %arg20[%c64_80, %c0_81], %241 {strides = array<i32>} : memref<96x128xf32, #tpu.memory_space<vmem>>, vector<8x128xf32>,
    %c72 = arith.constant 72 : index
    %c0_82 = arith.constant 0 : index
    %243 = vector.load %arg19[%c72, %c0_82] : memref<96x512xf32, #tpu.memory_space<vmem>>, vector<8x512xf32>
    %c0_83 = arith.constant 0 : index
    %c0_84 = arith.constant 0 : index
    %244 = vector.load %arg3[%c0_83, %c0_84] : memref<128x512xf32, #tpu.memory_space<vmem>>, vector<128x512xf32>
    %cst_85 = arith.constant dense<0.000000e+00> : vector<8x512xf32>
    %245 = tpu.matmul %241, %244, %cst_85 {dimension_numbers = #tpu.dot_dimension_numbers<[1], [0], [0], [1], [0, 0, 1, 1], [], []>} : vector<8x128xf32>, vector<128x512xf32>, vector<8x512xf32> -> vector<8x512xf32>
    %246 = arith.addf %243, %245 : vector<8x512xf32>
    %247 = vector.extract_strided_slice %246 {offsets = [0, 0], sizes = [8, 256], strides = [1, 1]} : vector<8x512xf32> to vector<8x256xf32>
    %248 = arith.negf %247 : vector<8x256xf32>
    %249 = math.exp %248 : vector<8x256xf32>
    %cst_86 = arith.constant 1.000000e+00 : f32
    %250 = vector.broadcast %cst_86 : f32 to vector<8x256xf32>
    %251 = arith.addf %250, %249 : vector<8x256xf32>
    %252 = arith.divf %250, %251 : vector<8x256xf32>
    %253 = vector.extract_strided_slice %252 {offsets = [0, 0], sizes = [8, 128], strides = [1, 1]} : vector<8x256xf32> to vector<8x128xf32>
    %254 = vector.extract_strided_slice %252 {offsets = [0, 128], sizes = [8, 128], strides = [1, 1]} : vector<8x256xf32> to vector<8x128xf32>
    %255 = vector.extract_strided_slice %246 {offsets = [0, 384], sizes = [8, 128], strides = [1, 1]} : vector<8x512xf32> to vector<8x128xf32>
    %256 = arith.negf %255 : vector<8x128xf32>
    %257 = math.exp %256 : vector<8x128xf32>
    %cst_87 = arith.constant 1.000000e+00 : f32
    %258 = vector.broadcast %cst_87 : f32 to vector<8x128xf32>
    %259 = arith.addf %258, %257 : vector<8x128xf32>
    %260 = arith.divf %258, %259 : vector<8x128xf32>
    %261 = vector.extract_strided_slice %246 {offsets = [0, 256], sizes = [8, 128], strides = [1, 1]} : vector<8x512xf32> to vector<8x128xf32>
    %262 = math.tanh %261 : vector<8x128xf32>
    %263 = arith.mulf %254, %239 : vector<8x128xf32>
    %264 = arith.mulf %253, %262 : vector<8x128xf32>
    %265 = arith.addf %263, %264 : vector<8x128xf32>
    %266 = math.tanh %265 : vector<8x128xf32>
    %267 = arith.mulf %260, %266 : vector<8x128xf32>
    %c72_88 = arith.constant 72 : index
    %c0_89 = arith.constant 0 : index
    %268 = vector.load %arg20[%c72_88, %c0_89] : memref<96x128xf32, #tpu.memory_space<vmem>>, vector<8x128xf32>
    tpu.vector_store %arg20[%c72_88, %c0_89], %267 {strides = array<i32>} : memref<96x128xf32, #tpu.memory_space<vmem>>, vector<8x128xf32>,
    %c80 = arith.constant 80 : index
    %c0_90 = arith.constant 0 : index
    %269 = vector.load %arg19[%c80, %c0_90] : memref<96x512xf32, #tpu.memory_space<vmem>>, vector<8x512xf32>
    %c0_91 = arith.constant 0 : index
    %c0_92 = arith.constant 0 : index
    %270 = vector.load %arg3[%c0_91, %c0_92] : memref<128x512xf32, #tpu.memory_space<vmem>>, vector<128x512xf32>
    %cst_93 = arith.constant dense<0.000000e+00> : vector<8x512xf32>
    %271 = tpu.matmul %267, %270, %cst_93 {dimension_numbers = #tpu.dot_dimension_numbers<[1], [0], [0], [1], [0, 0, 1, 1], [], []>} : vector<8x128xf32>, vector<128x512xf32>, vector<8x512xf32> -> vector<8x512xf32>
    %272 = arith.addf %269, %271 : vector<8x512xf32>
    %273 = vector.extract_strided_slice %272 {offsets = [0, 0], sizes = [8, 256], strides = [1, 1]} : vector<8x512xf32> to vector<8x256xf32>
    %274 = arith.negf %273 : vector<8x256xf32>
    %275 = math.exp %274 : vector<8x256xf32>
    %cst_94 = arith.constant 1.000000e+00 : f32
    %276 = vector.broadcast %cst_94 : f32 to vector<8x256xf32>
    %277 = arith.addf %276, %275 : vector<8x256xf32>
    %278 = arith.divf %276, %277 : vector<8x256xf32>
    %279 = vector.extract_strided_slice %278 {offsets = [0, 0], sizes = [8, 128], strides = [1, 1]} : vector<8x256xf32> to vector<8x128xf32>
    %280 = vector.extract_strided_slice %278 {offsets = [0, 128], sizes = [8, 128], strides = [1, 1]} : vector<8x256xf32> to vector<8x128xf32>
    %281 = vector.extract_strided_slice %272 {offsets = [0, 384], sizes = [8, 128], strides = [1, 1]} : vector<8x512xf32> to vector<8x128xf32>
    %282 = arith.negf %281 : vector<8x128xf32>
    %283 = math.exp %282 : vector<8x128xf32>
    %cst_95 = arith.constant 1.000000e+00 : f32
    %284 = vector.broadcast %cst_95 : f32 to vector<8x128xf32>
    %285 = arith.addf %284, %283 : vector<8x128xf32>
    %286 = arith.divf %284, %285 : vector<8x128xf32>
    %287 = vector.extract_strided_slice %272 {offsets = [0, 256], sizes = [8, 128], strides = [1, 1]} : vector<8x512xf32> to vector<8x128xf32>
    %288 = math.tanh %287 : vector<8x128xf32>
    %289 = arith.mulf %280, %265 : vector<8x128xf32>
    %290 = arith.mulf %279, %288 : vector<8x128xf32>
    %291 = arith.addf %289, %290 : vector<8x128xf32>
    %292 = math.tanh %291 : vector<8x128xf32>
    %293 = arith.mulf %286, %292 : vector<8x128xf32>
    %c80_96 = arith.constant 80 : index
    %c0_97 = arith.constant 0 : index
    %294 = vector.load %arg20[%c80_96, %c0_97] : memref<96x128xf32, #tpu.memory_space<vmem>>, vector<8x128xf32>
    tpu.vector_store %arg20[%c80_96, %c0_97], %293 {strides = array<i32>} : memref<96x128xf32, #tpu.memory_space<vmem>>, vector<8x128xf32>,
    %c88 = arith.constant 88 : index
    %c0_98 = arith.constant 0 : index
    %295 = vector.load %arg19[%c88, %c0_98] : memref<96x512xf32, #tpu.memory_space<vmem>>, vector<8x512xf32>
    %c0_99 = arith.constant 0 : index
    %c0_100 = arith.constant 0 : index
    %296 = vector.load %arg3[%c0_99, %c0_100] : memref<128x512xf32, #tpu.memory_space<vmem>>, vector<128x512xf32>
    %cst_101 = arith.constant dense<0.000000e+00> : vector<8x512xf32>
    %297 = tpu.matmul %293, %296, %cst_101 {dimension_numbers = #tpu.dot_dimension_numbers<[1], [0], [0], [1], [0, 0, 1, 1], [], []>} : vector<8x128xf32>, vector<128x512xf32>, vector<8x512xf32> -> vector<8x512xf32>
    %298 = arith.addf %295, %297 : vector<8x512xf32>
    %299 = vector.extract_strided_slice %298 {offsets = [0, 0], sizes = [8, 256], strides = [1, 1]} : vector<8x512xf32> to vector<8x256xf32>
    %300 = arith.negf %299 : vector<8x256xf32>
    %301 = math.exp %300 : vector<8x256xf32>
    %cst_102 = arith.constant 1.000000e+00 : f32
    %302 = vector.broadcast %cst_102 : f32 to vector<8x256xf32>
    %303 = arith.addf %302, %301 : vector<8x256xf32>
    %304 = arith.divf %302, %303 : vector<8x256xf32>
    %305 = vector.extract_strided_slice %304 {offsets = [0, 0], sizes = [8, 128], strides = [1, 1]} : vector<8x256xf32> to vector<8x128xf32>
    %306 = vector.extract_strided_slice %304 {offsets = [0, 128], sizes = [8, 128], strides = [1, 1]} : vector<8x256xf32> to vector<8x128xf32>
    %307 = vector.extract_strided_slice %298 {offsets = [0, 384], sizes = [8, 128], strides = [1, 1]} : vector<8x512xf32> to vector<8x128xf32>
    %308 = arith.negf %307 : vector<8x128xf32>
    %309 = math.exp %308 : vector<8x128xf32>
    %cst_103 = arith.constant 1.000000e+00 : f32
    %310 = vector.broadcast %cst_103 : f32 to vector<8x128xf32>
    %311 = arith.addf %310, %309 : vector<8x128xf32>
    %312 = arith.divf %310, %311 : vector<8x128xf32>
    %313 = vector.extract_strided_slice %298 {offsets = [0, 256], sizes = [8, 128], strides = [1, 1]} : vector<8x512xf32> to vector<8x128xf32>
    %314 = math.tanh %313 : vector<8x128xf32>
    %315 = arith.mulf %306, %291 : vector<8x128xf32>
    %316 = arith.mulf %305, %314 : vector<8x128xf32>
    %317 = arith.addf %315, %316 : vector<8x128xf32>
    %318 = math.tanh %317 : vector<8x128xf32>
    %319 = arith.mulf %312, %318 : vector<8x128xf32>
    %c88_104 = arith.constant 88 : index
    %c0_105 = arith.constant 0 : index
    %320 = vector.load %arg20[%c88_104, %c0_105] : memref<96x128xf32, #tpu.memory_space<vmem>>, vector<8x128xf32>
    tpu.vector_store %arg20[%c88_104, %c0_105], %319 {strides = array<i32>} : memref<96x128xf32, #tpu.memory_space<vmem>>, vector<8x128xf32>,
    %c0_106 = arith.constant 0 : index
    %c0_107 = arith.constant 0 : index
    %321 = vector.load %arg20[%c0_106, %c0_107] : memref<96x128xf32, #tpu.memory_space<vmem>>, vector<96x128xf32>
    %c0_108 = arith.constant 0 : index
    %c0_109 = arith.constant 0 : index
    %322 = vector.load %arg5[%c0_108, %c0_109] : memref<128x4xf32, #tpu.memory_space<vmem>>, vector<128x4xf32>
    %cst_110 = arith.constant dense<0.000000e+00> : vector<96x4xf32>
    %323 = tpu.matmul %321, %322, %cst_110 {dimension_numbers = #tpu.dot_dimension_numbers<[1], [0], [0], [1], [0, 0, 1, 1], [], []>} : vector<96x128xf32>, vector<128x4xf32>, vector<96x4xf32> -> vector<96x4xf32>
    %c0_111 = arith.constant 0 : index
    %c0_112 = arith.constant 0 : index
    %324 = vector.load %arg7[%c0_111, %c0_112] : memref<1x4xf32, #tpu.memory_space<vmem>>, vector<1x4xf32>
    %325 = vector.broadcast %324 : vector<1x4xf32> to vector<96x4xf32>
    %326 = arith.addf %323, %325 : vector<96x4xf32>
    %c0_113 = arith.constant 0 : index
    %c0_114 = arith.constant 0 : index
    %327 = vector.load %arg21[%c0_113, %c0_114] : memref<96x4xf32, #tpu.memory_space<vmem>>, vector<96x4xf32>
    tpu.vector_store %arg21[%c0_113, %c0_114], %326 {strides = array<i32>} : memref<96x4xf32, #tpu.memory_space<vmem>>, vector<96x4xf32>,
    %c0_115 = arith.constant 0 : index
    %c0_116 = arith.constant 0 : index
    %328 = vector.load %arg6[%c0_115, %c0_116] : memref<1x4xf32, #tpu.memory_space<vmem>>, vector<1x4xf32>
    %c0_117 = arith.constant 0 : index
    %c0_118 = arith.constant 0 : index
    %329 = vector.load %arg8[%c0_117, %c0_118] : memref<1x128xf32, #tpu.memory_space<vmem>>, vector<1x128xf32>
    %c0_119 = arith.constant 0 : index
    %c0_120 = arith.constant 0 : index
    %330 = vector.load %arg10[%c0_119, %c0_120] : memref<1x128xf32, #tpu.memory_space<vmem>>, vector<1x128xf32>
    %cst_121 = arith.constant 0.000000e+00 : f32
    %331 = vector.broadcast %cst_121 : f32 to vector<8x1xf32>
    %cst_122 = arith.constant 0.000000e+00 : f32
    %332 = vector.broadcast %cst_122 : f32 to vector<8x1xf32>
    %c0_123 = arith.constant 0 : index
    %c0_124 = arith.constant 0 : index
    %333 = vector.load %arg21[%c0_123, %c0_124] : memref<96x4xf32, #tpu.memory_space<vmem>>, vector<8x4xf32>
    %334 = vector.broadcast %331 : vector<8x1xf32> to vector<8x4xf32>
    %335 = vector.broadcast %328 : vector<1x4xf32> to vector<8x4xf32>
    %336 = arith.mulf %334, %335 : vector<8x4xf32>
    %337 = arith.addf %333, %336 : vector<8x4xf32>
    %338 = arith.negf %337 : vector<8x4xf32>
    %339 = math.exp %338 : vector<8x4xf32>
    %cst_125 = arith.constant 1.000000e+00 : f32
    %340 = vector.broadcast %cst_125 : f32 to vector<8x4xf32>
    %341 = arith.addf %340, %339 : vector<8x4xf32>
    %342 = arith.divf %340, %341 : vector<8x4xf32>
    %343 = vector.extract_strided_slice %342 {offsets = [0, 0], sizes = [8, 1], strides = [1, 1]} : vector<8x4xf32> to vector<8x1xf32>
    %344 = vector.extract_strided_slice %342 {offsets = [0, 1], sizes = [8, 1], strides = [1, 1]} : vector<8x4xf32> to vector<8x1xf32>
    %345 = vector.extract_strided_slice %342 {offsets = [0, 3], sizes = [8, 1], strides = [1, 1]} : vector<8x4xf32> to vector<8x1xf32>
    %346 = vector.extract_strided_slice %337 {offsets = [0, 2], sizes = [8, 1], strides = [1, 1]} : vector<8x4xf32> to vector<8x1xf32>
    %347 = math.tanh %346 : vector<8x1xf32>
    %348 = arith.mulf %344, %332 : vector<8x1xf32>
    %349 = arith.mulf %343, %347 : vector<8x1xf32>
    %350 = arith.addf %348, %349 : vector<8x1xf32>
    %351 = math.tanh %350 : vector<8x1xf32>
    %352 = arith.mulf %345, %351 : vector<8x1xf32>
    %cst_126 = arith.constant 0.000000e+00 : f32
    %353 = vector.broadcast %cst_126 : f32 to vector<8x1xf32>
    %354 = arith.maximumf %352, %353 : vector<8x1xf32>
    %355 = vector.broadcast %354 : vector<8x1xf32> to vector<8x128xf32>
    %356 = vector.broadcast %329 : vector<1x128xf32> to vector<8x128xf32>
    %357 = arith.mulf %355, %356 : vector<8x128xf32>
    %358 = vector.broadcast %330 : vector<1x128xf32> to vector<8x128xf32>
    %359 = arith.addf %357, %358 : vector<8x128xf32>
    %c0_127 = arith.constant 0 : index
    %c0_128 = arith.constant 0 : index
    %360 = vector.load %arg22[%c0_127, %c0_128] : memref<128x128xf32, #tpu.memory_space<vmem>>, vector<8x128xf32>
    tpu.vector_store %arg22[%c0_127, %c0_128], %359 {strides = array<i32>} : memref<128x128xf32, #tpu.memory_space<vmem>>, vector<8x128xf32>,
    %c8_129 = arith.constant 8 : index
    %c0_130 = arith.constant 0 : index
    %361 = vector.load %arg21[%c8_129, %c0_130] : memref<96x4xf32, #tpu.memory_space<vmem>>, vector<8x4xf32>
    %362 = vector.broadcast %352 : vector<8x1xf32> to vector<8x4xf32>
    %363 = vector.broadcast %328 : vector<1x4xf32> to vector<8x4xf32>
    %364 = arith.mulf %362, %363 : vector<8x4xf32>
    %365 = arith.addf %361, %364 : vector<8x4xf32>
    %366 = arith.negf %365 : vector<8x4xf32>
    %367 = math.exp %366 : vector<8x4xf32>
    %cst_131 = arith.constant 1.000000e+00 : f32
    %368 = vector.broadcast %cst_131 : f32 to vector<8x4xf32>
    %369 = arith.addf %368, %367 : vector<8x4xf32>
    %370 = arith.divf %368, %369 : vector<8x4xf32>
    %371 = vector.extract_strided_slice %370 {offsets = [0, 0], sizes = [8, 1], strides = [1, 1]} : vector<8x4xf32> to vector<8x1xf32>
    %372 = vector.extract_strided_slice %370 {offsets = [0, 1], sizes = [8, 1], strides = [1, 1]} : vector<8x4xf32> to vector<8x1xf32>
    %373 = vector.extract_strided_slice %370 {offsets = [0, 3], sizes = [8, 1], strides = [1, 1]} : vector<8x4xf32> to vector<8x1xf32>
    %374 = vector.extract_strided_slice %365 {offsets = [0, 2], sizes = [8, 1], strides = [1, 1]} : vector<8x4xf32> to vector<8x1xf32>
    %375 = math.tanh %374 : vector<8x1xf32>
    %376 = arith.mulf %372, %350 : vector<8x1xf32>
    %377 = arith.mulf %371, %375 : vector<8x1xf32>
    %378 = arith.addf %376, %377 : vector<8x1xf32>
    %379 = math.tanh %378 : vector<8x1xf32>
    %380 = arith.mulf %373, %379 : vector<8x1xf32>
    %cst_132 = arith.constant 0.000000e+00 : f32
    %381 = vector.broadcast %cst_132 : f32 to vector<8x1xf32>
    %382 = arith.maximumf %380, %381 : vector<8x1xf32>
    %383 = vector.broadcast %382 : vector<8x1xf32> to vector<8x128xf32>
    %384 = vector.broadcast %329 : vector<1x128xf32> to vector<8x128xf32>
    %385 = arith.mulf %383, %384 : vector<8x128xf32>
    %386 = vector.broadcast %330 : vector<1x128xf32> to vector<8x128xf32>
    %387 = arith.addf %385, %386 : vector<8x128xf32>
    %c8_133 = arith.constant 8 : index
    %c0_134 = arith.constant 0 : index
    %388 = vector.load %arg22[%c8_133, %c0_134] : memref<128x128xf32, #tpu.memory_space<vmem>>, vector<8x128xf32>
    tpu.vector_store %arg22[%c8_133, %c0_134], %387 {strides = array<i32>} : memref<128x128xf32, #tpu.memory_space<vmem>>, vector<8x128xf32>,
    %c16_135 = arith.constant 16 : index
    %c0_136 = arith.constant 0 : index
    %389 = vector.load %arg21[%c16_135, %c0_136] : memref<96x4xf32, #tpu.memory_space<vmem>>, vector<8x4xf32>
    %390 = vector.broadcast %380 : vector<8x1xf32> to vector<8x4xf32>
    %391 = vector.broadcast %328 : vector<1x4xf32> to vector<8x4xf32>
    %392 = arith.mulf %390, %391 : vector<8x4xf32>
    %393 = arith.addf %389, %392 : vector<8x4xf32>
    %394 = arith.negf %393 : vector<8x4xf32>
    %395 = math.exp %394 : vector<8x4xf32>
    %cst_137 = arith.constant 1.000000e+00 : f32
    %396 = vector.broadcast %cst_137 : f32 to vector<8x4xf32>
    %397 = arith.addf %396, %395 : vector<8x4xf32>
    %398 = arith.divf %396, %397 : vector<8x4xf32>
    %399 = vector.extract_strided_slice %398 {offsets = [0, 0], sizes = [8, 1], strides = [1, 1]} : vector<8x4xf32> to vector<8x1xf32>
    %400 = vector.extract_strided_slice %398 {offsets = [0, 1], sizes = [8, 1], strides = [1, 1]} : vector<8x4xf32> to vector<8x1xf32>
    %401 = vector.extract_strided_slice %398 {offsets = [0, 3], sizes = [8, 1], strides = [1, 1]} : vector<8x4xf32> to vector<8x1xf32>
    %402 = vector.extract_strided_slice %393 {offsets = [0, 2], sizes = [8, 1], strides = [1, 1]} : vector<8x4xf32> to vector<8x1xf32>
    %403 = math.tanh %402 : vector<8x1xf32>
    %404 = arith.mulf %400, %378 : vector<8x1xf32>
    %405 = arith.mulf %399, %403 : vector<8x1xf32>
    %406 = arith.addf %404, %405 : vector<8x1xf32>
    %407 = math.tanh %406 : vector<8x1xf32>
    %408 = arith.mulf %401, %407 : vector<8x1xf32>
    %cst_138 = arith.constant 0.000000e+00 : f32
    %409 = vector.broadcast %cst_138 : f32 to vector<8x1xf32>
    %410 = arith.maximumf %408, %409 : vector<8x1xf32>
    %411 = vector.broadcast %410 : vector<8x1xf32> to vector<8x128xf32>
    %412 = vector.broadcast %329 : vector<1x128xf32> to vector<8x128xf32>
    %413 = arith.mulf %411, %412 : vector<8x128xf32>
    %414 = vector.broadcast %330 : vector<1x128xf32> to vector<8x128xf32>
    %415 = arith.addf %413, %414 : vector<8x128xf32>
    %c16_139 = arith.constant 16 : index
    %c0_140 = arith.constant 0 : index
    %416 = vector.load %arg22[%c16_139, %c0_140] : memref<128x128xf32, #tpu.memory_space<vmem>>, vector<8x128xf32>
    tpu.vector_store %arg22[%c16_139, %c0_140], %415 {strides = array<i32>} : memref<128x128xf32, #tpu.memory_space<vmem>>, vector<8x128xf32>,
    %c24_141 = arith.constant 24 : index
    %c0_142 = arith.constant 0 : index
    %417 = vector.load %arg21[%c24_141, %c0_142] : memref<96x4xf32, #tpu.memory_space<vmem>>, vector<8x4xf32>
    %418 = vector.broadcast %408 : vector<8x1xf32> to vector<8x4xf32>
    %419 = vector.broadcast %328 : vector<1x4xf32> to vector<8x4xf32>
    %420 = arith.mulf %418, %419 : vector<8x4xf32>
    %421 = arith.addf %417, %420 : vector<8x4xf32>
    %422 = arith.negf %421 : vector<8x4xf32>
    %423 = math.exp %422 : vector<8x4xf32>
    %cst_143 = arith.constant 1.000000e+00 : f32
    %424 = vector.broadcast %cst_143 : f32 to vector<8x4xf32>
    %425 = arith.addf %424, %423 : vector<8x4xf32>
    %426 = arith.divf %424, %425 : vector<8x4xf32>
    %427 = vector.extract_strided_slice %426 {offsets = [0, 0], sizes = [8, 1], strides = [1, 1]} : vector<8x4xf32> to vector<8x1xf32>
    %428 = vector.extract_strided_slice %426 {offsets = [0, 1], sizes = [8, 1], strides = [1, 1]} : vector<8x4xf32> to vector<8x1xf32>
    %429 = vector.extract_strided_slice %426 {offsets = [0, 3], sizes = [8, 1], strides = [1, 1]} : vector<8x4xf32> to vector<8x1xf32>
    %430 = vector.extract_strided_slice %421 {offsets = [0, 2], sizes = [8, 1], strides = [1, 1]} : vector<8x4xf32> to vector<8x1xf32>
    %431 = math.tanh %430 : vector<8x1xf32>
    %432 = arith.mulf %428, %406 : vector<8x1xf32>
    %433 = arith.mulf %427, %431 : vector<8x1xf32>
    %434 = arith.addf %432, %433 : vector<8x1xf32>
    %435 = math.tanh %434 : vector<8x1xf32>
    %436 = arith.mulf %429, %435 : vector<8x1xf32>
    %cst_144 = arith.constant 0.000000e+00 : f32
    %437 = vector.broadcast %cst_144 : f32 to vector<8x1xf32>
    %438 = arith.maximumf %436, %437 : vector<8x1xf32>
    %439 = vector.broadcast %438 : vector<8x1xf32> to vector<8x128xf32>
    %440 = vector.broadcast %329 : vector<1x128xf32> to vector<8x128xf32>
    %441 = arith.mulf %439, %440 : vector<8x128xf32>
    %442 = vector.broadcast %330 : vector<1x128xf32> to vector<8x128xf32>
    %443 = arith.addf %441, %442 : vector<8x128xf32>
    %c24_145 = arith.constant 24 : index
    %c0_146 = arith.constant 0 : index
    %444 = vector.load %arg22[%c24_145, %c0_146] : memref<128x128xf32, #tpu.memory_space<vmem>>, vector<8x128xf32>
    tpu.vector_store %arg22[%c24_145, %c0_146], %443 {strides = array<i32>} : memref<128x128xf32, #tpu.memory_space<vmem>>, vector<8x128xf32>,
    %c32_147 = arith.constant 32 : index
    %c0_148 = arith.constant 0 : index
    %445 = vector.load %arg21[%c32_147, %c0_148] : memref<96x4xf32, #tpu.memory_space<vmem>>, vector<8x4xf32>
    %446 = vector.broadcast %436 : vector<8x1xf32> to vector<8x4xf32>
    %447 = vector.broadcast %328 : vector<1x4xf32> to vector<8x4xf32>
    %448 = arith.mulf %446, %447 : vector<8x4xf32>
    %449 = arith.addf %445, %448 : vector<8x4xf32>
    %450 = arith.negf %449 : vector<8x4xf32>
    %451 = math.exp %450 : vector<8x4xf32>
    %cst_149 = arith.constant 1.000000e+00 : f32
    %452 = vector.broadcast %cst_149 : f32 to vector<8x4xf32>
    %453 = arith.addf %452, %451 : vector<8x4xf32>
    %454 = arith.divf %452, %453 : vector<8x4xf32>
    %455 = vector.extract_strided_slice %454 {offsets = [0, 0], sizes = [8, 1], strides = [1, 1]} : vector<8x4xf32> to vector<8x1xf32>
    %456 = vector.extract_strided_slice %454 {offsets = [0, 1], sizes = [8, 1], strides = [1, 1]} : vector<8x4xf32> to vector<8x1xf32>
    %457 = vector.extract_strided_slice %454 {offsets = [0, 3], sizes = [8, 1], strides = [1, 1]} : vector<8x4xf32> to vector<8x1xf32>
    %458 = vector.extract_strided_slice %449 {offsets = [0, 2], sizes = [8, 1], strides = [1, 1]} : vector<8x4xf32> to vector<8x1xf32>
    %459 = math.tanh %458 : vector<8x1xf32>
    %460 = arith.mulf %456, %434 : vector<8x1xf32>
    %461 = arith.mulf %455, %459 : vector<8x1xf32>
    %462 = arith.addf %460, %461 : vector<8x1xf32>
    %463 = math.tanh %462 : vector<8x1xf32>
    %464 = arith.mulf %457, %463 : vector<8x1xf32>
    %cst_150 = arith.constant 0.000000e+00 : f32
    %465 = vector.broadcast %cst_150 : f32 to vector<8x1xf32>
    %466 = arith.maximumf %464, %465 : vector<8x1xf32>
    %467 = vector.broadcast %466 : vector<8x1xf32> to vector<8x128xf32>
    %468 = vector.broadcast %329 : vector<1x128xf32> to vector<8x128xf32>
    %469 = arith.mulf %467, %468 : vector<8x128xf32>
    %470 = vector.broadcast %330 : vector<1x128xf32> to vector<8x128xf32>
    %471 = arith.addf %469, %470 : vector<8x128xf32>
    %c32_151 = arith.constant 32 : index
    %c0_152 = arith.constant 0 : index
    %472 = vector.load %arg22[%c32_151, %c0_152] : memref<128x128xf32, #tpu.memory_space<vmem>>, vector<8x128xf32>
    tpu.vector_store %arg22[%c32_151, %c0_152], %471 {strides = array<i32>} : memref<128x128xf32, #tpu.memory_space<vmem>>, vector<8x128xf32>,
    %c40_153 = arith.constant 40 : index
    %c0_154 = arith.constant 0 : index
    %473 = vector.load %arg21[%c40_153, %c0_154] : memref<96x4xf32, #tpu.memory_space<vmem>>, vector<8x4xf32>
    %474 = vector.broadcast %464 : vector<8x1xf32> to vector<8x4xf32>
    %475 = vector.broadcast %328 : vector<1x4xf32> to vector<8x4xf32>
    %476 = arith.mulf %474, %475 : vector<8x4xf32>
    %477 = arith.addf %473, %476 : vector<8x4xf32>
    %478 = arith.negf %477 : vector<8x4xf32>
    %479 = math.exp %478 : vector<8x4xf32>
    %cst_155 = arith.constant 1.000000e+00 : f32
    %480 = vector.broadcast %cst_155 : f32 to vector<8x4xf32>
    %481 = arith.addf %480, %479 : vector<8x4xf32>
    %482 = arith.divf %480, %481 : vector<8x4xf32>
    %483 = vector.extract_strided_slice %482 {offsets = [0, 0], sizes = [8, 1], strides = [1, 1]} : vector<8x4xf32> to vector<8x1xf32>
    %484 = vector.extract_strided_slice %482 {offsets = [0, 1], sizes = [8, 1], strides = [1, 1]} : vector<8x4xf32> to vector<8x1xf32>
    %485 = vector.extract_strided_slice %482 {offsets = [0, 3], sizes = [8, 1], strides = [1, 1]} : vector<8x4xf32> to vector<8x1xf32>
    %486 = vector.extract_strided_slice %477 {offsets = [0, 2], sizes = [8, 1], strides = [1, 1]} : vector<8x4xf32> to vector<8x1xf32>
    %487 = math.tanh %486 : vector<8x1xf32>
    %488 = arith.mulf %484, %462 : vector<8x1xf32>
    %489 = arith.mulf %483, %487 : vector<8x1xf32>
    %490 = arith.addf %488, %489 : vector<8x1xf32>
    %491 = math.tanh %490 : vector<8x1xf32>
    %492 = arith.mulf %485, %491 : vector<8x1xf32>
    %cst_156 = arith.constant 0.000000e+00 : f32
    %493 = vector.broadcast %cst_156 : f32 to vector<8x1xf32>
    %494 = arith.maximumf %492, %493 : vector<8x1xf32>
    %495 = vector.broadcast %494 : vector<8x1xf32> to vector<8x128xf32>
    %496 = vector.broadcast %329 : vector<1x128xf32> to vector<8x128xf32>
    %497 = arith.mulf %495, %496 : vector<8x128xf32>
    %498 = vector.broadcast %330 : vector<1x128xf32> to vector<8x128xf32>
    %499 = arith.addf %497, %498 : vector<8x128xf32>
    %c40_157 = arith.constant 40 : index
    %c0_158 = arith.constant 0 : index
    %500 = vector.load %arg22[%c40_157, %c0_158] : memref<128x128xf32, #tpu.memory_space<vmem>>, vector<8x128xf32>
    tpu.vector_store %arg22[%c40_157, %c0_158], %499 {strides = array<i32>} : memref<128x128xf32, #tpu.memory_space<vmem>>, vector<8x128xf32>,
    %c48_159 = arith.constant 48 : index
    %c0_160 = arith.constant 0 : index
    %501 = vector.load %arg21[%c48_159, %c0_160] : memref<96x4xf32, #tpu.memory_space<vmem>>, vector<8x4xf32>
    %502 = vector.broadcast %492 : vector<8x1xf32> to vector<8x4xf32>
    %503 = vector.broadcast %328 : vector<1x4xf32> to vector<8x4xf32>
    %504 = arith.mulf %502, %503 : vector<8x4xf32>
    %505 = arith.addf %501, %504 : vector<8x4xf32>
    %506 = arith.negf %505 : vector<8x4xf32>
    %507 = math.exp %506 : vector<8x4xf32>
    %cst_161 = arith.constant 1.000000e+00 : f32
    %508 = vector.broadcast %cst_161 : f32 to vector<8x4xf32>
    %509 = arith.addf %508, %507 : vector<8x4xf32>
    %510 = arith.divf %508, %509 : vector<8x4xf32>
    %511 = vector.extract_strided_slice %510 {offsets = [0, 0], sizes = [8, 1], strides = [1, 1]} : vector<8x4xf32> to vector<8x1xf32>
    %512 = vector.extract_strided_slice %510 {offsets = [0, 1], sizes = [8, 1], strides = [1, 1]} : vector<8x4xf32> to vector<8x1xf32>
    %513 = vector.extract_strided_slice %510 {offsets = [0, 3], sizes = [8, 1], strides = [1, 1]} : vector<8x4xf32> to vector<8x1xf32>
    %514 = vector.extract_strided_slice %505 {offsets = [0, 2], sizes = [8, 1], strides = [1, 1]} : vector<8x4xf32> to vector<8x1xf32>
    %515 = math.tanh %514 : vector<8x1xf32>
    %516 = arith.mulf %512, %490 : vector<8x1xf32>
    %517 = arith.mulf %511, %515 : vector<8x1xf32>
    %518 = arith.addf %516, %517 : vector<8x1xf32>
    %519 = math.tanh %518 : vector<8x1xf32>
    %520 = arith.mulf %513, %519 : vector<8x1xf32>
    %cst_162 = arith.constant 0.000000e+00 : f32
    %521 = vector.broadcast %cst_162 : f32 to vector<8x1xf32>
    %522 = arith.maximumf %520, %521 : vector<8x1xf32>
    %523 = vector.broadcast %522 : vector<8x1xf32> to vector<8x128xf32>
    %524 = vector.broadcast %329 : vector<1x128xf32> to vector<8x128xf32>
    %525 = arith.mulf %523, %524 : vector<8x128xf32>
    %526 = vector.broadcast %330 : vector<1x128xf32> to vector<8x128xf32>
    %527 = arith.addf %525, %526 : vector<8x128xf32>
    %c48_163 = arith.constant 48 : index
    %c0_164 = arith.constant 0 : index
    %528 = vector.load %arg22[%c48_163, %c0_164] : memref<128x128xf32, #tpu.memory_space<vmem>>, vector<8x128xf32>
    tpu.vector_store %arg22[%c48_163, %c0_164], %527 {strides = array<i32>} : memref<128x128xf32, #tpu.memory_space<vmem>>, vector<8x128xf32>,
    %c56_165 = arith.constant 56 : index
    %c0_166 = arith.constant 0 : index
    %529 = vector.load %arg21[%c56_165, %c0_166] : memref<96x4xf32, #tpu.memory_space<vmem>>, vector<8x4xf32>
    %530 = vector.broadcast %520 : vector<8x1xf32> to vector<8x4xf32>
    %531 = vector.broadcast %328 : vector<1x4xf32> to vector<8x4xf32>
    %532 = arith.mulf %530, %531 : vector<8x4xf32>
    %533 = arith.addf %529, %532 : vector<8x4xf32>
    %534 = arith.negf %533 : vector<8x4xf32>
    %535 = math.exp %534 : vector<8x4xf32>
    %cst_167 = arith.constant 1.000000e+00 : f32
    %536 = vector.broadcast %cst_167 : f32 to vector<8x4xf32>
    %537 = arith.addf %536, %535 : vector<8x4xf32>
    %538 = arith.divf %536, %537 : vector<8x4xf32>
    %539 = vector.extract_strided_slice %538 {offsets = [0, 0], sizes = [8, 1], strides = [1, 1]} : vector<8x4xf32> to vector<8x1xf32>
    %540 = vector.extract_strided_slice %538 {offsets = [0, 1], sizes = [8, 1], strides = [1, 1]} : vector<8x4xf32> to vector<8x1xf32>
    %541 = vector.extract_strided_slice %538 {offsets = [0, 3], sizes = [8, 1], strides = [1, 1]} : vector<8x4xf32> to vector<8x1xf32>
    %542 = vector.extract_strided_slice %533 {offsets = [0, 2], sizes = [8, 1], strides = [1, 1]} : vector<8x4xf32> to vector<8x1xf32>
    %543 = math.tanh %542 : vector<8x1xf32>
    %544 = arith.mulf %540, %518 : vector<8x1xf32>
    %545 = arith.mulf %539, %543 : vector<8x1xf32>
    %546 = arith.addf %544, %545 : vector<8x1xf32>
    %547 = math.tanh %546 : vector<8x1xf32>
    %548 = arith.mulf %541, %547 : vector<8x1xf32>
    %cst_168 = arith.constant 0.000000e+00 : f32
    %549 = vector.broadcast %cst_168 : f32 to vector<8x1xf32>
    %550 = arith.maximumf %548, %549 : vector<8x1xf32>
    %551 = vector.broadcast %550 : vector<8x1xf32> to vector<8x128xf32>
    %552 = vector.broadcast %329 : vector<1x128xf32> to vector<8x128xf32>
    %553 = arith.mulf %551, %552 : vector<8x128xf32>
    %554 = vector.broadcast %330 : vector<1x128xf32> to vector<8x128xf32>
    %555 = arith.addf %553, %554 : vector<8x128xf32>
    %c56_169 = arith.constant 56 : index
    %c0_170 = arith.constant 0 : index
    %556 = vector.load %arg22[%c56_169, %c0_170] : memref<128x128xf32, #tpu.memory_space<vmem>>, vector<8x128xf32>
    tpu.vector_store %arg22[%c56_169, %c0_170], %555 {strides = array<i32>} : memref<128x128xf32, #tpu.memory_space<vmem>>, vector<8x128xf32>,
    %c64_171 = arith.constant 64 : index
    %c0_172 = arith.constant 0 : index
    %557 = vector.load %arg21[%c64_171, %c0_172] : memref<96x4xf32, #tpu.memory_space<vmem>>, vector<8x4xf32>
    %558 = vector.broadcast %548 : vector<8x1xf32> to vector<8x4xf32>
    %559 = vector.broadcast %328 : vector<1x4xf32> to vector<8x4xf32>
    %560 = arith.mulf %558, %559 : vector<8x4xf32>
    %561 = arith.addf %557, %560 : vector<8x4xf32>
    %562 = arith.negf %561 : vector<8x4xf32>
    %563 = math.exp %562 : vector<8x4xf32>
    %cst_173 = arith.constant 1.000000e+00 : f32
    %564 = vector.broadcast %cst_173 : f32 to vector<8x4xf32>
    %565 = arith.addf %564, %563 : vector<8x4xf32>
    %566 = arith.divf %564, %565 : vector<8x4xf32>
    %567 = vector.extract_strided_slice %566 {offsets = [0, 0], sizes = [8, 1], strides = [1, 1]} : vector<8x4xf32> to vector<8x1xf32>
    %568 = vector.extract_strided_slice %566 {offsets = [0, 1], sizes = [8, 1], strides = [1, 1]} : vector<8x4xf32> to vector<8x1xf32>
    %569 = vector.extract_strided_slice %566 {offsets = [0, 3], sizes = [8, 1], strides = [1, 1]} : vector<8x4xf32> to vector<8x1xf32>
    %570 = vector.extract_strided_slice %561 {offsets = [0, 2], sizes = [8, 1], strides = [1, 1]} : vector<8x4xf32> to vector<8x1xf32>
    %571 = math.tanh %570 : vector<8x1xf32>
    %572 = arith.mulf %568, %546 : vector<8x1xf32>
    %573 = arith.mulf %567, %571 : vector<8x1xf32>
    %574 = arith.addf %572, %573 : vector<8x1xf32>
    %575 = math.tanh %574 : vector<8x1xf32>
    %576 = arith.mulf %569, %575 : vector<8x1xf32>
    %cst_174 = arith.constant 0.000000e+00 : f32
    %577 = vector.broadcast %cst_174 : f32 to vector<8x1xf32>
    %578 = arith.maximumf %576, %577 : vector<8x1xf32>
    %579 = vector.broadcast %578 : vector<8x1xf32> to vector<8x128xf32>
    %580 = vector.broadcast %329 : vector<1x128xf32> to vector<8x128xf32>
    %581 = arith.mulf %579, %580 : vector<8x128xf32>
    %582 = vector.broadcast %330 : vector<1x128xf32> to vector<8x128xf32>
    %583 = arith.addf %581, %582 : vector<8x128xf32>
    %c64_175 = arith.constant 64 : index
    %c0_176 = arith.constant 0 : index
    %584 = vector.load %arg22[%c64_175, %c0_176] : memref<128x128xf32, #tpu.memory_space<vmem>>, vector<8x128xf32>
    tpu.vector_store %arg22[%c64_175, %c0_176], %583 {strides = array<i32>} : memref<128x128xf32, #tpu.memory_space<vmem>>, vector<8x128xf32>,
    %c72_177 = arith.constant 72 : index
    %c0_178 = arith.constant 0 : index
    %585 = vector.load %arg21[%c72_177, %c0_178] : memref<96x4xf32, #tpu.memory_space<vmem>>, vector<8x4xf32>
    %586 = vector.broadcast %576 : vector<8x1xf32> to vector<8x4xf32>
    %587 = vector.broadcast %328 : vector<1x4xf32> to vector<8x4xf32>
    %588 = arith.mulf %586, %587 : vector<8x4xf32>
    %589 = arith.addf %585, %588 : vector<8x4xf32>
    %590 = arith.negf %589 : vector<8x4xf32>
    %591 = math.exp %590 : vector<8x4xf32>
    %cst_179 = arith.constant 1.000000e+00 : f32
    %592 = vector.broadcast %cst_179 : f32 to vector<8x4xf32>
    %593 = arith.addf %592, %591 : vector<8x4xf32>
    %594 = arith.divf %592, %593 : vector<8x4xf32>
    %595 = vector.extract_strided_slice %594 {offsets = [0, 0], sizes = [8, 1], strides = [1, 1]} : vector<8x4xf32> to vector<8x1xf32>
    %596 = vector.extract_strided_slice %594 {offsets = [0, 1], sizes = [8, 1], strides = [1, 1]} : vector<8x4xf32> to vector<8x1xf32>
    %597 = vector.extract_strided_slice %594 {offsets = [0, 3], sizes = [8, 1], strides = [1, 1]} : vector<8x4xf32> to vector<8x1xf32>
    %598 = vector.extract_strided_slice %589 {offsets = [0, 2], sizes = [8, 1], strides = [1, 1]} : vector<8x4xf32> to vector<8x1xf32>
    %599 = math.tanh %598 : vector<8x1xf32>
    %600 = arith.mulf %596, %574 : vector<8x1xf32>
    %601 = arith.mulf %595, %599 : vector<8x1xf32>
    %602 = arith.addf %600, %601 : vector<8x1xf32>
    %603 = math.tanh %602 : vector<8x1xf32>
    %604 = arith.mulf %597, %603 : vector<8x1xf32>
    %cst_180 = arith.constant 0.000000e+00 : f32
    %605 = vector.broadcast %cst_180 : f32 to vector<8x1xf32>
    %606 = arith.maximumf %604, %605 : vector<8x1xf32>
    %607 = vector.broadcast %606 : vector<8x1xf32> to vector<8x128xf32>
    %608 = vector.broadcast %329 : vector<1x128xf32> to vector<8x128xf32>
    %609 = arith.mulf %607, %608 : vector<8x128xf32>
    %610 = vector.broadcast %330 : vector<1x128xf32> to vector<8x128xf32>
    %611 = arith.addf %609, %610 : vector<8x128xf32>
    %c72_181 = arith.constant 72 : index
    %c0_182 = arith.constant 0 : index
    %612 = vector.load %arg22[%c72_181, %c0_182] : memref<128x128xf32, #tpu.memory_space<vmem>>, vector<8x128xf32>
    tpu.vector_store %arg22[%c72_181, %c0_182], %611 {strides = array<i32>} : memref<128x128xf32, #tpu.memory_space<vmem>>, vector<8x128xf32>,
    %c80_183 = arith.constant 80 : index
    %c0_184 = arith.constant 0 : index
    %613 = vector.load %arg21[%c80_183, %c0_184] : memref<96x4xf32, #tpu.memory_space<vmem>>, vector<8x4xf32>
    %614 = vector.broadcast %604 : vector<8x1xf32> to vector<8x4xf32>
    %615 = vector.broadcast %328 : vector<1x4xf32> to vector<8x4xf32>
    %616 = arith.mulf %614, %615 : vector<8x4xf32>
    %617 = arith.addf %613, %616 : vector<8x4xf32>
    %618 = arith.negf %617 : vector<8x4xf32>
    %619 = math.exp %618 : vector<8x4xf32>
    %cst_185 = arith.constant 1.000000e+00 : f32
    %620 = vector.broadcast %cst_185 : f32 to vector<8x4xf32>
    %621 = arith.addf %620, %619 : vector<8x4xf32>
    %622 = arith.divf %620, %621 : vector<8x4xf32>
    %623 = vector.extract_strided_slice %622 {offsets = [0, 0], sizes = [8, 1], strides = [1, 1]} : vector<8x4xf32> to vector<8x1xf32>
    %624 = vector.extract_strided_slice %622 {offsets = [0, 1], sizes = [8, 1], strides = [1, 1]} : vector<8x4xf32> to vector<8x1xf32>
    %625 = vector.extract_strided_slice %622 {offsets = [0, 3], sizes = [8, 1], strides = [1, 1]} : vector<8x4xf32> to vector<8x1xf32>
    %626 = vector.extract_strided_slice %617 {offsets = [0, 2], sizes = [8, 1], strides = [1, 1]} : vector<8x4xf32> to vector<8x1xf32>
    %627 = math.tanh %626 : vector<8x1xf32>
    %628 = arith.mulf %624, %602 : vector<8x1xf32>
    %629 = arith.mulf %623, %627 : vector<8x1xf32>
    %630 = arith.addf %628, %629 : vector<8x1xf32>
    %631 = math.tanh %630 : vector<8x1xf32>
    %632 = arith.mulf %625, %631 : vector<8x1xf32>
    %cst_186 = arith.constant 0.000000e+00 : f32
    %633 = vector.broadcast %cst_186 : f32 to vector<8x1xf32>
    %634 = arith.maximumf %632, %633 : vector<8x1xf32>
    %635 = vector.broadcast %634 : vector<8x1xf32> to vector<8x128xf32>
    %636 = vector.broadcast %329 : vector<1x128xf32> to vector<8x128xf32>
    %637 = arith.mulf %635, %636 : vector<8x128xf32>
    %638 = vector.broadcast %330 : vector<1x128xf32> to vector<8x128xf32>
    %639 = arith.addf %637, %638 : vector<8x128xf32>
    %c80_187 = arith.constant 80 : index
    %c0_188 = arith.constant 0 : index
    %640 = vector.load %arg22[%c80_187, %c0_188] : memref<128x128xf32, #tpu.memory_space<vmem>>, vector<8x128xf32>
    tpu.vector_store %arg22[%c80_187, %c0_188], %639 {strides = array<i32>} : memref<128x128xf32, #tpu.memory_space<vmem>>, vector<8x128xf32>,
    %c88_189 = arith.constant 88 : index
    %c0_190 = arith.constant 0 : index
    %641 = vector.load %arg21[%c88_189, %c0_190] : memref<96x4xf32, #tpu.memory_space<vmem>>, vector<8x4xf32>
    %642 = vector.broadcast %632 : vector<8x1xf32> to vector<8x4xf32>
    %643 = vector.broadcast %328 : vector<1x4xf32> to vector<8x4xf32>
    %644 = arith.mulf %642, %643 : vector<8x4xf32>
    %645 = arith.addf %641, %644 : vector<8x4xf32>
    %646 = arith.negf %645 : vector<8x4xf32>
    %647 = math.exp %646 : vector<8x4xf32>
    %cst_191 = arith.constant 1.000000e+00 : f32
    %648 = vector.broadcast %cst_191 : f32 to vector<8x4xf32>
    %649 = arith.addf %648, %647 : vector<8x4xf32>
    %650 = arith.divf %648, %649 : vector<8x4xf32>
    %651 = vector.extract_strided_slice %650 {offsets = [0, 0], sizes = [8, 1], strides = [1, 1]} : vector<8x4xf32> to vector<8x1xf32>
    %652 = vector.extract_strided_slice %650 {offsets = [0, 1], sizes = [8, 1], strides = [1, 1]} : vector<8x4xf32> to vector<8x1xf32>
    %653 = vector.extract_strided_slice %650 {offsets = [0, 3], sizes = [8, 1], strides = [1, 1]} : vector<8x4xf32> to vector<8x1xf32>
    %654 = vector.extract_strided_slice %645 {offsets = [0, 2], sizes = [8, 1], strides = [1, 1]} : vector<8x4xf32> to vector<8x1xf32>
    %655 = math.tanh %654 : vector<8x1xf32>
    %656 = arith.mulf %652, %630 : vector<8x1xf32>
    %657 = arith.mulf %651, %655 : vector<8x1xf32>
    %658 = arith.addf %656, %657 : vector<8x1xf32>
    %659 = math.tanh %658 : vector<8x1xf32>
    %660 = arith.mulf %653, %659 : vector<8x1xf32>
    %cst_192 = arith.constant 0.000000e+00 : f32
    %661 = vector.broadcast %cst_192 : f32 to vector<8x1xf32>
    %662 = arith.maximumf %660, %661 : vector<8x1xf32>
    %663 = vector.broadcast %662 : vector<8x1xf32> to vector<8x128xf32>
    %664 = vector.broadcast %329 : vector<1x128xf32> to vector<8x128xf32>
    %665 = arith.mulf %663, %664 : vector<8x128xf32>
    %666 = vector.broadcast %330 : vector<1x128xf32> to vector<8x128xf32>
    %667 = arith.addf %665, %666 : vector<8x128xf32>
    %c88_193 = arith.constant 88 : index
    %c0_194 = arith.constant 0 : index
    %668 = vector.load %arg22[%c88_193, %c0_194] : memref<128x128xf32, #tpu.memory_space<vmem>>, vector<8x128xf32>
    tpu.vector_store %arg22[%c88_193, %c0_194], %667 {strides = array<i32>} : memref<128x128xf32, #tpu.memory_space<vmem>>, vector<8x128xf32>,
    %c0_195 = arith.constant 0 : index
    %c0_196 = arith.constant 0 : index
    %669 = vector.load %arg1[%c0_195, %c0_196] : memref<32x1xf32, #tpu.memory_space<vmem>>, vector<32x1xf32>
    %670 = vector.broadcast %669 : vector<32x1xf32> to vector<32x128xf32>
    %671 = vector.broadcast %329 : vector<1x128xf32> to vector<32x128xf32>
    %672 = arith.mulf %670, %671 : vector<32x128xf32>
    %673 = vector.broadcast %330 : vector<1x128xf32> to vector<32x128xf32>
    %674 = arith.addf %672, %673 : vector<32x128xf32>
    %c96 = arith.constant 96 : index
    %c0_197 = arith.constant 0 : index
    %675 = vector.load %arg22[%c96, %c0_197] : memref<128x128xf32, #tpu.memory_space<vmem>>, vector<32x128xf32>
    tpu.vector_store %arg22[%c96, %c0_197], %674 {strides = array<i32>} : memref<128x128xf32, #tpu.memory_space<vmem>>, vector<32x128xf32>,
    %cst_198 = arith.constant 0.000000e+00 : f32
    %676 = vector.broadcast %cst_198 : f32 to vector<8x32xf32>
    %cst_199 = arith.constant 0.000000e+00 : f32
    %677 = vector.broadcast %cst_199 : f32 to vector<8x32xf32>
    %c0_200 = arith.constant 0 : index
    %c0_201 = arith.constant 0 : index
    %678 = vector.load %arg22[%c0_200, %c0_201] : memref<128x128xf32, #tpu.memory_space<vmem>>, vector<8x128xf32>
    %c0_202 = arith.constant 0 : index
    %c0_203 = arith.constant 0 : index
    %679 = vector.load %arg9[%c0_202, %c0_203] : memref<32x128xf32, #tpu.memory_space<vmem>>, vector<32x128xf32>
    %cst_204 = arith.constant dense<0.000000e+00> : vector<8x128xf32>
    %680 = tpu.matmul %676, %679, %cst_204 {dimension_numbers = #tpu.dot_dimension_numbers<[1], [0], [0], [1], [0, 0, 1, 1], [], []>} : vector<8x32xf32>, vector<32x128xf32>, vector<8x128xf32> -> vector<8x128xf32>
    %681 = arith.addf %678, %680 : vector<8x128xf32>
    %682 = arith.negf %681 : vector<8x128xf32>
    %683 = math.exp %682 : vector<8x128xf32>
    %cst_205 = arith.constant 1.000000e+00 : f32
    %684 = vector.broadcast %cst_205 : f32 to vector<8x128xf32>
    %685 = arith.addf %684, %683 : vector<8x128xf32>
    %686 = arith.divf %684, %685 : vector<8x128xf32>
    %687 = vector.extract_strided_slice %686 {offsets = [0, 0], sizes = [8, 32], strides = [1, 1]} : vector<8x128xf32> to vector<8x32xf32>
    %688 = vector.extract_strided_slice %686 {offsets = [0, 32], sizes = [8, 32], strides = [1, 1]} : vector<8x128xf32> to vector<8x32xf32>
    %689 = vector.extract_strided_slice %686 {offsets = [0, 96], sizes = [8, 32], strides = [1, 1]} : vector<8x128xf32> to vector<8x32xf32>
    %690 = vector.extract_strided_slice %681 {offsets = [0, 64], sizes = [8, 32], strides = [1, 1]} : vector<8x128xf32> to vector<8x32xf32>
    %691 = math.tanh %690 : vector<8x32xf32>
    %692 = arith.mulf %688, %677 : vector<8x32xf32>
    %693 = arith.mulf %687, %691 : vector<8x32xf32>
    %694 = arith.addf %692, %693 : vector<8x32xf32>
    %695 = math.tanh %694 : vector<8x32xf32>
    %696 = arith.mulf %689, %695 : vector<8x32xf32>
    %c0_206 = arith.constant 0 : index
    %c0_207 = arith.constant 0 : index
    %697 = vector.load %arg23[%c0_206, %c0_207] : memref<128x32xf32, #tpu.memory_space<vmem>>, vector<8x32xf32>
    tpu.vector_store %arg23[%c0_206, %c0_207], %696 {strides = array<i32>} : memref<128x32xf32, #tpu.memory_space<vmem>>, vector<8x32xf32>,
    %c8_208 = arith.constant 8 : index
    %c0_209 = arith.constant 0 : index
    %698 = vector.load %arg22[%c8_208, %c0_209] : memref<128x128xf32, #tpu.memory_space<vmem>>, vector<8x128xf32>
    %c0_210 = arith.constant 0 : index
    %c0_211 = arith.constant 0 : index
    %699 = vector.load %arg9[%c0_210, %c0_211] : memref<32x128xf32, #tpu.memory_space<vmem>>, vector<32x128xf32>
    %cst_212 = arith.constant dense<0.000000e+00> : vector<8x128xf32>
    %700 = tpu.matmul %696, %699, %cst_212 {dimension_numbers = #tpu.dot_dimension_numbers<[1], [0], [0], [1], [0, 0, 1, 1], [], []>} : vector<8x32xf32>, vector<32x128xf32>, vector<8x128xf32> -> vector<8x128xf32>
    %701 = arith.addf %698, %700 : vector<8x128xf32>
    %702 = arith.negf %701 : vector<8x128xf32>
    %703 = math.exp %702 : vector<8x128xf32>
    %cst_213 = arith.constant 1.000000e+00 : f32
    %704 = vector.broadcast %cst_213 : f32 to vector<8x128xf32>
    %705 = arith.addf %704, %703 : vector<8x128xf32>
    %706 = arith.divf %704, %705 : vector<8x128xf32>
    %707 = vector.extract_strided_slice %706 {offsets = [0, 0], sizes = [8, 32], strides = [1, 1]} : vector<8x128xf32> to vector<8x32xf32>
    %708 = vector.extract_strided_slice %706 {offsets = [0, 32], sizes = [8, 32], strides = [1, 1]} : vector<8x128xf32> to vector<8x32xf32>
    %709 = vector.extract_strided_slice %706 {offsets = [0, 96], sizes = [8, 32], strides = [1, 1]} : vector<8x128xf32> to vector<8x32xf32>
    %710 = vector.extract_strided_slice %701 {offsets = [0, 64], sizes = [8, 32], strides = [1, 1]} : vector<8x128xf32> to vector<8x32xf32>
    %711 = math.tanh %710 : vector<8x32xf32>
    %712 = arith.mulf %708, %694 : vector<8x32xf32>
    %713 = arith.mulf %707, %711 : vector<8x32xf32>
    %714 = arith.addf %712, %713 : vector<8x32xf32>
    %715 = math.tanh %714 : vector<8x32xf32>
    %716 = arith.mulf %709, %715 : vector<8x32xf32>
    %c8_214 = arith.constant 8 : index
    %c0_215 = arith.constant 0 : index
    %717 = vector.load %arg23[%c8_214, %c0_215] : memref<128x32xf32, #tpu.memory_space<vmem>>, vector<8x32xf32>
    tpu.vector_store %arg23[%c8_214, %c0_215], %716 {strides = array<i32>} : memref<128x32xf32, #tpu.memory_space<vmem>>, vector<8x32xf32>,
    %c16_216 = arith.constant 16 : index
    %c0_217 = arith.constant 0 : index
    %718 = vector.load %arg22[%c16_216, %c0_217] : memref<128x128xf32, #tpu.memory_space<vmem>>, vector<8x128xf32>
    %c0_218 = arith.constant 0 : index
    %c0_219 = arith.constant 0 : index
    %719 = vector.load %arg9[%c0_218, %c0_219] : memref<32x128xf32, #tpu.memory_space<vmem>>, vector<32x128xf32>
    %cst_220 = arith.constant dense<0.000000e+00> : vector<8x128xf32>
    %720 = tpu.matmul %716, %719, %cst_220 {dimension_numbers = #tpu.dot_dimension_numbers<[1], [0], [0], [1], [0, 0, 1, 1], [], []>} : vector<8x32xf32>, vector<32x128xf32>, vector<8x128xf32> -> vector<8x128xf32>
    %721 = arith.addf %718, %720 : vector<8x128xf32>
    %722 = arith.negf %721 : vector<8x128xf32>
    %723 = math.exp %722 : vector<8x128xf32>
    %cst_221 = arith.constant 1.000000e+00 : f32
    %724 = vector.broadcast %cst_221 : f32 to vector<8x128xf32>
    %725 = arith.addf %724, %723 : vector<8x128xf32>
    %726 = arith.divf %724, %725 : vector<8x128xf32>
    %727 = vector.extract_strided_slice %726 {offsets = [0, 0], sizes = [8, 32], strides = [1, 1]} : vector<8x128xf32> to vector<8x32xf32>
    %728 = vector.extract_strided_slice %726 {offsets = [0, 32], sizes = [8, 32], strides = [1, 1]} : vector<8x128xf32> to vector<8x32xf32>
    %729 = vector.extract_strided_slice %726 {offsets = [0, 96], sizes = [8, 32], strides = [1, 1]} : vector<8x128xf32> to vector<8x32xf32>
    %730 = vector.extract_strided_slice %721 {offsets = [0, 64], sizes = [8, 32], strides = [1, 1]} : vector<8x128xf32> to vector<8x32xf32>
    %731 = math.tanh %730 : vector<8x32xf32>
    %732 = arith.mulf %728, %714 : vector<8x32xf32>
    %733 = arith.mulf %727, %731 : vector<8x32xf32>
    %734 = arith.addf %732, %733 : vector<8x32xf32>
    %735 = math.tanh %734 : vector<8x32xf32>
    %736 = arith.mulf %729, %735 : vector<8x32xf32>
    %c16_222 = arith.constant 16 : index
    %c0_223 = arith.constant 0 : index
    %737 = vector.load %arg23[%c16_222, %c0_223] : memref<128x32xf32, #tpu.memory_space<vmem>>, vector<8x32xf32>
    tpu.vector_store %arg23[%c16_222, %c0_223], %736 {strides = array<i32>} : memref<128x32xf32, #tpu.memory_space<vmem>>, vector<8x32xf32>,
    %c24_224 = arith.constant 24 : index
    %c0_225 = arith.constant 0 : index
    %738 = vector.load %arg22[%c24_224, %c0_225] : memref<128x128xf32, #tpu.memory_space<vmem>>, vector<8x128xf32>
    %c0_226 = arith.constant 0 : index
    %c0_227 = arith.constant 0 : index
    %739 = vector.load %arg9[%c0_226, %c0_227] : memref<32x128xf32, #tpu.memory_space<vmem>>, vector<32x128xf32>
    %cst_228 = arith.constant dense<0.000000e+00> : vector<8x128xf32>
    %740 = tpu.matmul %736, %739, %cst_228 {dimension_numbers = #tpu.dot_dimension_numbers<[1], [0], [0], [1], [0, 0, 1, 1], [], []>} : vector<8x32xf32>, vector<32x128xf32>, vector<8x128xf32> -> vector<8x128xf32>
    %741 = arith.addf %738, %740 : vector<8x128xf32>
    %742 = arith.negf %741 : vector<8x128xf32>
    %743 = math.exp %742 : vector<8x128xf32>
    %cst_229 = arith.constant 1.000000e+00 : f32
    %744 = vector.broadcast %cst_229 : f32 to vector<8x128xf32>
    %745 = arith.addf %744, %743 : vector<8x128xf32>
    %746 = arith.divf %744, %745 : vector<8x128xf32>
    %747 = vector.extract_strided_slice %746 {offsets = [0, 0], sizes = [8, 32], strides = [1, 1]} : vector<8x128xf32> to vector<8x32xf32>
    %748 = vector.extract_strided_slice %746 {offsets = [0, 32], sizes = [8, 32], strides = [1, 1]} : vector<8x128xf32> to vector<8x32xf32>
    %749 = vector.extract_strided_slice %746 {offsets = [0, 96], sizes = [8, 32], strides = [1, 1]} : vector<8x128xf32> to vector<8x32xf32>
    %750 = vector.extract_strided_slice %741 {offsets = [0, 64], sizes = [8, 32], strides = [1, 1]} : vector<8x128xf32> to vector<8x32xf32>
    %751 = math.tanh %750 : vector<8x32xf32>
    %752 = arith.mulf %748, %734 : vector<8x32xf32>
    %753 = arith.mulf %747, %751 : vector<8x32xf32>
    %754 = arith.addf %752, %753 : vector<8x32xf32>
    %755 = math.tanh %754 : vector<8x32xf32>
    %756 = arith.mulf %749, %755 : vector<8x32xf32>
    %c24_230 = arith.constant 24 : index
    %c0_231 = arith.constant 0 : index
    %757 = vector.load %arg23[%c24_230, %c0_231] : memref<128x32xf32, #tpu.memory_space<vmem>>, vector<8x32xf32>
    tpu.vector_store %arg23[%c24_230, %c0_231], %756 {strides = array<i32>} : memref<128x32xf32, #tpu.memory_space<vmem>>, vector<8x32xf32>,
    %c32_232 = arith.constant 32 : index
    %c0_233 = arith.constant 0 : index
    %758 = vector.load %arg22[%c32_232, %c0_233] : memref<128x128xf32, #tpu.memory_space<vmem>>, vector<8x128xf32>
    %c0_234 = arith.constant 0 : index
    %c0_235 = arith.constant 0 : index
    %759 = vector.load %arg9[%c0_234, %c0_235] : memref<32x128xf32, #tpu.memory_space<vmem>>, vector<32x128xf32>
    %cst_236 = arith.constant dense<0.000000e+00> : vector<8x128xf32>
    %760 = tpu.matmul %756, %759, %cst_236 {dimension_numbers = #tpu.dot_dimension_numbers<[1], [0], [0], [1], [0, 0, 1, 1], [], []>} : vector<8x32xf32>, vector<32x128xf32>, vector<8x128xf32> -> vector<8x128xf32>
    %761 = arith.addf %758, %760 : vector<8x128xf32>
    %762 = arith.negf %761 : vector<8x128xf32>
    %763 = math.exp %762 : vector<8x128xf32>
    %cst_237 = arith.constant 1.000000e+00 : f32
    %764 = vector.broadcast %cst_237 : f32 to vector<8x128xf32>
    %765 = arith.addf %764, %763 : vector<8x128xf32>
    %766 = arith.divf %764, %765 : vector<8x128xf32>
    %767 = vector.extract_strided_slice %766 {offsets = [0, 0], sizes = [8, 32], strides = [1, 1]} : vector<8x128xf32> to vector<8x32xf32>
    %768 = vector.extract_strided_slice %766 {offsets = [0, 32], sizes = [8, 32], strides = [1, 1]} : vector<8x128xf32> to vector<8x32xf32>
    %769 = vector.extract_strided_slice %766 {offsets = [0, 96], sizes = [8, 32], strides = [1, 1]} : vector<8x128xf32> to vector<8x32xf32>
    %770 = vector.extract_strided_slice %761 {offsets = [0, 64], sizes = [8, 32], strides = [1, 1]} : vector<8x128xf32> to vector<8x32xf32>
    %771 = math.tanh %770 : vector<8x32xf32>
    %772 = arith.mulf %768, %754 : vector<8x32xf32>
    %773 = arith.mulf %767, %771 : vector<8x32xf32>
    %774 = arith.addf %772, %773 : vector<8x32xf32>
    %775 = math.tanh %774 : vector<8x32xf32>
    %776 = arith.mulf %769, %775 : vector<8x32xf32>
    %c32_238 = arith.constant 32 : index
    %c0_239 = arith.constant 0 : index
    %777 = vector.load %arg23[%c32_238, %c0_239] : memref<128x32xf32, #tpu.memory_space<vmem>>, vector<8x32xf32>
    tpu.vector_store %arg23[%c32_238, %c0_239], %776 {strides = array<i32>} : memref<128x32xf32, #tpu.memory_space<vmem>>, vector<8x32xf32>,
    %c40_240 = arith.constant 40 : index
    %c0_241 = arith.constant 0 : index
    %778 = vector.load %arg22[%c40_240, %c0_241] : memref<128x128xf32, #tpu.memory_space<vmem>>, vector<8x128xf32>
    %c0_242 = arith.constant 0 : index
    %c0_243 = arith.constant 0 : index
    %779 = vector.load %arg9[%c0_242, %c0_243] : memref<32x128xf32, #tpu.memory_space<vmem>>, vector<32x128xf32>
    %cst_244 = arith.constant dense<0.000000e+00> : vector<8x128xf32>
    %780 = tpu.matmul %776, %779, %cst_244 {dimension_numbers = #tpu.dot_dimension_numbers<[1], [0], [0], [1], [0, 0, 1, 1], [], []>} : vector<8x32xf32>, vector<32x128xf32>, vector<8x128xf32> -> vector<8x128xf32>
    %781 = arith.addf %778, %780 : vector<8x128xf32>
    %782 = arith.negf %781 : vector<8x128xf32>
    %783 = math.exp %782 : vector<8x128xf32>
    %cst_245 = arith.constant 1.000000e+00 : f32
    %784 = vector.broadcast %cst_245 : f32 to vector<8x128xf32>
    %785 = arith.addf %784, %783 : vector<8x128xf32>
    %786 = arith.divf %784, %785 : vector<8x128xf32>
    %787 = vector.extract_strided_slice %786 {offsets = [0, 0], sizes = [8, 32], strides = [1, 1]} : vector<8x128xf32> to vector<8x32xf32>
    %788 = vector.extract_strided_slice %786 {offsets = [0, 32], sizes = [8, 32], strides = [1, 1]} : vector<8x128xf32> to vector<8x32xf32>
    %789 = vector.extract_strided_slice %786 {offsets = [0, 96], sizes = [8, 32], strides = [1, 1]} : vector<8x128xf32> to vector<8x32xf32>
    %790 = vector.extract_strided_slice %781 {offsets = [0, 64], sizes = [8, 32], strides = [1, 1]} : vector<8x128xf32> to vector<8x32xf32>
    %791 = math.tanh %790 : vector<8x32xf32>
    %792 = arith.mulf %788, %774 : vector<8x32xf32>
    %793 = arith.mulf %787, %791 : vector<8x32xf32>
    %794 = arith.addf %792, %793 : vector<8x32xf32>
    %795 = math.tanh %794 : vector<8x32xf32>
    %796 = arith.mulf %789, %795 : vector<8x32xf32>
    %c40_246 = arith.constant 40 : index
    %c0_247 = arith.constant 0 : index
    %797 = vector.load %arg23[%c40_246, %c0_247] : memref<128x32xf32, #tpu.memory_space<vmem>>, vector<8x32xf32>
    tpu.vector_store %arg23[%c40_246, %c0_247], %796 {strides = array<i32>} : memref<128x32xf32, #tpu.memory_space<vmem>>, vector<8x32xf32>,
    %c48_248 = arith.constant 48 : index
    %c0_249 = arith.constant 0 : index
    %798 = vector.load %arg22[%c48_248, %c0_249] : memref<128x128xf32, #tpu.memory_space<vmem>>, vector<8x128xf32>
    %c0_250 = arith.constant 0 : index
    %c0_251 = arith.constant 0 : index
    %799 = vector.load %arg9[%c0_250, %c0_251] : memref<32x128xf32, #tpu.memory_space<vmem>>, vector<32x128xf32>
    %cst_252 = arith.constant dense<0.000000e+00> : vector<8x128xf32>
    %800 = tpu.matmul %796, %799, %cst_252 {dimension_numbers = #tpu.dot_dimension_numbers<[1], [0], [0], [1], [0, 0, 1, 1], [], []>} : vector<8x32xf32>, vector<32x128xf32>, vector<8x128xf32> -> vector<8x128xf32>
    %801 = arith.addf %798, %800 : vector<8x128xf32>
    %802 = arith.negf %801 : vector<8x128xf32>
    %803 = math.exp %802 : vector<8x128xf32>
    %cst_253 = arith.constant 1.000000e+00 : f32
    %804 = vector.broadcast %cst_253 : f32 to vector<8x128xf32>
    %805 = arith.addf %804, %803 : vector<8x128xf32>
    %806 = arith.divf %804, %805 : vector<8x128xf32>
    %807 = vector.extract_strided_slice %806 {offsets = [0, 0], sizes = [8, 32], strides = [1, 1]} : vector<8x128xf32> to vector<8x32xf32>
    %808 = vector.extract_strided_slice %806 {offsets = [0, 32], sizes = [8, 32], strides = [1, 1]} : vector<8x128xf32> to vector<8x32xf32>
    %809 = vector.extract_strided_slice %806 {offsets = [0, 96], sizes = [8, 32], strides = [1, 1]} : vector<8x128xf32> to vector<8x32xf32>
    %810 = vector.extract_strided_slice %801 {offsets = [0, 64], sizes = [8, 32], strides = [1, 1]} : vector<8x128xf32> to vector<8x32xf32>
    %811 = math.tanh %810 : vector<8x32xf32>
    %812 = arith.mulf %808, %794 : vector<8x32xf32>
    %813 = arith.mulf %807, %811 : vector<8x32xf32>
    %814 = arith.addf %812, %813 : vector<8x32xf32>
    %815 = math.tanh %814 : vector<8x32xf32>
    %816 = arith.mulf %809, %815 : vector<8x32xf32>
    %c48_254 = arith.constant 48 : index
    %c0_255 = arith.constant 0 : index
    %817 = vector.load %arg23[%c48_254, %c0_255] : memref<128x32xf32, #tpu.memory_space<vmem>>, vector<8x32xf32>
    tpu.vector_store %arg23[%c48_254, %c0_255], %816 {strides = array<i32>} : memref<128x32xf32, #tpu.memory_space<vmem>>, vector<8x32xf32>,
    %c56_256 = arith.constant 56 : index
    %c0_257 = arith.constant 0 : index
    %818 = vector.load %arg22[%c56_256, %c0_257] : memref<128x128xf32, #tpu.memory_space<vmem>>, vector<8x128xf32>
    %c0_258 = arith.constant 0 : index
    %c0_259 = arith.constant 0 : index
    %819 = vector.load %arg9[%c0_258, %c0_259] : memref<32x128xf32, #tpu.memory_space<vmem>>, vector<32x128xf32>
    %cst_260 = arith.constant dense<0.000000e+00> : vector<8x128xf32>
    %820 = tpu.matmul %816, %819, %cst_260 {dimension_numbers = #tpu.dot_dimension_numbers<[1], [0], [0], [1], [0, 0, 1, 1], [], []>} : vector<8x32xf32>, vector<32x128xf32>, vector<8x128xf32> -> vector<8x128xf32>
    %821 = arith.addf %818, %820 : vector<8x128xf32>
    %822 = arith.negf %821 : vector<8x128xf32>
    %823 = math.exp %822 : vector<8x128xf32>
    %cst_261 = arith.constant 1.000000e+00 : f32
    %824 = vector.broadcast %cst_261 : f32 to vector<8x128xf32>
    %825 = arith.addf %824, %823 : vector<8x128xf32>
    %826 = arith.divf %824, %825 : vector<8x128xf32>
    %827 = vector.extract_strided_slice %826 {offsets = [0, 0], sizes = [8, 32], strides = [1, 1]} : vector<8x128xf32> to vector<8x32xf32>
    %828 = vector.extract_strided_slice %826 {offsets = [0, 32], sizes = [8, 32], strides = [1, 1]} : vector<8x128xf32> to vector<8x32xf32>
    %829 = vector.extract_strided_slice %826 {offsets = [0, 96], sizes = [8, 32], strides = [1, 1]} : vector<8x128xf32> to vector<8x32xf32>
    %830 = vector.extract_strided_slice %821 {offsets = [0, 64], sizes = [8, 32], strides = [1, 1]} : vector<8x128xf32> to vector<8x32xf32>
    %831 = math.tanh %830 : vector<8x32xf32>
    %832 = arith.mulf %828, %814 : vector<8x32xf32>
    %833 = arith.mulf %827, %831 : vector<8x32xf32>
    %834 = arith.addf %832, %833 : vector<8x32xf32>
    %835 = math.tanh %834 : vector<8x32xf32>
    %836 = arith.mulf %829, %835 : vector<8x32xf32>
    %c56_262 = arith.constant 56 : index
    %c0_263 = arith.constant 0 : index
    %837 = vector.load %arg23[%c56_262, %c0_263] : memref<128x32xf32, #tpu.memory_space<vmem>>, vector<8x32xf32>
    tpu.vector_store %arg23[%c56_262, %c0_263], %836 {strides = array<i32>} : memref<128x32xf32, #tpu.memory_space<vmem>>, vector<8x32xf32>,
    %c64_264 = arith.constant 64 : index
    %c0_265 = arith.constant 0 : index
    %838 = vector.load %arg22[%c64_264, %c0_265] : memref<128x128xf32, #tpu.memory_space<vmem>>, vector<8x128xf32>
    %c0_266 = arith.constant 0 : index
    %c0_267 = arith.constant 0 : index
    %839 = vector.load %arg9[%c0_266, %c0_267] : memref<32x128xf32, #tpu.memory_space<vmem>>, vector<32x128xf32>
    %cst_268 = arith.constant dense<0.000000e+00> : vector<8x128xf32>
    %840 = tpu.matmul %836, %839, %cst_268 {dimension_numbers = #tpu.dot_dimension_numbers<[1], [0], [0], [1], [0, 0, 1, 1], [], []>} : vector<8x32xf32>, vector<32x128xf32>, vector<8x128xf32> -> vector<8x128xf32>
    %841 = arith.addf %838, %840 : vector<8x128xf32>
    %842 = arith.negf %841 : vector<8x128xf32>
    %843 = math.exp %842 : vector<8x128xf32>
    %cst_269 = arith.constant 1.000000e+00 : f32
    %844 = vector.broadcast %cst_269 : f32 to vector<8x128xf32>
    %845 = arith.addf %844, %843 : vector<8x128xf32>
    %846 = arith.divf %844, %845 : vector<8x128xf32>
    %847 = vector.extract_strided_slice %846 {offsets = [0, 0], sizes = [8, 32], strides = [1, 1]} : vector<8x128xf32> to vector<8x32xf32>
    %848 = vector.extract_strided_slice %846 {offsets = [0, 32], sizes = [8, 32], strides = [1, 1]} : vector<8x128xf32> to vector<8x32xf32>
    %849 = vector.extract_strided_slice %846 {offsets = [0, 96], sizes = [8, 32], strides = [1, 1]} : vector<8x128xf32> to vector<8x32xf32>
    %850 = vector.extract_strided_slice %841 {offsets = [0, 64], sizes = [8, 32], strides = [1, 1]} : vector<8x128xf32> to vector<8x32xf32>
    %851 = math.tanh %850 : vector<8x32xf32>
    %852 = arith.mulf %848, %834 : vector<8x32xf32>
    %853 = arith.mulf %847, %851 : vector<8x32xf32>
    %854 = arith.addf %852, %853 : vector<8x32xf32>
    %855 = math.tanh %854 : vector<8x32xf32>
    %856 = arith.mulf %849, %855 : vector<8x32xf32>
    %c64_270 = arith.constant 64 : index
    %c0_271 = arith.constant 0 : index
    %857 = vector.load %arg23[%c64_270, %c0_271] : memref<128x32xf32, #tpu.memory_space<vmem>>, vector<8x32xf32>
    tpu.vector_store %arg23[%c64_270, %c0_271], %856 {strides = array<i32>} : memref<128x32xf32, #tpu.memory_space<vmem>>, vector<8x32xf32>,
    %c72_272 = arith.constant 72 : index
    %c0_273 = arith.constant 0 : index
    %858 = vector.load %arg22[%c72_272, %c0_273] : memref<128x128xf32, #tpu.memory_space<vmem>>, vector<8x128xf32>
    %c0_274 = arith.constant 0 : index
    %c0_275 = arith.constant 0 : index
    %859 = vector.load %arg9[%c0_274, %c0_275] : memref<32x128xf32, #tpu.memory_space<vmem>>, vector<32x128xf32>
    %cst_276 = arith.constant dense<0.000000e+00> : vector<8x128xf32>
    %860 = tpu.matmul %856, %859, %cst_276 {dimension_numbers = #tpu.dot_dimension_numbers<[1], [0], [0], [1], [0, 0, 1, 1], [], []>} : vector<8x32xf32>, vector<32x128xf32>, vector<8x128xf32> -> vector<8x128xf32>
    %861 = arith.addf %858, %860 : vector<8x128xf32>
    %862 = arith.negf %861 : vector<8x128xf32>
    %863 = math.exp %862 : vector<8x128xf32>
    %cst_277 = arith.constant 1.000000e+00 : f32
    %864 = vector.broadcast %cst_277 : f32 to vector<8x128xf32>
    %865 = arith.addf %864, %863 : vector<8x128xf32>
    %866 = arith.divf %864, %865 : vector<8x128xf32>
    %867 = vector.extract_strided_slice %866 {offsets = [0, 0], sizes = [8, 32], strides = [1, 1]} : vector<8x128xf32> to vector<8x32xf32>
    %868 = vector.extract_strided_slice %866 {offsets = [0, 32], sizes = [8, 32], strides = [1, 1]} : vector<8x128xf32> to vector<8x32xf32>
    %869 = vector.extract_strided_slice %866 {offsets = [0, 96], sizes = [8, 32], strides = [1, 1]} : vector<8x128xf32> to vector<8x32xf32>
    %870 = vector.extract_strided_slice %861 {offsets = [0, 64], sizes = [8, 32], strides = [1, 1]} : vector<8x128xf32> to vector<8x32xf32>
    %871 = math.tanh %870 : vector<8x32xf32>
    %872 = arith.mulf %868, %854 : vector<8x32xf32>
    %873 = arith.mulf %867, %871 : vector<8x32xf32>
    %874 = arith.addf %872, %873 : vector<8x32xf32>
    %875 = math.tanh %874 : vector<8x32xf32>
    %876 = arith.mulf %869, %875 : vector<8x32xf32>
    %c72_278 = arith.constant 72 : index
    %c0_279 = arith.constant 0 : index
    %877 = vector.load %arg23[%c72_278, %c0_279] : memref<128x32xf32, #tpu.memory_space<vmem>>, vector<8x32xf32>
    tpu.vector_store %arg23[%c72_278, %c0_279], %876 {strides = array<i32>} : memref<128x32xf32, #tpu.memory_space<vmem>>, vector<8x32xf32>,
    %c80_280 = arith.constant 80 : index
    %c0_281 = arith.constant 0 : index
    %878 = vector.load %arg22[%c80_280, %c0_281] : memref<128x128xf32, #tpu.memory_space<vmem>>, vector<8x128xf32>
    %c0_282 = arith.constant 0 : index
    %c0_283 = arith.constant 0 : index
    %879 = vector.load %arg9[%c0_282, %c0_283] : memref<32x128xf32, #tpu.memory_space<vmem>>, vector<32x128xf32>
    %cst_284 = arith.constant dense<0.000000e+00> : vector<8x128xf32>
    %880 = tpu.matmul %876, %879, %cst_284 {dimension_numbers = #tpu.dot_dimension_numbers<[1], [0], [0], [1], [0, 0, 1, 1], [], []>} : vector<8x32xf32>, vector<32x128xf32>, vector<8x128xf32> -> vector<8x128xf32>
    %881 = arith.addf %878, %880 : vector<8x128xf32>
    %882 = arith.negf %881 : vector<8x128xf32>
    %883 = math.exp %882 : vector<8x128xf32>
    %cst_285 = arith.constant 1.000000e+00 : f32
    %884 = vector.broadcast %cst_285 : f32 to vector<8x128xf32>
    %885 = arith.addf %884, %883 : vector<8x128xf32>
    %886 = arith.divf %884, %885 : vector<8x128xf32>
    %887 = vector.extract_strided_slice %886 {offsets = [0, 0], sizes = [8, 32], strides = [1, 1]} : vector<8x128xf32> to vector<8x32xf32>
    %888 = vector.extract_strided_slice %886 {offsets = [0, 32], sizes = [8, 32], strides = [1, 1]} : vector<8x128xf32> to vector<8x32xf32>
    %889 = vector.extract_strided_slice %886 {offsets = [0, 96], sizes = [8, 32], strides = [1, 1]} : vector<8x128xf32> to vector<8x32xf32>
    %890 = vector.extract_strided_slice %881 {offsets = [0, 64], sizes = [8, 32], strides = [1, 1]} : vector<8x128xf32> to vector<8x32xf32>
    %891 = math.tanh %890 : vector<8x32xf32>
    %892 = arith.mulf %888, %874 : vector<8x32xf32>
    %893 = arith.mulf %887, %891 : vector<8x32xf32>
    %894 = arith.addf %892, %893 : vector<8x32xf32>
    %895 = math.tanh %894 : vector<8x32xf32>
    %896 = arith.mulf %889, %895 : vector<8x32xf32>
    %c80_286 = arith.constant 80 : index
    %c0_287 = arith.constant 0 : index
    %897 = vector.load %arg23[%c80_286, %c0_287] : memref<128x32xf32, #tpu.memory_space<vmem>>, vector<8x32xf32>
    tpu.vector_store %arg23[%c80_286, %c0_287], %896 {strides = array<i32>} : memref<128x32xf32, #tpu.memory_space<vmem>>, vector<8x32xf32>,
    %c88_288 = arith.constant 88 : index
    %c0_289 = arith.constant 0 : index
    %898 = vector.load %arg22[%c88_288, %c0_289] : memref<128x128xf32, #tpu.memory_space<vmem>>, vector<8x128xf32>
    %c0_290 = arith.constant 0 : index
    %c0_291 = arith.constant 0 : index
    %899 = vector.load %arg9[%c0_290, %c0_291] : memref<32x128xf32, #tpu.memory_space<vmem>>, vector<32x128xf32>
    %cst_292 = arith.constant dense<0.000000e+00> : vector<8x128xf32>
    %900 = tpu.matmul %896, %899, %cst_292 {dimension_numbers = #tpu.dot_dimension_numbers<[1], [0], [0], [1], [0, 0, 1, 1], [], []>} : vector<8x32xf32>, vector<32x128xf32>, vector<8x128xf32> -> vector<8x128xf32>
    %901 = arith.addf %898, %900 : vector<8x128xf32>
    %902 = arith.negf %901 : vector<8x128xf32>
    %903 = math.exp %902 : vector<8x128xf32>
    %cst_293 = arith.constant 1.000000e+00 : f32
    %904 = vector.broadcast %cst_293 : f32 to vector<8x128xf32>
    %905 = arith.addf %904, %903 : vector<8x128xf32>
    %906 = arith.divf %904, %905 : vector<8x128xf32>
    %907 = vector.extract_strided_slice %906 {offsets = [0, 0], sizes = [8, 32], strides = [1, 1]} : vector<8x128xf32> to vector<8x32xf32>
    %908 = vector.extract_strided_slice %906 {offsets = [0, 32], sizes = [8, 32], strides = [1, 1]} : vector<8x128xf32> to vector<8x32xf32>
    %909 = vector.extract_strided_slice %906 {offsets = [0, 96], sizes = [8, 32], strides = [1, 1]} : vector<8x128xf32> to vector<8x32xf32>
    %910 = vector.extract_strided_slice %901 {offsets = [0, 64], sizes = [8, 32], strides = [1, 1]} : vector<8x128xf32> to vector<8x32xf32>
    %911 = math.tanh %910 : vector<8x32xf32>
    %912 = arith.mulf %908, %894 : vector<8x32xf32>
    %913 = arith.mulf %907, %911 : vector<8x32xf32>
    %914 = arith.addf %912, %913 : vector<8x32xf32>
    %915 = math.tanh %914 : vector<8x32xf32>
    %916 = arith.mulf %909, %915 : vector<8x32xf32>
    %c88_294 = arith.constant 88 : index
    %c0_295 = arith.constant 0 : index
    %917 = vector.load %arg23[%c88_294, %c0_295] : memref<128x32xf32, #tpu.memory_space<vmem>>, vector<8x32xf32>
    tpu.vector_store %arg23[%c88_294, %c0_295], %916 {strides = array<i32>} : memref<128x32xf32, #tpu.memory_space<vmem>>, vector<8x32xf32>,
    %c96_296 = arith.constant 96 : index
    %c0_297 = arith.constant 0 : index
    %918 = vector.load %arg22[%c96_296, %c0_297] : memref<128x128xf32, #tpu.memory_space<vmem>>, vector<8x128xf32>
    %c0_298 = arith.constant 0 : index
    %c0_299 = arith.constant 0 : index
    %919 = vector.load %arg9[%c0_298, %c0_299] : memref<32x128xf32, #tpu.memory_space<vmem>>, vector<32x128xf32>
    %cst_300 = arith.constant dense<0.000000e+00> : vector<8x128xf32>
    %920 = tpu.matmul %916, %919, %cst_300 {dimension_numbers = #tpu.dot_dimension_numbers<[1], [0], [0], [1], [0, 0, 1, 1], [], []>} : vector<8x32xf32>, vector<32x128xf32>, vector<8x128xf32> -> vector<8x128xf32>
    %921 = arith.addf %918, %920 : vector<8x128xf32>
    %922 = arith.negf %921 : vector<8x128xf32>
    %923 = math.exp %922 : vector<8x128xf32>
    %cst_301 = arith.constant 1.000000e+00 : f32
    %924 = vector.broadcast %cst_301 : f32 to vector<8x128xf32>
    %925 = arith.addf %924, %923 : vector<8x128xf32>
    %926 = arith.divf %924, %925 : vector<8x128xf32>
    %927 = vector.extract_strided_slice %926 {offsets = [0, 0], sizes = [8, 32], strides = [1, 1]} : vector<8x128xf32> to vector<8x32xf32>
    %928 = vector.extract_strided_slice %926 {offsets = [0, 32], sizes = [8, 32], strides = [1, 1]} : vector<8x128xf32> to vector<8x32xf32>
    %929 = vector.extract_strided_slice %926 {offsets = [0, 96], sizes = [8, 32], strides = [1, 1]} : vector<8x128xf32> to vector<8x32xf32>
    %930 = vector.extract_strided_slice %921 {offsets = [0, 64], sizes = [8, 32], strides = [1, 1]} : vector<8x128xf32> to vector<8x32xf32>
    %931 = math.tanh %930 : vector<8x32xf32>
    %932 = arith.mulf %928, %914 : vector<8x32xf32>
    %933 = arith.mulf %927, %931 : vector<8x32xf32>
    %934 = arith.addf %932, %933 : vector<8x32xf32>
    %935 = math.tanh %934 : vector<8x32xf32>
    %936 = arith.mulf %929, %935 : vector<8x32xf32>
    %c96_302 = arith.constant 96 : index
    %c0_303 = arith.constant 0 : index
    %937 = vector.load %arg23[%c96_302, %c0_303] : memref<128x32xf32, #tpu.memory_space<vmem>>, vector<8x32xf32>
    tpu.vector_store %arg23[%c96_302, %c0_303], %936 {strides = array<i32>} : memref<128x32xf32, #tpu.memory_space<vmem>>, vector<8x32xf32>,
    %c104 = arith.constant 104 : index
    %c0_304 = arith.constant 0 : index
    %938 = vector.load %arg22[%c104, %c0_304] : memref<128x128xf32, #tpu.memory_space<vmem>>, vector<8x128xf32>
    %c0_305 = arith.constant 0 : index
    %c0_306 = arith.constant 0 : index
    %939 = vector.load %arg9[%c0_305, %c0_306] : memref<32x128xf32, #tpu.memory_space<vmem>>, vector<32x128xf32>
    %cst_307 = arith.constant dense<0.000000e+00> : vector<8x128xf32>
    %940 = tpu.matmul %936, %939, %cst_307 {dimension_numbers = #tpu.dot_dimension_numbers<[1], [0], [0], [1], [0, 0, 1, 1], [], []>} : vector<8x32xf32>, vector<32x128xf32>, vector<8x128xf32> -> vector<8x128xf32>
    %941 = arith.addf %938, %940 : vector<8x128xf32>
    %942 = arith.negf %941 : vector<8x128xf32>
    %943 = math.exp %942 : vector<8x128xf32>
    %cst_308 = arith.constant 1.000000e+00 : f32
    %944 = vector.broadcast %cst_308 : f32 to vector<8x128xf32>
    %945 = arith.addf %944, %943 : vector<8x128xf32>
    %946 = arith.divf %944, %945 : vector<8x128xf32>
    %947 = vector.extract_strided_slice %946 {offsets = [0, 0], sizes = [8, 32], strides = [1, 1]} : vector<8x128xf32> to vector<8x32xf32>
    %948 = vector.extract_strided_slice %946 {offsets = [0, 32], sizes = [8, 32], strides = [1, 1]} : vector<8x128xf32> to vector<8x32xf32>
    %949 = vector.extract_strided_slice %946 {offsets = [0, 96], sizes = [8, 32], strides = [1, 1]} : vector<8x128xf32> to vector<8x32xf32>
    %950 = vector.extract_strided_slice %941 {offsets = [0, 64], sizes = [8, 32], strides = [1, 1]} : vector<8x128xf32> to vector<8x32xf32>
    %951 = math.tanh %950 : vector<8x32xf32>
    %952 = arith.mulf %948, %934 : vector<8x32xf32>
    %953 = arith.mulf %947, %951 : vector<8x32xf32>
    %954 = arith.addf %952, %953 : vector<8x32xf32>
    %955 = math.tanh %954 : vector<8x32xf32>
    %956 = arith.mulf %949, %955 : vector<8x32xf32>
    %c104_309 = arith.constant 104 : index
    %c0_310 = arith.constant 0 : index
    %957 = vector.load %arg23[%c104_309, %c0_310] : memref<128x32xf32, #tpu.memory_space<vmem>>, vector<8x32xf32>
    tpu.vector_store %arg23[%c104_309, %c0_310], %956 {strides = array<i32>} : memref<128x32xf32, #tpu.memory_space<vmem>>, vector<8x32xf32>,
    %c112 = arith.constant 112 : index
    %c0_311 = arith.constant 0 : index
    %958 = vector.load %arg22[%c112, %c0_311] : memref<128x128xf32, #tpu.memory_space<vmem>>, vector<8x128xf32>
    %c0_312 = arith.constant 0 : index
    %c0_313 = arith.constant 0 : index
    %959 = vector.load %arg9[%c0_312, %c0_313] : memref<32x128xf32, #tpu.memory_space<vmem>>, vector<32x128xf32>
    %cst_314 = arith.constant dense<0.000000e+00> : vector<8x128xf32>
    %960 = tpu.matmul %956, %959, %cst_314 {dimension_numbers = #tpu.dot_dimension_numbers<[1], [0], [0], [1], [0, 0, 1, 1], [], []>} : vector<8x32xf32>, vector<32x128xf32>, vector<8x128xf32> -> vector<8x128xf32>
    %961 = arith.addf %958, %960 : vector<8x128xf32>
    %962 = arith.negf %961 : vector<8x128xf32>
    %963 = math.exp %962 : vector<8x128xf32>
    %cst_315 = arith.constant 1.000000e+00 : f32
    %964 = vector.broadcast %cst_315 : f32 to vector<8x128xf32>
    %965 = arith.addf %964, %963 : vector<8x128xf32>
    %966 = arith.divf %964, %965 : vector<8x128xf32>
    %967 = vector.extract_strided_slice %966 {offsets = [0, 0], sizes = [8, 32], strides = [1, 1]} : vector<8x128xf32> to vector<8x32xf32>
    %968 = vector.extract_strided_slice %966 {offsets = [0, 32], sizes = [8, 32], strides = [1, 1]} : vector<8x128xf32> to vector<8x32xf32>
    %969 = vector.extract_strided_slice %966 {offsets = [0, 96], sizes = [8, 32], strides = [1, 1]} : vector<8x128xf32> to vector<8x32xf32>
    %970 = vector.extract_strided_slice %961 {offsets = [0, 64], sizes = [8, 32], strides = [1, 1]} : vector<8x128xf32> to vector<8x32xf32>
    %971 = math.tanh %970 : vector<8x32xf32>
    %972 = arith.mulf %968, %954 : vector<8x32xf32>
    %973 = arith.mulf %967, %971 : vector<8x32xf32>
    %974 = arith.addf %972, %973 : vector<8x32xf32>
    %975 = math.tanh %974 : vector<8x32xf32>
    %976 = arith.mulf %969, %975 : vector<8x32xf32>
    %c112_316 = arith.constant 112 : index
    %c0_317 = arith.constant 0 : index
    %977 = vector.load %arg23[%c112_316, %c0_317] : memref<128x32xf32, #tpu.memory_space<vmem>>, vector<8x32xf32>
    tpu.vector_store %arg23[%c112_316, %c0_317], %976 {strides = array<i32>} : memref<128x32xf32, #tpu.memory_space<vmem>>, vector<8x32xf32>,
    %c120 = arith.constant 120 : index
    %c0_318 = arith.constant 0 : index
    %978 = vector.load %arg22[%c120, %c0_318] : memref<128x128xf32, #tpu.memory_space<vmem>>, vector<8x128xf32>
    %c0_319 = arith.constant 0 : index
    %c0_320 = arith.constant 0 : index
    %979 = vector.load %arg9[%c0_319, %c0_320] : memref<32x128xf32, #tpu.memory_space<vmem>>, vector<32x128xf32>
    %cst_321 = arith.constant dense<0.000000e+00> : vector<8x128xf32>
    %980 = tpu.matmul %976, %979, %cst_321 {dimension_numbers = #tpu.dot_dimension_numbers<[1], [0], [0], [1], [0, 0, 1, 1], [], []>} : vector<8x32xf32>, vector<32x128xf32>, vector<8x128xf32> -> vector<8x128xf32>
    %981 = arith.addf %978, %980 : vector<8x128xf32>
    %982 = arith.negf %981 : vector<8x128xf32>
    %983 = math.exp %982 : vector<8x128xf32>
    %cst_322 = arith.constant 1.000000e+00 : f32
    %984 = vector.broadcast %cst_322 : f32 to vector<8x128xf32>
    %985 = arith.addf %984, %983 : vector<8x128xf32>
    %986 = arith.divf %984, %985 : vector<8x128xf32>
    %987 = vector.extract_strided_slice %986 {offsets = [0, 0], sizes = [8, 32], strides = [1, 1]} : vector<8x128xf32> to vector<8x32xf32>
    %988 = vector.extract_strided_slice %986 {offsets = [0, 32], sizes = [8, 32], strides = [1, 1]} : vector<8x128xf32> to vector<8x32xf32>
    %989 = vector.extract_strided_slice %986 {offsets = [0, 96], sizes = [8, 32], strides = [1, 1]} : vector<8x128xf32> to vector<8x32xf32>
    %990 = vector.extract_strided_slice %981 {offsets = [0, 64], sizes = [8, 32], strides = [1, 1]} : vector<8x128xf32> to vector<8x32xf32>
    %991 = math.tanh %990 : vector<8x32xf32>
    %992 = arith.mulf %988, %974 : vector<8x32xf32>
    %993 = arith.mulf %987, %991 : vector<8x32xf32>
    %994 = arith.addf %992, %993 : vector<8x32xf32>
    %995 = math.tanh %994 : vector<8x32xf32>
    %996 = arith.mulf %989, %995 : vector<8x32xf32>
    %c120_323 = arith.constant 120 : index
    %c0_324 = arith.constant 0 : index
    %997 = vector.load %arg23[%c120_323, %c0_324] : memref<128x32xf32, #tpu.memory_space<vmem>>, vector<8x32xf32>
    tpu.vector_store %arg23[%c120_323, %c0_324], %996 {strides = array<i32>} : memref<128x32xf32, #tpu.memory_space<vmem>>, vector<8x32xf32>,
    %c0_325 = arith.constant 0 : index
    %c0_326 = arith.constant 0 : index
    %998 = vector.load %arg23[%c0_325, %c0_326] : memref<128x32xf32, #tpu.memory_space<vmem>>, vector<128x32xf32>
    %c0_327 = arith.constant 0 : index
    %c0_328 = arith.constant 0 : index
    %999 = vector.load %arg11[%c0_327, %c0_328] : memref<32x4xf32, #tpu.memory_space<vmem>>, vector<32x4xf32>
    %cst_329 = arith.constant dense<0.000000e+00> : vector<128x4xf32>
    %1000 = tpu.matmul %998, %999, %cst_329 {dimension_numbers = #tpu.dot_dimension_numbers<[1], [0], [0], [1], [0, 0, 1, 1], [], []>} : vector<128x32xf32>, vector<32x4xf32>, vector<128x4xf32> -> vector<128x4xf32>
    %c0_330 = arith.constant 0 : index
    %c0_331 = arith.constant 0 : index
    %1001 = vector.load %arg13[%c0_330, %c0_331] : memref<1x4xf32, #tpu.memory_space<vmem>>, vector<1x4xf32>
    %1002 = vector.broadcast %1001 : vector<1x4xf32> to vector<128x4xf32>
    %1003 = arith.addf %1000, %1002 : vector<128x4xf32>
    %c0_332 = arith.constant 0 : index
    %c0_333 = arith.constant 0 : index
    %1004 = vector.load %arg24[%c0_332, %c0_333] : memref<128x4xf32, #tpu.memory_space<vmem>>, vector<128x4xf32>
    tpu.vector_store %arg24[%c0_332, %c0_333], %1003 {strides = array<i32>} : memref<128x4xf32, #tpu.memory_space<vmem>>, vector<128x4xf32>,
    %c0_334 = arith.constant 0 : index
    %c0_335 = arith.constant 0 : index
    %1005 = vector.load %arg12[%c0_334, %c0_335] : memref<1x4xf32, #tpu.memory_space<vmem>>, vector<1x4xf32>
    %cst_336 = arith.constant 0.000000e+00 : f32
    %1006 = vector.broadcast %cst_336 : f32 to vector<8x1xf32>
    %cst_337 = arith.constant 0.000000e+00 : f32
    %1007 = vector.broadcast %cst_337 : f32 to vector<8x1xf32>
    %c0_338 = arith.constant 0 : index
    %c0_339 = arith.constant 0 : index
    %1008 = vector.load %arg24[%c0_338, %c0_339] : memref<128x4xf32, #tpu.memory_space<vmem>>, vector<8x4xf32>
    %1009 = vector.broadcast %1006 : vector<8x1xf32> to vector<8x4xf32>
    %1010 = vector.broadcast %1005 : vector<1x4xf32> to vector<8x4xf32>
    %1011 = arith.mulf %1009, %1010 : vector<8x4xf32>
    %1012 = arith.addf %1008, %1011 : vector<8x4xf32>
    %1013 = arith.negf %1012 : vector<8x4xf32>
    %1014 = math.exp %1013 : vector<8x4xf32>
    %cst_340 = arith.constant 1.000000e+00 : f32
    %1015 = vector.broadcast %cst_340 : f32 to vector<8x4xf32>
    %1016 = arith.addf %1015, %1014 : vector<8x4xf32>
    %1017 = arith.divf %1015, %1016 : vector<8x4xf32>
    %1018 = vector.extract_strided_slice %1017 {offsets = [0, 0], sizes = [8, 1], strides = [1, 1]} : vector<8x4xf32> to vector<8x1xf32>
    %1019 = vector.extract_strided_slice %1017 {offsets = [0, 1], sizes = [8, 1], strides = [1, 1]} : vector<8x4xf32> to vector<8x1xf32>
    %1020 = vector.extract_strided_slice %1017 {offsets = [0, 3], sizes = [8, 1], strides = [1, 1]} : vector<8x4xf32> to vector<8x1xf32>
    %1021 = vector.extract_strided_slice %1012 {offsets = [0, 2], sizes = [8, 1], strides = [1, 1]} : vector<8x4xf32> to vector<8x1xf32>
    %1022 = math.tanh %1021 : vector<8x1xf32>
    %1023 = arith.mulf %1019, %1007 : vector<8x1xf32>
    %1024 = arith.mulf %1018, %1022 : vector<8x1xf32>
    %1025 = arith.addf %1023, %1024 : vector<8x1xf32>
    %1026 = math.tanh %1025 : vector<8x1xf32>
    %1027 = arith.mulf %1020, %1026 : vector<8x1xf32>
    %c8_341 = arith.constant 8 : index
    %c0_342 = arith.constant 0 : index
    %1028 = vector.load %arg24[%c8_341, %c0_342] : memref<128x4xf32, #tpu.memory_space<vmem>>, vector<8x4xf32>
    %1029 = vector.broadcast %1027 : vector<8x1xf32> to vector<8x4xf32>
    %1030 = vector.broadcast %1005 : vector<1x4xf32> to vector<8x4xf32>
    %1031 = arith.mulf %1029, %1030 : vector<8x4xf32>
    %1032 = arith.addf %1028, %1031 : vector<8x4xf32>
    %1033 = arith.negf %1032 : vector<8x4xf32>
    %1034 = math.exp %1033 : vector<8x4xf32>
    %cst_343 = arith.constant 1.000000e+00 : f32
    %1035 = vector.broadcast %cst_343 : f32 to vector<8x4xf32>
    %1036 = arith.addf %1035, %1034 : vector<8x4xf32>
    %1037 = arith.divf %1035, %1036 : vector<8x4xf32>
    %1038 = vector.extract_strided_slice %1037 {offsets = [0, 0], sizes = [8, 1], strides = [1, 1]} : vector<8x4xf32> to vector<8x1xf32>
    %1039 = vector.extract_strided_slice %1037 {offsets = [0, 1], sizes = [8, 1], strides = [1, 1]} : vector<8x4xf32> to vector<8x1xf32>
    %1040 = vector.extract_strided_slice %1037 {offsets = [0, 3], sizes = [8, 1], strides = [1, 1]} : vector<8x4xf32> to vector<8x1xf32>
    %1041 = vector.extract_strided_slice %1032 {offsets = [0, 2], sizes = [8, 1], strides = [1, 1]} : vector<8x4xf32> to vector<8x1xf32>
    %1042 = math.tanh %1041 : vector<8x1xf32>
    %1043 = arith.mulf %1039, %1025 : vector<8x1xf32>
    %1044 = arith.mulf %1038, %1042 : vector<8x1xf32>
    %1045 = arith.addf %1043, %1044 : vector<8x1xf32>
    %1046 = math.tanh %1045 : vector<8x1xf32>
    %1047 = arith.mulf %1040, %1046 : vector<8x1xf32>
    %c16_344 = arith.constant 16 : index
    %c0_345 = arith.constant 0 : index
    %1048 = vector.load %arg24[%c16_344, %c0_345] : memref<128x4xf32, #tpu.memory_space<vmem>>, vector<8x4xf32>
    %1049 = vector.broadcast %1047 : vector<8x1xf32> to vector<8x4xf32>
    %1050 = vector.broadcast %1005 : vector<1x4xf32> to vector<8x4xf32>
    %1051 = arith.mulf %1049, %1050 : vector<8x4xf32>
    %1052 = arith.addf %1048, %1051 : vector<8x4xf32>
    %1053 = arith.negf %1052 : vector<8x4xf32>
    %1054 = math.exp %1053 : vector<8x4xf32>
    %cst_346 = arith.constant 1.000000e+00 : f32
    %1055 = vector.broadcast %cst_346 : f32 to vector<8x4xf32>
    %1056 = arith.addf %1055, %1054 : vector<8x4xf32>
    %1057 = arith.divf %1055, %1056 : vector<8x4xf32>
    %1058 = vector.extract_strided_slice %1057 {offsets = [0, 0], sizes = [8, 1], strides = [1, 1]} : vector<8x4xf32> to vector<8x1xf32>
    %1059 = vector.extract_strided_slice %1057 {offsets = [0, 1], sizes = [8, 1], strides = [1, 1]} : vector<8x4xf32> to vector<8x1xf32>
    %1060 = vector.extract_strided_slice %1057 {offsets = [0, 3], sizes = [8, 1], strides = [1, 1]} : vector<8x4xf32> to vector<8x1xf32>
    %1061 = vector.extract_strided_slice %1052 {offsets = [0, 2], sizes = [8, 1], strides = [1, 1]} : vector<8x4xf32> to vector<8x1xf32>
    %1062 = math.tanh %1061 : vector<8x1xf32>
    %1063 = arith.mulf %1059, %1045 : vector<8x1xf32>
    %1064 = arith.mulf %1058, %1062 : vector<8x1xf32>
    %1065 = arith.addf %1063, %1064 : vector<8x1xf32>
    %1066 = math.tanh %1065 : vector<8x1xf32>
    %1067 = arith.mulf %1060, %1066 : vector<8x1xf32>
    %c24_347 = arith.constant 24 : index
    %c0_348 = arith.constant 0 : index
    %1068 = vector.load %arg24[%c24_347, %c0_348] : memref<128x4xf32, #tpu.memory_space<vmem>>, vector<8x4xf32>
    %1069 = vector.broadcast %1067 : vector<8x1xf32> to vector<8x4xf32>
    %1070 = vector.broadcast %1005 : vector<1x4xf32> to vector<8x4xf32>
    %1071 = arith.mulf %1069, %1070 : vector<8x4xf32>
    %1072 = arith.addf %1068, %1071 : vector<8x4xf32>
    %1073 = arith.negf %1072 : vector<8x4xf32>
    %1074 = math.exp %1073 : vector<8x4xf32>
    %cst_349 = arith.constant 1.000000e+00 : f32
    %1075 = vector.broadcast %cst_349 : f32 to vector<8x4xf32>
    %1076 = arith.addf %1075, %1074 : vector<8x4xf32>
    %1077 = arith.divf %1075, %1076 : vector<8x4xf32>
    %1078 = vector.extract_strided_slice %1077 {offsets = [0, 0], sizes = [8, 1], strides = [1, 1]} : vector<8x4xf32> to vector<8x1xf32>
    %1079 = vector.extract_strided_slice %1077 {offsets = [0, 1], sizes = [8, 1], strides = [1, 1]} : vector<8x4xf32> to vector<8x1xf32>
    %1080 = vector.extract_strided_slice %1077 {offsets = [0, 3], sizes = [8, 1], strides = [1, 1]} : vector<8x4xf32> to vector<8x1xf32>
    %1081 = vector.extract_strided_slice %1072 {offsets = [0, 2], sizes = [8, 1], strides = [1, 1]} : vector<8x4xf32> to vector<8x1xf32>
    %1082 = math.tanh %1081 : vector<8x1xf32>
    %1083 = arith.mulf %1079, %1065 : vector<8x1xf32>
    %1084 = arith.mulf %1078, %1082 : vector<8x1xf32>
    %1085 = arith.addf %1083, %1084 : vector<8x1xf32>
    %1086 = math.tanh %1085 : vector<8x1xf32>
    %1087 = arith.mulf %1080, %1086 : vector<8x1xf32>
    %c32_350 = arith.constant 32 : index
    %c0_351 = arith.constant 0 : index
    %1088 = vector.load %arg24[%c32_350, %c0_351] : memref<128x4xf32, #tpu.memory_space<vmem>>, vector<8x4xf32>
    %1089 = vector.broadcast %1087 : vector<8x1xf32> to vector<8x4xf32>
    %1090 = vector.broadcast %1005 : vector<1x4xf32> to vector<8x4xf32>
    %1091 = arith.mulf %1089, %1090 : vector<8x4xf32>
    %1092 = arith.addf %1088, %1091 : vector<8x4xf32>
    %1093 = arith.negf %1092 : vector<8x4xf32>
    %1094 = math.exp %1093 : vector<8x4xf32>
    %cst_352 = arith.constant 1.000000e+00 : f32
    %1095 = vector.broadcast %cst_352 : f32 to vector<8x4xf32>
    %1096 = arith.addf %1095, %1094 : vector<8x4xf32>
    %1097 = arith.divf %1095, %1096 : vector<8x4xf32>
    %1098 = vector.extract_strided_slice %1097 {offsets = [0, 0], sizes = [8, 1], strides = [1, 1]} : vector<8x4xf32> to vector<8x1xf32>
    %1099 = vector.extract_strided_slice %1097 {offsets = [0, 1], sizes = [8, 1], strides = [1, 1]} : vector<8x4xf32> to vector<8x1xf32>
    %1100 = vector.extract_strided_slice %1097 {offsets = [0, 3], sizes = [8, 1], strides = [1, 1]} : vector<8x4xf32> to vector<8x1xf32>
    %1101 = vector.extract_strided_slice %1092 {offsets = [0, 2], sizes = [8, 1], strides = [1, 1]} : vector<8x4xf32> to vector<8x1xf32>
    %1102 = math.tanh %1101 : vector<8x1xf32>
    %1103 = arith.mulf %1099, %1085 : vector<8x1xf32>
    %1104 = arith.mulf %1098, %1102 : vector<8x1xf32>
    %1105 = arith.addf %1103, %1104 : vector<8x1xf32>
    %1106 = math.tanh %1105 : vector<8x1xf32>
    %1107 = arith.mulf %1100, %1106 : vector<8x1xf32>
    %c40_353 = arith.constant 40 : index
    %c0_354 = arith.constant 0 : index
    %1108 = vector.load %arg24[%c40_353, %c0_354] : memref<128x4xf32, #tpu.memory_space<vmem>>, vector<8x4xf32>
    %1109 = vector.broadcast %1107 : vector<8x1xf32> to vector<8x4xf32>
    %1110 = vector.broadcast %1005 : vector<1x4xf32> to vector<8x4xf32>
    %1111 = arith.mulf %1109, %1110 : vector<8x4xf32>
    %1112 = arith.addf %1108, %1111 : vector<8x4xf32>
    %1113 = arith.negf %1112 : vector<8x4xf32>
    %1114 = math.exp %1113 : vector<8x4xf32>
    %cst_355 = arith.constant 1.000000e+00 : f32
    %1115 = vector.broadcast %cst_355 : f32 to vector<8x4xf32>
    %1116 = arith.addf %1115, %1114 : vector<8x4xf32>
    %1117 = arith.divf %1115, %1116 : vector<8x4xf32>
    %1118 = vector.extract_strided_slice %1117 {offsets = [0, 0], sizes = [8, 1], strides = [1, 1]} : vector<8x4xf32> to vector<8x1xf32>
    %1119 = vector.extract_strided_slice %1117 {offsets = [0, 1], sizes = [8, 1], strides = [1, 1]} : vector<8x4xf32> to vector<8x1xf32>
    %1120 = vector.extract_strided_slice %1117 {offsets = [0, 3], sizes = [8, 1], strides = [1, 1]} : vector<8x4xf32> to vector<8x1xf32>
    %1121 = vector.extract_strided_slice %1112 {offsets = [0, 2], sizes = [8, 1], strides = [1, 1]} : vector<8x4xf32> to vector<8x1xf32>
    %1122 = math.tanh %1121 : vector<8x1xf32>
    %1123 = arith.mulf %1119, %1105 : vector<8x1xf32>
    %1124 = arith.mulf %1118, %1122 : vector<8x1xf32>
    %1125 = arith.addf %1123, %1124 : vector<8x1xf32>
    %1126 = math.tanh %1125 : vector<8x1xf32>
    %1127 = arith.mulf %1120, %1126 : vector<8x1xf32>
    %c48_356 = arith.constant 48 : index
    %c0_357 = arith.constant 0 : index
    %1128 = vector.load %arg24[%c48_356, %c0_357] : memref<128x4xf32, #tpu.memory_space<vmem>>, vector<8x4xf32>
    %1129 = vector.broadcast %1127 : vector<8x1xf32> to vector<8x4xf32>
    %1130 = vector.broadcast %1005 : vector<1x4xf32> to vector<8x4xf32>
    %1131 = arith.mulf %1129, %1130 : vector<8x4xf32>
    %1132 = arith.addf %1128, %1131 : vector<8x4xf32>
    %1133 = arith.negf %1132 : vector<8x4xf32>
    %1134 = math.exp %1133 : vector<8x4xf32>
    %cst_358 = arith.constant 1.000000e+00 : f32
    %1135 = vector.broadcast %cst_358 : f32 to vector<8x4xf32>
    %1136 = arith.addf %1135, %1134 : vector<8x4xf32>
    %1137 = arith.divf %1135, %1136 : vector<8x4xf32>
    %1138 = vector.extract_strided_slice %1137 {offsets = [0, 0], sizes = [8, 1], strides = [1, 1]} : vector<8x4xf32> to vector<8x1xf32>
    %1139 = vector.extract_strided_slice %1137 {offsets = [0, 1], sizes = [8, 1], strides = [1, 1]} : vector<8x4xf32> to vector<8x1xf32>
    %1140 = vector.extract_strided_slice %1137 {offsets = [0, 3], sizes = [8, 1], strides = [1, 1]} : vector<8x4xf32> to vector<8x1xf32>
    %1141 = vector.extract_strided_slice %1132 {offsets = [0, 2], sizes = [8, 1], strides = [1, 1]} : vector<8x4xf32> to vector<8x1xf32>
    %1142 = math.tanh %1141 : vector<8x1xf32>
    %1143 = arith.mulf %1139, %1125 : vector<8x1xf32>
    %1144 = arith.mulf %1138, %1142 : vector<8x1xf32>
    %1145 = arith.addf %1143, %1144 : vector<8x1xf32>
    %1146 = math.tanh %1145 : vector<8x1xf32>
    %1147 = arith.mulf %1140, %1146 : vector<8x1xf32>
    %c56_359 = arith.constant 56 : index
    %c0_360 = arith.constant 0 : index
    %1148 = vector.load %arg24[%c56_359, %c0_360] : memref<128x4xf32, #tpu.memory_space<vmem>>, vector<8x4xf32>
    %1149 = vector.broadcast %1147 : vector<8x1xf32> to vector<8x4xf32>
    %1150 = vector.broadcast %1005 : vector<1x4xf32> to vector<8x4xf32>
    %1151 = arith.mulf %1149, %1150 : vector<8x4xf32>
    %1152 = arith.addf %1148, %1151 : vector<8x4xf32>
    %1153 = arith.negf %1152 : vector<8x4xf32>
    %1154 = math.exp %1153 : vector<8x4xf32>
    %cst_361 = arith.constant 1.000000e+00 : f32
    %1155 = vector.broadcast %cst_361 : f32 to vector<8x4xf32>
    %1156 = arith.addf %1155, %1154 : vector<8x4xf32>
    %1157 = arith.divf %1155, %1156 : vector<8x4xf32>
    %1158 = vector.extract_strided_slice %1157 {offsets = [0, 0], sizes = [8, 1], strides = [1, 1]} : vector<8x4xf32> to vector<8x1xf32>
    %1159 = vector.extract_strided_slice %1157 {offsets = [0, 1], sizes = [8, 1], strides = [1, 1]} : vector<8x4xf32> to vector<8x1xf32>
    %1160 = vector.extract_strided_slice %1157 {offsets = [0, 3], sizes = [8, 1], strides = [1, 1]} : vector<8x4xf32> to vector<8x1xf32>
    %1161 = vector.extract_strided_slice %1152 {offsets = [0, 2], sizes = [8, 1], strides = [1, 1]} : vector<8x4xf32> to vector<8x1xf32>
    %1162 = math.tanh %1161 : vector<8x1xf32>
    %1163 = arith.mulf %1159, %1145 : vector<8x1xf32>
    %1164 = arith.mulf %1158, %1162 : vector<8x1xf32>
    %1165 = arith.addf %1163, %1164 : vector<8x1xf32>
    %1166 = math.tanh %1165 : vector<8x1xf32>
    %1167 = arith.mulf %1160, %1166 : vector<8x1xf32>
    %c64_362 = arith.constant 64 : index
    %c0_363 = arith.constant 0 : index
    %1168 = vector.load %arg24[%c64_362, %c0_363] : memref<128x4xf32, #tpu.memory_space<vmem>>, vector<8x4xf32>
    %1169 = vector.broadcast %1167 : vector<8x1xf32> to vector<8x4xf32>
    %1170 = vector.broadcast %1005 : vector<1x4xf32> to vector<8x4xf32>
    %1171 = arith.mulf %1169, %1170 : vector<8x4xf32>
    %1172 = arith.addf %1168, %1171 : vector<8x4xf32>
    %1173 = arith.negf %1172 : vector<8x4xf32>
    %1174 = math.exp %1173 : vector<8x4xf32>
    %cst_364 = arith.constant 1.000000e+00 : f32
    %1175 = vector.broadcast %cst_364 : f32 to vector<8x4xf32>
    %1176 = arith.addf %1175, %1174 : vector<8x4xf32>
    %1177 = arith.divf %1175, %1176 : vector<8x4xf32>
    %1178 = vector.extract_strided_slice %1177 {offsets = [0, 0], sizes = [8, 1], strides = [1, 1]} : vector<8x4xf32> to vector<8x1xf32>
    %1179 = vector.extract_strided_slice %1177 {offsets = [0, 1], sizes = [8, 1], strides = [1, 1]} : vector<8x4xf32> to vector<8x1xf32>
    %1180 = vector.extract_strided_slice %1177 {offsets = [0, 3], sizes = [8, 1], strides = [1, 1]} : vector<8x4xf32> to vector<8x1xf32>
    %1181 = vector.extract_strided_slice %1172 {offsets = [0, 2], sizes = [8, 1], strides = [1, 1]} : vector<8x4xf32> to vector<8x1xf32>
    %1182 = math.tanh %1181 : vector<8x1xf32>
    %1183 = arith.mulf %1179, %1165 : vector<8x1xf32>
    %1184 = arith.mulf %1178, %1182 : vector<8x1xf32>
    %1185 = arith.addf %1183, %1184 : vector<8x1xf32>
    %1186 = math.tanh %1185 : vector<8x1xf32>
    %1187 = arith.mulf %1180, %1186 : vector<8x1xf32>
    %c72_365 = arith.constant 72 : index
    %c0_366 = arith.constant 0 : index
    %1188 = vector.load %arg24[%c72_365, %c0_366] : memref<128x4xf32, #tpu.memory_space<vmem>>, vector<8x4xf32>
    %1189 = vector.broadcast %1187 : vector<8x1xf32> to vector<8x4xf32>
    %1190 = vector.broadcast %1005 : vector<1x4xf32> to vector<8x4xf32>
    %1191 = arith.mulf %1189, %1190 : vector<8x4xf32>
    %1192 = arith.addf %1188, %1191 : vector<8x4xf32>
    %1193 = arith.negf %1192 : vector<8x4xf32>
    %1194 = math.exp %1193 : vector<8x4xf32>
    %cst_367 = arith.constant 1.000000e+00 : f32
    %1195 = vector.broadcast %cst_367 : f32 to vector<8x4xf32>
    %1196 = arith.addf %1195, %1194 : vector<8x4xf32>
    %1197 = arith.divf %1195, %1196 : vector<8x4xf32>
    %1198 = vector.extract_strided_slice %1197 {offsets = [0, 0], sizes = [8, 1], strides = [1, 1]} : vector<8x4xf32> to vector<8x1xf32>
    %1199 = vector.extract_strided_slice %1197 {offsets = [0, 1], sizes = [8, 1], strides = [1, 1]} : vector<8x4xf32> to vector<8x1xf32>
    %1200 = vector.extract_strided_slice %1197 {offsets = [0, 3], sizes = [8, 1], strides = [1, 1]} : vector<8x4xf32> to vector<8x1xf32>
    %1201 = vector.extract_strided_slice %1192 {offsets = [0, 2], sizes = [8, 1], strides = [1, 1]} : vector<8x4xf32> to vector<8x1xf32>
    %1202 = math.tanh %1201 : vector<8x1xf32>
    %1203 = arith.mulf %1199, %1185 : vector<8x1xf32>
    %1204 = arith.mulf %1198, %1202 : vector<8x1xf32>
    %1205 = arith.addf %1203, %1204 : vector<8x1xf32>
    %1206 = math.tanh %1205 : vector<8x1xf32>
    %1207 = arith.mulf %1200, %1206 : vector<8x1xf32>
    %c80_368 = arith.constant 80 : index
    %c0_369 = arith.constant 0 : index
    %1208 = vector.load %arg24[%c80_368, %c0_369] : memref<128x4xf32, #tpu.memory_space<vmem>>, vector<8x4xf32>
    %1209 = vector.broadcast %1207 : vector<8x1xf32> to vector<8x4xf32>
    %1210 = vector.broadcast %1005 : vector<1x4xf32> to vector<8x4xf32>
    %1211 = arith.mulf %1209, %1210 : vector<8x4xf32>
    %1212 = arith.addf %1208, %1211 : vector<8x4xf32>
    %1213 = arith.negf %1212 : vector<8x4xf32>
    %1214 = math.exp %1213 : vector<8x4xf32>
    %cst_370 = arith.constant 1.000000e+00 : f32
    %1215 = vector.broadcast %cst_370 : f32 to vector<8x4xf32>
    %1216 = arith.addf %1215, %1214 : vector<8x4xf32>
    %1217 = arith.divf %1215, %1216 : vector<8x4xf32>
    %1218 = vector.extract_strided_slice %1217 {offsets = [0, 0], sizes = [8, 1], strides = [1, 1]} : vector<8x4xf32> to vector<8x1xf32>
    %1219 = vector.extract_strided_slice %1217 {offsets = [0, 1], sizes = [8, 1], strides = [1, 1]} : vector<8x4xf32> to vector<8x1xf32>
    %1220 = vector.extract_strided_slice %1217 {offsets = [0, 3], sizes = [8, 1], strides = [1, 1]} : vector<8x4xf32> to vector<8x1xf32>
    %1221 = vector.extract_strided_slice %1212 {offsets = [0, 2], sizes = [8, 1], strides = [1, 1]} : vector<8x4xf32> to vector<8x1xf32>
    %1222 = math.tanh %1221 : vector<8x1xf32>
    %1223 = arith.mulf %1219, %1205 : vector<8x1xf32>
    %1224 = arith.mulf %1218, %1222 : vector<8x1xf32>
    %1225 = arith.addf %1223, %1224 : vector<8x1xf32>
    %1226 = math.tanh %1225 : vector<8x1xf32>
    %1227 = arith.mulf %1220, %1226 : vector<8x1xf32>
    %c88_371 = arith.constant 88 : index
    %c0_372 = arith.constant 0 : index
    %1228 = vector.load %arg24[%c88_371, %c0_372] : memref<128x4xf32, #tpu.memory_space<vmem>>, vector<8x4xf32>
    %1229 = vector.broadcast %1227 : vector<8x1xf32> to vector<8x4xf32>
    %1230 = vector.broadcast %1005 : vector<1x4xf32> to vector<8x4xf32>
    %1231 = arith.mulf %1229, %1230 : vector<8x4xf32>
    %1232 = arith.addf %1228, %1231 : vector<8x4xf32>
    %1233 = arith.negf %1232 : vector<8x4xf32>
    %1234 = math.exp %1233 : vector<8x4xf32>
    %cst_373 = arith.constant 1.000000e+00 : f32
    %1235 = vector.broadcast %cst_373 : f32 to vector<8x4xf32>
    %1236 = arith.addf %1235, %1234 : vector<8x4xf32>
    %1237 = arith.divf %1235, %1236 : vector<8x4xf32>
    %1238 = vector.extract_strided_slice %1237 {offsets = [0, 0], sizes = [8, 1], strides = [1, 1]} : vector<8x4xf32> to vector<8x1xf32>
    %1239 = vector.extract_strided_slice %1237 {offsets = [0, 1], sizes = [8, 1], strides = [1, 1]} : vector<8x4xf32> to vector<8x1xf32>
    %1240 = vector.extract_strided_slice %1237 {offsets = [0, 3], sizes = [8, 1], strides = [1, 1]} : vector<8x4xf32> to vector<8x1xf32>
    %1241 = vector.extract_strided_slice %1232 {offsets = [0, 2], sizes = [8, 1], strides = [1, 1]} : vector<8x4xf32> to vector<8x1xf32>
    %1242 = math.tanh %1241 : vector<8x1xf32>
    %1243 = arith.mulf %1239, %1225 : vector<8x1xf32>
    %1244 = arith.mulf %1238, %1242 : vector<8x1xf32>
    %1245 = arith.addf %1243, %1244 : vector<8x1xf32>
    %1246 = math.tanh %1245 : vector<8x1xf32>
    %1247 = arith.mulf %1240, %1246 : vector<8x1xf32>
    %c96_374 = arith.constant 96 : index
    %c0_375 = arith.constant 0 : index
    %1248 = vector.load %arg24[%c96_374, %c0_375] : memref<128x4xf32, #tpu.memory_space<vmem>>, vector<8x4xf32>
    %1249 = vector.broadcast %1247 : vector<8x1xf32> to vector<8x4xf32>
    %1250 = vector.broadcast %1005 : vector<1x4xf32> to vector<8x4xf32>
    %1251 = arith.mulf %1249, %1250 : vector<8x4xf32>
    %1252 = arith.addf %1248, %1251 : vector<8x4xf32>
    %1253 = arith.negf %1252 : vector<8x4xf32>
    %1254 = math.exp %1253 : vector<8x4xf32>
    %cst_376 = arith.constant 1.000000e+00 : f32
    %1255 = vector.broadcast %cst_376 : f32 to vector<8x4xf32>
    %1256 = arith.addf %1255, %1254 : vector<8x4xf32>
    %1257 = arith.divf %1255, %1256 : vector<8x4xf32>
    %1258 = vector.extract_strided_slice %1257 {offsets = [0, 0], sizes = [8, 1], strides = [1, 1]} : vector<8x4xf32> to vector<8x1xf32>
    %1259 = vector.extract_strided_slice %1257 {offsets = [0, 1], sizes = [8, 1], strides = [1, 1]} : vector<8x4xf32> to vector<8x1xf32>
    %1260 = vector.extract_strided_slice %1257 {offsets = [0, 3], sizes = [8, 1], strides = [1, 1]} : vector<8x4xf32> to vector<8x1xf32>
    %1261 = vector.extract_strided_slice %1252 {offsets = [0, 2], sizes = [8, 1], strides = [1, 1]} : vector<8x4xf32> to vector<8x1xf32>
    %1262 = math.tanh %1261 : vector<8x1xf32>
    %1263 = arith.mulf %1259, %1245 : vector<8x1xf32>
    %1264 = arith.mulf %1258, %1262 : vector<8x1xf32>
    %1265 = arith.addf %1263, %1264 : vector<8x1xf32>
    %1266 = math.tanh %1265 : vector<8x1xf32>
    %1267 = arith.mulf %1260, %1266 : vector<8x1xf32>
    %c104_377 = arith.constant 104 : index
    %c0_378 = arith.constant 0 : index
    %1268 = vector.load %arg24[%c104_377, %c0_378] : memref<128x4xf32, #tpu.memory_space<vmem>>, vector<8x4xf32>
    %1269 = vector.broadcast %1267 : vector<8x1xf32> to vector<8x4xf32>
    %1270 = vector.broadcast %1005 : vector<1x4xf32> to vector<8x4xf32>
    %1271 = arith.mulf %1269, %1270 : vector<8x4xf32>
    %1272 = arith.addf %1268, %1271 : vector<8x4xf32>
    %1273 = arith.negf %1272 : vector<8x4xf32>
    %1274 = math.exp %1273 : vector<8x4xf32>
    %cst_379 = arith.constant 1.000000e+00 : f32
    %1275 = vector.broadcast %cst_379 : f32 to vector<8x4xf32>
    %1276 = arith.addf %1275, %1274 : vector<8x4xf32>
    %1277 = arith.divf %1275, %1276 : vector<8x4xf32>
    %1278 = vector.extract_strided_slice %1277 {offsets = [0, 0], sizes = [8, 1], strides = [1, 1]} : vector<8x4xf32> to vector<8x1xf32>
    %1279 = vector.extract_strided_slice %1277 {offsets = [0, 1], sizes = [8, 1], strides = [1, 1]} : vector<8x4xf32> to vector<8x1xf32>
    %1280 = vector.extract_strided_slice %1277 {offsets = [0, 3], sizes = [8, 1], strides = [1, 1]} : vector<8x4xf32> to vector<8x1xf32>
    %1281 = vector.extract_strided_slice %1272 {offsets = [0, 2], sizes = [8, 1], strides = [1, 1]} : vector<8x4xf32> to vector<8x1xf32>
    %1282 = math.tanh %1281 : vector<8x1xf32>
    %1283 = arith.mulf %1279, %1265 : vector<8x1xf32>
    %1284 = arith.mulf %1278, %1282 : vector<8x1xf32>
    %1285 = arith.addf %1283, %1284 : vector<8x1xf32>
    %1286 = math.tanh %1285 : vector<8x1xf32>
    %1287 = arith.mulf %1280, %1286 : vector<8x1xf32>
    %c112_380 = arith.constant 112 : index
    %c0_381 = arith.constant 0 : index
    %1288 = vector.load %arg24[%c112_380, %c0_381] : memref<128x4xf32, #tpu.memory_space<vmem>>, vector<8x4xf32>
    %1289 = vector.broadcast %1287 : vector<8x1xf32> to vector<8x4xf32>
    %1290 = vector.broadcast %1005 : vector<1x4xf32> to vector<8x4xf32>
    %1291 = arith.mulf %1289, %1290 : vector<8x4xf32>
    %1292 = arith.addf %1288, %1291 : vector<8x4xf32>
    %1293 = arith.negf %1292 : vector<8x4xf32>
    %1294 = math.exp %1293 : vector<8x4xf32>
    %cst_382 = arith.constant 1.000000e+00 : f32
    %1295 = vector.broadcast %cst_382 : f32 to vector<8x4xf32>
    %1296 = arith.addf %1295, %1294 : vector<8x4xf32>
    %1297 = arith.divf %1295, %1296 : vector<8x4xf32>
    %1298 = vector.extract_strided_slice %1297 {offsets = [0, 0], sizes = [8, 1], strides = [1, 1]} : vector<8x4xf32> to vector<8x1xf32>
    %1299 = vector.extract_strided_slice %1297 {offsets = [0, 1], sizes = [8, 1], strides = [1, 1]} : vector<8x4xf32> to vector<8x1xf32>
    %1300 = vector.extract_strided_slice %1297 {offsets = [0, 3], sizes = [8, 1], strides = [1, 1]} : vector<8x4xf32> to vector<8x1xf32>
    %1301 = vector.extract_strided_slice %1292 {offsets = [0, 2], sizes = [8, 1], strides = [1, 1]} : vector<8x4xf32> to vector<8x1xf32>
    %1302 = math.tanh %1301 : vector<8x1xf32>
    %1303 = arith.mulf %1299, %1285 : vector<8x1xf32>
    %1304 = arith.mulf %1298, %1302 : vector<8x1xf32>
    %1305 = arith.addf %1303, %1304 : vector<8x1xf32>
    %1306 = math.tanh %1305 : vector<8x1xf32>
    %1307 = arith.mulf %1300, %1306 : vector<8x1xf32>
    %c120_383 = arith.constant 120 : index
    %c0_384 = arith.constant 0 : index
    %1308 = vector.load %arg24[%c120_383, %c0_384] : memref<128x4xf32, #tpu.memory_space<vmem>>, vector<8x4xf32>
    %1309 = vector.broadcast %1307 : vector<8x1xf32> to vector<8x4xf32>
    %1310 = vector.broadcast %1005 : vector<1x4xf32> to vector<8x4xf32>
    %1311 = arith.mulf %1309, %1310 : vector<8x4xf32>
    %1312 = arith.addf %1308, %1311 : vector<8x4xf32>
    %1313 = arith.negf %1312 : vector<8x4xf32>
    %1314 = math.exp %1313 : vector<8x4xf32>
    %cst_385 = arith.constant 1.000000e+00 : f32
    %1315 = vector.broadcast %cst_385 : f32 to vector<8x4xf32>
    %1316 = arith.addf %1315, %1314 : vector<8x4xf32>
    %1317 = arith.divf %1315, %1316 : vector<8x4xf32>
    %1318 = vector.extract_strided_slice %1317 {offsets = [0, 0], sizes = [8, 1], strides = [1, 1]} : vector<8x4xf32> to vector<8x1xf32>
    %1319 = vector.extract_strided_slice %1317 {offsets = [0, 1], sizes = [8, 1], strides = [1, 1]} : vector<8x4xf32> to vector<8x1xf32>
    %1320 = vector.extract_strided_slice %1317 {offsets = [0, 3], sizes = [8, 1], strides = [1, 1]} : vector<8x4xf32> to vector<8x1xf32>
    %1321 = vector.extract_strided_slice %1312 {offsets = [0, 2], sizes = [8, 1], strides = [1, 1]} : vector<8x4xf32> to vector<8x1xf32>
    %1322 = math.tanh %1321 : vector<8x1xf32>
    %1323 = arith.mulf %1319, %1305 : vector<8x1xf32>
    %1324 = arith.mulf %1318, %1322 : vector<8x1xf32>
    %1325 = arith.addf %1323, %1324 : vector<8x1xf32>
    %1326 = math.tanh %1325 : vector<8x1xf32>
    %1327 = arith.mulf %1320, %1326 : vector<8x1xf32>
    %1328 = tpu.concatenate %1027, %1047, %1067, %1087, %1107, %1127, %1147, %1167, %1187, %1207, %1227, %1247, %1267, %1287, %1307, %1327 in 1 : vector<8x1xf32>, vector<8x1xf32>, vector<8x1xf32>, vector<8x1xf32>, vector<8x1xf32>, vector<8x1xf32>, vector<8x1xf32>, vector<8x1xf32>, vector<8x1xf32>, vector<8x1xf32>, vector<8x1xf32>, vector<8x1xf32>, vector<8x1xf32>, vector<8x1xf32>, vector<8x1xf32>, vector<8x1xf32> -> vector<8x16xf32>
    %c0_386 = arith.constant 0 : index
    %c0_387 = arith.constant 0 : index
    %1329 = vector.load %arg14[%c0_386, %c0_387] : memref<16x32xf32, #tpu.memory_space<vmem>>, vector<16x32xf32>
    %cst_388 = arith.constant dense<0.000000e+00> : vector<8x32xf32>
    %1330 = tpu.matmul %1328, %1329, %cst_388 {dimension_numbers = #tpu.dot_dimension_numbers<[1], [0], [0], [1], [0, 0, 1, 1], [], []>} : vector<8x16xf32>, vector<16x32xf32>, vector<8x32xf32> -> vector<8x32xf32>
    %c0_389 = arith.constant 0 : index
    %c0_390 = arith.constant 0 : index
    %1331 = vector.load %arg15[%c0_389, %c0_390] : memref<1x32xf32, #tpu.memory_space<vmem>>, vector<1x32xf32>
    %1332 = vector.broadcast %1331 : vector<1x32xf32> to vector<8x32xf32>
    %1333 = arith.addf %1330, %1332 : vector<8x32xf32>
    %c0_391 = arith.constant 0 : index
    %c0_392 = arith.constant 0 : index
    %1334 = vector.load %arg16[%c0_391, %c0_392] : memref<32x4xf32, #tpu.memory_space<vmem>>, vector<32x4xf32>
    %cst_393 = arith.constant dense<0.000000e+00> : vector<8x4xf32>
    %1335 = tpu.matmul %1333, %1334, %cst_393 {dimension_numbers = #tpu.dot_dimension_numbers<[1], [0], [0], [1], [0, 0, 1, 1], [], []>} : vector<8x32xf32>, vector<32x4xf32>, vector<8x4xf32> -> vector<8x4xf32>
    %c0_394 = arith.constant 0 : index
    %c0_395 = arith.constant 0 : index
    %1336 = vector.load %arg17[%c0_394, %c0_395] : memref<1x4xf32, #tpu.memory_space<vmem>>, vector<1x4xf32>
    %1337 = vector.broadcast %1336 : vector<1x4xf32> to vector<8x4xf32>
    %1338 = arith.addf %1335, %1337 : vector<8x4xf32>
    %c0_396 = arith.constant 0 : index
    %c0_397 = arith.constant 0 : index
    %1339 = vector.load %arg18[%c0_396, %c0_397] : memref<8x4xf32, #tpu.memory_space<vmem>>, vector<8x4xf32>
    tpu.vector_store %arg18[%c0_396, %c0_397], %1338 {strides = array<i32>} : memref<8x4xf32, #tpu.memory_space<vmem>>, vector<8x4xf32>,
    return
  }
}

</mosaic_0001>

<llo_original>
// kernel: squeeze.0
$region0: #{squeeze.0}
  %s0 = inlined_call_operand.vmem [shape: f32[4,8,1], index: 0, kind: input, shape index: {}]
  %s1 = inlined_call_operand.vmem [shape: f32[32,1], index: 1, kind: output, shape index: {}]
  $region1: #{squeeze.0} parent=0
    #allocation0 [shape = 'u8[4096]{0}', space=vmem, size = 0x1000, scoped, tag = 'scoped mem for input reshape']
    %s3 = sshllo.u32 0, 4
    %v4 = vld [vmem:[%s0] sm:%s3]
    %5 = vst [vmem:[#allocation0] sm:%s3] %v4
    %v6 = vld [vmem:[#allocation0] sm:$0xf]
    %vm7 = vcmask 7168
    %8 = vst.msk [vmem:[%s1] ss:$8 sm:$0xf] %vm7, %v6
    %v9 = vld [vmem:[#allocation0] sm:$0xf]
    %10 = vrot.lane.b32.xlu0 %v9, 127
    %v11 = vpop.permute.xlu0 %10
    %vm12 = vcmask 7168
    %s13 = scalar_lea.vmem %s1, 1
    %14 = vst.msk [vmem:[%s13] ss:$8 sm:$0xf] %vm12, %v11
    %v15 = vld [vmem:[#allocation0] sm:$0xf]
    %16 = vrot.lane.b32.xlu0 %v15, 126
    %v17 = vpop.permute.xlu0 %16
    %vm18 = vcmask 7168
    %s19 = scalar_lea.vmem %s1, 2
    %20 = vst.msk [vmem:[%s19] ss:$8 sm:$0xf] %vm18, %v17
    %v21 = vld [vmem:[#allocation0] sm:$0xf]
    %22 = vrot.lane.b32.xlu0 %v21, 125
    %v23 = vpop.permute.xlu0 %22
    %vm24 = vcmask 7168
    %s25 = scalar_lea.vmem %s1, 3
    %26 = vst.msk [vmem:[%s25] ss:$8 sm:$0xf] %vm24, %v23
    %v27 = vld [vmem:[#allocation0] sm:$0xf]
    %28 = vrot.lane.b32.xlu0 %v27, 124
    %v29 = vpop.permute.xlu0 %28
    %vm30 = vcmask 7168
    %s31 = scalar_lea.vmem %s1, 4
    %32 = vst.msk [vmem:[%s31] ss:$8 sm:$0xf] %vm30, %v29
    %v33 = vld [vmem:[#allocation0] sm:$0xf]
    %34 = vrot.lane.b32.xlu0 %v33, 123
    %v35 = vpop.permute.xlu0 %34
    %vm36 = vcmask 7168
    %s37 = scalar_lea.vmem %s1, 5
    %38 = vst.msk [vmem:[%s37] ss:$8 sm:$0xf] %vm36, %v35
    %v39 = vld [vmem:[#allocation0] sm:$0xf]
    %40 = vrot.lane.b32.xlu0 %v39, 122
    %v41 = vpop.permute.xlu0 %40
    %vm42 = vcmask 7168
    %s43 = scalar_lea.vmem %s1, 6
    %44 = vst.msk [vmem:[%s43] ss:$8 sm:$0xf] %vm42, %v41
    %v45 = vld [vmem:[#allocation0] sm:$0xf]
    %46 = vrot.lane.b32.xlu0 %v45, 121
    %v47 = vpop.permute.xlu0 %46
    %vm48 = vcmask 7168
    %s49 = scalar_lea.vmem %s1, 7
    %50 = vst.msk [vmem:[%s49] ss:$8 sm:$0xf] %vm48, %v47

// kernel: vd_encoder_decoder_forward.1
$region0: #{vd_encoder_decoder_forward.1}
  #allocation0 [shape = 'u32[]', space=smem, size = 0x4, offset = 0x4, fixed_abs, tag = 'smem constant byte address 0x4 - core index']
  #allocation1 [shape = 'u32[144,128]{1,0:T(1,128)}', space=vmem, size = 0x12000, scoped, tag = 'internal scratch']
  #allocation2 [shape = 'f32[96,512]{1,0:T(8,128)}', space=vmem, size = 0x30000, scoped, tag = 'scratch operand']
  #allocation3 [shape = 'f32[96,128]{1,0:T(8,128)}', space=vmem, size = 0xc000, scoped, tag = 'scratch operand']
  #allocation4 [shape = 'f32[96,4]{1,0:T(8,128)}', space=vmem, size = 0xc000, scoped, tag = 'scratch operand']
  #allocation5 [shape = 'f32[128,128]{1,0:T(8,128)}', space=vmem, size = 0x10000, scoped, tag = 'scratch operand']
  #allocation6 [shape = 'f32[128,32]{1,0:T(8,128)}', space=vmem, size = 0x10000, scoped, tag = 'scratch operand']
  #allocation7 [shape = 'f32[128,4]{1,0:T(8,128)}', space=vmem, size = 0x10000, scoped, tag = 'scratch operand']
  %s0 = inlined_call_operand.vmem [shape: f32[96,4], index: 0, kind: input, shape index: {}]
  %s1 = inlined_call_operand.vmem [shape: f32[32,1], index: 1, kind: input, shape index: {}]
  %s2 = inlined_call_operand.vmem [shape: f32[4,512], index: 2, kind: input, shape index: {}]
  %s3 = inlined_call_operand.vmem [shape: f32[128,512], index: 3, kind: input, shape index: {}]
  %s4 = inlined_call_operand.vmem [shape: f32[1,512], index: 4, kind: input, shape index: {}]
  %s5 = inlined_call_operand.vmem [shape: f32[128,4], index: 5, kind: input, shape index: {}]
  %s6 = inlined_call_operand.vmem [shape: f32[1,4], index: 6, kind: input, shape index: {}]
  %s7 = inlined_call_operand.vmem [shape: f32[1,4], index: 7, kind: input, shape index: {}]
  %s8 = inlined_call_operand.vmem [shape: f32[1,128], index: 8, kind: input, shape index: {}]
  %s9 = inlined_call_operand.vmem [shape: f32[32,128], index: 9, kind: input, shape index: {}]
  %s10 = inlined_call_operand.vmem [shape: f32[1,128], index: 10, kind: input, shape index: {}]
  %s11 = inlined_call_operand.vmem [shape: f32[32,4], index: 11, kind: input, shape index: {}]
  %s12 = inlined_call_operand.vmem [shape: f32[1,4], index: 12, kind: input, shape index: {}]
  %s13 = inlined_call_operand.vmem [shape: f32[1,4], index: 13, kind: input, shape index: {}]
  %s14 = inlined_call_operand.vmem [shape: f32[16,32], index: 14, kind: input, shape index: {}]
  %s15 = inlined_call_operand.vmem [shape: f32[1,32], index: 15, kind: input, shape index: {}]
  %s16 = inlined_call_operand.vmem [shape: f32[32,4], index: 16, kind: input, shape index: {}]
  %s17 = inlined_call_operand.vmem [shape: f32[1,4], index: 17, kind: input, shape index: {}]
  %s18 = inlined_call_operand.vmem [shape: f32[8,4], index: 18, kind: output, shape index: {}]
  %s19 = sld [smem:[#allocation0]]
  $region82: #{vd_encoder_decoder_forward.1} parent=0
    _
  %s21 = ssub.s32 1, %s19
  %s22 = scalar_select 0, %s21, %s19
  // Predicated region
  $region2: #{vd_encoder_decoder_forward.1} parent=0 // pred_check
    _
  $region3: #{vd_encoder_decoder_forward.1} parent=0 // pred_check_branch
    %24 = sbr.rel (0) target = $region5
  $region4: #{vd_encoder_decoder_forward.1} parent=0 // pred_region
    _
  $region5: #{vd_encoder_decoder_forward.1} parent=0 // pred_fallthru
    _
  // Predicated region
  $region6: #{vd_encoder_decoder_forward.1} parent=0 // pred_check
    _
  $region7: #{vd_encoder_decoder_forward.1} parent=0 // pred_check_branch
    %26 = sbr.rel (0) target = $region9
  $region8: #{vd_encoder_decoder_forward.1} parent=0 // pred_region
    _
  $region9: #{vd_encoder_decoder_forward.1} parent=0 // pred_fallthru
    _
  // Predicated region
  $region10: #{vd_encoder_decoder_forward.1} parent=0 // pred_check
    _
  $region11: #{vd_encoder_decoder_forward.1} parent=0 // pred_check_branch
    %28 = sbr.rel (0) target = $region13
  $region12: #{vd_encoder_decoder_forward.1} parent=0 // pred_region
    _
  $region13: #{vd_encoder_decoder_forward.1} parent=0 // pred_fallthru
    _
  // Predicated region
  $region14: #{vd_encoder_decoder_forward.1} parent=0 // pred_check
    _
  $region15: #{vd_encoder_decoder_forward.1} parent=0 // pred_check_branch
    %30 = sbr.rel (0) target = $region17
  $region16: #{vd_encoder_decoder_forward.1} parent=0 // pred_region
    _
  $region17: #{vd_encoder_decoder_forward.1} parent=0 // pred_fallthru
    _
  // Predicated region
  $region18: #{vd_encoder_decoder_forward.1} parent=0 // pred_check
    _
  $region19: #{vd_encoder_decoder_forward.1} parent=0 // pred_check_branch
    %32 = sbr.rel (0) target = $region21
  $region20: #{vd_encoder_decoder_forward.1} parent=0 // pred_region
    _
  $region21: #{vd_encoder_decoder_forward.1} parent=0 // pred_fallthru
    _
  // Predicated region
  $region22: #{vd_encoder_decoder_forward.1} parent=0 // pred_check
    _
  $region23: #{vd_encoder_decoder_forward.1} parent=0 // pred_check_branch
    %34 = sbr.rel (0) target = $region25
  $region24: #{vd_encoder_decoder_forward.1} parent=0 // pred_region
    _
  $region25: #{vd_encoder_decoder_forward.1} parent=0 // pred_fallthru
    _
  // Predicated region
  $region26: #{vd_encoder_decoder_forward.1} parent=0 // pred_check
    _
  $region27: #{vd_encoder_decoder_forward.1} parent=0 // pred_check_branch
    %36 = sbr.rel (0) target = $region29
  $region28: #{vd_encoder_decoder_forward.1} parent=0 // pred_region
    _
  $region29: #{vd_encoder_decoder_forward.1} parent=0 // pred_fallthru
    _
  // Predicated region
  $region30: #{vd_encoder_decoder_forward.1} parent=0 // pred_check
    _
  $region31: #{vd_encoder_decoder_forward.1} parent=0 // pred_check_branch
    %38 = sbr.rel (0) target = $region33
  $region32: #{vd_encoder_decoder_forward.1} parent=0 // pred_region
    _
  $region33: #{vd_encoder_decoder_forward.1} parent=0 // pred_fallthru
    _
  // Predicated region
  $region34: #{vd_encoder_decoder_forward.1} parent=0 // pred_check
    _
  $region35: #{vd_encoder_decoder_forward.1} parent=0 // pred_check_branch
    %40 = sbr.rel (0) target = $region37
  $region36: #{vd_encoder_decoder_forward.1} parent=0 // pred_region
    _
  $region37: #{vd_encoder_decoder_forward.1} parent=0 // pred_fallthru
    _
  // Predicated region
  $region38: #{vd_encoder_decoder_forward.1} parent=0 // pred_check
    _
  $region39: #{vd_encoder_decoder_forward.1} parent=0 // pred_check_branch
    %42 = sbr.rel (0) target = $region41
  $region40: #{vd_encoder_decoder_forward.1} parent=0 // pred_region
    _
  $region41: #{vd_encoder_decoder_forward.1} parent=0 // pred_fallthru
    _
  // Predicated region
  $region42: #{vd_encoder_decoder_forward.1} parent=0 // pred_check
    _
  $region43: #{vd_encoder_decoder_forward.1} parent=0 // pred_check_branch
    %44 = sbr.rel (0) target = $region45
  $region44: #{vd_encoder_decoder_forward.1} parent=0 // pred_region
    _
  $region45: #{vd_encoder_decoder_forward.1} parent=0 // pred_fallthru
    _
  // Predicated region
  $region46: #{vd_encoder_decoder_forward.1} parent=0 // pred_check
    _
  $region47: #{vd_encoder_decoder_forward.1} parent=0 // pred_check_branch
    %46 = sbr.rel (0) target = $region49
  $region48: #{vd_encoder_decoder_forward.1} parent=0 // pred_region
    _
  $region49: #{vd_encoder_decoder_forward.1} parent=0 // pred_fallthru
    _
  // Predicated region
  $region50: #{vd_encoder_decoder_forward.1} parent=0 // pred_check
    _
  $region51: #{vd_encoder_decoder_forward.1} parent=0 // pred_check_branch
    %48 = sbr.rel (0) target = $region53
  $region52: #{vd_encoder_decoder_forward.1} parent=0 // pred_region
    _
  $region53: #{vd_encoder_decoder_forward.1} parent=0 // pred_fallthru
    _
  // Predicated region
  $region54: #{vd_encoder_decoder_forward.1} parent=0 // pred_check
    _
  $region55: #{vd_encoder_decoder_forward.1} parent=0 // pred_check_branch
    %50 = sbr.rel (0) target = $region57
  $region56: #{vd_encoder_decoder_forward.1} parent=0 // pred_region
    _
  $region57: #{vd_encoder_decoder_forward.1} parent=0 // pred_fallthru
    _
  // Predicated region
  $region58: #{vd_encoder_decoder_forward.1} parent=0 // pred_check
    _
  $region59: #{vd_encoder_decoder_forward.1} parent=0 // pred_check_branch
    %52 = sbr.rel (0) target = $region61
  $region60: #{vd_encoder_decoder_forward.1} parent=0 // pred_region
    _
  $region61: #{vd_encoder_decoder_forward.1} parent=0 // pred_fallthru
    _
  // Predicated region
  $region62: #{vd_encoder_decoder_forward.1} parent=0 // pred_check
    _
  $region63: #{vd_encoder_decoder_forward.1} parent=0 // pred_check_branch
    %54 = sbr.rel (0) target = $region65
  $region64: #{vd_encoder_decoder_forward.1} parent=0 // pred_region
    _
  $region65: #{vd_encoder_decoder_forward.1} parent=0 // pred_fallthru
    _
  // Predicated region
  $region66: #{vd_encoder_decoder_forward.1} parent=0 // pred_check
    _
  $region67: #{vd_encoder_decoder_forward.1} parent=0 // pred_check_branch
    %56 = sbr.rel (0) target = $region69
  $region68: #{vd_encoder_decoder_forward.1} parent=0 // pred_region
    _
  $region69: #{vd_encoder_decoder_forward.1} parent=0 // pred_fallthru
    _
  // Predicated region
  $region70: #{vd_encoder_decoder_forward.1} parent=0 // pred_check
    _
  $region71: #{vd_encoder_decoder_forward.1} parent=0 // pred_check_branch
    %58 = sbr.rel (0) target = $region73
  $region72: #{vd_encoder_decoder_forward.1} parent=0 // pred_region
    _
  $region73: #{vd_encoder_decoder_forward.1} parent=0 // pred_fallthru
    _
  %v59 = vld [vmem:[%s0] sm:$0xff]
  %v60 = vld [vmem:[%s0 + $0x8] sm:$0xff]
  %v61 = vld [vmem:[%s0 + $0x10] sm:$0xff]
  %v62 = vld [vmem:[%s0 + $0x18] sm:$0xff]
  %v63 = vld [vmem:[%s0 + $0x20] sm:$0xff]
  %v64 = vld [vmem:[%s0 + $0x28] sm:$0xff]
  %v65 = vld [vmem:[%s0 + $0x30] sm:$0xff]
  %v66 = vld [vmem:[%s0 + $0x38] sm:$0xff]
  %v67 = vld [vmem:[%s0 + $0x40] sm:$0xff]
  %v68 = vld [vmem:[%s0 + $0x48] sm:$0xff]
  %v69 = vld [vmem:[%s0 + $0x50] sm:$0xff]
  %v70 = vld [vmem:[%s0 + $0x58] sm:$0xff]
  %v71 = vld [vmem:[%s2] sm:$0xff]
  %v72 = vld [vmem:[%s2 + $0x8] sm:$0xff]
  %v73 = vld [vmem:[%s4] sm:$0xf]
  %v75 = vlaneseq
  %v76 = vshrl.u32 %v75, 7
  %v77 = vsub.s32 0, %v76
  %v78 = vrot.slane %v73, %v77
  %v79 = vlaneseq
  %v80 = vshrl.u32 %v79, 7
  %v81 = vsub.s32 1, %v80
  %v82 = vrot.slane %v73, %v81
  %v83 = vlaneseq
  %v84 = vshrl.u32 %v83, 7
  %v85 = vsub.s32 2, %v84
  %v86 = vrot.slane %v73, %v85
  %v87 = vlaneseq
  %v88 = vshrl.u32 %v87, 7
  %v89 = vsub.s32 3, %v88
  %v90 = vrot.slane %v73, %v89
  %v97 = vcombine.high %v71, %v71
  %v98 = vcombine.high %v72, %v72
  %vm99 = vcmask 31744
  %v101 = vsel %vm99, %v59, 0
  %v104 = vsel %vm99, %v60, 0
  %v107 = vsel %vm99, %v61, 0
  %v110 = vsel %vm99, %v62, 0
  %v113 = vsel %vm99, %v63, 0
  %v116 = vsel %vm99, %v64, 0
  %v119 = vsel %vm99, %v65, 0
  %v122 = vsel %vm99, %v66, 0
  %v125 = vsel %vm99, %v67, 0
  %v128 = vsel %vm99, %v68, 0
  %v131 = vsel %vm99, %v69, 0
  %v134 = vsel %vm99, %v70, 0
  %vm136 = vcmask 1043456
  %v137 = vsel %vm136, %v71, 0
  %v139 = vsel %vm136, %v97, 0
  %v141 = vsel %vm136, %v72, 0
  %v143 = vsel %vm136, %v98, 0
  %145 = vmatprep.subr.mxu0 %v139
  %146 = vmatpush1.msra.mxu0 %v137
  %147 = vmatprep.subr.mxu0 0.0
  %148 = vmatpush1.msra.mxu0 0.0
  %149 = vmatprep.subr.mxu0 0.0
  %150 = vmatpush1.msra.mxu0 0.0
  %151 = vmatprep.subr.mxu0 0.0
  %152 = vmatpush1.msra.mxu0 0.0
  %153 = vmatprep.subr.mxu0 0.0
  %154 = vmatpush1.msra.mxu0 0.0
  %155 = vmatprep.subr.mxu0 0.0
  %156 = vmatpush1.msra.mxu0 0.0
  %157 = vmatprep.subr.mxu0 0.0
  %158 = vmatpush1.msra.mxu0 0.0
  %159 = vmatprep.subr.mxu0 0.0
  %160 = vmatpush1.msra.mxu0 0.0
  %161 = vmatprep.subr.mxu0 0.0
  %162 = vmatpush1.msra.mxu0 0.0
  %163 = vmatprep.subr.mxu0 0.0
  %164 = vmatpush1.msra.mxu0 0.0
  %165 = vmatprep.subr.mxu0 0.0
  %166 = vmatpush1.msra.mxu0 0.0
  %167 = vmatprep.subr.mxu0 0.0
  %168 = vmatpush1.msra.mxu0 0.0
  %169 = vmatprep.subr.mxu0 0.0
  %170 = vmatpush1.msra.mxu0 0.0
  %171 = vmatprep.subr.mxu0 0.0
  %172 = vmatpush1.msra.mxu0 0.0
  %173 = vmatprep.subr.mxu0 0.0
  %174 = vmatpush1.msra.mxu0 0.0
  %175 = vmatprep.subr.mxu0 0.0
  %176 = vmatpush1.msra.mxu0 0.0
  %177 = vmatprep.subr.mxu0 0.0
  %178 = vmatpush1.msra.mxu0 0.0
  %179 = vmatprep.subr.mxu0 0.0
  %180 = vmatpush1.msra.mxu0 0.0
  %181 = vmatprep.subr.mxu0 0.0
  %182 = vmatpush1.msra.mxu0 0.0
  %183 = vmatprep.subr.mxu0 0.0
  %184 = vmatpush1.msra.mxu0 0.0
  %185 = vmatprep.subr.mxu0 0.0
  %186 = vmatpush1.msra.mxu0 0.0
  %187 = vmatprep.subr.mxu0 0.0
  %188 = vmatpush1.msra.mxu0 0.0
  %189 = vmatprep.subr.mxu0 0.0
  %190 = vmatpush1.msra.mxu0 0.0
  %191 = vmatprep.subr.mxu0 0.0
  %192 = vmatpush1.msra.mxu0 0.0
  %193 = vmatprep.subr.mxu0 0.0
  %194 = vmatpush1.msra.mxu0 0.0
  %195 = vmatprep.subr.mxu0 0.0
  %196 = vmatpush1.msra.mxu0 0.0
  %197 = vmatprep.subr.mxu0 0.0
  %198 = vmatpush1.msra.mxu0 0.0
  %199 = vmatprep.subr.mxu0 0.0
  %200 = vmatpush1.msra.mxu0 0.0
  %201 = vmatprep.subr.mxu0 0.0
  %202 = vmatpush1.msra.mxu0 0.0
  %203 = vmatprep.subr.mxu0 0.0
  %204 = vmatpush1.msra.mxu0 0.0
  %205 = vmatprep.subr.mxu0 0.0
  %206 = vmatpush1.msra.mxu0 0.0
  %207 = vmatprep.subr.mxu0 0.0
  %208 = vmatpush1.msra.mxu0 0.0
  %209 = vmatprep.mubr.f32.mxu0 0.0
  %210 = vmatmul.mubr.f32.gmra.mrb[0].mxu0 %v101
  %v211 = vpop.f32.mrb[0].mxu0
  %v212 = vadd.f32 %v78, %v211
  %v213 = vpop.f32.mrb[0].mxu0
  %v214 = vadd.f32 %v82, %v213
  %215 = vmatprep.mubr.f32.mxu0 0.0
  %216 = vmatmul.mubr.f32.gmra.mrb[0].mxu0 %v104
  %v217 = vpop.f32.mrb[0].mxu0
  %v218 = vadd.f32 %v78, %v217
  %v219 = vpop.f32.mrb[0].mxu0
  %v220 = vadd.f32 %v82, %v219
  %221 = vmatprep.mubr.f32.mxu0 0.0
  %222 = vmatmul.mubr.f32.gmra.mrb[0].mxu0 %v107
  %v223 = vpop.f32.mrb[0].mxu0
  %v224 = vadd.f32 %v78, %v223
  %v225 = vpop.f32.mrb[0].mxu0
  %v226 = vadd.f32 %v82, %v225
  %227 = vmatprep.mubr.f32.mxu0 0.0
  %228 = vmatmul.mubr.f32.gmra.mrb[0].mxu0 %v110
  %v229 = vpop.f32.mrb[0].mxu0
  %v230 = vadd.f32 %v78, %v229
  %v231 = vpop.f32.mrb[0].mxu0
  %v232 = vadd.f32 %v82, %v231
  %233 = vmatprep.mubr.f32.mxu0 0.0
  %234 = vmatmul.mubr.f32.gmra.mrb[0].mxu0 %v113
  %v235 = vpop.f32.mrb[0].mxu0
  %v236 = vadd.f32 %v78, %v235
  %v237 = vpop.f32.mrb[0].mxu0
  %v238 = vadd.f32 %v82, %v237
  %239 = vmatprep.mubr.f32.mxu0 0.0
  %240 = vmatmul.mubr.f32.gmra.mrb[0].mxu0 %v116
  %v241 = vpop.f32.mrb[0].mxu0
  %v242 = vadd.f32 %v78, %v241
  %v243 = vpop.f32.mrb[0].mxu0
  %v244 = vadd.f32 %v82, %v243
  %245 = vmatprep.mubr.f32.mxu0 0.0
  %246 = vmatmul.mubr.f32.gmra.mrb[0].mxu0 %v119
  %v247 = vpop.f32.mrb[0].mxu0
  %v248 = vadd.f32 %v78, %v247
  %v249 = vpop.f32.mrb[0].mxu0
  %v250 = vadd.f32 %v82, %v249
  %251 = vmatprep.mubr.f32.mxu0 0.0
  %252 = vmatmul.mubr.f32.gmra.mrb[0].mxu0 %v122
  %v253 = vpop.f32.mrb[0].mxu0
  %v254 = vadd.f32 %v78, %v253
  %v255 = vpop.f32.mrb[0].mxu0
  %v256 = vadd.f32 %v82, %v255
  %257 = vmatprep.mubr.f32.mxu0 0.0
  %258 = vmatmul.mubr.f32.gmra.mrb[0].mxu0 %v125
  %v259 = vpop.f32.mrb[0].mxu0
  %v260 = vadd.f32 %v78, %v259
  %v261 = vpop.f32.mrb[0].mxu0
  %v262 = vadd.f32 %v82, %v261
  %263 = vmatprep.mubr.f32.mxu0 0.0
  %264 = vmatmul.mubr.f32.gmra.mrb[0].mxu0 %v128
  %v265 = vpop.f32.mrb[0].mxu0
  %v266 = vadd.f32 %v78, %v265
  %v267 = vpop.f32.mrb[0].mxu0
  %v268 = vadd.f32 %v82, %v267
  %269 = vmatprep.mubr.f32.mxu0 0.0
  %270 = vmatmul.mubr.f32.gmra.mrb[0].mxu0 %v131
  %v271 = vpop.f32.mrb[0].mxu0
  %v272 = vadd.f32 %v78, %v271
  %v273 = vpop.f32.mrb[0].mxu0
  %v274 = vadd.f32 %v82, %v273
  %275 = vmatprep.mubr.f32.mxu0 0.0
  %276 = vmatmul.mubr.f32.gmra.mrb[0].mxu0 %v134
  %v277 = vpop.f32.mrb[0].mxu0
  %v278 = vadd.f32 %v78, %v277
  %v279 = vpop.f32.mrb[0].mxu0
  %v280 = vadd.f32 %v82, %v279
  %281 = vdwg.mxu0
  %282 = vmatprep.subr.mxu0 %v143
  %283 = vmatpush1.msra.mxu0 %v141
  %284 = vmatprep.subr.mxu0 0.0
  %285 = vmatpush1.msra.mxu0 0.0
  %286 = vmatprep.subr.mxu0 0.0
  %287 = vmatpush1.msra.mxu0 0.0
  %288 = vmatprep.subr.mxu0 0.0
  %289 = vmatpush1.msra.mxu0 0.0
  %290 = vmatprep.subr.mxu0 0.0
  %291 = vmatpush1.msra.mxu0 0.0
  %292 = vmatprep.subr.mxu0 0.0
  %293 = vmatpush1.msra.mxu0 0.0
  %294 = vmatprep.subr.mxu0 0.0
  %295 = vmatpush1.msra.mxu0 0.0
  %296 = vmatprep.subr.mxu0 0.0
  %297 = vmatpush1.msra.mxu0 0.0
  %298 = vmatprep.subr.mxu0 0.0
  %299 = vmatpush1.msra.mxu0 0.0
  %300 = vmatprep.subr.mxu0 0.0
  %301 = vmatpush1.msra.mxu0 0.0
  %302 = vmatprep.subr.mxu0 0.0
  %303 = vmatpush1.msra.mxu0 0.0
  %304 = vmatprep.subr.mxu0 0.0
  %305 = vmatpush1.msra.mxu0 0.0
  %306 = vmatprep.subr.mxu0 0.0
  %307 = vmatpush1.msra.mxu0 0.0
  %308 = vmatprep.subr.mxu0 0.0
  %309 = vmatpush1.msra.mxu0 0.0
  %310 = vmatprep.subr.mxu0 0.0
  %311 = vmatpush1.msra.mxu0 0.0
  %312 = vmatprep.subr.mxu0 0.0
  %313 = vmatpush1.msra.mxu0 0.0
  %314 = vmatprep.subr.mxu0 0.0
  %315 = vmatpush1.msra.mxu0 0.0
  %316 = vmatprep.subr.mxu0 0.0
  %317 = vmatpush1.msra.mxu0 0.0
  %318 = vmatprep.subr.mxu0 0.0
  %319 = vmatpush1.msra.mxu0 0.0
  %320 = vmatprep.subr.mxu0 0.0
  %321 = vmatpush1.msra.mxu0 0.0
  %322 = vmatprep.subr.mxu0 0.0
  %323 = vmatpush1.msra.mxu0 0.0
  %324 = vmatprep.subr.mxu0 0.0
  %325 = vmatpush1.msra.mxu0 0.0
  %326 = vmatprep.subr.mxu0 0.0
  %327 = vmatpush1.msra.mxu0 0.0
  %328 = vmatprep.subr.mxu0 0.0
  %329 = vmatpush1.msra.mxu0 0.0
  %330 = vmatprep.subr.mxu0 0.0
  %331 = vmatpush1.msra.mxu0 0.0
  %332 = vmatprep.subr.mxu0 0.0
  %333 = vmatpush1.msra.mxu0 0.0
  %334 = vmatprep.subr.mxu0 0.0
  %335 = vmatpush1.msra.mxu0 0.0
  %336 = vmatprep.subr.mxu0 0.0
  %337 = vmatpush1.msra.mxu0 0.0
  %338 = vmatprep.subr.mxu0 0.0
  %339 = vmatpush1.msra.mxu0 0.0
  %340 = vmatprep.subr.mxu0 0.0
  %341 = vmatpush1.msra.mxu0 0.0
  %342 = vmatprep.subr.mxu0 0.0
  %343 = vmatpush1.msra.mxu0 0.0
  %344 = vmatprep.subr.mxu0 0.0
  %345 = vmatpush1.msra.mxu0 0.0
  %346 = vmatprep.mubr.f32.mxu0 0.0
  %347 = vmatmul.mubr.f32.gmra.mrb[0].mxu0 %v101
  %v348 = vpop.f32.mrb[0].mxu0
  %v349 = vadd.f32 %v86, %v348
  %v350 = vpop.f32.mrb[0].mxu0
  %v351 = vadd.f32 %v90, %v350
  %352 = vmatprep.mubr.f32.mxu0 0.0
  %353 = vmatmul.mubr.f32.gmra.mrb[0].mxu0 %v104
  %v354 = vpop.f32.mrb[0].mxu0
  %v355 = vadd.f32 %v86, %v354
  %v356 = vpop.f32.mrb[0].mxu0
  %v357 = vadd.f32 %v90, %v356
  %358 = vmatprep.mubr.f32.mxu0 0.0
  %359 = vmatmul.mubr.f32.gmra.mrb[0].mxu0 %v107
  %v360 = vpop.f32.mrb[0].mxu0
  %v361 = vadd.f32 %v86, %v360
  %v362 = vpop.f32.mrb[0].mxu0
  %v363 = vadd.f32 %v90, %v362
  %364 = vmatprep.mubr.f32.mxu0 0.0
  %365 = vmatmul.mubr.f32.gmra.mrb[0].mxu0 %v110
  %v366 = vpop.f32.mrb[0].mxu0
  %v367 = vadd.f32 %v86, %v366
  %v368 = vpop.f32.mrb[0].mxu0
  %v369 = vadd.f32 %v90, %v368
  %370 = vmatprep.mubr.f32.mxu0 0.0
  %371 = vmatmul.mubr.f32.gmra.mrb[0].mxu0 %v113
  %v372 = vpop.f32.mrb[0].mxu0
  %v373 = vadd.f32 %v86, %v372
  %v374 = vpop.f32.mrb[0].mxu0
  %v375 = vadd.f32 %v90, %v374
  %376 = vmatprep.mubr.f32.mxu0 0.0
  %377 = vmatmul.mubr.f32.gmra.mrb[0].mxu0 %v116
  %v378 = vpop.f32.mrb[0].mxu0
  %v379 = vadd.f32 %v86, %v378
  %v380 = vpop.f32.mrb[0].mxu0
  %v381 = vadd.f32 %v90, %v380
  %382 = vmatprep.mubr.f32.mxu0 0.0
  %383 = vmatmul.mubr.f32.gmra.mrb[0].mxu0 %v119
  %v384 = vpop.f32.mrb[0].mxu0
  %v385 = vadd.f32 %v86, %v384
  %v386 = vpop.f32.mrb[0].mxu0
  %v387 = vadd.f32 %v90, %v386
  %388 = vmatprep.mubr.f32.mxu0 0.0
  %389 = vmatmul.mubr.f32.gmra.mrb[0].mxu0 %v122
  %v390 = vpop.f32.mrb[0].mxu0
  %v391 = vadd.f32 %v86, %v390
  %v392 = vpop.f32.mrb[0].mxu0
  %v393 = vadd.f32 %v90, %v392
  %394 = vmatprep.mubr.f32.mxu0 0.0
  %395 = vmatmul.mubr.f32.gmra.mrb[0].mxu0 %v125
  %v396 = vpop.f32.mrb[0].mxu0
  %v397 = vadd.f32 %v86, %v396
  %v398 = vpop.f32.mrb[0].mxu0
  %v399 = vadd.f32 %v90, %v398
  %400 = vmatprep.mubr.f32.mxu0 0.0
  %401 = vmatmul.mubr.f32.gmra.mrb[0].mxu0 %v128
  %v402 = vpop.f32.mrb[0].mxu0
  %v403 = vadd.f32 %v86, %v402
  %v404 = vpop.f32.mrb[0].mxu0
  %v405 = vadd.f32 %v90, %v404
  %406 = vmatprep.mubr.f32.mxu0 0.0
  %407 = vmatmul.mubr.f32.gmra.mrb[0].mxu0 %v131
  %v408 = vpop.f32.mrb[0].mxu0
  %v409 = vadd.f32 %v86, %v408
  %v410 = vpop.f32.mrb[0].mxu0
  %v411 = vadd.f32 %v90, %v410
  %412 = vmatprep.mubr.f32.mxu0 0.0
  %413 = vmatmul.mubr.f32.gmra.mrb[0].mxu0 %v134
  %v414 = vpop.f32.mrb[0].mxu0
  %v415 = vadd.f32 %v86, %v414
  %v416 = vpop.f32.mrb[0].mxu0
  %v417 = vadd.f32 %v90, %v416
  %418 = vdwg.mxu0
  %419 = vst [vmem:[#allocation2] sm:$0xff] %v212
  %420 = vst [vmem:[#allocation2 + $0x8] sm:$0xff] %v214
  %421 = vst [vmem:[#allocation2 + $0x10] sm:$0xff] %v349
  %422 = vst [vmem:[#allocation2 + $0x18] sm:$0xff] %v351
  %423 = vst [vmem:[#allocation2 + $0x20] sm:$0xff] %v218
  %424 = vst [vmem:[#allocation2 + $0x28] sm:$0xff] %v220
  %425 = vst [vmem:[#allocation2 + $0x30] sm:$0xff] %v355
  %426 = vst [vmem:[#allocation2 + $0x38] sm:$0xff] %v357
  %427 = vst [vmem:[#allocation2 + $0x40] sm:$0xff] %v224
  %428 = vst [vmem:[#allocation2 + $0x48] sm:$0xff] %v226
  %429 = vst [vmem:[#allocation2 + $0x50] sm:$0xff] %v361
  %430 = vst [vmem:[#allocation2 + $0x58] sm:$0xff] %v363
  %431 = vst [vmem:[#allocation2 + $0x60] sm:$0xff] %v230
  %432 = vst [vmem:[#allocation2 + $0x68] sm:$0xff] %v232
  %433 = vst [vmem:[#allocation2 + $0x70] sm:$0xff] %v367
  %434 = vst [vmem:[#allocation2 + $0x78] sm:$0xff] %v369
  %435 = vst [vmem:[#allocation2 + $0x80] sm:$0xff] %v236
  %436 = vst [vmem:[#allocation2 + $0x88] sm:$0xff] %v238
  %437 = vst [vmem:[#allocation2 + $0x90] sm:$0xff] %v373
  %438 = vst [vmem:[#allocation2 + $0x98] sm:$0xff] %v375
  %439 = vst [vmem:[#allocation2 + $0xa0] sm:$0xff] %v242
  %440 = vst [vmem:[#allocation2 + $0xa8] sm:$0xff] %v244
  %441 = vst [vmem:[#allocation2 + $0xb0] sm:$0xff] %v379
  %442 = vst [vmem:[#allocation2 + $0xb8] sm:$0xff] %v381
  %443 = vst [vmem:[#allocation2 + $0xc0] sm:$0xff] %v248
  %444 = vst [vmem:[#allocation2 + $0xc8] sm:$0xff] %v250
  %445 = vst [vmem:[#allocation2 + $0xd0] sm:$0xff] %v385
  %446 = vst [vmem:[#allocation2 + $0xd8] sm:$0xff] %v387
  %447 = vst [vmem:[#allocation2 + $0xe0] sm:$0xff] %v254
  %448 = vst [vmem:[#allocation2 + $0xe8] sm:$0xff] %v256
  %449 = vst [vmem:[#allocation2 + $0xf0] sm:$0xff] %v391
  %450 = vst [vmem:[#allocation2 + $0xf8] sm:$0xff] %v393
  %451 = vst [vmem:[#allocation2 + $0x100] sm:$0xff] %v260
  %452 = vst [vmem:[#allocation2 + $0x108] sm:$0xff] %v262
  %453 = vst [vmem:[#allocation2 + $0x110] sm:$0xff] %v397
  %454 = vst [vmem:[#allocation2 + $0x118] sm:$0xff] %v399
  %455 = vst [vmem:[#allocation2 + $0x120] sm:$0xff] %v266
  %456 = vst [vmem:[#allocation2 + $0x128] sm:$0xff] %v268
  %457 = vst [vmem:[#allocation2 + $0x130] sm:$0xff] %v403
  %458 = vst [vmem:[#allocation2 + $0x138] sm:$0xff] %v405
  %459 = vst [vmem:[#allocation2 + $0x140] sm:$0xff] %v272
  %460 = vst [vmem:[#allocation2 + $0x148] sm:$0xff] %v274
  %461 = vst [vmem:[#allocation2 + $0x150] sm:$0xff] %v409
  %462 = vst [vmem:[#allocation2 + $0x158] sm:$0xff] %v411
  %463 = vst [vmem:[#allocation2 + $0x160] sm:$0xff] %v278
  %464 = vst [vmem:[#allocation2 + $0x168] sm:$0xff] %v280
  %465 = vst [vmem:[#allocation2 + $0x170] sm:$0xff] %v415
  %466 = vst [vmem:[#allocation2 + $0x178] sm:$0xff] %v417
  %v467 = vld [vmem:[#allocation2] sm:$0xff]
  %v468 = vld [vmem:[#allocation2 + $0x8] sm:$0xff]
  %v469 = vld [vmem:[#allocation2 + $0x10] sm:$0xff]
  %v470 = vld [vmem:[#allocation2 + $0x18] sm:$0xff]
  %v471 = vld [vmem:[%s3] sm:$0xff]
  %v472 = vld [vmem:[%s3 + $0x8] sm:$0xff]
  %v473 = vld [vmem:[%s3 + $0x10] sm:$0xff]
  %v474 = vld [vmem:[%s3 + $0x18] sm:$0xff]
  %v475 = vld [vmem:[%s3 + $0x20] sm:$0xff]
  %v476 = vld [vmem:[%s3 + $0x28] sm:$0xff]
  %v477 = vld [vmem:[%s3 + $0x30] sm:$0xff]
  %v478 = vld [vmem:[%s3 + $0x38] sm:$0xff]
  %v479 = vld [vmem:[%s3 + $0x40] sm:$0xff]
  %v480 = vld [vmem:[%s3 + $0x48] sm:$0xff]
  %v481 = vld [vmem:[%s3 + $0x50] sm:$0xff]
  %v482 = vld [vmem:[%s3 + $0x58] sm:$0xff]
  %v483 = vld [vmem:[%s3 + $0x60] sm:$0xff]
  %v484 = vld [vmem:[%s3 + $0x68] sm:$0xff]
  %v485 = vld [vmem:[%s3 + $0x70] sm:$0xff]
  %v486 = vld [vmem:[%s3 + $0x78] sm:$0xff]
  %v487 = vld [vmem:[%s3 + $0x80] sm:$0xff]
  %v488 = vld [vmem:[%s3 + $0x88] sm:$0xff]
  %v489 = vld [vmem:[%s3 + $0x90] sm:$0xff]
  %v490 = vld [vmem:[%s3 + $0x98] sm:$0xff]
  %v491 = vld [vmem:[%s3 + $0xa0] sm:$0xff]
  %v492 = vld [vmem:[%s3 + $0xa8] sm:$0xff]
  %v493 = vld [vmem:[%s3 + $0xb0] sm:$0xff]
  %v494 = vld [vmem:[%s3 + $0xb8] sm:$0xff]
  %v495 = vld [vmem:[%s3 + $0xc0] sm:$0xff]
  %v496 = vld [vmem:[%s3 + $0xc8] sm:$0xff]
  %v497 = vld [vmem:[%s3 + $0xd0] sm:$0xff]
  %v498 = vld [vmem:[%s3 + $0xd8] sm:$0xff]
  %v499 = vld [vmem:[%s3 + $0xe0] sm:$0xff]
  %v500 = vld [vmem:[%s3 + $0xe8] sm:$0xff]
  %v501 = vld [vmem:[%s3 + $0xf0] sm:$0xff]
  %v502 = vld [vmem:[%s3 + $0xf8] sm:$0xff]
  %v503 = vld [vmem:[%s3 + $0x100] sm:$0xff]
  %v504 = vld [vmem:[%s3 + $0x108] sm:$0xff]
  %v505 = vld [vmem:[%s3 + $0x110] sm:$0xff]
  %v506 = vld [vmem:[%s3 + $0x118] sm:$0xff]
  %v507 = vld [vmem:[%s3 + $0x120] sm:$0xff]
  %v508 = vld [vmem:[%s3 + $0x128] sm:$0xff]
  %v509 = vld [vmem:[%s3 + $0x130] sm:$0xff]
  %v510 = vld [vmem:[%s3 + $0x138] sm:$0xff]
  %v511 = vld [vmem:[%s3 + $0x140] sm:$0xff]
  %v512 = vld [vmem:[%s3 + $0x148] sm:$0xff]
  %v513 = vld [vmem:[%s3 + $0x150] sm:$0xff]
  %v514 = vld [vmem:[%s3 + $0x158] sm:$0xff]
  %v515 = vld [vmem:[%s3 + $0x160] sm:$0xff]
  %v516 = vld [vmem:[%s3 + $0x168] sm:$0xff]
  %v517 = vld [vmem:[%s3 + $0x170] sm:$0xff]
  %v518 = vld [vmem:[%s3 + $0x178] sm:$0xff]
  %v519 = vld [vmem:[%s3 + $0x180] sm:$0xff]
  %v520 = vld [vmem:[%s3 + $0x188] sm:$0xff]
  %v521 = vld [vmem:[%s3 + $0x190] sm:$0xff]
  %v522 = vld [vmem:[%s3 + $0x198] sm:$0xff]
  %v523 = vld [vmem:[%s3 + $0x1a0] sm:$0xff]
  %v524 = vld [vmem:[%s3 + $0x1a8] sm:$0xff]
  %v525 = vld [vmem:[%s3 + $0x1b0] sm:$0xff]
  %v526 = vld [vmem:[%s3 + $0x1b8] sm:$0xff]
  %v527 = vld [vmem:[%s3 + $0x1c0] sm:$0xff]
  %v528 = vld [vmem:[%s3 + $0x1c8] sm:$0xff]
  %v529 = vld [vmem:[%s3 + $0x1d0] sm:$0xff]
  %v530 = vld [vmem:[%s3 + $0x1d8] sm:$0xff]
  %v531 = vld [vmem:[%s3 + $0x1e0] sm:$0xff]
  %v532 = vld [vmem:[%s3 + $0x1e8] sm:$0xff]
  %v533 = vld [vmem:[%s3 + $0x1f0] sm:$0xff]
  %v534 = vld [vmem:[%s3 + $0x1f8] sm:$0xff]
  %535 = vmatprep.subr.mxu0 %v472
  %536 = vmatpush1.msra.mxu0 %v471
  %537 = vmatprep.subr.mxu0 %v476
  %538 = vmatpush1.msra.mxu0 %v475
  %539 = vmatprep.subr.mxu0 %v480
  %540 = vmatpush1.msra.mxu0 %v479
  %541 = vmatprep.subr.mxu0 %v484
  %542 = vmatpush1.msra.mxu0 %v483
  %543 = vmatprep.subr.mxu0 %v488
  %544 = vmatpush1.msra.mxu0 %v487
  %545 = vmatprep.subr.mxu0 %v492
  %546 = vmatpush1.msra.mxu0 %v491
  %547 = vmatprep.subr.mxu0 %v496
  %548 = vmatpush1.msra.mxu0 %v495
  %549 = vmatprep.subr.mxu0 %v500
  %550 = vmatpush1.msra.mxu0 %v499
  %551 = vmatprep.subr.mxu0 %v504
  %552 = vmatpush1.msra.mxu0 %v503
  %553 = vmatprep.subr.mxu0 %v508
  %554 = vmatpush1.msra.mxu0 %v507
  %555 = vmatprep.subr.mxu0 %v512
  %556 = vmatpush1.msra.mxu0 %v511
  %557 = vmatprep.subr.mxu0 %v516
  %558 = vmatpush1.msra.mxu0 %v515
  %559 = vmatprep.subr.mxu0 %v520
  %560 = vmatpush1.msra.mxu0 %v519
  %561 = vmatprep.subr.mxu0 %v524
  %562 = vmatpush1.msra.mxu0 %v523
  %563 = vmatprep.subr.mxu0 %v528
  %564 = vmatpush1.msra.mxu0 %v527
  %565 = vmatprep.subr.mxu0 %v532
  %566 = vmatpush1.msra.mxu0 %v531
  %567 = vmatprep.subr.mxu0 0.0
  %568 = vmatpush1.msra.mxu0 0.0
  %569 = vmatprep.subr.mxu0 0.0
  %570 = vmatpush1.msra.mxu0 0.0
  %571 = vmatprep.subr.mxu0 0.0
  %572 = vmatpush1.msra.mxu0 0.0
  %573 = vmatprep.subr.mxu0 0.0
  %574 = vmatpush1.msra.mxu0 0.0
  %575 = vmatprep.subr.mxu0 0.0
  %576 = vmatpush1.msra.mxu0 0.0
  %577 = vmatprep.subr.mxu0 0.0
  %578 = vmatpush1.msra.mxu0 0.0
  %579 = vmatprep.subr.mxu0 0.0
  %580 = vmatpush1.msra.mxu0 0.0
  %581 = vmatprep.subr.mxu0 0.0
  %582 = vmatpush1.msra.mxu0 0.0
  %583 = vmatprep.subr.mxu0 0.0
  %584 = vmatpush1.msra.mxu0 0.0
  %585 = vmatprep.subr.mxu0 0.0
  %586 = vmatpush1.msra.mxu0 0.0
  %587 = vmatprep.subr.mxu0 0.0
  %588 = vmatpush1.msra.mxu0 0.0
  %589 = vmatprep.subr.mxu0 0.0
  %590 = vmatpush1.msra.mxu0 0.0
  %591 = vmatprep.subr.mxu0 0.0
  %592 = vmatpush1.msra.mxu0 0.0
  %593 = vmatprep.subr.mxu0 0.0
  %594 = vmatpush1.msra.mxu0 0.0
  %595 = vmatprep.subr.mxu0 0.0
  %596 = vmatpush1.msra.mxu0 0.0
  %597 = vmatprep.subr.mxu0 0.0
  %598 = vmatpush1.msra.mxu0 0.0
  %599 = vmatprep.mubr.f32.mxu0 0.0
  %600 = vmatmul.mubr.f32.gmra.mrb[0].mxu0 0.0
  %v601 = vpop.f32.mrb[0].mxu0
  %v602 = vadd.f32 0.0, %v601
  %v603 = vpop.f32.mrb[0].mxu0
  %v604 = vadd.f32 0.0, %v603
  %605 = vdwg.mxu0
  %606 = vmatprep.subr.mxu0 %v474
  %607 = vmatpush1.msra.mxu0 %v473
  %608 = vmatprep.subr.mxu0 %v478
  %609 = vmatpush1.msra.mxu0 %v477
  %610 = vmatprep.subr.mxu0 %v482
  %611 = vmatpush1.msra.mxu0 %v481
  %612 = vmatprep.subr.mxu0 %v486
  %613 = vmatpush1.msra.mxu0 %v485
  %614 = vmatprep.subr.mxu0 %v490
  %615 = vmatpush1.msra.mxu0 %v489
  %616 = vmatprep.subr.mxu0 %v494
  %617 = vmatpush1.msra.mxu0 %v493
  %618 = vmatprep.subr.mxu0 %v498
  %619 = vmatpush1.msra.mxu0 %v497
  %620 = vmatprep.subr.mxu0 %v502
  %621 = vmatpush1.msra.mxu0 %v501
  %622 = vmatprep.subr.mxu0 %v506
  %623 = vmatpush1.msra.mxu0 %v505
  %624 = vmatprep.subr.mxu0 %v510
  %625 = vmatpush1.msra.mxu0 %v509
  %626 = vmatprep.subr.mxu0 %v514
  %627 = vmatpush1.msra.mxu0 %v513
  %628 = vmatprep.subr.mxu0 %v518
  %629 = vmatpush1.msra.mxu0 %v517
  %630 = vmatprep.subr.mxu0 %v522
  %631 = vmatpush1.msra.mxu0 %v521
  %632 = vmatprep.subr.mxu0 %v526
  %633 = vmatpush1.msra.mxu0 %v525
  %634 = vmatprep.subr.mxu0 %v530
  %635 = vmatpush1.msra.mxu0 %v529
  %636 = vmatprep.subr.mxu0 %v534
  %637 = vmatpush1.msra.mxu0 %v533
  %638 = vmatprep.subr.mxu0 0.0
  %639 = vmatpush1.msra.mxu0 0.0
  %640 = vmatprep.subr.mxu0 0.0
  %641 = vmatpush1.msra.mxu0 0.0
  %642 = vmatprep.subr.mxu0 0.0
  %643 = vmatpush1.msra.mxu0 0.0
  %644 = vmatprep.subr.mxu0 0.0
  %645 = vmatpush1.msra.mxu0 0.0
  %646 = vmatprep.subr.mxu0 0.0
  %647 = vmatpush1.msra.mxu0 0.0
  %648 = vmatprep.subr.mxu0 0.0
  %649 = vmatpush1.msra.mxu0 0.0
  %650 = vmatprep.subr.mxu0 0.0
  %651 = vmatpush1.msra.mxu0 0.0
  %652 = vmatprep.subr.mxu0 0.0
  %653 = vmatpush1.msra.mxu0 0.0
  %654 = vmatprep.subr.mxu0 0.0
  %655 = vmatpush1.msra.mxu0 0.0
  %656 = vmatprep.subr.mxu0 0.0
  %657 = vmatpush1.msra.mxu0 0.0
  %658 = vmatprep.subr.mxu0 0.0
  %659 = vmatpush1.msra.mxu0 0.0
  %660 = vmatprep.subr.mxu0 0.0
  %661 = vmatpush1.msra.mxu0 0.0
  %662 = vmatprep.subr.mxu0 0.0
  %663 = vmatpush1.msra.mxu0 0.0
  %664 = vmatprep.subr.mxu0 0.0
  %665 = vmatpush1.msra.mxu0 0.0
  %666 = vmatprep.subr.mxu0 0.0
  %667 = vmatpush1.msra.mxu0 0.0
  %668 = vmatprep.subr.mxu0 0.0
  %669 = vmatpush1.msra.mxu0 0.0
  %670 = vmatprep.mubr.f32.mxu0 0.0
  %671 = vmatmul.mubr.f32.gmra.mrb[0].mxu0 0.0
  %v672 = vpop.f32.mrb[0].mxu0
  %v673 = vadd.f32 0.0, %v672
  %v674 = vpop.f32.mrb[0].mxu0
  %v675 = vadd.f32 0.0, %v674
  %676 = vdwg.mxu0
  %v677 = vadd.f32 %v467, %v602
  %v678 = vadd.f32 %v468, %v604
  %v679 = vadd.f32 %v469, %v673
  %v680 = vadd.f32 %v470, %v675
  %v681 = vxor.u32 %v677, 2147483648
  %v682 = vxor.u32 %v678, 2147483648
  %v683 = vmul.f32 %v681, 1.442695
  %v684 = vpow.pop %v683
  %v685 = vmul.f32 %v682, 1.442695
  %v686 = vpow.pop %v685
  %v687 = vadd.f32 %v684, 1.0
  %v688 = vadd.f32 %v686, 1.0
  %v689 = vrcp.pop %v687
  %v690 = vmul.f32 1.0, %v689
  %v691 = vrcp.pop %v688
  %v692 = vmul.f32 1.0, %v691
  %v693 = vxor.u32 %v680, 2147483648
  %v694 = vmul.f32 %v693, 1.442695
  %v695 = vpow.pop %v694
  %v696 = vadd.f32 %v695, 1.0
  %v697 = vrcp.pop %v696
  %v698 = vmul.f32 1.0, %v697
  %v699 = vtanh.pop %v679
  %v700 = vmul.f32 %v692, 0.0
  %v701 = vmul.f32 %v690, %v699
  %v702 = vadd.f32 %v700, %v701
  %v703 = vtanh.pop %v702
  %v704 = vmul.f32 %v698, %v703
  %705 = vst [vmem:[#allocation3] sm:$0xff] %v704
  %v706 = vld [vmem:[#allocation2 + $0x20] sm:$0xff]
  %v707 = vld [vmem:[#allocation2 + $0x28] sm:$0xff]
  %v708 = vld [vmem:[#allocation2 + $0x30] sm:$0xff]
  %v709 = vld [vmem:[#allocation2 + $0x38] sm:$0xff]
  %v710 = vld [vmem:[%s3] sm:$0xff]
  %v711 = vld [vmem:[%s3 + $0x8] sm:$0xff]
  %v712 = vld [vmem:[%s3 + $0x10] sm:$0xff]
  %v713 = vld [vmem:[%s3 + $0x18] sm:$0xff]
  %v714 = vld [vmem:[%s3 + $0x20] sm:$0xff]
  %v715 = vld [vmem:[%s3 + $0x28] sm:$0xff]
  %v716 = vld [vmem:[%s3 + $0x30] sm:$0xff]
  %v717 = vld [vmem:[%s3 + $0x38] sm:$0xff]
  %v718 = vld [vmem:[%s3 + $0x40] sm:$0xff]
  %v719 = vld [vmem:[%s3 + $0x48] sm:$0xff]
  %v720 = vld [vmem:[%s3 + $0x50] sm:$0xff]
  %v721 = vld [vmem:[%s3 + $0x58] sm:$0xff]
  %v722 = vld [vmem:[%s3 + $0x60] sm:$0xff]
  %v723 = vld [vmem:[%s3 + $0x68] sm:$0xff]
  %v724 = vld [vmem:[%s3 + $0x70] sm:$0xff]
  %v725 = vld [vmem:[%s3 + $0x78] sm:$0xff]
  %v726 = vld [vmem:[%s3 + $0x80] sm:$0xff]
  %v727 = vld [vmem:[%s3 + $0x88] sm:$0xff]
  %v728 = vld [vmem:[%s3 + $0x90] sm:$0xff]
  %v729 = vld [vmem:[%s3 + $0x98] sm:$0xff]
  %v730 = vld [vmem:[%s3 + $0xa0] sm:$0xff]
  %v731 = vld [vmem:[%s3 + $0xa8] sm:$0xff]
  %v732 = vld [vmem:[%s3 + $0xb0] sm:$0xff]
  %v733 = vld [vmem:[%s3 + $0xb8] sm:$0xff]
  %v734 = vld [vmem:[%s3 + $0xc0] sm:$0xff]
  %v735 = vld [vmem:[%s3 + $0xc8] sm:$0xff]
  %v736 = vld [vmem:[%s3 + $0xd0] sm:$0xff]
  %v737 = vld [vmem:[%s3 + $0xd8] sm:$0xff]
  %v738 = vld [vmem:[%s3 + $0xe0] sm:$0xff]
  %v739 = vld [vmem:[%s3 + $0xe8] sm:$0xff]
  %v740 = vld [vmem:[%s3 + $0xf0] sm:$0xff]
  %v741 = vld [vmem:[%s3 + $0xf8] sm:$0xff]
  %v742 = vld [vmem:[%s3 + $0x100] sm:$0xff]
  %v743 = vld [vmem:[%s3 + $0x108] sm:$0xff]
  %v744 = vld [vmem:[%s3 + $0x110] sm:$0xff]
  %v745 = vld [vmem:[%s3 + $0x118] sm:$0xff]
  %v746 = vld [vmem:[%s3 + $0x120] sm:$0xff]
  %v747 = vld [vmem:[%s3 + $0x128] sm:$0xff]
  %v748 = vld [vmem:[%s3 + $0x130] sm:$0xff]
  %v749 = vld [vmem:[%s3 + $0x138] sm:$0xff]
  %v750 = vld [vmem:[%s3 + $0x140] sm:$0xff]
  %v751 = vld [vmem:[%s3 + $0x148] sm:$0xff]
  %v752 = vld [vmem:[%s3 + $0x150] sm:$0xff]
  %v753 = vld [vmem:[%s3 + $0x158] sm:$0xff]
  %v754 = vld [vmem:[%s3 + $0x160] sm:$0xff]
  %v755 = vld [vmem:[%s3 + $0x168] sm:$0xff]
  %v756 = vld [vmem:[%s3 + $0x170] sm:$0xff]
  %v757 = vld [vmem:[%s3 + $0x178] sm:$0xff]
  %v758 = vld [vmem:[%s3 + $0x180] sm:$0xff]
  %v759 = vld [vmem:[%s3 + $0x188] sm:$0xff]
  %v760 = vld [vmem:[%s3 + $0x190] sm:$0xff]
  %v761 = vld [vmem:[%s3 + $0x198] sm:$0xff]
  %v762 = vld [vmem:[%s3 + $0x1a0] sm:$0xff]
  %v763 = vld [vmem:[%s3 + $0x1a8] sm:$0xff]
  %v764 = vld [vmem:[%s3 + $0x1b0] sm:$0xff]
  %v765 = vld [vmem:[%s3 + $0x1b8] sm:$0xff]
  %v766 = vld [vmem:[%s3 + $0x1c0] sm:$0xff]
  %v767 = vld [vmem:[%s3 + $0x1c8] sm:$0xff]
  %v768 = vld [vmem:[%s3 + $0x1d0] sm:$0xff]
  %v769 = vld [vmem:[%s3 + $0x1d8] sm:$0xff]
  %v770 = vld [vmem:[%s3 + $0x1e0] sm:$0xff]
  %v771 = vld [vmem:[%s3 + $0x1e8] sm:$0xff]
  %v772 = vld [vmem:[%s3 + $0x1f0] sm:$0xff]
  %v773 = vld [vmem:[%s3 + $0x1f8] sm:$0xff]
  %774 = vmatprep.subr.mxu0 %v711
  %775 = vmatpush1.msra.mxu0 %v710
  %776 = vmatprep.subr.mxu0 %v715
  %777 = vmatpush1.msra.mxu0 %v714
  %778 = vmatprep.subr.mxu0 %v719
  %779 = vmatpush1.msra.mxu0 %v718
  %780 = vmatprep.subr.mxu0 %v723
  %781 = vmatpush1.msra.mxu0 %v722
  %782 = vmatprep.subr.mxu0 %v727
  %783 = vmatpush1.msra.mxu0 %v726
  %784 = vmatprep.subr.mxu0 %v731
  %785 = vmatpush1.msra.mxu0 %v730
  %786 = vmatprep.subr.mxu0 %v735
  %787 = vmatpush1.msra.mxu0 %v734
  %788 = vmatprep.subr.mxu0 %v739
  %789 = vmatpush1.msra.mxu0 %v738
  %790 = vmatprep.subr.mxu0 %v743
  %791 = vmatpush1.msra.mxu0 %v742
  %792 = vmatprep.subr.mxu0 %v747
  %793 = vmatpush1.msra.mxu0 %v746
  %794 = vmatprep.subr.mxu0 %v751
  %795 = vmatpush1.msra.mxu0 %v750
  %796 = vmatprep.subr.mxu0 %v755
  %797 = vmatpush1.msra.mxu0 %v754
  %798 = vmatprep.subr.mxu0 %v759
  %799 = vmatpush1.msra.mxu0 %v758
  %800 = vmatprep.subr.mxu0 %v763
  %801 = vmatpush1.msra.mxu0 %v762
  %802 = vmatprep.subr.mxu0 %v767
  %803 = vmatpush1.msra.mxu0 %v766
  %804 = vmatprep.subr.mxu0 %v771
  %805 = vmatpush1.msra.mxu0 %v770
  %806 = vmatprep.subr.mxu0 0.0
  %807 = vmatpush1.msra.mxu0 0.0
  %808 = vmatprep.subr.mxu0 0.0
  %809 = vmatpush1.msra.mxu0 0.0
  %810 = vmatprep.subr.mxu0 0.0
  %811 = vmatpush1.msra.mxu0 0.0
  %812 = vmatprep.subr.mxu0 0.0
  %813 = vmatpush1.msra.mxu0 0.0
  %814 = vmatprep.subr.mxu0 0.0
  %815 = vmatpush1.msra.mxu0 0.0
  %816 = vmatprep.subr.mxu0 0.0
  %817 = vmatpush1.msra.mxu0 0.0
  %818 = vmatprep.subr.mxu0 0.0
  %819 = vmatpush1.msra.mxu0 0.0
  %820 = vmatprep.subr.mxu0 0.0
  %821 = vmatpush1.msra.mxu0 0.0
  %822 = vmatprep.subr.mxu0 0.0
  %823 = vmatpush1.msra.mxu0 0.0
  %824 = vmatprep.subr.mxu0 0.0
  %825 = vmatpush1.msra.mxu0 0.0
  %826 = vmatprep.subr.mxu0 0.0
  %827 = vmatpush1.msra.mxu0 0.0
  %828 = vmatprep.subr.mxu0 0.0
  %829 = vmatpush1.msra.mxu0 0.0
  %830 = vmatprep.subr.mxu0 0.0
  %831 = vmatpush1.msra.mxu0 0.0
  %832 = vmatprep.subr.mxu0 0.0
  %833 = vmatpush1.msra.mxu0 0.0
  %834 = vmatprep.subr.mxu0 0.0
  %835 = vmatpush1.msra.mxu0 0.0
  %836 = vmatprep.subr.mxu0 0.0
  %837 = vmatpush1.msra.mxu0 0.0
  %838 = vmatprep.mubr.f32.mxu0 0.0
  %839 = vmatmul.mubr.f32.gmra.mrb[0].mxu0 %v704
  %v840 = vpop.f32.mrb[0].mxu0
  %v841 = vadd.f32 0.0, %v840
  %v842 = vpop.f32.mrb[0].mxu0
  %v843 = vadd.f32 0.0, %v842
  %844 = vdwg.mxu0
  %845 = vmatprep.subr.mxu0 %v713
  %846 = vmatpush1.msra.mxu0 %v712
  %847 = vmatprep.subr.mxu0 %v717
  %848 = vmatpush1.msra.mxu0 %v716
  %849 = vmatprep.subr.mxu0 %v721
  %850 = vmatpush1.msra.mxu0 %v720
  %851 = vmatprep.subr.mxu0 %v725
  %852 = vmatpush1.msra.mxu0 %v724
  %853 = vmatprep.subr.mxu0 %v729
  %854 = vmatpush1.msra.mxu0 %v728
  %855 = vmatprep.subr.mxu0 %v733
  %856 = vmatpush1.msra.mxu0 %v732
  %857 = vmatprep.subr.mxu0 %v737
  %858 = vmatpush1.msra.mxu0 %v736
  %859 = vmatprep.subr.mxu0 %v741
  %860 = vmatpush1.msra.mxu0 %v740
  %861 = vmatprep.subr.mxu0 %v745
  %862 = vmatpush1.msra.mxu0 %v744
  %863 = vmatprep.subr.mxu0 %v749
  %864 = vmatpush1.msra.mxu0 %v748
  %865 = vmatprep.subr.mxu0 %v753
  %866 = vmatpush1.msra.mxu0 %v752
  %867 = vmatprep.subr.mxu0 %v757
  %868 = vmatpush1.msra.mxu0 %v756
  %869 = vmatprep.subr.mxu0 %v761
  %870 = vmatpush1.msra.mxu0 %v760
  %871 = vmatprep.subr.mxu0 %v765
  %872 = vmatpush1.msra.mxu0 %v764
  %873 = vmatprep.subr.mxu0 %v769
  %874 = vmatpush1.msra.mxu0 %v768
  %875 = vmatprep.subr.mxu0 %v773
  %876 = vmatpush1.msra.mxu0 %v772
  %877 = vmatprep.subr.mxu0 0.0
  %878 = vmatpush1.msra.mxu0 0.0
  %879 = vmatprep.subr.mxu0 0.0
  %880 = vmatpush1.msra.mxu0 0.0
  %881 = vmatprep.subr.mxu0 0.0
  %882 = vmatpush1.msra.mxu0 0.0
  %883 = vmatprep.subr.mxu0 0.0
  %884 = vmatpush1.msra.mxu0 0.0
  %885 = vmatprep.subr.mxu0 0.0
  %886 = vmatpush1.msra.mxu0 0.0
  %887 = vmatprep.subr.mxu0 0.0
  %888 = vmatpush1.msra.mxu0 0.0
  %889 = vmatprep.subr.mxu0 0.0
  %890 = vmatpush1.msra.mxu0 0.0
  %891 = vmatprep.subr.mxu0 0.0
  %892 = vmatpush1.msra.mxu0 0.0
  %893 = vmatprep.subr.mxu0 0.0
  %894 = vmatpush1.msra.mxu0 0.0
  %895 = vmatprep.subr.mxu0 0.0
  %896 = vmatpush1.msra.mxu0 0.0
  %897 = vmatprep.subr.mxu0 0.0
  %898 = vmatpush1.msra.mxu0 0.0
  %899 = vmatprep.subr.mxu0 0.0
  %900 = vmatpush1.msra.mxu0 0.0
  %901 = vmatprep.subr.mxu0 0.0
  %902 = vmatpush1.msra.mxu0 0.0
  %903 = vmatprep.subr.mxu0 0.0
  %904 = vmatpush1.msra.mxu0 0.0
  %905 = vmatprep.subr.mxu0 0.0
  %906 = vmatpush1.msra.mxu0 0.0
  %907 = vmatprep.subr.mxu0 0.0
  %908 = vmatpush1.msra.mxu0 0.0
  %909 = vmatprep.mubr.f32.mxu0 0.0
  %910 = vmatmul.mubr.f32.gmra.mrb[0].mxu0 %v704
  %v911 = vpop.f32.mrb[0].mxu0
  %v912 = vadd.f32 0.0, %v911
  %v913 = vpop.f32.mrb[0].mxu0
  %v914 = vadd.f32 0.0, %v913
  %915 = vdwg.mxu0
  %v916 = vadd.f32 %v706, %v841
  %v917 = vadd.f32 %v707, %v843
  %v918 = vadd.f32 %v708, %v912
  %v919 = vadd.f32 %v709, %v914
  %v920 = vxor.u32 %v916, 2147483648
  %v921 = vxor.u32 %v917, 2147483648
  %v922 = vmul.f32 %v920, 1.442695
  %v923 = vpow.pop %v922
  %v924 = vmul.f32 %v921, 1.442695
  %v925 = vpow.pop %v924
  %v926 = vadd.f32 %v923, 1.0
  %v927 = vadd.f32 %v925, 1.0
  %v928 = vrcp.pop %v926
  %v929 = vmul.f32 1.0, %v928
  %v930 = vrcp.pop %v927
  %v931 = vmul.f32 1.0, %v930
  %v932 = vxor.u32 %v919, 2147483648
  %v933 = vmul.f32 %v932, 1.442695
  %v934 = vpow.pop %v933
  %v935 = vadd.f32 %v934, 1.0
  %v936 = vrcp.pop %v935
  %v937 = vmul.f32 1.0, %v936
  %v938 = vtanh.pop %v918
  %v939 = vmul.f32 %v931, %v702
  %v940 = vmul.f32 %v929, %v938
  %v941 = vadd.f32 %v939, %v940
  %v942 = vtanh.pop %v941
  %v943 = vmul.f32 %v937, %v942
  %944 = vst [vmem:[#allocation3 + $0x8] sm:$0xff] %v943
  %v945 = vld [vmem:[#allocation2 + $0x40] sm:$0xff]
  %v946 = vld [vmem:[#allocation2 + $0x48] sm:$0xff]
  %v947 = vld [vmem:[#allocation2 + $0x50] sm:$0xff]
  %v948 = vld [vmem:[#allocation2 + $0x58] sm:$0xff]
  %v949 = vld [vmem:[%s3] sm:$0xff]
  %v950 = vld [vmem:[%s3 + $0x8] sm:$0xff]
  %v951 = vld [vmem:[%s3 + $0x10] sm:$0xff]
  %v952 = vld [vmem:[%s3 + $0x18] sm:$0xff]
  %v953 = vld [vmem:[%s3 + $0x20] sm:$0xff]
  %v954 = vld [vmem:[%s3 + $0x28] sm:$0xff]
  %v955 = vld [vmem:[%s3 + $0x30] sm:$0xff]
  %v956 = vld [vmem:[%s3 + $0x38] sm:$0xff]
  %v957 = vld [vmem:[%s3 + $0x40] sm:$0xff]
  %v958 = vld [vmem:[%s3 + $0x48] sm:$0xff]
  %v959 = vld [vmem:[%s3 + $0x50] sm:$0xff]
  %v960 = vld [vmem:[%s3 + $0x58] sm:$0xff]
  %v961 = vld [vmem:[%s3 + $0x60] sm:$0xff]
  %v962 = vld [vmem:[%s3 + $0x68] sm:$0xff]
  %v963 = vld [vmem:[%s3 + $0x70] sm:$0xff]
  %v964 = vld [vmem:[%s3 + $0x78] sm:$0xff]
  %v965 = vld [vmem:[%s3 + $0x80] sm:$0xff]
  %v966 = vld [vmem:[%s3 + $0x88] sm:$0xff]
  %v967 = vld [vmem:[%s3 + $0x90] sm:$0xff]
  %v968 = vld [vmem:[%s3 + $0x98] sm:$0xff]
  %v969 = vld [vmem:[%s3 + $0xa0] sm:$0xff]
  %v970 = vld [vmem:[%s3 + $0xa8] sm:$0xff]
  %v971 = vld [vmem:[%s3 + $0xb0] sm:$0xff]
  %v972 = vld [vmem:[%s3 + $0xb8] sm:$0xff]
  %v973 = vld [vmem:[%s3 + $0xc0] sm:$0xff]
  %v974 = vld [vmem:[%s3 + $0xc8] sm:$0xff]
  %v975 = vld [vmem:[%s3 + $0xd0] sm:$0xff]
  %v976 = vld [vmem:[%s3 + $0xd8] sm:$0xff]
  %v977 = vld [vmem:[%s3 + $0xe0] sm:$0xff]
  %v978 = vld [vmem:[%s3 + $0xe8] sm:$0xff]
  %v979 = vld [vmem:[%s3 + $0xf0] sm:$0xff]
  %v980 = vld [vmem:[%s3 + $0xf8] sm:$0xff]
  %v981 = vld [vmem:[%s3 + $0x100] sm:$0xff]
  %v982 = vld [vmem:[%s3 + $0x108] sm:$0xff]
  %v983 = vld [vmem:[%s3 + $0x110] sm:$0xff]
  %v984 = vld [vmem:[%s3 + $0x118] sm:$0xff]
  %v985 = vld [vmem:[%s3 + $0x120] sm:$0xff]
  %v986 = vld [vmem:[%s3 + $0x128] sm:$0xff]
  %v987 = vld [vmem:[%s3 + $0x130] sm:$0xff]
  %v988 = vld [vmem:[%s3 + $0x138] sm:$0xff]
  %v989 = vld [vmem:[%s3 + $0x140] sm:$0xff]
  %v990 = vld [vmem:[%s3 + $0x148] sm:$0xff]
  %v991 = vld [vmem:[%s3 + $0x150] sm:$0xff]
  %v992 = vld [vmem:[%s3 + $0x158] sm:$0xff]
  %v993 = vld [vmem:[%s3 + $0x160] sm:$0xff]
  %v994 = vld [vmem:[%s3 + $0x168] sm:$0xff]
  %v995 = vld [vmem:[%s3 + $0x170] sm:$0xff]
  %v996 = vld [vmem:[%s3 + $0x178] sm:$0xff]
  %v997 = vld [vmem:[%s3 + $0x180] sm:$0xff]
  %v998 = vld [vmem:[%s3 + $0x188] sm:$0xff]
  %v999 = vld [vmem:[%s3 + $0x190] sm:$0xff]
  %v1000 = vld [vmem:[%s3 + $0x198] sm:$0xff]
  %v1001 = vld [vmem:[%s3 + $0x1a0] sm:$0xff]
  %v1002 = vld [vmem:[%s3 + $0x1a8] sm:$0xff]
  %v1003 = vld [vmem:[%s3 + $0x1b0] sm:$0xff]
  %v1004 = vld [vmem:[%s3 + $0x1b8] sm:$0xff]
  %v1005 = vld [vmem:[%s3 + $0x1c0] sm:$0xff]
  %v1006 = vld [vmem:[%s3 + $0x1c8] sm:$0xff]
  %v1007 = vld [vmem:[%s3 + $0x1d0] sm:$0xff]
  %v1008 = vld [vmem:[%s3 + $0x1d8] sm:$0xff]
  %v1009 = vld [vmem:[%s3 + $0x1e0] sm:$0xff]
  %v1010 = vld [vmem:[%s3 + $0x1e8] sm:$0xff]
  %v1011 = vld [vmem:[%s3 + $0x1f0] sm:$0xff]
  %v1012 = vld [vmem:[%s3 + $0x1f8] sm:$0xff]
  %1013 = vmatprep.subr.mxu0 %v950
  %1014 = vmatpush1.msra.mxu0 %v949
  %1015 = vmatprep.subr.mxu0 %v954
  %1016 = vmatpush1.msra.mxu0 %v953
  %1017 = vmatprep.subr.mxu0 %v958
  %1018 = vmatpush1.msra.mxu0 %v957
  %1019 = vmatprep.subr.mxu0 %v962
  %1020 = vmatpush1.msra.mxu0 %v961
  %1021 = vmatprep.subr.mxu0 %v966
  %1022 = vmatpush1.msra.mxu0 %v965
  %1023 = vmatprep.subr.mxu0 %v970
  %1024 = vmatpush1.msra.mxu0 %v969
  %1025 = vmatprep.subr.mxu0 %v974
  %1026 = vmatpush1.msra.mxu0 %v973
  %1027 = vmatprep.subr.mxu0 %v978
  %1028 = vmatpush1.msra.mxu0 %v977
  %1029 = vmatprep.subr.mxu0 %v982
  %1030 = vmatpush1.msra.mxu0 %v981
  %1031 = vmatprep.subr.mxu0 %v986
  %1032 = vmatpush1.msra.mxu0 %v985
  %1033 = vmatprep.subr.mxu0 %v990
  %1034 = vmatpush1.msra.mxu0 %v989
  %1035 = vmatprep.subr.mxu0 %v994
  %1036 = vmatpush1.msra.mxu0 %v993
  %1037 = vmatprep.subr.mxu0 %v998
  %1038 = vmatpush1.msra.mxu0 %v997
  %1039 = vmatprep.subr.mxu0 %v1002
  %1040 = vmatpush1.msra.mxu0 %v1001
  %1041 = vmatprep.subr.mxu0 %v1006
  %1042 = vmatpush1.msra.mxu0 %v1005
  %1043 = vmatprep.subr.mxu0 %v1010
  %1044 = vmatpush1.msra.mxu0 %v1009
  %1045 = vmatprep.subr.mxu0 0.0
  %1046 = vmatpush1.msra.mxu0 0.0
  %1047 = vmatprep.subr.mxu0 0.0
  %1048 = vmatpush1.msra.mxu0 0.0
  %1049 = vmatprep.subr.mxu0 0.0
  %1050 = vmatpush1.msra.mxu0 0.0
  %1051 = vmatprep.subr.mxu0 0.0
  %1052 = vmatpush1.msra.mxu0 0.0
  %1053 = vmatprep.subr.mxu0 0.0
  %1054 = vmatpush1.msra.mxu0 0.0
  %1055 = vmatprep.subr.mxu0 0.0
  %1056 = vmatpush1.msra.mxu0 0.0
  %1057 = vmatprep.subr.mxu0 0.0
  %1058 = vmatpush1.msra.mxu0 0.0
  %1059 = vmatprep.subr.mxu0 0.0
  %1060 = vmatpush1.msra.mxu0 0.0
  %1061 = vmatprep.subr.mxu0 0.0
  %1062 = vmatpush1.msra.mxu0 0.0
  %1063 = vmatprep.subr.mxu0 0.0
  %1064 = vmatpush1.msra.mxu0 0.0
  %1065 = vmatprep.subr.mxu0 0.0
  %1066 = vmatpush1.msra.mxu0 0.0
  %1067 = vmatprep.subr.mxu0 0.0
  %1068 = vmatpush1.msra.mxu0 0.0
  %1069 = vmatprep.subr.mxu0 0.0
  %1070 = vmatpush1.msra.mxu0 0.0
  %1071 = vmatprep.subr.mxu0 0.0
  %1072 = vmatpush1.msra.mxu0 0.0
  %1073 = vmatprep.subr.mxu0 0.0
  %1074 = vmatpush1.msra.mxu0 0.0
  %1075 = vmatprep.subr.mxu0 0.0
  %1076 = vmatpush1.msra.mxu0 0.0
  %1077 = vmatprep.mubr.f32.mxu0 0.0
  %1078 = vmatmul.mubr.f32.gmra.mrb[0].mxu0 %v943
  %v1079 = vpop.f32.mrb[0].mxu0
  %v1080 = vadd.f32 0.0, %v1079
  %v1081 = vpop.f32.mrb[0].mxu0
  %v1082 = vadd.f32 0.0, %v1081
  %1083 = vdwg.mxu0
  %1084 = vmatprep.subr.mxu0 %v952
  %1085 = vmatpush1.msra.mxu0 %v951
  %1086 = vmatprep.subr.mxu0 %v956
  %1087 = vmatpush1.msra.mxu0 %v955
  %1088 = vmatprep.subr.mxu0 %v960
  %1089 = vmatpush1.msra.mxu0 %v959
  %1090 = vmatprep.subr.mxu0 %v964
  %1091 = vmatpush1.msra.mxu0 %v963
  %1092 = vmatprep.subr.mxu0 %v968
  %1093 = vmatpush1.msra.mxu0 %v967
  %1094 = vmatprep.subr.mxu0 %v972
  %1095 = vmatpush1.msra.mxu0 %v971
  %1096 = vmatprep.subr.mxu0 %v976
  %1097 = vmatpush1.msra.mxu0 %v975
  %1098 = vmatprep.subr.mxu0 %v980
  %1099 = vmatpush1.msra.mxu0 %v979
  %1100 = vmatprep.subr.mxu0 %v984
  %1101 = vmatpush1.msra.mxu0 %v983
  %1102 = vmatprep.subr.mxu0 %v988
  %1103 = vmatpush1.msra.mxu0 %v987
  %1104 = vmatprep.subr.mxu0 %v992
  %1105 = vmatpush1.msra.mxu0 %v991
  %1106 = vmatprep.subr.mxu0 %v996
  %1107 = vmatpush1.msra.mxu0 %v995
  %1108 = vmatprep.subr.mxu0 %v1000
  %1109 = vmatpush1.msra.mxu0 %v999
  %1110 = vmatprep.subr.mxu0 %v1004
  %1111 = vmatpush1.msra.mxu0 %v1003
  %1112 = vmatprep.subr.mxu0 %v1008
  %1113 = vmatpush1.msra.mxu0 %v1007
  %1114 = vmatprep.subr.mxu0 %v1012
  %1115 = vmatpush1.msra.mxu0 %v1011
  %1116 = vmatprep.subr.mxu0 0.0
  %1117 = vmatpush1.msra.mxu0 0.0
  %1118 = vmatprep.subr.mxu0 0.0
  %1119 = vmatpush1.msra.mxu0 0.0
  %1120 = vmatprep.subr.mxu0 0.0
  %1121 = vmatpush1.msra.mxu0 0.0
  %1122 = vmatprep.subr.mxu0 0.0
  %1123 = vmatpush1.msra.mxu0 0.0
  %1124 = vmatprep.subr.mxu0 0.0
  %1125 = vmatpush1.msra.mxu0 0.0
  %1126 = vmatprep.subr.mxu0 0.0
  %1127 = vmatpush1.msra.mxu0 0.0
  %1128 = vmatprep.subr.mxu0 0.0
  %1129 = vmatpush1.msra.mxu0 0.0
  %1130 = vmatprep.subr.mxu0 0.0
  %1131 = vmatpush1.msra.mxu0 0.0
  %1132 = vmatprep.subr.mxu0 0.0
  %1133 = vmatpush1.msra.mxu0 0.0
  %1134 = vmatprep.subr.mxu0 0.0
  %1135 = vmatpush1.msra.mxu0 0.0
  %1136 = vmatprep.subr.mxu0 0.0
  %1137 = vmatpush1.msra.mxu0 0.0
  %1138 = vmatprep.subr.mxu0 0.0
  %1139 = vmatpush1.msra.mxu0 0.0
  %1140 = vmatprep.subr.mxu0 0.0
  %1141 = vmatpush1.msra.mxu0 0.0
  %1142 = vmatprep.subr.mxu0 0.0
  %1143 = vmatpush1.msra.mxu0 0.0
  %1144 = vmatprep.subr.mxu0 0.0
  %1145 = vmatpush1.msra.mxu0 0.0
  %1146 = vmatprep.subr.mxu0 0.0
  %1147 = vmatpush1.msra.mxu0 0.0
  %1148 = vmatprep.mubr.f32.mxu0 0.0
  %1149 = vmatmul.mubr.f32.gmra.mrb[0].mxu0 %v943
  %v1150 = vpop.f32.mrb[0].mxu0
  %v1151 = vadd.f32 0.0, %v1150
  %v1152 = vpop.f32.mrb[0].mxu0
  %v1153 = vadd.f32 0.0, %v1152
  %1154 = vdwg.mxu0
  %v1155 = vadd.f32 %v945, %v1080
  %v1156 = vadd.f32 %v946, %v1082
  %v1157 = vadd.f32 %v947, %v1151
  %v1158 = vadd.f32 %v948, %v1153
  %v1159 = vxor.u32 %v1155, 2147483648
  %v1160 = vxor.u32 %v1156, 2147483648
  %v1161 = vmul.f32 %v1159, 1.442695
  %v1162 = vpow.pop %v1161
  %v1163 = vmul.f32 %v1160, 1.442695
  %v1164 = vpow.pop %v1163
  %v1165 = vadd.f32 %v1162, 1.0
  %v1166 = vadd.f32 %v1164, 1.0
  %v1167 = vrcp.pop %v1165
  %v1168 = vmul.f32 1.0, %v1167
  %v1169 = vrcp.pop %v1166
  %v1170 = vmul.f32 1.0, %v1169
  %v1171 = vxor.u32 %v1158, 2147483648
  %v1172 = vmul.f32 %v1171, 1.442695
  %v1173 = vpow.pop %v1172
  %v1174 = vadd.f32 %v1173, 1.0
  %v1175 = vrcp.pop %v1174
  %v1176 = vmul.f32 1.0, %v1175
  %v1177 = vtanh.pop %v1157
  %v1178 = vmul.f32 %v1170, %v941
  %v1179 = vmul.f32 %v1168, %v1177
  %v1180 = vadd.f32 %v1178, %v1179
  %v1181 = vtanh.pop %v1180
  %v1182 = vmul.f32 %v1176, %v1181
  %1183 = vst [vmem:[#allocation3 + $0x10] sm:$0xff] %v1182
  %v1184 = vld [vmem:[#allocation2 + $0x60] sm:$0xff]
  %v1185 = vld [vmem:[#allocation2 + $0x68] sm:$0xff]
  %v1186 = vld [vmem:[#allocation2 + $0x70] sm:$0xff]
  %v1187 = vld [vmem:[#allocation2 + $0x78] sm:$0xff]
  %v1188 = vld [vmem:[%s3] sm:$0xff]
  %v1189 = vld [vmem:[%s3 + $0x8] sm:$0xff]
  %v1190 = vld [vmem:[%s3 + $0x10] sm:$0xff]
  %v1191 = vld [vmem:[%s3 + $0x18] sm:$0xff]
  %v1192 = vld [vmem:[%s3 + $0x20] sm:$0xff]
  %v1193 = vld [vmem:[%s3 + $0x28] sm:$0xff]
  %v1194 = vld [vmem:[%s3 + $0x30] sm:$0xff]
  %v1195 = vld [vmem:[%s3 + $0x38] sm:$0xff]
  %v1196 = vld [vmem:[%s3 + $0x40] sm:$0xff]
  %v1197 = vld [vmem:[%s3 + $0x48] sm:$0xff]
  %v1198 = vld [vmem:[%s3 + $0x50] sm:$0xff]
  %v1199 = vld [vmem:[%s3 + $0x58] sm:$0xff]
  %v1200 = vld [vmem:[%s3 + $0x60] sm:$0xff]
  %v1201 = vld [vmem:[%s3 + $0x68] sm:$0xff]
  %v1202 = vld [vmem:[%s3 + $0x70] sm:$0xff]
  %v1203 = vld [vmem:[%s3 + $0x78] sm:$0xff]
  %v1204 = vld [vmem:[%s3 + $0x80] sm:$0xff]
  %v1205 = vld [vmem:[%s3 + $0x88] sm:$0xff]
  %v1206 = vld [vmem:[%s3 + $0x90] sm:$0xff]
  %v1207 = vld [vmem:[%s3 + $0x98] sm:$0xff]
  %v1208 = vld [vmem:[%s3 + $0xa0] sm:$0xff]
  %v1209 = vld [vmem:[%s3 + $0xa8] sm:$0xff]
  %v1210 = vld [vmem:[%s3 + $0xb0] sm:$0xff]
  %v1211 = vld [vmem:[%s3 + $0xb8] sm:$0xff]
  %v1212 = vld [vmem:[%s3 + $0xc0] sm:$0xff]
  %v1213 = vld [vmem:[%s3 + $0xc8] sm:$0xff]
  %v1214 = vld [vmem:[%s3 + $0xd0] sm:$0xff]
  %v1215 = vld [vmem:[%s3 + $0xd8] sm:$0xff]
  %v1216 = vld [vmem:[%s3 + $0xe0] sm:$0xff]
  %v1217 = vld [vmem:[%s3 + $0xe8] sm:$0xff]
  %v1218 = vld [vmem:[%s3 + $0xf0] sm:$0xff]
  %v1219 = vld [vmem:[%s3 + $0xf8] sm:$0xff]
  %v1220 = vld [vmem:[%s3 + $0x100] sm:$0xff]
  %v1221 = vld [vmem:[%s3 + $0x108] sm:$0xff]
  %v1222 = vld [vmem:[%s3 + $0x110] sm:$0xff]
  %v1223 = vld [vmem:[%s3 + $0x118] sm:$0xff]
  %v1224 = vld [vmem:[%s3 + $0x120] sm:$0xff]
  %v1225 = vld [vmem:[%s3 + $0x128] sm:$0xff]
  %v1226 = vld [vmem:[%s3 + $0x130] sm:$0xff]
  %v1227 = vld [vmem:[%s3 + $0x138] sm:$0xff]
  %v1228 = vld [vmem:[%s3 + $0x140] sm:$0xff]
  %v1229 = vld [vmem:[%s3 + $0x148] sm:$0xff]
  %v1230 = vld [vmem:[%s3 + $0x150] sm:$0xff]
  %v1231 = vld [vmem:[%s3 + $0x158] sm:$0xff]
  %v1232 = vld [vmem:[%s3 + $0x160] sm:$0xff]
  %v1233 = vld [vmem:[%s3 + $0x168] sm:$0xff]
  %v1234 = vld [vmem:[%s3 + $0x170] sm:$0xff]
  %v1235 = vld [vmem:[%s3 + $0x178] sm:$0xff]
  %v1236 = vld [vmem:[%s3 + $0x180] sm:$0xff]
  %v1237 = vld [vmem:[%s3 + $0x188] sm:$0xff]
  %v1238 = vld [vmem:[%s3 + $0x190] sm:$0xff]
  %v1239 = vld [vmem:[%s3 + $0x198] sm:$0xff]
  %v1240 = vld [vmem:[%s3 + $0x1a0] sm:$0xff]
  %v1241 = vld [vmem:[%s3 + $0x1a8] sm:$0xff]
  %v1242 = vld [vmem:[%s3 + $0x1b0] sm:$0xff]
  %v1243 = vld [vmem:[%s3 + $0x1b8] sm:$0xff]
  %v1244 = vld [vmem:[%s3 + $0x1c0] sm:$0xff]
  %v1245 = vld [vmem:[%s3 + $0x1c8] sm:$0xff]
  %v1246 = vld [vmem:[%s3 + $0x1d0] sm:$0xff]
  %v1247 = vld [vmem:[%s3 + $0x1d8] sm:$0xff]
  %v1248 = vld [vmem:[%s3 + $0x1e0] sm:$0xff]
  %v1249 = vld [vmem:[%s3 + $0x1e8] sm:$0xff]
  %v1250 = vld [vmem:[%s3 + $0x1f0] sm:$0xff]
  %v1251 = vld [vmem:[%s3 + $0x1f8] sm:$0xff]
  %1252 = vmatprep.subr.mxu0 %v1189
  %1253 = vmatpush1.msra.mxu0 %v1188
  %1254 = vmatprep.subr.mxu0 %v1193
  %1255 = vmatpush1.msra.mxu0 %v1192
  %1256 = vmatprep.subr.mxu0 %v1197
  %1257 = vmatpush1.msra.mxu0 %v1196
  %1258 = vmatprep.subr.mxu0 %v1201
  %1259 = vmatpush1.msra.mxu0 %v1200
  %1260 = vmatprep.subr.mxu0 %v1205
  %1261 = vmatpush1.msra.mxu0 %v1204
  %1262 = vmatprep.subr.mxu0 %v1209
  %1263 = vmatpush1.msra.mxu0 %v1208
  %1264 = vmatprep.subr.mxu0 %v1213
  %1265 = vmatpush1.msra.mxu0 %v1212
  %1266 = vmatprep.subr.mxu0 %v1217
  %1267 = vmatpush1.msra.mxu0 %v1216
  %1268 = vmatprep.subr.mxu0 %v1221
  %1269 = vmatpush1.msra.mxu0 %v1220
  %1270 = vmatprep.subr.mxu0 %v1225
  %1271 = vmatpush1.msra.mxu0 %v1224
  %1272 = vmatprep.subr.mxu0 %v1229
  %1273 = vmatpush1.msra.mxu0 %v1228
  %1274 = vmatprep.subr.mxu0 %v1233
  %1275 = vmatpush1.msra.mxu0 %v1232
  %1276 = vmatprep.subr.mxu0 %v1237
  %1277 = vmatpush1.msra.mxu0 %v1236
  %1278 = vmatprep.subr.mxu0 %v1241
  %1279 = vmatpush1.msra.mxu0 %v1240
  %1280 = vmatprep.subr.mxu0 %v1245
  %1281 = vmatpush1.msra.mxu0 %v1244
  %1282 = vmatprep.subr.mxu0 %v1249
  %1283 = vmatpush1.msra.mxu0 %v1248
  %1284 = vmatprep.subr.mxu0 0.0
  %1285 = vmatpush1.msra.mxu0 0.0
  %1286 = vmatprep.subr.mxu0 0.0
  %1287 = vmatpush1.msra.mxu0 0.0
  %1288 = vmatprep.subr.mxu0 0.0
  %1289 = vmatpush1.msra.mxu0 0.0
  %1290 = vmatprep.subr.mxu0 0.0
  %1291 = vmatpush1.msra.mxu0 0.0
  %1292 = vmatprep.subr.mxu0 0.0
  %1293 = vmatpush1.msra.mxu0 0.0
  %1294 = vmatprep.subr.mxu0 0.0
  %1295 = vmatpush1.msra.mxu0 0.0
  %1296 = vmatprep.subr.mxu0 0.0
  %1297 = vmatpush1.msra.mxu0 0.0
  %1298 = vmatprep.subr.mxu0 0.0
  %1299 = vmatpush1.msra.mxu0 0.0
  %1300 = vmatprep.subr.mxu0 0.0
  %1301 = vmatpush1.msra.mxu0 0.0
  %1302 = vmatprep.subr.mxu0 0.0
  %1303 = vmatpush1.msra.mxu0 0.0
  %1304 = vmatprep.subr.mxu0 0.0
  %1305 = vmatpush1.msra.mxu0 0.0
  %1306 = vmatprep.subr.mxu0 0.0
  %1307 = vmatpush1.msra.mxu0 0.0
  %1308 = vmatprep.subr.mxu0 0.0
  %1309 = vmatpush1.msra.mxu0 0.0
  %1310 = vmatprep.subr.mxu0 0.0
  %1311 = vmatpush1.msra.mxu0 0.0
  %1312 = vmatprep.subr.mxu0 0.0
  %1313 = vmatpush1.msra.mxu0 0.0
  %1314 = vmatprep.subr.mxu0 0.0
  %1315 = vmatpush1.msra.mxu0 0.0
  %1316 = vmatprep.mubr.f32.mxu0 0.0
  %1317 = vmatmul.mubr.f32.gmra.mrb[0].mxu0 %v1182
  %v1318 = vpop.f32.mrb[0].mxu0
  %v1319 = vadd.f32 0.0, %v1318
  %v1320 = vpop.f32.mrb[0].mxu0
  %v1321 = vadd.f32 0.0, %v1320
  %1322 = vdwg.mxu0
  %1323 = vmatprep.subr.mxu0 %v1191
  %1324 = vmatpush1.msra.mxu0 %v1190
  %1325 = vmatprep.subr.mxu0 %v1195
  %1326 = vmatpush1.msra.mxu0 %v1194
  %1327 = vmatprep.subr.mxu0 %v1199
  %1328 = vmatpush1.msra.mxu0 %v1198
  %1329 = vmatprep.subr.mxu0 %v1203
  %1330 = vmatpush1.msra.mxu0 %v1202
  %1331 = vmatprep.subr.mxu0 %v1207
  %1332 = vmatpush1.msra.mxu0 %v1206
  %1333 = vmatprep.subr.mxu0 %v1211
  %1334 = vmatpush1.msra.mxu0 %v1210
  %1335 = vmatprep.subr.mxu0 %v1215
  %1336 = vmatpush1.msra.mxu0 %v1214
  %1337 = vmatprep.subr.mxu0 %v1219
  %1338 = vmatpush1.msra.mxu0 %v1218
  %1339 = vmatprep.subr.mxu0 %v1223
  %1340 = vmatpush1.msra.mxu0 %v1222
  %1341 = vmatprep.subr.mxu0 %v1227
  %1342 = vmatpush1.msra.mxu0 %v1226
  %1343 = vmatprep.subr.mxu0 %v1231
  %1344 = vmatpush1.msra.mxu0 %v1230
  %1345 = vmatprep.subr.mxu0 %v1235
  %1346 = vmatpush1.msra.mxu0 %v1234
  %1347 = vmatprep.subr.mxu0 %v1239
  %1348 = vmatpush1.msra.mxu0 %v1238
  %1349 = vmatprep.subr.mxu0 %v1243
  %1350 = vmatpush1.msra.mxu0 %v1242
  %1351 = vmatprep.subr.mxu0 %v1247
  %1352 = vmatpush1.msra.mxu0 %v1246
  %1353 = vmatprep.subr.mxu0 %v1251
  %1354 = vmatpush1.msra.mxu0 %v1250
  %1355 = vmatprep.subr.mxu0 0.0
  %1356 = vmatpush1.msra.mxu0 0.0
  %1357 = vmatprep.subr.mxu0 0.0
  %1358 = vmatpush1.msra.mxu0 0.0
  %1359 = vmatprep.subr.mxu0 0.0
  %1360 = vmatpush1.msra.mxu0 0.0
  %1361 = vmatprep.subr.mxu0 0.0
  %1362 = vmatpush1.msra.mxu0 0.0
  %1363 = vmatprep.subr.mxu0 0.0
  %1364 = vmatpush1.msra.mxu0 0.0
  %1365 = vmatprep.subr.mxu0 0.0
  %1366 = vmatpush1.msra.mxu0 0.0
  %1367 = vmatprep.subr.mxu0 0.0
  %1368 = vmatpush1.msra.mxu0 0.0
  %1369 = vmatprep.subr.mxu0 0.0
  %1370 = vmatpush1.msra.mxu0 0.0
  %1371 = vmatprep.subr.mxu0 0.0
  %1372 = vmatpush1.msra.mxu0 0.0
  %1373 = vmatprep.subr.mxu0 0.0
  %1374 = vmatpush1.msra.mxu0 0.0
  %1375 = vmatprep.subr.mxu0 0.0
  %1376 = vmatpush1.msra.mxu0 0.0
  %1377 = vmatprep.subr.mxu0 0.0
  %1378 = vmatpush1.msra.mxu0 0.0
  %1379 = vmatprep.subr.mxu0 0.0
  %1380 = vmatpush1.msra.mxu0 0.0
  %1381 = vmatprep.subr.mxu0 0.0
  %1382 = vmatpush1.msra.mxu0 0.0
  %1383 = vmatprep.subr.mxu0 0.0
  %1384 = vmatpush1.msra.mxu0 0.0
  %1385 = vmatprep.subr.mxu0 0.0
  %1386 = vmatpush1.msra.mxu0 0.0
  %1387 = vmatprep.mubr.f32.mxu0 0.0
  %1388 = vmatmul.mubr.f32.gmra.mrb[0].mxu0 %v1182
  %v1389 = vpop.f32.mrb[0].mxu0
  %v1390 = vadd.f32 0.0, %v1389
  %v1391 = vpop.f32.mrb[0].mxu0
  %v1392 = vadd.f32 0.0, %v1391
  %1393 = vdwg.mxu0
  %v1394 = vadd.f32 %v1184, %v1319
  %v1395 = vadd.f32 %v1185, %v1321
  %v1396 = vadd.f32 %v1186, %v1390
  %v1397 = vadd.f32 %v1187, %v1392
  %v1398 = vxor.u32 %v1394, 2147483648
  %v1399 = vxor.u32 %v1395, 2147483648
  %v1400 = vmul.f32 %v1398, 1.442695
  %v1401 = vpow.pop %v1400
  %v1402 = vmul.f32 %v1399, 1.442695
  %v1403 = vpow.pop %v1402
  %v1404 = vadd.f32 %v1401, 1.0
  %v1405 = vadd.f32 %v1403, 1.0
  %v1406 = vrcp.pop %v1404
  %v1407 = vmul.f32 1.0, %v1406
  %v1408 = vrcp.pop %v1405
  %v1409 = vmul.f32 1.0, %v1408
  %v1410 = vxor.u32 %v1397, 2147483648
  %v1411 = vmul.f32 %v1410, 1.442695
  %v1412 = vpow.pop %v1411
  %v1413 = vadd.f32 %v1412, 1.0
  %v1414 = vrcp.pop %v1413
  %v1415 = vmul.f32 1.0, %v1414
  %v1416 = vtanh.pop %v1396
  %v1417 = vmul.f32 %v1409, %v1180
  %v1418 = vmul.f32 %v1407, %v1416
  %v1419 = vadd.f32 %v1417, %v1418
  %v1420 = vtanh.pop %v1419
  %v1421 = vmul.f32 %v1415, %v1420
  %1422 = vst [vmem:[#allocation3 + $0x18] sm:$0xff] %v1421
  %v1423 = vld [vmem:[#allocation2 + $0x80] sm:$0xff]
  %v1424 = vld [vmem:[#allocation2 + $0x88] sm:$0xff]
  %v1425 = vld [vmem:[#allocation2 + $0x90] sm:$0xff]
  %v1426 = vld [vmem:[#allocation2 + $0x98] sm:$0xff]
  %v1427 = vld [vmem:[%s3] sm:$0xff]
  %v1428 = vld [vmem:[%s3 + $0x8] sm:$0xff]
  %v1429 = vld [vmem:[%s3 + $0x10] sm:$0xff]
  %v1430 = vld [vmem:[%s3 + $0x18] sm:$0xff]
  %v1431 = vld [vmem:[%s3 + $0x20] sm:$0xff]
  %v1432 = vld [vmem:[%s3 + $0x28] sm:$0xff]
  %v1433 = vld [vmem:[%s3 + $0x30] sm:$0xff]
  %v1434 = vld [vmem:[%s3 + $0x38] sm:$0xff]
  %v1435 = vld [vmem:[%s3 + $0x40] sm:$0xff]
  %v1436 = vld [vmem:[%s3 + $0x48] sm:$0xff]
  %v1437 = vld [vmem:[%s3 + $0x50] sm:$0xff]
  %v1438 = vld [vmem:[%s3 + $0x58] sm:$0xff]
  %v1439 = vld [vmem:[%s3 + $0x60] sm:$0xff]
  %v1440 = vld [vmem:[%s3 + $0x68] sm:$0xff]
  %v1441 = vld [vmem:[%s3 + $0x70] sm:$0xff]
  %v1442 = vld [vmem:[%s3 + $0x78] sm:$0xff]
  %v1443 = vld [vmem:[%s3 + $0x80] sm:$0xff]
  %v1444 = vld [vmem:[%s3 + $0x88] sm:$0xff]
  %v1445 = vld [vmem:[%s3 + $0x90] sm:$0xff]
  %v1446 = vld [vmem:[%s3 + $0x98] sm:$0xff]
  %v1447 = vld [vmem:[%s3 + $0xa0] sm:$0xff]
  %v1448 = vld [vmem:[%s3 + $0xa8] sm:$0xff]
  %v1449 = vld [vmem:[%s3 + $0xb0] sm:$0xff]
  %v1450 = vld [vmem:[%s3 + $0xb8] sm:$0xff]
  %v1451 = vld [vmem:[%s3 + $0xc0] sm:$0xff]
  %v1452 = vld [vmem:[%s3 + $0xc8] sm:$0xff]
  %v1453 = vld [vmem:[%s3 + $0xd0] sm:$0xff]
  %v1454 = vld [vmem:[%s3 + $0xd8] sm:$0xff]
  %v1455 = vld [vmem:[%s3 + $0xe0] sm:$0xff]
  %v1456 = vld [vmem:[%s3 + $0xe8] sm:$0xff]
  %v1457 = vld [vmem:[%s3 + $0xf0] sm:$0xff]
  %v1458 = vld [vmem:[%s3 + $0xf8] sm:$0xff]
  %v1459 = vld [vmem:[%s3 + $0x100] sm:$0xff]
  %v1460 = vld [vmem:[%s3 + $0x108] sm:$0xff]
  %v1461 = vld [vmem:[%s3 + $0x110] sm:$0xff]
  %v1462 = vld [vmem:[%s3 + $0x118] sm:$0xff]
  %v1463 = vld [vmem:[%s3 + $0x120] sm:$0xff]
  %v1464 = vld [vmem:[%s3 + $0x128] sm:$0xff]
  %v1465 = vld [vmem:[%s3 + $0x130] sm:$0xff]
  %v1466 = vld [vmem:[%s3 + $0x138] sm:$0xff]
  %v1467 = vld [vmem:[%s3 + $0x140] sm:$0xff]
  %v1468 = vld [vmem:[%s3 + $0x148] sm:$0xff]
  %v1469 = vld [vmem:[%s3 + $0x150] sm:$0xff]
  %v1470 = vld [vmem:[%s3 + $0x158] sm:$0xff]
  %v1471 = vld [vmem:[%s3 + $0x160] sm:$0xff]
  %v1472 = vld [vmem:[%s3 + $0x168] sm:$0xff]
  %v1473 = vld [vmem:[%s3 + $0x170] sm:$0xff]
  %v1474 = vld [vmem:[%s3 + $0x178] sm:$0xff]
  %v1475 = vld [vmem:[%s3 + $0x180] sm:$0xff]
  %v1476 = vld [vmem:[%s3 + $0x188] sm:$0xff]
  %v1477 = vld [vmem:[%s3 + $0x190] sm:$0xff]
  %v1478 = vld [vmem:[%s3 + $0x198] sm:$0xff]
  %v1479 = vld [vmem:[%s3 + $0x1a0] sm:$0xff]
  %v1480 = vld [vmem:[%s3 + $0x1a8] sm:$0xff]
  %v1481 = vld [vmem:[%s3 + $0x1b0] sm:$0xff]
  %v1482 = vld [vmem:[%s3 + $0x1b8] sm:$0xff]
  %v1483 = vld [vmem:[%s3 + $0x1c0] sm:$0xff]
  %v1484 = vld [vmem:[%s3 + $0x1c8] sm:$0xff]
  %v1485 = vld [vmem:[%s3 + $0x1d0] sm:$0xff]
  %v1486 = vld [vmem:[%s3 + $0x1d8] sm:$0xff]
  %v1487 = vld [vmem:[%s3 + $0x1e0] sm:$0xff]
  %v1488 = vld [vmem:[%s3 + $0x1e8] sm:$0xff]
  %v1489 = vld [vmem:[%s3 + $0x1f0] sm:$0xff]
  %v1490 = vld [vmem:[%s3 + $0x1f8] sm:$0xff]
  %1491 = vmatprep.subr.mxu0 %v1428
  %1492 = vmatpush1.msra.mxu0 %v1427
  %1493 = vmatprep.subr.mxu0 %v1432
  %1494 = vmatpush1.msra.mxu0 %v1431
  %1495 = vmatprep.subr.mxu0 %v1436
  %1496 = vmatpush1.msra.mxu0 %v1435
  %1497 = vmatprep.subr.mxu0 %v1440
  %1498 = vmatpush1.msra.mxu0 %v1439
  %1499 = vmatprep.subr.mxu0 %v1444
  %1500 = vmatpush1.msra.mxu0 %v1443
  %1501 = vmatprep.subr.mxu0 %v1448
  %1502 = vmatpush1.msra.mxu0 %v1447
  %1503 = vmatprep.subr.mxu0 %v1452
  %1504 = vmatpush1.msra.mxu0 %v1451
  %1505 = vmatprep.subr.mxu0 %v1456
  %1506 = vmatpush1.msra.mxu0 %v1455
  %1507 = vmatprep.subr.mxu0 %v1460
  %1508 = vmatpush1.msra.mxu0 %v1459
  %1509 = vmatprep.subr.mxu0 %v1464
  %1510 = vmatpush1.msra.mxu0 %v1463
  %1511 = vmatprep.subr.mxu0 %v1468
  %1512 = vmatpush1.msra.mxu0 %v1467
  %1513 = vmatprep.subr.mxu0 %v1472
  %1514 = vmatpush1.msra.mxu0 %v1471
  %1515 = vmatprep.subr.mxu0 %v1476
  %1516 = vmatpush1.msra.mxu0 %v1475
  %1517 = vmatprep.subr.mxu0 %v1480
  %1518 = vmatpush1.msra.mxu0 %v1479
  %1519 = vmatprep.subr.mxu0 %v1484
  %1520 = vmatpush1.msra.mxu0 %v1483
  %1521 = vmatprep.subr.mxu0 %v1488
  %1522 = vmatpush1.msra.mxu0 %v1487
  %1523 = vmatprep.subr.mxu0 0.0
  %1524 = vmatpush1.msra.mxu0 0.0
  %1525 = vmatprep.subr.mxu0 0.0
  %1526 = vmatpush1.msra.mxu0 0.0
  %1527 = vmatprep.subr.mxu0 0.0
  %1528 = vmatpush1.msra.mxu0 0.0
  %1529 = vmatprep.subr.mxu0 0.0
  %1530 = vmatpush1.msra.mxu0 0.0
  %1531 = vmatprep.subr.mxu0 0.0
  %1532 = vmatpush1.msra.mxu0 0.0
  %1533 = vmatprep.subr.mxu0 0.0
  %1534 = vmatpush1.msra.mxu0 0.0
  %1535 = vmatprep.subr.mxu0 0.0
  %1536 = vmatpush1.msra.mxu0 0.0
  %1537 = vmatprep.subr.mxu0 0.0
  %1538 = vmatpush1.msra.mxu0 0.0
  %1539 = vmatprep.subr.mxu0 0.0
  %1540 = vmatpush1.msra.mxu0 0.0
  %1541 = vmatprep.subr.mxu0 0.0
  %1542 = vmatpush1.msra.mxu0 0.0
  %1543 = vmatprep.subr.mxu0 0.0
  %1544 = vmatpush1.msra.mxu0 0.0
  %1545 = vmatprep.subr.mxu0 0.0
  %1546 = vmatpush1.msra.mxu0 0.0
  %1547 = vmatprep.subr.mxu0 0.0
  %1548 = vmatpush1.msra.mxu0 0.0
  %1549 = vmatprep.subr.mxu0 0.0
  %1550 = vmatpush1.msra.mxu0 0.0
  %1551 = vmatprep.subr.mxu0 0.0
  %1552 = vmatpush1.msra.mxu0 0.0
  %1553 = vmatprep.subr.mxu0 0.0
  %1554 = vmatpush1.msra.mxu0 0.0
  %1555 = vmatprep.mubr.f32.mxu0 0.0
  %1556 = vmatmul.mubr.f32.gmra.mrb[0].mxu0 %v1421
  %v1557 = vpop.f32.mrb[0].mxu0
  %v1558 = vadd.f32 0.0, %v1557
  %v1559 = vpop.f32.mrb[0].mxu0
  %v1560 = vadd.f32 0.0, %v1559
  %1561 = vdwg.mxu0
  %1562 = vmatprep.subr.mxu0 %v1430
  %1563 = vmatpush1.msra.mxu0 %v1429
  %1564 = vmatprep.subr.mxu0 %v1434
  %1565 = vmatpush1.msra.mxu0 %v1433
  %1566 = vmatprep.subr.mxu0 %v1438
  %1567 = vmatpush1.msra.mxu0 %v1437
  %1568 = vmatprep.subr.mxu0 %v1442
  %1569 = vmatpush1.msra.mxu0 %v1441
  %1570 = vmatprep.subr.mxu0 %v1446
  %1571 = vmatpush1.msra.mxu0 %v1445
  %1572 = vmatprep.subr.mxu0 %v1450
  %1573 = vmatpush1.msra.mxu0 %v1449
  %1574 = vmatprep.subr.mxu0 %v1454
  %1575 = vmatpush1.msra.mxu0 %v1453
  %1576 = vmatprep.subr.mxu0 %v1458
  %1577 = vmatpush1.msra.mxu0 %v1457
  %1578 = vmatprep.subr.mxu0 %v1462
  %1579 = vmatpush1.msra.mxu0 %v1461
  %1580 = vmatprep.subr.mxu0 %v1466
  %1581 = vmatpush1.msra.mxu0 %v1465
  %1582 = vmatprep.subr.mxu0 %v1470
  %1583 = vmatpush1.msra.mxu0 %v1469
  %1584 = vmatprep.subr.mxu0 %v1474
  %1585 = vmatpush1.msra.mxu0 %v1473
  %1586 = vmatprep.subr.mxu0 %v1478
  %1587 = vmatpush1.msra.mxu0 %v1477
  %1588 = vmatprep.subr.mxu0 %v1482
  %1589 = vmatpush1.msra.mxu0 %v1481
  %1590 = vmatprep.subr.mxu0 %v1486
  %1591 = vmatpush1.msra.mxu0 %v1485
  %1592 = vmatprep.subr.mxu0 %v1490
  %1593 = vmatpush1.msra.mxu0 %v1489
  %1594 = vmatprep.subr.mxu0 0.0
  %1595 = vmatpush1.msra.mxu0 0.0
  %1596 = vmatprep.subr.mxu0 0.0
  %1597 = vmatpush1.msra.mxu0 0.0
  %1598 = vmatprep.subr.mxu0 0.0
  %1599 = vmatpush1.msra.mxu0 0.0
  %1600 = vmatprep.subr.mxu0 0.0
  %1601 = vmatpush1.msra.mxu0 0.0
  %1602 = vmatprep.subr.mxu0 0.0
  %1603 = vmatpush1.msra.mxu0 0.0
  %1604 = vmatprep.subr.mxu0 0.0
  %1605 = vmatpush1.msra.mxu0 0.0
  %1606 = vmatprep.subr.mxu0 0.0
  %1607 = vmatpush1.msra.mxu0 0.0
  %1608 = vmatprep.subr.mxu0 0.0
  %1609 = vmatpush1.msra.mxu0 0.0
  %1610 = vmatprep.subr.mxu0 0.0
  %1611 = vmatpush1.msra.mxu0 0.0
  %1612 = vmatprep.subr.mxu0 0.0
  %1613 = vmatpush1.msra.mxu0 0.0
  %1614 = vmatprep.subr.mxu0 0.0
  %1615 = vmatpush1.msra.mxu0 0.0
  %1616 = vmatprep.subr.mxu0 0.0
  %1617 = vmatpush1.msra.mxu0 0.0
  %1618 = vmatprep.subr.mxu0 0.0
  %1619 = vmatpush1.msra.mxu0 0.0
  %1620 = vmatprep.subr.mxu0 0.0
  %1621 = vmatpush1.msra.mxu0 0.0
  %1622 = vmatprep.subr.mxu0 0.0
  %1623 = vmatpush1.msra.mxu0 0.0
  %1624 = vmatprep.subr.mxu0 0.0
  %1625 = vmatpush1.msra.mxu0 0.0
  %1626 = vmatprep.mubr.f32.mxu0 0.0
  %1627 = vmatmul.mubr.f32.gmra.mrb[0].mxu0 %v1421
  %v1628 = vpop.f32.mrb[0].mxu0
  %v1629 = vadd.f32 0.0, %v1628
  %v1630 = vpop.f32.mrb[0].mxu0
  %v1631 = vadd.f32 0.0, %v1630
  %1632 = vdwg.mxu0
  %v1633 = vadd.f32 %v1423, %v1558
  %v1634 = vadd.f32 %v1424, %v1560
  %v1635 = vadd.f32 %v1425, %v1629
  %v1636 = vadd.f32 %v1426, %v1631
  %v1637 = vxor.u32 %v1633, 2147483648
  %v1638 = vxor.u32 %v1634, 2147483648
  %v1639 = vmul.f32 %v1637, 1.442695
  %v1640 = vpow.pop %v1639
  %v1641 = vmul.f32 %v1638, 1.442695
  %v1642 = vpow.pop %v1641
  %v1643 = vadd.f32 %v1640, 1.0
  %v1644 = vadd.f32 %v1642, 1.0
  %v1645 = vrcp.pop %v1643
  %v1646 = vmul.f32 1.0, %v1645
  %v1647 = vrcp.pop %v1644
  %v1648 = vmul.f32 1.0, %v1647
  %v1649 = vxor.u32 %v1636, 2147483648
  %v1650 = vmul.f32 %v1649, 1.442695
  %v1651 = vpow.pop %v1650
  %v1652 = vadd.f32 %v1651, 1.0
  %v1653 = vrcp.pop %v1652
  %v1654 = vmul.f32 1.0, %v1653
  %v1655 = vtanh.pop %v1635
  %v1656 = vmul.f32 %v1648, %v1419
  %v1657 = vmul.f32 %v1646, %v1655
  %v1658 = vadd.f32 %v1656, %v1657
  %v1659 = vtanh.pop %v1658
  %v1660 = vmul.f32 %v1654, %v1659
  %1661 = vst [vmem:[#allocation3 + $0x20] sm:$0xff] %v1660
  %v1662 = vld [vmem:[#allocation2 + $0xa0] sm:$0xff]
  %v1663 = vld [vmem:[#allocation2 + $0xa8] sm:$0xff]
  %v1664 = vld [vmem:[#allocation2 + $0xb0] sm:$0xff]
  %v1665 = vld [vmem:[#allocation2 + $0xb8] sm:$0xff]
  %v1666 = vld [vmem:[%s3] sm:$0xff]
  %v1667 = vld [vmem:[%s3 + $0x8] sm:$0xff]
  %v1668 = vld [vmem:[%s3 + $0x10] sm:$0xff]
  %v1669 = vld [vmem:[%s3 + $0x18] sm:$0xff]
  %v1670 = vld [vmem:[%s3 + $0x20] sm:$0xff]
  %v1671 = vld [vmem:[%s3 + $0x28] sm:$0xff]
  %v1672 = vld [vmem:[%s3 + $0x30] sm:$0xff]
  %v1673 = vld [vmem:[%s3 + $0x38] sm:$0xff]
  %v1674 = vld [vmem:[%s3 + $0x40] sm:$0xff]
  %v1675 = vld [vmem:[%s3 + $0x48] sm:$0xff]
  %v1676 = vld [vmem:[%s3 + $0x50] sm:$0xff]
  %v1677 = vld [vmem:[%s3 + $0x58] sm:$0xff]
  %v1678 = vld [vmem:[%s3 + $0x60] sm:$0xff]
  %v1679 = vld [vmem:[%s3 + $0x68] sm:$0xff]
  %v1680 = vld [vmem:[%s3 + $0x70] sm:$0xff]
  %v1681 = vld [vmem:[%s3 + $0x78] sm:$0xff]
  %v1682 = vld [vmem:[%s3 + $0x80] sm:$0xff]
  %v1683 = vld [vmem:[%s3 + $0x88] sm:$0xff]
  %v1684 = vld [vmem:[%s3 + $0x90] sm:$0xff]
  %v1685 = vld [vmem:[%s3 + $0x98] sm:$0xff]
  %v1686 = vld [vmem:[%s3 + $0xa0] sm:$0xff]
  %v1687 = vld [vmem:[%s3 + $0xa8] sm:$0xff]
  %v1688 = vld [vmem:[%s3 + $0xb0] sm:$0xff]
  %v1689 = vld [vmem:[%s3 + $0xb8] sm:$0xff]
  %v1690 = vld [vmem:[%s3 + $0xc0] sm:$0xff]
  %v1691 = vld [vmem:[%s3 + $0xc8] sm:$0xff]
  %v1692 = vld [vmem:[%s3 + $0xd0] sm:$0xff]
  %v1693 = vld [vmem:[%s3 + $0xd8] sm:$0xff]
  %v1694 = vld [vmem:[%s3 + $0xe0] sm:$0xff]
  %v1695 = vld [vmem:[%s3 + $0xe8] sm:$0xff]
  %v1696 = vld [vmem:[%s3 + $0xf0] sm:$0xff]
  %v1697 = vld [vmem:[%s3 + $0xf8] sm:$0xff]
  %v1698 = vld [vmem:[%s3 + $0x100] sm:$0xff]
  %v1699 = vld [vmem:[%s3 + $0x108] sm:$0xff]
  %v1700 = vld [vmem:[%s3 + $0x110] sm:$0xff]
  %v1701 = vld [vmem:[%s3 + $0x118] sm:$0xff]
  %v1702 = vld [vmem:[%s3 + $0x120] sm:$0xff]
  %v1703 = vld [vmem:[%s3 + $0x128] sm:$0xff]
  %v1704 = vld [vmem:[%s3 + $0x130] sm:$0xff]
  %v1705 = vld [vmem:[%s3 + $0x138] sm:$0xff]
  %v1706 = vld [vmem:[%s3 + $0x140] sm:$0xff]
  %v1707 = vld [vmem:[%s3 + $0x148] sm:$0xff]
  %v1708 = vld [vmem:[%s3 + $0x150] sm:$0xff]
  %v1709 = vld [vmem:[%s3 + $0x158] sm:$0xff]
  %v1710 = vld [vmem:[%s3 + $0x160] sm:$0xff]
  %v1711 = vld [vmem:[%s3 + $0x168] sm:$0xff]
  %v1712 = vld [vmem:[%s3 + $0x170] sm:$0xff]
  %v1713 = vld [vmem:[%s3 + $0x178] sm:$0xff]
  %v1714 = vld [vmem:[%s3 + $0x180] sm:$0xff]
  %v1715 = vld [vmem:[%s3 + $0x188] sm:$0xff]
  %v1716 = vld [vmem:[%s3 + $0x190] sm:$0xff]
  %v1717 = vld [vmem:[%s3 + $0x198] sm:$0xff]
  %v1718 = vld [vmem:[%s3 + $0x1a0] sm:$0xff]
  %v1719 = vld [vmem:[%s3 + $0x1a8] sm:$0xff]
  %v1720 = vld [vmem:[%s3 + $0x1b0] sm:$0xff]
  %v1721 = vld [vmem:[%s3 + $0x1b8] sm:$0xff]
  %v1722 = vld [vmem:[%s3 + $0x1c0] sm:$0xff]
  %v1723 = vld [vmem:[%s3 + $0x1c8] sm:$0xff]
  %v1724 = vld [vmem:[%s3 + $0x1d0] sm:$0xff]
  %v1725 = vld [vmem:[%s3 + $0x1d8] sm:$0xff]
  %v1726 = vld [vmem:[%s3 + $0x1e0] sm:$0xff]
  %v1727 = vld [vmem:[%s3 + $0x1e8] sm:$0xff]
  %v1728 = vld [vmem:[%s3 + $0x1f0] sm:$0xff]
  %v1729 = vld [vmem:[%s3 + $0x1f8] sm:$0xff]
  %1730 = vmatprep.subr.mxu0 %v1667
  %1731 = vmatpush1.msra.mxu0 %v1666
  %1732 = vmatprep.subr.mxu0 %v1671
  %1733 = vmatpush1.msra.mxu0 %v1670
  %1734 = vmatprep.subr.mxu0 %v1675
  %1735 = vmatpush1.msra.mxu0 %v1674
  %1736 = vmatprep.subr.mxu0 %v1679
  %1737 = vmatpush1.msra.mxu0 %v1678
  %1738 = vmatprep.subr.mxu0 %v1683
  %1739 = vmatpush1.msra.mxu0 %v1682
  %1740 = vmatprep.subr.mxu0 %v1687
  %1741 = vmatpush1.msra.mxu0 %v1686
  %1742 = vmatprep.subr.mxu0 %v1691
  %1743 = vmatpush1.msra.mxu0 %v1690
  %1744 = vmatprep.subr.mxu0 %v1695
  %1745 = vmatpush1.msra.mxu0 %v1694
  %1746 = vmatprep.subr.mxu0 %v1699
  %1747 = vmatpush1.msra.mxu0 %v1698
  %1748 = vmatprep.subr.mxu0 %v1703
  %1749 = vmatpush1.msra.mxu0 %v1702
  %1750 = vmatprep.subr.mxu0 %v1707
  %1751 = vmatpush1.msra.mxu0 %v1706
  %1752 = vmatprep.subr.mxu0 %v1711
  %1753 = vmatpush1.msra.mxu0 %v1710
  %1754 = vmatprep.subr.mxu0 %v1715
  %1755 = vmatpush1.msra.mxu0 %v1714
  %1756 = vmatprep.subr.mxu0 %v1719
  %1757 = vmatpush1.msra.mxu0 %v1718
  %1758 = vmatprep.subr.mxu0 %v1723
  %1759 = vmatpush1.msra.mxu0 %v1722
  %1760 = vmatprep.subr.mxu0 %v1727
  %1761 = vmatpush1.msra.mxu0 %v1726
  %1762 = vmatprep.subr.mxu0 0.0
  %1763 = vmatpush1.msra.mxu0 0.0
  %1764 = vmatprep.subr.mxu0 0.0
  %1765 = vmatpush1.msra.mxu0 0.0
  %1766 = vmatprep.subr.mxu0 0.0
  %1767 = vmatpush1.msra.mxu0 0.0
  %1768 = vmatprep.subr.mxu0 0.0
  %1769 = vmatpush1.msra.mxu0 0.0
  %1770 = vmatprep.subr.mxu0 0.0
  %1771 = vmatpush1.msra.mxu0 0.0
  %1772 = vmatprep.subr.mxu0 0.0
  %1773 = vmatpush1.msra.mxu0 0.0
  %1774 = vmatprep.subr.mxu0 0.0
  %1775 = vmatpush1.msra.mxu0 0.0
  %1776 = vmatprep.subr.mxu0 0.0
  %1777 = vmatpush1.msra.mxu0 0.0
  %1778 = vmatprep.subr.mxu0 0.0
  %1779 = vmatpush1.msra.mxu0 0.0
  %1780 = vmatprep.subr.mxu0 0.0
  %1781 = vmatpush1.msra.mxu0 0.0
  %1782 = vmatprep.subr.mxu0 0.0
  %1783 = vmatpush1.msra.mxu0 0.0
  %1784 = vmatprep.subr.mxu0 0.0
  %1785 = vmatpush1.msra.mxu0 0.0
  %1786 = vmatprep.subr.mxu0 0.0
  %1787 = vmatpush1.msra.mxu0 0.0
  %1788 = vmatprep.subr.mxu0 0.0
  %1789 = vmatpush1.msra.mxu0 0.0
  %1790 = vmatprep.subr.mxu0 0.0
  %1791 = vmatpush1.msra.mxu0 0.0
  %1792 = vmatprep.subr.mxu0 0.0
  %1793 = vmatpush1.msra.mxu0 0.0
  %1794 = vmatprep.mubr.f32.mxu0 0.0
  %1795 = vmatmul.mubr.f32.gmra.mrb[0].mxu0 %v1660
  %v1796 = vpop.f32.mrb[0].mxu0
  %v1797 = vadd.f32 0.0, %v1796
  %v1798 = vpop.f32.mrb[0].mxu0
  %v1799 = vadd.f32 0.0, %v1798
  %1800 = vdwg.mxu0
  %1801 = vmatprep.subr.mxu0 %v1669
  %1802 = vmatpush1.msra.mxu0 %v1668
  %1803 = vmatprep.subr.mxu0 %v1673
  %1804 = vmatpush1.msra.mxu0 %v1672
  %1805 = vmatprep.subr.mxu0 %v1677
  %1806 = vmatpush1.msra.mxu0 %v1676
  %1807 = vmatprep.subr.mxu0 %v1681
  %1808 = vmatpush1.msra.mxu0 %v1680
  %1809 = vmatprep.subr.mxu0 %v1685
  %1810 = vmatpush1.msra.mxu0 %v1684
  %1811 = vmatprep.subr.mxu0 %v1689
  %1812 = vmatpush1.msra.mxu0 %v1688
  %1813 = vmatprep.subr.mxu0 %v1693
  %1814 = vmatpush1.msra.mxu0 %v1692
  %1815 = vmatprep.subr.mxu0 %v1697
  %1816 = vmatpush1.msra.mxu0 %v1696
  %1817 = vmatprep.subr.mxu0 %v1701
  %1818 = vmatpush1.msra.mxu0 %v1700
  %1819 = vmatprep.subr.mxu0 %v1705
  %1820 = vmatpush1.msra.mxu0 %v1704
  %1821 = vmatprep.subr.mxu0 %v1709
  %1822 = vmatpush1.msra.mxu0 %v1708
  %1823 = vmatprep.subr.mxu0 %v1713
  %1824 = vmatpush1.msra.mxu0 %v1712
  %1825 = vmatprep.subr.mxu0 %v1717
  %1826 = vmatpush1.msra.mxu0 %v1716
  %1827 = vmatprep.subr.mxu0 %v1721
  %1828 = vmatpush1.msra.mxu0 %v1720
  %1829 = vmatprep.subr.mxu0 %v1725
  %1830 = vmatpush1.msra.mxu0 %v1724
  %1831 = vmatprep.subr.mxu0 %v1729
  %1832 = vmatpush1.msra.mxu0 %v1728
  %1833 = vmatprep.subr.mxu0 0.0
  %1834 = vmatpush1.msra.mxu0 0.0
  %1835 = vmatprep.subr.mxu0 0.0
  %1836 = vmatpush1.msra.mxu0 0.0
  %1837 = vmatprep.subr.mxu0 0.0
  %1838 = vmatpush1.msra.mxu0 0.0
  %1839 = vmatprep.subr.mxu0 0.0
  %1840 = vmatpush1.msra.mxu0 0.0
  %1841 = vmatprep.subr.mxu0 0.0
  %1842 = vmatpush1.msra.mxu0 0.0
  %1843 = vmatprep.subr.mxu0 0.0
  %1844 = vmatpush1.msra.mxu0 0.0
  %1845 = vmatprep.subr.mxu0 0.0
  %1846 = vmatpush1.msra.mxu0 0.0
  %1847 = vmatprep.subr.mxu0 0.0
  %1848 = vmatpush1.msra.mxu0 0.0
  %1849 = vmatprep.subr.mxu0 0.0
  %1850 = vmatpush1.msra.mxu0 0.0
  %1851 = vmatprep.subr.mxu0 0.0
  %1852 = vmatpush1.msra.mxu0 0.0
  %1853 = vmatprep.subr.mxu0 0.0
  %1854 = vmatpush1.msra.mxu0 0.0
  %1855 = vmatprep.subr.mxu0 0.0
  %1856 = vmatpush1.msra.mxu0 0.0
  %1857 = vmatprep.subr.mxu0 0.0
  %1858 = vmatpush1.msra.mxu0 0.0
  %1859 = vmatprep.subr.mxu0 0.0
  %1860 = vmatpush1.msra.mxu0 0.0
  %1861 = vmatprep.subr.mxu0 0.0
  %1862 = vmatpush1.msra.mxu0 0.0
  %1863 = vmatprep.subr.mxu0 0.0
  %1864 = vmatpush1.msra.mxu0 0.0
  %1865 = vmatprep.mubr.f32.mxu0 0.0
  %1866 = vmatmul.mubr.f32.gmra.mrb[0].mxu0 %v1660
  %v1867 = vpop.f32.mrb[0].mxu0
  %v1868 = vadd.f32 0.0, %v1867
  %v1869 = vpop.f32.mrb[0].mxu0
  %v1870 = vadd.f32 0.0, %v1869
  %1871 = vdwg.mxu0
  %v1872 = vadd.f32 %v1662, %v1797
  %v1873 = vadd.f32 %v1663, %v1799
  %v1874 = vadd.f32 %v1664, %v1868
  %v1875 = vadd.f32 %v1665, %v1870
  %v1876 = vxor.u32 %v1872, 2147483648
  %v1877 = vxor.u32 %v1873, 2147483648
  %v1878 = vmul.f32 %v1876, 1.442695
  %v1879 = vpow.pop %v1878
  %v1880 = vmul.f32 %v1877, 1.442695
  %v1881 = vpow.pop %v1880
  %v1882 = vadd.f32 %v1879, 1.0
  %v1883 = vadd.f32 %v1881, 1.0
  %v1884 = vrcp.pop %v1882
  %v1885 = vmul.f32 1.0, %v1884
  %v1886 = vrcp.pop %v1883
  %v1887 = vmul.f32 1.0, %v1886
  %v1888 = vxor.u32 %v1875, 2147483648
  %v1889 = vmul.f32 %v1888, 1.442695
  %v1890 = vpow.pop %v1889
  %v1891 = vadd.f32 %v1890, 1.0
  %v1892 = vrcp.pop %v1891
  %v1893 = vmul.f32 1.0, %v1892
  %v1894 = vtanh.pop %v1874
  %v1895 = vmul.f32 %v1887, %v1658
  %v1896 = vmul.f32 %v1885, %v1894
  %v1897 = vadd.f32 %v1895, %v1896
  %v1898 = vtanh.pop %v1897
  %v1899 = vmul.f32 %v1893, %v1898
  %1900 = vst [vmem:[#allocation3 + $0x28] sm:$0xff] %v1899
  %v1901 = vld [vmem:[#allocation2 + $0xc0] sm:$0xff]
  %v1902 = vld [vmem:[#allocation2 + $0xc8] sm:$0xff]
  %v1903 = vld [vmem:[#allocation2 + $0xd0] sm:$0xff]
  %v1904 = vld [vmem:[#allocation2 + $0xd8] sm:$0xff]
  %v1905 = vld [vmem:[%s3] sm:$0xff]
  %v1906 = vld [vmem:[%s3 + $0x8] sm:$0xff]
  %v1907 = vld [vmem:[%s3 + $0x10] sm:$0xff]
  %v1908 = vld [vmem:[%s3 + $0x18] sm:$0xff]
  %v1909 = vld [vmem:[%s3 + $0x20] sm:$0xff]
  %v1910 = vld [vmem:[%s3 + $0x28] sm:$0xff]
  %v1911 = vld [vmem:[%s3 + $0x30] sm:$0xff]
  %v1912 = vld [vmem:[%s3 + $0x38] sm:$0xff]
  %v1913 = vld [vmem:[%s3 + $0x40] sm:$0xff]
  %v1914 = vld [vmem:[%s3 + $0x48] sm:$0xff]
  %v1915 = vld [vmem:[%s3 + $0x50] sm:$0xff]
  %v1916 = vld [vmem:[%s3 + $0x58] sm:$0xff]
  %v1917 = vld [vmem:[%s3 + $0x60] sm:$0xff]
  %v1918 = vld [vmem:[%s3 + $0x68] sm:$0xff]
  %v1919 = vld [vmem:[%s3 + $0x70] sm:$0xff]
  %v1920 = vld [vmem:[%s3 + $0x78] sm:$0xff]
  %v1921 = vld [vmem:[%s3 + $0x80] sm:$0xff]
  %v1922 = vld [vmem:[%s3 + $0x88] sm:$0xff]
  %v1923 = vld [vmem:[%s3 + $0x90] sm:$0xff]
  %v1924 = vld [vmem:[%s3 + $0x98] sm:$0xff]
  %v1925 = vld [vmem:[%s3 + $0xa0] sm:$0xff]
  %v1926 = vld [vmem:[%s3 + $0xa8] sm:$0xff]
  %v1927 = vld [vmem:[%s3 + $0xb0] sm:$0xff]
  %v1928 = vld [vmem:[%s3 + $0xb8] sm:$0xff]
  %v1929 = vld [vmem:[%s3 + $0xc0] sm:$0xff]
  %v1930 = vld [vmem:[%s3 + $0xc8] sm:$0xff]
  %v1931 = vld [vmem:[%s3 + $0xd0] sm:$0xff]
  %v1932 = vld [vmem:[%s3 + $0xd8] sm:$0xff]
  %v1933 = vld [vmem:[%s3 + $0xe0] sm:$0xff]
  %v1934 = vld [vmem:[%s3 + $0xe8] sm:$0xff]
  %v1935 = vld [vmem:[%s3 + $0xf0] sm:$0xff]
  %v1936 = vld [vmem:[%s3 + $0xf8] sm:$0xff]
  %v1937 = vld [vmem:[%s3 + $0x100] sm:$0xff]
  %v1938 = vld [vmem:[%s3 + $0x108] sm:$0xff]
  %v1939 = vld [vmem:[%s3 + $0x110] sm:$0xff]
  %v1940 = vld [vmem:[%s3 + $0x118] sm:$0xff]
  %v1941 = vld [vmem:[%s3 + $0x120] sm:$0xff]
  %v1942 = vld [vmem:[%s3 + $0x128] sm:$0xff]
  %v1943 = vld [vmem:[%s3 + $0x130] sm:$0xff]
  %v1944 = vld [vmem:[%s3 + $0x138] sm:$0xff]
  %v1945 = vld [vmem:[%s3 + $0x140] sm:$0xff]
  %v1946 = vld [vmem:[%s3 + $0x148] sm:$0xff]
  %v1947 = vld [vmem:[%s3 + $0x150] sm:$0xff]
  %v1948 = vld [vmem:[%s3 + $0x158] sm:$0xff]
  %v1949 = vld [vmem:[%s3 + $0x160] sm:$0xff]
  %v1950 = vld [vmem:[%s3 + $0x168] sm:$0xff]
  %v1951 = vld [vmem:[%s3 + $0x170] sm:$0xff]
  %v1952 = vld [vmem:[%s3 + $0x178] sm:$0xff]
  %v1953 = vld [vmem:[%s3 + $0x180] sm:$0xff]
  %v1954 = vld [vmem:[%s3 + $0x188] sm:$0xff]
  %v1955 = vld [vmem:[%s3 + $0x190] sm:$0xff]
  %v1956 = vld [vmem:[%s3 + $0x198] sm:$0xff]
  %v1957 = vld [vmem:[%s3 + $0x1a0] sm:$0xff]
  %v1958 = vld [vmem:[%s3 + $0x1a8] sm:$0xff]
  %v1959 = vld [vmem:[%s3 + $0x1b0] sm:$0xff]
  %v1960 = vld [vmem:[%s3 + $0x1b8] sm:$0xff]
  %v1961 = vld [vmem:[%s3 + $0x1c0] sm:$0xff]
  %v1962 = vld [vmem:[%s3 + $0x1c8] sm:$0xff]
  %v1963 = vld [vmem:[%s3 + $0x1d0] sm:$0xff]
  %v1964 = vld [vmem:[%s3 + $0x1d8] sm:$0xff]
  %v1965 = vld [vmem:[%s3 + $0x1e0] sm:$0xff]
  %v1966 = vld [vmem:[%s3 + $0x1e8] sm:$0xff]
  %v1967 = vld [vmem:[%s3 + $0x1f0] sm:$0xff]
  %v1968 = vld [vmem:[%s3 + $0x1f8] sm:$0xff]
  %1969 = vmatprep.subr.mxu0 %v1906
  %1970 = vmatpush1.msra.mxu0 %v1905
  %1971 = vmatprep.subr.mxu0 %v1910
  %1972 = vmatpush1.msra.mxu0 %v1909
  %1973 = vmatprep.subr.mxu0 %v1914
  %1974 = vmatpush1.msra.mxu0 %v1913
  %1975 = vmatprep.subr.mxu0 %v1918
  %1976 = vmatpush1.msra.mxu0 %v1917
  %1977 = vmatprep.subr.mxu0 %v1922
  %1978 = vmatpush1.msra.mxu0 %v1921
  %1979 = vmatprep.subr.mxu0 %v1926
  %1980 = vmatpush1.msra.mxu0 %v1925
  %1981 = vmatprep.subr.mxu0 %v1930
  %1982 = vmatpush1.msra.mxu0 %v1929
  %1983 = vmatprep.subr.mxu0 %v1934
  %1984 = vmatpush1.msra.mxu0 %v1933
  %1985 = vmatprep.subr.mxu0 %v1938
  %1986 = vmatpush1.msra.mxu0 %v1937
  %1987 = vmatprep.subr.mxu0 %v1942
  %1988 = vmatpush1.msra.mxu0 %v1941
  %1989 = vmatprep.subr.mxu0 %v1946
  %1990 = vmatpush1.msra.mxu0 %v1945
  %1991 = vmatprep.subr.mxu0 %v1950
  %1992 = vmatpush1.msra.mxu0 %v1949
  %1993 = vmatprep.subr.mxu0 %v1954
  %1994 = vmatpush1.msra.mxu0 %v1953
  %1995 = vmatprep.subr.mxu0 %v1958
  %1996 = vmatpush1.msra.mxu0 %v1957
  %1997 = vmatprep.subr.mxu0 %v1962
  %1998 = vmatpush1.msra.mxu0 %v1961
  %1999 = vmatprep.subr.mxu0 %v1966
  %2000 = vmatpush1.msra.mxu0 %v1965
  %2001 = vmatprep.subr.mxu0 0.0
  %2002 = vmatpush1.msra.mxu0 0.0
  %2003 = vmatprep.subr.mxu0 0.0
  %2004 = vmatpush1.msra.mxu0 0.0
  %2005 = vmatprep.subr.mxu0 0.0
  %2006 = vmatpush1.msra.mxu0 0.0
  %2007 = vmatprep.subr.mxu0 0.0
  %2008 = vmatpush1.msra.mxu0 0.0
  %2009 = vmatprep.subr.mxu0 0.0
  %2010 = vmatpush1.msra.mxu0 0.0
  %2011 = vmatprep.subr.mxu0 0.0
  %2012 = vmatpush1.msra.mxu0 0.0
  %2013 = vmatprep.subr.mxu0 0.0
  %2014 = vmatpush1.msra.mxu0 0.0
  %2015 = vmatprep.subr.mxu0 0.0
  %2016 = vmatpush1.msra.mxu0 0.0
  %2017 = vmatprep.subr.mxu0 0.0
  %2018 = vmatpush1.msra.mxu0 0.0
  %2019 = vmatprep.subr.mxu0 0.0
  %2020 = vmatpush1.msra.mxu0 0.0
  %2021 = vmatprep.subr.mxu0 0.0
  %2022 = vmatpush1.msra.mxu0 0.0
  %2023 = vmatprep.subr.mxu0 0.0
  %2024 = vmatpush1.msra.mxu0 0.0
  %2025 = vmatprep.subr.mxu0 0.0
  %2026 = vmatpush1.msra.mxu0 0.0
  %2027 = vmatprep.subr.mxu0 0.0
  %2028 = vmatpush1.msra.mxu0 0.0
  %2029 = vmatprep.subr.mxu0 0.0
  %2030 = vmatpush1.msra.mxu0 0.0
  %2031 = vmatprep.subr.mxu0 0.0
  %2032 = vmatpush1.msra.mxu0 0.0
  %2033 = vmatprep.mubr.f32.mxu0 0.0
  %2034 = vmatmul.mubr.f32.gmra.mrb[0].mxu0 %v1899
  %v2035 = vpop.f32.mrb[0].mxu0
  %v2036 = vadd.f32 0.0, %v2035
  %v2037 = vpop.f32.mrb[0].mxu0
  %v2038 = vadd.f32 0.0, %v2037
  %2039 = vdwg.mxu0
  %2040 = vmatprep.subr.mxu0 %v1908
  %2041 = vmatpush1.msra.mxu0 %v1907
  %2042 = vmatprep.subr.mxu0 %v1912
  %2043 = vmatpush1.msra.mxu0 %v1911
  %2044 = vmatprep.subr.mxu0 %v1916
  %2045 = vmatpush1.msra.mxu0 %v1915
  %2046 = vmatprep.subr.mxu0 %v1920
  %2047 = vmatpush1.msra.mxu0 %v1919
  %2048 = vmatprep.subr.mxu0 %v1924
  %2049 = vmatpush1.msra.mxu0 %v1923
  %2050 = vmatprep.subr.mxu0 %v1928
  %2051 = vmatpush1.msra.mxu0 %v1927
  %2052 = vmatprep.subr.mxu0 %v1932
  %2053 = vmatpush1.msra.mxu0 %v1931
  %2054 = vmatprep.subr.mxu0 %v1936
  %2055 = vmatpush1.msra.mxu0 %v1935
  %2056 = vmatprep.subr.mxu0 %v1940
  %2057 = vmatpush1.msra.mxu0 %v1939
  %2058 = vmatprep.subr.mxu0 %v1944
  %2059 = vmatpush1.msra.mxu0 %v1943
  %2060 = vmatprep.subr.mxu0 %v1948
  %2061 = vmatpush1.msra.mxu0 %v1947
  %2062 = vmatprep.subr.mxu0 %v1952
  %2063 = vmatpush1.msra.mxu0 %v1951
  %2064 = vmatprep.subr.mxu0 %v1956
  %2065 = vmatpush1.msra.mxu0 %v1955
  %2066 = vmatprep.subr.mxu0 %v1960
  %2067 = vmatpush1.msra.mxu0 %v1959
  %2068 = vmatprep.subr.mxu0 %v1964
  %2069 = vmatpush1.msra.mxu0 %v1963
  %2070 = vmatprep.subr.mxu0 %v1968
  %2071 = vmatpush1.msra.mxu0 %v1967
  %2072 = vmatprep.subr.mxu0 0.0
  %2073 = vmatpush1.msra.mxu0 0.0
  %2074 = vmatprep.subr.mxu0 0.0
  %2075 = vmatpush1.msra.mxu0 0.0
  %2076 = vmatprep.subr.mxu0 0.0
  %2077 = vmatpush1.msra.mxu0 0.0
  %2078 = vmatprep.subr.mxu0 0.0
  %2079 = vmatpush1.msra.mxu0 0.0
  %2080 = vmatprep.subr.mxu0 0.0
  %2081 = vmatpush1.msra.mxu0 0.0
  %2082 = vmatprep.subr.mxu0 0.0
  %2083 = vmatpush1.msra.mxu0 0.0
  %2084 = vmatprep.subr.mxu0 0.0
  %2085 = vmatpush1.msra.mxu0 0.0
  %2086 = vmatprep.subr.mxu0 0.0
  %2087 = vmatpush1.msra.mxu0 0.0
  %2088 = vmatprep.subr.mxu0 0.0
  %2089 = vmatpush1.msra.mxu0 0.0
  %2090 = vmatprep.subr.mxu0 0.0
  %2091 = vmatpush1.msra.mxu0 0.0
  %2092 = vmatprep.subr.mxu0 0.0
  %2093 = vmatpush1.msra.mxu0 0.0
  %2094 = vmatprep.subr.mxu0 0.0
  %2095 = vmatpush1.msra.mxu0 0.0
  %2096 = vmatprep.subr.mxu0 0.0
  %2097 = vmatpush1.msra.mxu0 0.0
  %2098 = vmatprep.subr.mxu0 0.0
  %2099 = vmatpush1.msra.mxu0 0.0
  %2100 = vmatprep.subr.mxu0 0.0
  %2101 = vmatpush1.msra.mxu0 0.0
  %2102 = vmatprep.subr.mxu0 0.0
  %2103 = vmatpush1.msra.mxu0 0.0
  %2104 = vmatprep.mubr.f32.mxu0 0.0
  %2105 = vmatmul.mubr.f32.gmra.mrb[0].mxu0 %v1899
  %v2106 = vpop.f32.mrb[0].mxu0
  %v2107 = vadd.f32 0.0, %v2106
  %v2108 = vpop.f32.mrb[0].mxu0
  %v2109 = vadd.f32 0.0, %v2108
  %2110 = vdwg.mxu0
  %v2111 = vadd.f32 %v1901, %v2036
  %v2112 = vadd.f32 %v1902, %v2038
  %v2113 = vadd.f32 %v1903, %v2107
  %v2114 = vadd.f32 %v1904, %v2109
  %v2115 = vxor.u32 %v2111, 2147483648
  %v2116 = vxor.u32 %v2112, 2147483648
  %v2117 = vmul.f32 %v2115, 1.442695
  %v2118 = vpow.pop %v2117
  %v2119 = vmul.f32 %v2116, 1.442695
  %v2120 = vpow.pop %v2119
  %v2121 = vadd.f32 %v2118, 1.0
  %v2122 = vadd.f32 %v2120, 1.0
  %v2123 = vrcp.pop %v2121
  %v2124 = vmul.f32 1.0, %v2123
  %v2125 = vrcp.pop %v2122
  %v2126 = vmul.f32 1.0, %v2125
  %v2127 = vxor.u32 %v2114, 2147483648
  %v2128 = vmul.f32 %v2127, 1.442695
  %v2129 = vpow.pop %v2128
  %v2130 = vadd.f32 %v2129, 1.0
  %v2131 = vrcp.pop %v2130
  %v2132 = vmul.f32 1.0, %v2131
  %v2133 = vtanh.pop %v2113
  %v2134 = vmul.f32 %v2126, %v1897
  %v2135 = vmul.f32 %v2124, %v2133
  %v2136 = vadd.f32 %v2134, %v2135
  %v2137 = vtanh.pop %v2136
  %v2138 = vmul.f32 %v2132, %v2137
  %2139 = vst [vmem:[#allocation3 + $0x30] sm:$0xff] %v2138
  %v2140 = vld [vmem:[#allocation2 + $0xe0] sm:$0xff]
  %v2141 = vld [vmem:[#allocation2 + $0xe8] sm:$0xff]
  %v2142 = vld [vmem:[#allocation2 + $0xf0] sm:$0xff]
  %v2143 = vld [vmem:[#allocation2 + $0xf8] sm:$0xff]
  %v2144 = vld [vmem:[%s3] sm:$0xff]
  %v2145 = vld [vmem:[%s3 + $0x8] sm:$0xff]
  %v2146 = vld [vmem:[%s3 + $0x10] sm:$0xff]
  %v2147 = vld [vmem:[%s3 + $0x18] sm:$0xff]
  %v2148 = vld [vmem:[%s3 + $0x20] sm:$0xff]
  %v2149 = vld [vmem:[%s3 + $0x28] sm:$0xff]
  %v2150 = vld [vmem:[%s3 + $0x30] sm:$0xff]
  %v2151 = vld [vmem:[%s3 + $0x38] sm:$0xff]
  %v2152 = vld [vmem:[%s3 + $0x40] sm:$0xff]
  %v2153 = vld [vmem:[%s3 + $0x48] sm:$0xff]
  %v2154 = vld [vmem:[%s3 + $0x50] sm:$0xff]
  %v2155 = vld [vmem:[%s3 + $0x58] sm:$0xff]
  %v2156 = vld [vmem:[%s3 + $0x60] sm:$0xff]
  %v2157 = vld [vmem:[%s3 + $0x68] sm:$0xff]
  %v2158 = vld [vmem:[%s3 + $0x70] sm:$0xff]
  %v2159 = vld [vmem:[%s3 + $0x78] sm:$0xff]
  %v2160 = vld [vmem:[%s3 + $0x80] sm:$0xff]
  %v2161 = vld [vmem:[%s3 + $0x88] sm:$0xff]
  %v2162 = vld [vmem:[%s3 + $0x90] sm:$0xff]
  %v2163 = vld [vmem:[%s3 + $0x98] sm:$0xff]
  %v2164 = vld [vmem:[%s3 + $0xa0] sm:$0xff]
  %v2165 = vld [vmem:[%s3 + $0xa8] sm:$0xff]
  %v2166 = vld [vmem:[%s3 + $0xb0] sm:$0xff]
  %v2167 = vld [vmem:[%s3 + $0xb8] sm:$0xff]
  %v2168 = vld [vmem:[%s3 + $0xc0] sm:$0xff]
  %v2169 = vld [vmem:[%s3 + $0xc8] sm:$0xff]
  %v2170 = vld [vmem:[%s3 + $0xd0] sm:$0xff]
  %v2171 = vld [vmem:[%s3 + $0xd8] sm:$0xff]
  %v2172 = vld [vmem:[%s3 + $0xe0] sm:$0xff]
  %v2173 = vld [vmem:[%s3 + $0xe8] sm:$0xff]
  %v2174 = vld [vmem:[%s3 + $0xf0] sm:$0xff]
  %v2175 = vld [vmem:[%s3 + $0xf8] sm:$0xff]
  %v2176 = vld [vmem:[%s3 + $0x100] sm:$0xff]
  %v2177 = vld [vmem:[%s3 + $0x108] sm:$0xff]
  %v2178 = vld [vmem:[%s3 + $0x110] sm:$0xff]
  %v2179 = vld [vmem:[%s3 + $0x118] sm:$0xff]
  %v2180 = vld [vmem:[%s3 + $0x120] sm:$0xff]
  %v2181 = vld [vmem:[%s3 + $0x128] sm:$0xff]
  %v2182 = vld [vmem:[%s3 + $0x130] sm:$0xff]
  %v2183 = vld [vmem:[%s3 + $0x138] sm:$0xff]
  %v2184 = vld [vmem:[%s3 + $0x140] sm:$0xff]
  %v2185 = vld [vmem:[%s3 + $0x148] sm:$0xff]
  %v2186 = vld [vmem:[%s3 + $0x150] sm:$0xff]
  %v2187 = vld [vmem:[%s3 + $0x158] sm:$0xff]
  %v2188 = vld [vmem:[%s3 + $0x160] sm:$0xff]
  %v2189 = vld [vmem:[%s3 + $0x168] sm:$0xff]
  %v2190 = vld [vmem:[%s3 + $0x170] sm:$0xff]
  %v2191 = vld [vmem:[%s3 + $0x178] sm:$0xff]
  %v2192 = vld [vmem:[%s3 + $0x180] sm:$0xff]
  %v2193 = vld [vmem:[%s3 + $0x188] sm:$0xff]
  %v2194 = vld [vmem:[%s3 + $0x190] sm:$0xff]
  %v2195 = vld [vmem:[%s3 + $0x198] sm:$0xff]
  %v2196 = vld [vmem:[%s3 + $0x1a0] sm:$0xff]
  %v2197 = vld [vmem:[%s3 + $0x1a8] sm:$0xff]
  %v2198 = vld [vmem:[%s3 + $0x1b0] sm:$0xff]
  %v2199 = vld [vmem:[%s3 + $0x1b8] sm:$0xff]
  %v2200 = vld [vmem:[%s3 + $0x1c0] sm:$0xff]
  %v2201 = vld [vmem:[%s3 + $0x1c8] sm:$0xff]
  %v2202 = vld [vmem:[%s3 + $0x1d0] sm:$0xff]
  %v2203 = vld [vmem:[%s3 + $0x1d8] sm:$0xff]
  %v2204 = vld [vmem:[%s3 + $0x1e0] sm:$0xff]
  %v2205 = vld [vmem:[%s3 + $0x1e8] sm:$0xff]
  %v2206 = vld [vmem:[%s3 + $0x1f0] sm:$0xff]
  %v2207 = vld [vmem:[%s3 + $0x1f8] sm:$0xff]
  %2208 = vmatprep.subr.mxu0 %v2145
  %2209 = vmatpush1.msra.mxu0 %v2144
  %2210 = vmatprep.subr.mxu0 %v2149
  %2211 = vmatpush1.msra.mxu0 %v2148
  %2212 = vmatprep.subr.mxu0 %v2153
  %2213 = vmatpush1.msra.mxu0 %v2152
  %2214 = vmatprep.subr.mxu0 %v2157
  %2215 = vmatpush1.msra.mxu0 %v2156
  %2216 = vmatprep.subr.mxu0 %v2161
  %2217 = vmatpush1.msra.mxu0 %v2160
  %2218 = vmatprep.subr.mxu0 %v2165
  %2219 = vmatpush1.msra.mxu0 %v2164
  %2220 = vmatprep.subr.mxu0 %v2169
  %2221 = vmatpush1.msra.mxu0 %v2168
  %2222 = vmatprep.subr.mxu0 %v2173
  %2223 = vmatpush1.msra.mxu0 %v2172
  %2224 = vmatprep.subr.mxu0 %v2177
  %2225 = vmatpush1.msra.mxu0 %v2176
  %2226 = vmatprep.subr.mxu0 %v2181
  %2227 = vmatpush1.msra.mxu0 %v2180
  %2228 = vmatprep.subr.mxu0 %v2185
  %2229 = vmatpush1.msra.mxu0 %v2184
  %2230 = vmatprep.subr.mxu0 %v2189
  %2231 = vmatpush1.msra.mxu0 %v2188
  %2232 = vmatprep.subr.mxu0 %v2193
  %2233 = vmatpush1.msra.mxu0 %v2192
  %2234 = vmatprep.subr.mxu0 %v2197
  %2235 = vmatpush1.msra.mxu0 %v2196
  %2236 = vmatprep.subr.mxu0 %v2201
  %2237 = vmatpush1.msra.mxu0 %v2200
  %2238 = vmatprep.subr.mxu0 %v2205
  %2239 = vmatpush1.msra.mxu0 %v2204
  %2240 = vmatprep.subr.mxu0 0.0
  %2241 = vmatpush1.msra.mxu0 0.0
  %2242 = vmatprep.subr.mxu0 0.0
  %2243 = vmatpush1.msra.mxu0 0.0
  %2244 = vmatprep.subr.mxu0 0.0
  %2245 = vmatpush1.msra.mxu0 0.0
  %2246 = vmatprep.subr.mxu0 0.0
  %2247 = vmatpush1.msra.mxu0 0.0
  %2248 = vmatprep.subr.mxu0 0.0
  %2249 = vmatpush1.msra.mxu0 0.0
  %2250 = vmatprep.subr.mxu0 0.0
  %2251 = vmatpush1.msra.mxu0 0.0
  %2252 = vmatprep.subr.mxu0 0.0
  %2253 = vmatpush1.msra.mxu0 0.0
  %2254 = vmatprep.subr.mxu0 0.0
  %2255 = vmatpush1.msra.mxu0 0.0
  %2256 = vmatprep.subr.mxu0 0.0
  %2257 = vmatpush1.msra.mxu0 0.0
  %2258 = vmatprep.subr.mxu0 0.0
  %2259 = vmatpush1.msra.mxu0 0.0
  %2260 = vmatprep.subr.mxu0 0.0
  %2261 = vmatpush1.msra.mxu0 0.0
  %2262 = vmatprep.subr.mxu0 0.0
  %2263 = vmatpush1.msra.mxu0 0.0
  %2264 = vmatprep.subr.mxu0 0.0
  %2265 = vmatpush1.msra.mxu0 0.0
  %2266 = vmatprep.subr.mxu0 0.0
  %2267 = vmatpush1.msra.mxu0 0.0
  %2268 = vmatprep.subr.mxu0 0.0
  %2269 = vmatpush1.msra.mxu0 0.0
  %2270 = vmatprep.subr.mxu0 0.0
  %2271 = vmatpush1.msra.mxu0 0.0
  %2272 = vmatprep.mubr.f32.mxu0 0.0
  %2273 = vmatmul.mubr.f32.gmra.mrb[0].mxu0 %v2138
  %v2274 = vpop.f32.mrb[0].mxu0
  %v2275 = vadd.f32 0.0, %v2274
  %v2276 = vpop.f32.mrb[0].mxu0
  %v2277 = vadd.f32 0.0, %v2276
  %2278 = vdwg.mxu0
  %2279 = vmatprep.subr.mxu0 %v2147
  %2280 = vmatpush1.msra.mxu0 %v2146
  %2281 = vmatprep.subr.mxu0 %v2151
  %2282 = vmatpush1.msra.mxu0 %v2150
  %2283 = vmatprep.subr.mxu0 %v2155
  %2284 = vmatpush1.msra.mxu0 %v2154
  %2285 = vmatprep.subr.mxu0 %v2159
  %2286 = vmatpush1.msra.mxu0 %v2158
  %2287 = vmatprep.subr.mxu0 %v2163
  %2288 = vmatpush1.msra.mxu0 %v2162
  %2289 = vmatprep.subr.mxu0 %v2167
  %2290 = vmatpush1.msra.mxu0 %v2166
  %2291 = vmatprep.subr.mxu0 %v2171
  %2292 = vmatpush1.msra.mxu0 %v2170
  %2293 = vmatprep.subr.mxu0 %v2175
  %2294 = vmatpush1.msra.mxu0 %v2174
  %2295 = vmatprep.subr.mxu0 %v2179
  %2296 = vmatpush1.msra.mxu0 %v2178
  %2297 = vmatprep.subr.mxu0 %v2183
  %2298 = vmatpush1.msra.mxu0 %v2182
  %2299 = vmatprep.subr.mxu0 %v2187
  %2300 = vmatpush1.msra.mxu0 %v2186
  %2301 = vmatprep.subr.mxu0 %v2191
  %2302 = vmatpush1.msra.mxu0 %v2190
  %2303 = vmatprep.subr.mxu0 %v2195
  %2304 = vmatpush1.msra.mxu0 %v2194
  %2305 = vmatprep.subr.mxu0 %v2199
  %2306 = vmatpush1.msra.mxu0 %v2198
  %2307 = vmatprep.subr.mxu0 %v2203
  %2308 = vmatpush1.msra.mxu0 %v2202
  %2309 = vmatprep.subr.mxu0 %v2207
  %2310 = vmatpush1.msra.mxu0 %v2206
  %2311 = vmatprep.subr.mxu0 0.0
  %2312 = vmatpush1.msra.mxu0 0.0
  %2313 = vmatprep.subr.mxu0 0.0
  %2314 = vmatpush1.msra.mxu0 0.0
  %2315 = vmatprep.subr.mxu0 0.0
  %2316 = vmatpush1.msra.mxu0 0.0
  %2317 = vmatprep.subr.mxu0 0.0
  %2318 = vmatpush1.msra.mxu0 0.0
  %2319 = vmatprep.subr.mxu0 0.0
  %2320 = vmatpush1.msra.mxu0 0.0
  %2321 = vmatprep.subr.mxu0 0.0
  %2322 = vmatpush1.msra.mxu0 0.0
  %2323 = vmatprep.subr.mxu0 0.0
  %2324 = vmatpush1.msra.mxu0 0.0
  %2325 = vmatprep.subr.mxu0 0.0
  %2326 = vmatpush1.msra.mxu0 0.0
  %2327 = vmatprep.subr.mxu0 0.0
  %2328 = vmatpush1.msra.mxu0 0.0
  %2329 = vmatprep.subr.mxu0 0.0
  %2330 = vmatpush1.msra.mxu0 0.0
  %2331 = vmatprep.subr.mxu0 0.0
  %2332 = vmatpush1.msra.mxu0 0.0
  %2333 = vmatprep.subr.mxu0 0.0
  %2334 = vmatpush1.msra.mxu0 0.0
  %2335 = vmatprep.subr.mxu0 0.0
  %2336 = vmatpush1.msra.mxu0 0.0
  %2337 = vmatprep.subr.mxu0 0.0
  %2338 = vmatpush1.msra.mxu0 0.0
  %2339 = vmatprep.subr.mxu0 0.0
  %2340 = vmatpush1.msra.mxu0 0.0
  %2341 = vmatprep.subr.mxu0 0.0
  %2342 = vmatpush1.msra.mxu0 0.0
  %2343 = vmatprep.mubr.f32.mxu0 0.0
  %2344 = vmatmul.mubr.f32.gmra.mrb[0].mxu0 %v2138
  %v2345 = vpop.f32.mrb[0].mxu0
  %v2346 = vadd.f32 0.0, %v2345
  %v2347 = vpop.f32.mrb[0].mxu0
  %v2348 = vadd.f32 0.0, %v2347
  %2349 = vdwg.mxu0
  %v2350 = vadd.f32 %v2140, %v2275
  %v2351 = vadd.f32 %v2141, %v2277
  %v2352 = vadd.f32 %v2142, %v2346
  %v2353 = vadd.f32 %v2143, %v2348
  %v2354 = vxor.u32 %v2350, 2147483648
  %v2355 = vxor.u32 %v2351, 2147483648
  %v2356 = vmul.f32 %v2354, 1.442695
  %v2357 = vpow.pop %v2356
  %v2358 = vmul.f32 %v2355, 1.442695
  %v2359 = vpow.pop %v2358
  %v2360 = vadd.f32 %v2357, 1.0
  %v2361 = vadd.f32 %v2359, 1.0
  %v2362 = vrcp.pop %v2360
  %v2363 = vmul.f32 1.0, %v2362
  %v2364 = vrcp.pop %v2361
  %v2365 = vmul.f32 1.0, %v2364
  %v2366 = vxor.u32 %v2353, 2147483648
  %v2367 = vmul.f32 %v2366, 1.442695
  %v2368 = vpow.pop %v2367
  %v2369 = vadd.f32 %v2368, 1.0
  %v2370 = vrcp.pop %v2369
  %v2371 = vmul.f32 1.0, %v2370
  %v2372 = vtanh.pop %v2352
  %v2373 = vmul.f32 %v2365, %v2136
  %v2374 = vmul.f32 %v2363, %v2372
  %v2375 = vadd.f32 %v2373, %v2374
  %v2376 = vtanh.pop %v2375
  %v2377 = vmul.f32 %v2371, %v2376
  %2378 = vst [vmem:[#allocation3 + $0x38] sm:$0xff] %v2377
  %v2379 = vld [vmem:[#allocation2 + $0x100] sm:$0xff]
  %v2380 = vld [vmem:[#allocation2 + $0x108] sm:$0xff]
  %v2381 = vld [vmem:[#allocation2 + $0x110] sm:$0xff]
  %v2382 = vld [vmem:[#allocation2 + $0x118] sm:$0xff]
  %v2383 = vld [vmem:[%s3] sm:$0xff]
  %v2384 = vld [vmem:[%s3 + $0x8] sm:$0xff]
  %v2385 = vld [vmem:[%s3 + $0x10] sm:$0xff]
  %v2386 = vld [vmem:[%s3 + $0x18] sm:$0xff]
  %v2387 = vld [vmem:[%s3 + $0x20] sm:$0xff]
  %v2388 = vld [vmem:[%s3 + $0x28] sm:$0xff]
  %v2389 = vld [vmem:[%s3 + $0x30] sm:$0xff]
  %v2390 = vld [vmem:[%s3 + $0x38] sm:$0xff]
  %v2391 = vld [vmem:[%s3 + $0x40] sm:$0xff]
  %v2392 = vld [vmem:[%s3 + $0x48] sm:$0xff]
  %v2393 = vld [vmem:[%s3 + $0x50] sm:$0xff]
  %v2394 = vld [vmem:[%s3 + $0x58] sm:$0xff]
  %v2395 = vld [vmem:[%s3 + $0x60] sm:$0xff]
  %v2396 = vld [vmem:[%s3 + $0x68] sm:$0xff]
  %v2397 = vld [vmem:[%s3 + $0x70] sm:$0xff]
  %v2398 = vld [vmem:[%s3 + $0x78] sm:$0xff]
  %v2399 = vld [vmem:[%s3 + $0x80] sm:$0xff]
  %v2400 = vld [vmem:[%s3 + $0x88] sm:$0xff]
  %v2401 = vld [vmem:[%s3 + $0x90] sm:$0xff]
  %v2402 = vld [vmem:[%s3 + $0x98] sm:$0xff]
  %v2403 = vld [vmem:[%s3 + $0xa0] sm:$0xff]
  %v2404 = vld [vmem:[%s3 + $0xa8] sm:$0xff]
  %v2405 = vld [vmem:[%s3 + $0xb0] sm:$0xff]
  %v2406 = vld [vmem:[%s3 + $0xb8] sm:$0xff]
  %v2407 = vld [vmem:[%s3 + $0xc0] sm:$0xff]
  %v2408 = vld [vmem:[%s3 + $0xc8] sm:$0xff]
  %v2409 = vld [vmem:[%s3 + $0xd0] sm:$0xff]
  %v2410 = vld [vmem:[%s3 + $0xd8] sm:$0xff]
  %v2411 = vld [vmem:[%s3 + $0xe0] sm:$0xff]
  %v2412 = vld [vmem:[%s3 + $0xe8] sm:$0xff]
  %v2413 = vld [vmem:[%s3 + $0xf0] sm:$0xff]
  %v2414 = vld [vmem:[%s3 + $0xf8] sm:$0xff]
  %v2415 = vld [vmem:[%s3 + $0x100] sm:$0xff]
  %v2416 = vld [vmem:[%s3 + $0x108] sm:$0xff]
  %v2417 = vld [vmem:[%s3 + $0x110] sm:$0xff]
  %v2418 = vld [vmem:[%s3 + $0x118] sm:$0xff]
  %v2419 = vld [vmem:[%s3 + $0x120] sm:$0xff]
  %v2420 = vld [vmem:[%s3 + $0x128] sm:$0xff]
  %v2421 = vld [vmem:[%s3 + $0x130] sm:$0xff]
  %v2422 = vld [vmem:[%s3 + $0x138] sm:$0xff]
  %v2423 = vld [vmem:[%s3 + $0x140] sm:$0xff]
  %v2424 = vld [vmem:[%s3 + $0x148] sm:$0xff]
  %v2425 = vld [vmem:[%s3 + $0x150] sm:$0xff]
  %v2426 = vld [vmem:[%s3 + $0x158] sm:$0xff]
  %v2427 = vld [vmem:[%s3 + $0x160] sm:$0xff]
  %v2428 = vld [vmem:[%s3 + $0x168] sm:$0xff]
  %v2429 = vld [vmem:[%s3 + $0x170] sm:$0xff]
  %v2430 = vld [vmem:[%s3 + $0x178] sm:$0xff]
  %v2431 = vld [vmem:[%s3 + $0x180] sm:$0xff]
  %v2432 = vld [vmem:[%s3 + $0x188] sm:$0xff]
  %v2433 = vld [vmem:[%s3 + $0x190] sm:$0xff]
  %v2434 = vld [vmem:[%s3 + $0x198] sm:$0xff]
  %v2435 = vld [vmem:[%s3 + $0x1a0] sm:$0xff]
  %v2436 = vld [vmem:[%s3 + $0x1a8] sm:$0xff]
  %v2437 = vld [vmem:[%s3 + $0x1b0] sm:$0xff]
  %v2438 = vld [vmem:[%s3 + $0x1b8] sm:$0xff]
  %v2439 = vld [vmem:[%s3 + $0x1c0] sm:$0xff]
  %v2440 = vld [vmem:[%s3 + $0x1c8] sm:$0xff]
  %v2441 = vld [vmem:[%s3 + $0x1d0] sm:$0xff]
  %v2442 = vld [vmem:[%s3 + $0x1d8] sm:$0xff]
  %v2443 = vld [vmem:[%s3 + $0x1e0] sm:$0xff]
  %v2444 = vld [vmem:[%s3 + $0x1e8] sm:$0xff]
  %v2445 = vld [vmem:[%s3 + $0x1f0] sm:$0xff]
  %v2446 = vld [vmem:[%s3 + $0x1f8] sm:$0xff]
  %2447 = vmatprep.subr.mxu0 %v2384
  %2448 = vmatpush1.msra.mxu0 %v2383
  %2449 = vmatprep.subr.mxu0 %v2388
  %2450 = vmatpush1.msra.mxu0 %v2387
  %2451 = vmatprep.subr.mxu0 %v2392
  %2452 = vmatpush1.msra.mxu0 %v2391
  %2453 = vmatprep.subr.mxu0 %v2396
  %2454 = vmatpush1.msra.mxu0 %v2395
  %2455 = vmatprep.subr.mxu0 %v2400
  %2456 = vmatpush1.msra.mxu0 %v2399
  %2457 = vmatprep.subr.mxu0 %v2404
  %2458 = vmatpush1.msra.mxu0 %v2403
  %2459 = vmatprep.subr.mxu0 %v2408
  %2460 = vmatpush1.msra.mxu0 %v2407
  %2461 = vmatprep.subr.mxu0 %v2412
  %2462 = vmatpush1.msra.mxu0 %v2411
  %2463 = vmatprep.subr.mxu0 %v2416
  %2464 = vmatpush1.msra.mxu0 %v2415
  %2465 = vmatprep.subr.mxu0 %v2420
  %2466 = vmatpush1.msra.mxu0 %v2419
  %2467 = vmatprep.subr.mxu0 %v2424
  %2468 = vmatpush1.msra.mxu0 %v2423
  %2469 = vmatprep.subr.mxu0 %v2428
  %2470 = vmatpush1.msra.mxu0 %v2427
  %2471 = vmatprep.subr.mxu0 %v2432
  %2472 = vmatpush1.msra.mxu0 %v2431
  %2473 = vmatprep.subr.mxu0 %v2436
  %2474 = vmatpush1.msra.mxu0 %v2435
  %2475 = vmatprep.subr.mxu0 %v2440
  %2476 = vmatpush1.msra.mxu0 %v2439
  %2477 = vmatprep.subr.mxu0 %v2444
  %2478 = vmatpush1.msra.mxu0 %v2443
  %2479 = vmatprep.subr.mxu0 0.0
  %2480 = vmatpush1.msra.mxu0 0.0
  %2481 = vmatprep.subr.mxu0 0.0
  %2482 = vmatpush1.msra.mxu0 0.0
  %2483 = vmatprep.subr.mxu0 0.0
  %2484 = vmatpush1.msra.mxu0 0.0
  %2485 = vmatprep.subr.mxu0 0.0
  %2486 = vmatpush1.msra.mxu0 0.0
  %2487 = vmatprep.subr.mxu0 0.0
  %2488 = vmatpush1.msra.mxu0 0.0
  %2489 = vmatprep.subr.mxu0 0.0
  %2490 = vmatpush1.msra.mxu0 0.0
  %2491 = vmatprep.subr.mxu0 0.0
  %2492 = vmatpush1.msra.mxu0 0.0
  %2493 = vmatprep.subr.mxu0 0.0
  %2494 = vmatpush1.msra.mxu0 0.0
  %2495 = vmatprep.subr.mxu0 0.0
  %2496 = vmatpush1.msra.mxu0 0.0
  %2497 = vmatprep.subr.mxu0 0.0
  %2498 = vmatpush1.msra.mxu0 0.0
  %2499 = vmatprep.subr.mxu0 0.0
  %2500 = vmatpush1.msra.mxu0 0.0
  %2501 = vmatprep.subr.mxu0 0.0
  %2502 = vmatpush1.msra.mxu0 0.0
  %2503 = vmatprep.subr.mxu0 0.0
  %2504 = vmatpush1.msra.mxu0 0.0
  %2505 = vmatprep.subr.mxu0 0.0
  %2506 = vmatpush1.msra.mxu0 0.0
  %2507 = vmatprep.subr.mxu0 0.0
  %2508 = vmatpush1.msra.mxu0 0.0
  %2509 = vmatprep.subr.mxu0 0.0
  %2510 = vmatpush1.msra.mxu0 0.0
  %2511 = vmatprep.mubr.f32.mxu0 0.0
  %2512 = vmatmul.mubr.f32.gmra.mrb[0].mxu0 %v2377
  %v2513 = vpop.f32.mrb[0].mxu0
  %v2514 = vadd.f32 0.0, %v2513
  %v2515 = vpop.f32.mrb[0].mxu0
  %v2516 = vadd.f32 0.0, %v2515
  %2517 = vdwg.mxu0
  %2518 = vmatprep.subr.mxu0 %v2386
  %2519 = vmatpush1.msra.mxu0 %v2385
  %2520 = vmatprep.subr.mxu0 %v2390
  %2521 = vmatpush1.msra.mxu0 %v2389
  %2522 = vmatprep.subr.mxu0 %v2394
  %2523 = vmatpush1.msra.mxu0 %v2393
  %2524 = vmatprep.subr.mxu0 %v2398
  %2525 = vmatpush1.msra.mxu0 %v2397
  %2526 = vmatprep.subr.mxu0 %v2402
  %2527 = vmatpush1.msra.mxu0 %v2401
  %2528 = vmatprep.subr.mxu0 %v2406
  %2529 = vmatpush1.msra.mxu0 %v2405
  %2530 = vmatprep.subr.mxu0 %v2410
  %2531 = vmatpush1.msra.mxu0 %v2409
  %2532 = vmatprep.subr.mxu0 %v2414
  %2533 = vmatpush1.msra.mxu0 %v2413
  %2534 = vmatprep.subr.mxu0 %v2418
  %2535 = vmatpush1.msra.mxu0 %v2417
  %2536 = vmatprep.subr.mxu0 %v2422
  %2537 = vmatpush1.msra.mxu0 %v2421
  %2538 = vmatprep.subr.mxu0 %v2426
  %2539 = vmatpush1.msra.mxu0 %v2425
  %2540 = vmatprep.subr.mxu0 %v2430
  %2541 = vmatpush1.msra.mxu0 %v2429
  %2542 = vmatprep.subr.mxu0 %v2434
  %2543 = vmatpush1.msra.mxu0 %v2433
  %2544 = vmatprep.subr.mxu0 %v2438
  %2545 = vmatpush1.msra.mxu0 %v2437
  %2546 = vmatprep.subr.mxu0 %v2442
  %2547 = vmatpush1.msra.mxu0 %v2441
  %2548 = vmatprep.subr.mxu0 %v2446
  %2549 = vmatpush1.msra.mxu0 %v2445
  %2550 = vmatprep.subr.mxu0 0.0
  %2551 = vmatpush1.msra.mxu0 0.0
  %2552 = vmatprep.subr.mxu0 0.0
  %2553 = vmatpush1.msra.mxu0 0.0
  %2554 = vmatprep.subr.mxu0 0.0
  %2555 = vmatpush1.msra.mxu0 0.0
  %2556 = vmatprep.subr.mxu0 0.0
  %2557 = vmatpush1.msra.mxu0 0.0
  %2558 = vmatprep.subr.mxu0 0.0
  %2559 = vmatpush1.msra.mxu0 0.0
  %2560 = vmatprep.subr.mxu0 0.0
  %2561 = vmatpush1.msra.mxu0 0.0
  %2562 = vmatprep.subr.mxu0 0.0
  %2563 = vmatpush1.msra.mxu0 0.0
  %2564 = vmatprep.subr.mxu0 0.0
  %2565 = vmatpush1.msra.mxu0 0.0
  %2566 = vmatprep.subr.mxu0 0.0
  %2567 = vmatpush1.msra.mxu0 0.0
  %2568 = vmatprep.subr.mxu0 0.0
  %2569 = vmatpush1.msra.mxu0 0.0
  %2570 = vmatprep.subr.mxu0 0.0
  %2571 = vmatpush1.msra.mxu0 0.0
  %2572 = vmatprep.subr.mxu0 0.0
  %2573 = vmatpush1.msra.mxu0 0.0
  %2574 = vmatprep.subr.mxu0 0.0
  %2575 = vmatpush1.msra.mxu0 0.0
  %2576 = vmatprep.subr.mxu0 0.0
  %2577 = vmatpush1.msra.mxu0 0.0
  %2578 = vmatprep.subr.mxu0 0.0
  %2579 = vmatpush1.msra.mxu0 0.0
  %2580 = vmatprep.subr.mxu0 0.0
  %2581 = vmatpush1.msra.mxu0 0.0
  %2582 = vmatprep.mubr.f32.mxu0 0.0
  %2583 = vmatmul.mubr.f32.gmra.mrb[0].mxu0 %v2377
  %v2584 = vpop.f32.mrb[0].mxu0
  %v2585 = vadd.f32 0.0, %v2584
  %v2586 = vpop.f32.mrb[0].mxu0
  %v2587 = vadd.f32 0.0, %v2586
  %2588 = vdwg.mxu0
  %v2589 = vadd.f32 %v2379, %v2514
  %v2590 = vadd.f32 %v2380, %v2516
  %v2591 = vadd.f32 %v2381, %v2585
  %v2592 = vadd.f32 %v2382, %v2587
  %v2593 = vxor.u32 %v2589, 2147483648
  %v2594 = vxor.u32 %v2590, 2147483648
  %v2595 = vmul.f32 %v2593, 1.442695
  %v2596 = vpow.pop %v2595
  %v2597 = vmul.f32 %v2594, 1.442695
  %v2598 = vpow.pop %v2597
  %v2599 = vadd.f32 %v2596, 1.0
  %v2600 = vadd.f32 %v2598, 1.0
  %v2601 = vrcp.pop %v2599
  %v2602 = vmul.f32 1.0, %v2601
  %v2603 = vrcp.pop %v2600
  %v2604 = vmul.f32 1.0, %v2603
  %v2605 = vxor.u32 %v2592, 2147483648
  %v2606 = vmul.f32 %v2605, 1.442695
  %v2607 = vpow.pop %v2606
  %v2608 = vadd.f32 %v2607, 1.0
  %v2609 = vrcp.pop %v2608
  %v2610 = vmul.f32 1.0, %v2609
  %v2611 = vtanh.pop %v2591
  %v2612 = vmul.f32 %v2604, %v2375
  %v2613 = vmul.f32 %v2602, %v2611
  %v2614 = vadd.f32 %v2612, %v2613
  %v2615 = vtanh.pop %v2614
  %v2616 = vmul.f32 %v2610, %v2615
  %2617 = vst [vmem:[#allocation3 + $0x40] sm:$0xff] %v2616
  %v2618 = vld [vmem:[#allocation2 + $0x120] sm:$0xff]
  %v2619 = vld [vmem:[#allocation2 + $0x128] sm:$0xff]
  %v2620 = vld [vmem:[#allocation2 + $0x130] sm:$0xff]
  %v2621 = vld [vmem:[#allocation2 + $0x138] sm:$0xff]
  %v2622 = vld [vmem:[%s3] sm:$0xff]
  %v2623 = vld [vmem:[%s3 + $0x8] sm:$0xff]
  %v2624 = vld [vmem:[%s3 + $0x10] sm:$0xff]
  %v2625 = vld [vmem:[%s3 + $0x18] sm:$0xff]
  %v2626 = vld [vmem:[%s3 + $0x20] sm:$0xff]
  %v2627 = vld [vmem:[%s3 + $0x28] sm:$0xff]
  %v2628 = vld [vmem:[%s3 + $0x30] sm:$0xff]
  %v2629 = vld [vmem:[%s3 + $0x38] sm:$0xff]
  %v2630 = vld [vmem:[%s3 + $0x40] sm:$0xff]
  %v2631 = vld [vmem:[%s3 + $0x48] sm:$0xff]
  %v2632 = vld [vmem:[%s3 + $0x50] sm:$0xff]
  %v2633 = vld [vmem:[%s3 + $0x58] sm:$0xff]
  %v2634 = vld [vmem:[%s3 + $0x60] sm:$0xff]
  %v2635 = vld [vmem:[%s3 + $0x68] sm:$0xff]
  %v2636 = vld [vmem:[%s3 + $0x70] sm:$0xff]
  %v2637 = vld [vmem:[%s3 + $0x78] sm:$0xff]
  %v2638 = vld [vmem:[%s3 + $0x80] sm:$0xff]
  %v2639 = vld [vmem:[%s3 + $0x88] sm:$0xff]
  %v2640 = vld [vmem:[%s3 + $0x90] sm:$0xff]
  %v2641 = vld [vmem:[%s3 + $0x98] sm:$0xff]
  %v2642 = vld [vmem:[%s3 + $0xa0] sm:$0xff]
  %v2643 = vld [vmem:[%s3 + $0xa8] sm:$0xff]
  %v2644 = vld [vmem:[%s3 + $0xb0] sm:$0xff]
  %v2645 = vld [vmem:[%s3 + $0xb8] sm:$0xff]
  %v2646 = vld [vmem:[%s3 + $0xc0] sm:$0xff]
  %v2647 = vld [vmem:[%s3 + $0xc8] sm:$0xff]
  %v2648 = vld [vmem:[%s3 + $0xd0] sm:$0xff]
  %v2649 = vld [vmem:[%s3 + $0xd8] sm:$0xff]
  %v2650 = vld [vmem:[%s3 + $0xe0] sm:$0xff]
  %v2651 = vld [vmem:[%s3 + $0xe8] sm:$0xff]
  %v2652 = vld [vmem:[%s3 + $0xf0] sm:$0xff]
  %v2653 = vld [vmem:[%s3 + $0xf8] sm:$0xff]
  %v2654 = vld [vmem:[%s3 + $0x100] sm:$0xff]
  %v2655 = vld [vmem:[%s3 + $0x108] sm:$0xff]
  %v2656 = vld [vmem:[%s3 + $0x110] sm:$0xff]
  %v2657 = vld [vmem:[%s3 + $0x118] sm:$0xff]
  %v2658 = vld [vmem:[%s3 + $0x120] sm:$0xff]
  %v2659 = vld [vmem:[%s3 + $0x128] sm:$0xff]
  %v2660 = vld [vmem:[%s3 + $0x130] sm:$0xff]
  %v2661 = vld [vmem:[%s3 + $0x138] sm:$0xff]
  %v2662 = vld [vmem:[%s3 + $0x140] sm:$0xff]
  %v2663 = vld [vmem:[%s3 + $0x148] sm:$0xff]
  %v2664 = vld [vmem:[%s3 + $0x150] sm:$0xff]
  %v2665 = vld [vmem:[%s3 + $0x158] sm:$0xff]
  %v2666 = vld [vmem:[%s3 + $0x160] sm:$0xff]
  %v2667 = vld [vmem:[%s3 + $0x168] sm:$0xff]
  %v2668 = vld [vmem:[%s3 + $0x170] sm:$0xff]
  %v2669 = vld [vmem:[%s3 + $0x178] sm:$0xff]
  %v2670 = vld [vmem:[%s3 + $0x180] sm:$0xff]
  %v2671 = vld [vmem:[%s3 + $0x188] sm:$0xff]
  %v2672 = vld [vmem:[%s3 + $0x190] sm:$0xff]
  %v2673 = vld [vmem:[%s3 + $0x198] sm:$0xff]
  %v2674 = vld [vmem:[%s3 + $0x1a0] sm:$0xff]
  %v2675 = vld [vmem:[%s3 + $0x1a8] sm:$0xff]
  %v2676 = vld [vmem:[%s3 + $0x1b0] sm:$0xff]
  %v2677 = vld [vmem:[%s3 + $0x1b8] sm:$0xff]
  %v2678 = vld [vmem:[%s3 + $0x1c0] sm:$0xff]
  %v2679 = vld [vmem:[%s3 + $0x1c8] sm:$0xff]
  %v2680 = vld [vmem:[%s3 + $0x1d0] sm:$0xff]
  %v2681 = vld [vmem:[%s3 + $0x1d8] sm:$0xff]
  %v2682 = vld [vmem:[%s3 + $0x1e0] sm:$0xff]
  %v2683 = vld [vmem:[%s3 + $0x1e8] sm:$0xff]
  %v2684 = vld [vmem:[%s3 + $0x1f0] sm:$0xff]
  %v2685 = vld [vmem:[%s3 + $0x1f8] sm:$0xff]
  %2686 = vmatprep.subr.mxu0 %v2623
  %2687 = vmatpush1.msra.mxu0 %v2622
  %2688 = vmatprep.subr.mxu0 %v2627
  %2689 = vmatpush1.msra.mxu0 %v2626
  %2690 = vmatprep.subr.mxu0 %v2631
  %2691 = vmatpush1.msra.mxu0 %v2630
  %2692 = vmatprep.subr.mxu0 %v2635
  %2693 = vmatpush1.msra.mxu0 %v2634
  %2694 = vmatprep.subr.mxu0 %v2639
  %2695 = vmatpush1.msra.mxu0 %v2638
  %2696 = vmatprep.subr.mxu0 %v2643
  %2697 = vmatpush1.msra.mxu0 %v2642
  %2698 = vmatprep.subr.mxu0 %v2647
  %2699 = vmatpush1.msra.mxu0 %v2646
  %2700 = vmatprep.subr.mxu0 %v2651
  %2701 = vmatpush1.msra.mxu0 %v2650
  %2702 = vmatprep.subr.mxu0 %v2655
  %2703 = vmatpush1.msra.mxu0 %v2654
  %2704 = vmatprep.subr.mxu0 %v2659
  %2705 = vmatpush1.msra.mxu0 %v2658
  %2706 = vmatprep.subr.mxu0 %v2663
  %2707 = vmatpush1.msra.mxu0 %v2662
  %2708 = vmatprep.subr.mxu0 %v2667
  %2709 = vmatpush1.msra.mxu0 %v2666
  %2710 = vmatprep.subr.mxu0 %v2671
  %2711 = vmatpush1.msra.mxu0 %v2670
  %2712 = vmatprep.subr.mxu0 %v2675
  %2713 = vmatpush1.msra.mxu0 %v2674
  %2714 = vmatprep.subr.mxu0 %v2679
  %2715 = vmatpush1.msra.mxu0 %v2678
  %2716 = vmatprep.subr.mxu0 %v2683
  %2717 = vmatpush1.msra.mxu0 %v2682
  %2718 = vmatprep.subr.mxu0 0.0
  %2719 = vmatpush1.msra.mxu0 0.0
  %2720 = vmatprep.subr.mxu0 0.0
  %2721 = vmatpush1.msra.mxu0 0.0
  %2722 = vmatprep.subr.mxu0 0.0
  %2723 = vmatpush1.msra.mxu0 0.0
  %2724 = vmatprep.subr.mxu0 0.0
  %2725 = vmatpush1.msra.mxu0 0.0
  %2726 = vmatprep.subr.mxu0 0.0
  %2727 = vmatpush1.msra.mxu0 0.0
  %2728 = vmatprep.subr.mxu0 0.0
  %2729 = vmatpush1.msra.mxu0 0.0
  %2730 = vmatprep.subr.mxu0 0.0
  %2731 = vmatpush1.msra.mxu0 0.0
  %2732 = vmatprep.subr.mxu0 0.0
  %2733 = vmatpush1.msra.mxu0 0.0
  %2734 = vmatprep.subr.mxu0 0.0
  %2735 = vmatpush1.msra.mxu0 0.0
  %2736 = vmatprep.subr.mxu0 0.0
  %2737 = vmatpush1.msra.mxu0 0.0
  %2738 = vmatprep.subr.mxu0 0.0
  %2739 = vmatpush1.msra.mxu0 0.0
  %2740 = vmatprep.subr.mxu0 0.0
  %2741 = vmatpush1.msra.mxu0 0.0
  %2742 = vmatprep.subr.mxu0 0.0
  %2743 = vmatpush1.msra.mxu0 0.0
  %2744 = vmatprep.subr.mxu0 0.0
  %2745 = vmatpush1.msra.mxu0 0.0
  %2746 = vmatprep.subr.mxu0 0.0
  %2747 = vmatpush1.msra.mxu0 0.0
  %2748 = vmatprep.subr.mxu0 0.0
  %2749 = vmatpush1.msra.mxu0 0.0
  %2750 = vmatprep.mubr.f32.mxu0 0.0
  %2751 = vmatmul.mubr.f32.gmra.mrb[0].mxu0 %v2616
  %v2752 = vpop.f32.mrb[0].mxu0
  %v2753 = vadd.f32 0.0, %v2752
  %v2754 = vpop.f32.mrb[0].mxu0
  %v2755 = vadd.f32 0.0, %v2754
  %2756 = vdwg.mxu0
  %2757 = vmatprep.subr.mxu0 %v2625
  %2758 = vmatpush1.msra.mxu0 %v2624
  %2759 = vmatprep.subr.mxu0 %v2629
  %2760 = vmatpush1.msra.mxu0 %v2628
  %2761 = vmatprep.subr.mxu0 %v2633
  %2762 = vmatpush1.msra.mxu0 %v2632
  %2763 = vmatprep.subr.mxu0 %v2637
  %2764 = vmatpush1.msra.mxu0 %v2636
  %2765 = vmatprep.subr.mxu0 %v2641
  %2766 = vmatpush1.msra.mxu0 %v2640
  %2767 = vmatprep.subr.mxu0 %v2645
  %2768 = vmatpush1.msra.mxu0 %v2644
  %2769 = vmatprep.subr.mxu0 %v2649
  %2770 = vmatpush1.msra.mxu0 %v2648
  %2771 = vmatprep.subr.mxu0 %v2653
  %2772 = vmatpush1.msra.mxu0 %v2652
  %2773 = vmatprep.subr.mxu0 %v2657
  %2774 = vmatpush1.msra.mxu0 %v2656
  %2775 = vmatprep.subr.mxu0 %v2661
  %2776 = vmatpush1.msra.mxu0 %v2660
  %2777 = vmatprep.subr.mxu0 %v2665
  %2778 = vmatpush1.msra.mxu0 %v2664
  %2779 = vmatprep.subr.mxu0 %v2669
  %2780 = vmatpush1.msra.mxu0 %v2668
  %2781 = vmatprep.subr.mxu0 %v2673
  %2782 = vmatpush1.msra.mxu0 %v2672
  %2783 = vmatprep.subr.mxu0 %v2677
  %2784 = vmatpush1.msra.mxu0 %v2676
  %2785 = vmatprep.subr.mxu0 %v2681
  %2786 = vmatpush1.msra.mxu0 %v2680
  %2787 = vmatprep.subr.mxu0 %v2685
  %2788 = vmatpush1.msra.mxu0 %v2684
  %2789 = vmatprep.subr.mxu0 0.0
  %2790 = vmatpush1.msra.mxu0 0.0
  %2791 = vmatprep.subr.mxu0 0.0
  %2792 = vmatpush1.msra.mxu0 0.0
  %2793 = vmatprep.subr.mxu0 0.0
  %2794 = vmatpush1.msra.mxu0 0.0
  %2795 = vmatprep.subr.mxu0 0.0
  %2796 = vmatpush1.msra.mxu0 0.0
  %2797 = vmatprep.subr.mxu0 0.0
  %2798 = vmatpush1.msra.mxu0 0.0
  %2799 = vmatprep.subr.mxu0 0.0
  %2800 = vmatpush1.msra.mxu0 0.0
  %2801 = vmatprep.subr.mxu0 0.0
  %2802 = vmatpush1.msra.mxu0 0.0
  %2803 = vmatprep.subr.mxu0 0.0
  %2804 = vmatpush1.msra.mxu0 0.0
  %2805 = vmatprep.subr.mxu0 0.0
  %2806 = vmatpush1.msra.mxu0 0.0
  %2807 = vmatprep.subr.mxu0 0.0
  %2808 = vmatpush1.msra.mxu0 0.0
  %2809 = vmatprep.subr.mxu0 0.0
  %2810 = vmatpush1.msra.mxu0 0.0
  %2811 = vmatprep.subr.mxu0 0.0
  %2812 = vmatpush1.msra.mxu0 0.0
  %2813 = vmatprep.subr.mxu0 0.0
  %2814 = vmatpush1.msra.mxu0 0.0
  %2815 = vmatprep.subr.mxu0 0.0
  %2816 = vmatpush1.msra.mxu0 0.0
  %2817 = vmatprep.subr.mxu0 0.0
  %2818 = vmatpush1.msra.mxu0 0.0
  %2819 = vmatprep.subr.mxu0 0.0
  %2820 = vmatpush1.msra.mxu0 0.0
  %2821 = vmatprep.mubr.f32.mxu0 0.0
  %2822 = vmatmul.mubr.f32.gmra.mrb[0].mxu0 %v2616
  %v2823 = vpop.f32.mrb[0].mxu0
  %v2824 = vadd.f32 0.0, %v2823
  %v2825 = vpop.f32.mrb[0].mxu0
  %v2826 = vadd.f32 0.0, %v2825
  %2827 = vdwg.mxu0
  %v2828 = vadd.f32 %v2618, %v2753
  %v2829 = vadd.f32 %v2619, %v2755
  %v2830 = vadd.f32 %v2620, %v2824
  %v2831 = vadd.f32 %v2621, %v2826
  %v2832 = vxor.u32 %v2828, 2147483648
  %v2833 = vxor.u32 %v2829, 2147483648
  %v2834 = vmul.f32 %v2832, 1.442695
  %v2835 = vpow.pop %v2834
  %v2836 = vmul.f32 %v2833, 1.442695
  %v2837 = vpow.pop %v2836
  %v2838 = vadd.f32 %v2835, 1.0
  %v2839 = vadd.f32 %v2837, 1.0
  %v2840 = vrcp.pop %v2838
  %v2841 = vmul.f32 1.0, %v2840
  %v2842 = vrcp.pop %v2839
  %v2843 = vmul.f32 1.0, %v2842
  %v2844 = vxor.u32 %v2831, 2147483648
  %v2845 = vmul.f32 %v2844, 1.442695
  %v2846 = vpow.pop %v2845
  %v2847 = vadd.f32 %v2846, 1.0
  %v2848 = vrcp.pop %v2847
  %v2849 = vmul.f32 1.0, %v2848
  %v2850 = vtanh.pop %v2830
  %v2851 = vmul.f32 %v2843, %v2614
  %v2852 = vmul.f32 %v2841, %v2850
  %v2853 = vadd.f32 %v2851, %v2852
  %v2854 = vtanh.pop %v2853
  %v2855 = vmul.f32 %v2849, %v2854
  %2856 = vst [vmem:[#allocation3 + $0x48] sm:$0xff] %v2855
  %v2857 = vld [vmem:[#allocation2 + $0x140] sm:$0xff]
  %v2858 = vld [vmem:[#allocation2 + $0x148] sm:$0xff]
  %v2859 = vld [vmem:[#allocation2 + $0x150] sm:$0xff]
  %v2860 = vld [vmem:[#allocation2 + $0x158] sm:$0xff]
  %v2861 = vld [vmem:[%s3] sm:$0xff]
  %v2862 = vld [vmem:[%s3 + $0x8] sm:$0xff]
  %v2863 = vld [vmem:[%s3 + $0x10] sm:$0xff]
  %v2864 = vld [vmem:[%s3 + $0x18] sm:$0xff]
  %v2865 = vld [vmem:[%s3 + $0x20] sm:$0xff]
  %v2866 = vld [vmem:[%s3 + $0x28] sm:$0xff]
  %v2867 = vld [vmem:[%s3 + $0x30] sm:$0xff]
  %v2868 = vld [vmem:[%s3 + $0x38] sm:$0xff]
  %v2869 = vld [vmem:[%s3 + $0x40] sm:$0xff]
  %v2870 = vld [vmem:[%s3 + $0x48] sm:$0xff]
  %v2871 = vld [vmem:[%s3 + $0x50] sm:$0xff]
  %v2872 = vld [vmem:[%s3 + $0x58] sm:$0xff]
  %v2873 = vld [vmem:[%s3 + $0x60] sm:$0xff]
  %v2874 = vld [vmem:[%s3 + $0x68] sm:$0xff]
  %v2875 = vld [vmem:[%s3 + $0x70] sm:$0xff]
  %v2876 = vld [vmem:[%s3 + $0x78] sm:$0xff]
  %v2877 = vld [vmem:[%s3 + $0x80] sm:$0xff]
  %v2878 = vld [vmem:[%s3 + $0x88] sm:$0xff]
  %v2879 = vld [vmem:[%s3 + $0x90] sm:$0xff]
  %v2880 = vld [vmem:[%s3 + $0x98] sm:$0xff]
  %v2881 = vld [vmem:[%s3 + $0xa0] sm:$0xff]
  %v2882 = vld [vmem:[%s3 + $0xa8] sm:$0xff]
  %v2883 = vld [vmem:[%s3 + $0xb0] sm:$0xff]
  %v2884 = vld [vmem:[%s3 + $0xb8] sm:$0xff]
  %v2885 = vld [vmem:[%s3 + $0xc0] sm:$0xff]
  %v2886 = vld [vmem:[%s3 + $0xc8] sm:$0xff]
  %v2887 = vld [vmem:[%s3 + $0xd0] sm:$0xff]
  %v2888 = vld [vmem:[%s3 + $0xd8] sm:$0xff]
  %v2889 = vld [vmem:[%s3 + $0xe0] sm:$0xff]
  %v2890 = vld [vmem:[%s3 + $0xe8] sm:$0xff]
  %v2891 = vld [vmem:[%s3 + $0xf0] sm:$0xff]
  %v2892 = vld [vmem:[%s3 + $0xf8] sm:$0xff]
  %v2893 = vld [vmem:[%s3 + $0x100] sm:$0xff]
  %v2894 = vld [vmem:[%s3 + $0x108] sm:$0xff]
  %v2895 = vld [vmem:[%s3 + $0x110] sm:$0xff]
  %v2896 = vld [vmem:[%s3 + $0x118] sm:$0xff]
  %v2897 = vld [vmem:[%s3 + $0x120] sm:$0xff]
  %v2898 = vld [vmem:[%s3 + $0x128] sm:$0xff]
  %v2899 = vld [vmem:[%s3 + $0x130] sm:$0xff]
  %v2900 = vld [vmem:[%s3 + $0x138] sm:$0xff]
  %v2901 = vld [vmem:[%s3 + $0x140] sm:$0xff]
  %v2902 = vld [vmem:[%s3 + $0x148] sm:$0xff]
  %v2903 = vld [vmem:[%s3 + $0x150] sm:$0xff]
  %v2904 = vld [vmem:[%s3 + $0x158] sm:$0xff]
  %v2905 = vld [vmem:[%s3 + $0x160] sm:$0xff]
  %v2906 = vld [vmem:[%s3 + $0x168] sm:$0xff]
  %v2907 = vld [vmem:[%s3 + $0x170] sm:$0xff]
  %v2908 = vld [vmem:[%s3 + $0x178] sm:$0xff]
  %v2909 = vld [vmem:[%s3 + $0x180] sm:$0xff]
  %v2910 = vld [vmem:[%s3 + $0x188] sm:$0xff]
  %v2911 = vld [vmem:[%s3 + $0x190] sm:$0xff]
  %v2912 = vld [vmem:[%s3 + $0x198] sm:$0xff]
  %v2913 = vld [vmem:[%s3 + $0x1a0] sm:$0xff]
  %v2914 = vld [vmem:[%s3 + $0x1a8] sm:$0xff]
  %v2915 = vld [vmem:[%s3 + $0x1b0] sm:$0xff]
  %v2916 = vld [vmem:[%s3 + $0x1b8] sm:$0xff]
  %v2917 = vld [vmem:[%s3 + $0x1c0] sm:$0xff]
  %v2918 = vld [vmem:[%s3 + $0x1c8] sm:$0xff]
  %v2919 = vld [vmem:[%s3 + $0x1d0] sm:$0xff]
  %v2920 = vld [vmem:[%s3 + $0x1d8] sm:$0xff]
  %v2921 = vld [vmem:[%s3 + $0x1e0] sm:$0xff]
  %v2922 = vld [vmem:[%s3 + $0x1e8] sm:$0xff]
  %v2923 = vld [vmem:[%s3 + $0x1f0] sm:$0xff]
  %v2924 = vld [vmem:[%s3 + $0x1f8] sm:$0xff]
  %2925 = vmatprep.subr.mxu0 %v2862
  %2926 = vmatpush1.msra.mxu0 %v2861
  %2927 = vmatprep.subr.mxu0 %v2866
  %2928 = vmatpush1.msra.mxu0 %v2865
  %2929 = vmatprep.subr.mxu0 %v2870
  %2930 = vmatpush1.msra.mxu0 %v2869
  %2931 = vmatprep.subr.mxu0 %v2874
  %2932 = vmatpush1.msra.mxu0 %v2873
  %2933 = vmatprep.subr.mxu0 %v2878
  %2934 = vmatpush1.msra.mxu0 %v2877
  %2935 = vmatprep.subr.mxu0 %v2882
  %2936 = vmatpush1.msra.mxu0 %v2881
  %2937 = vmatprep.subr.mxu0 %v2886
  %2938 = vmatpush1.msra.mxu0 %v2885
  %2939 = vmatprep.subr.mxu0 %v2890
  %2940 = vmatpush1.msra.mxu0 %v2889
  %2941 = vmatprep.subr.mxu0 %v2894
  %2942 = vmatpush1.msra.mxu0 %v2893
  %2943 = vmatprep.subr.mxu0 %v2898
  %2944 = vmatpush1.msra.mxu0 %v2897
  %2945 = vmatprep.subr.mxu0 %v2902
  %2946 = vmatpush1.msra.mxu0 %v2901
  %2947 = vmatprep.subr.mxu0 %v2906
  %2948 = vmatpush1.msra.mxu0 %v2905
  %2949 = vmatprep.subr.mxu0 %v2910
  %2950 = vmatpush1.msra.mxu0 %v2909
  %2951 = vmatprep.subr.mxu0 %v2914
  %2952 = vmatpush1.msra.mxu0 %v2913
  %2953 = vmatprep.subr.mxu0 %v2918
  %2954 = vmatpush1.msra.mxu0 %v2917
  %2955 = vmatprep.subr.mxu0 %v2922
  %2956 = vmatpush1.msra.mxu0 %v2921
  %2957 = vmatprep.subr.mxu0 0.0
  %2958 = vmatpush1.msra.mxu0 0.0
  %2959 = vmatprep.subr.mxu0 0.0
  %2960 = vmatpush1.msra.mxu0 0.0
  %2961 = vmatprep.subr.mxu0 0.0
  %2962 = vmatpush1.msra.mxu0 0.0
  %2963 = vmatprep.subr.mxu0 0.0
  %2964 = vmatpush1.msra.mxu0 0.0
  %2965 = vmatprep.subr.mxu0 0.0
  %2966 = vmatpush1.msra.mxu0 0.0
  %2967 = vmatprep.subr.mxu0 0.0
  %2968 = vmatpush1.msra.mxu0 0.0
  %2969 = vmatprep.subr.mxu0 0.0
  %2970 = vmatpush1.msra.mxu0 0.0
  %2971 = vmatprep.subr.mxu0 0.0
  %2972 = vmatpush1.msra.mxu0 0.0
  %2973 = vmatprep.subr.mxu0 0.0
  %2974 = vmatpush1.msra.mxu0 0.0
  %2975 = vmatprep.subr.mxu0 0.0
  %2976 = vmatpush1.msra.mxu0 0.0
  %2977 = vmatprep.subr.mxu0 0.0
  %2978 = vmatpush1.msra.mxu0 0.0
  %2979 = vmatprep.subr.mxu0 0.0
  %2980 = vmatpush1.msra.mxu0 0.0
  %2981 = vmatprep.subr.mxu0 0.0
  %2982 = vmatpush1.msra.mxu0 0.0
  %2983 = vmatprep.subr.mxu0 0.0
  %2984 = vmatpush1.msra.mxu0 0.0
  %2985 = vmatprep.subr.mxu0 0.0
  %2986 = vmatpush1.msra.mxu0 0.0
  %2987 = vmatprep.subr.mxu0 0.0
  %2988 = vmatpush1.msra.mxu0 0.0
  %2989 = vmatprep.mubr.f32.mxu0 0.0
  %2990 = vmatmul.mubr.f32.gmra.mrb[0].mxu0 %v2855
  %v2991 = vpop.f32.mrb[0].mxu0
  %v2992 = vadd.f32 0.0, %v2991
  %v2993 = vpop.f32.mrb[0].mxu0
  %v2994 = vadd.f32 0.0, %v2993
  %2995 = vdwg.mxu0
  %2996 = vmatprep.subr.mxu0 %v2864
  %2997 = vmatpush1.msra.mxu0 %v2863
  %2998 = vmatprep.subr.mxu0 %v2868
  %2999 = vmatpush1.msra.mxu0 %v2867
  %3000 = vmatprep.subr.mxu0 %v2872
  %3001 = vmatpush1.msra.mxu0 %v2871
  %3002 = vmatprep.subr.mxu0 %v2876
  %3003 = vmatpush1.msra.mxu0 %v2875
  %3004 = vmatprep.subr.mxu0 %v2880
  %3005 = vmatpush1.msra.mxu0 %v2879
  %3006 = vmatprep.subr.mxu0 %v2884
  %3007 = vmatpush1.msra.mxu0 %v2883
  %3008 = vmatprep.subr.mxu0 %v2888
  %3009 = vmatpush1.msra.mxu0 %v2887
  %3010 = vmatprep.subr.mxu0 %v2892
  %3011 = vmatpush1.msra.mxu0 %v2891
  %3012 = vmatprep.subr.mxu0 %v2896
  %3013 = vmatpush1.msra.mxu0 %v2895
  %3014 = vmatprep.subr.mxu0 %v2900
  %3015 = vmatpush1.msra.mxu0 %v2899
  %3016 = vmatprep.subr.mxu0 %v2904
  %3017 = vmatpush1.msra.mxu0 %v2903
  %3018 = vmatprep.subr.mxu0 %v2908
  %3019 = vmatpush1.msra.mxu0 %v2907
  %3020 = vmatprep.subr.mxu0 %v2912
  %3021 = vmatpush1.msra.mxu0 %v2911
  %3022 = vmatprep.subr.mxu0 %v2916
  %3023 = vmatpush1.msra.mxu0 %v2915
  %3024 = vmatprep.subr.mxu0 %v2920
  %3025 = vmatpush1.msra.mxu0 %v2919
  %3026 = vmatprep.subr.mxu0 %v2924
  %3027 = vmatpush1.msra.mxu0 %v2923
  %3028 = vmatprep.subr.mxu0 0.0
  %3029 = vmatpush1.msra.mxu0 0.0
  %3030 = vmatprep.subr.mxu0 0.0
  %3031 = vmatpush1.msra.mxu0 0.0
  %3032 = vmatprep.subr.mxu0 0.0
  %3033 = vmatpush1.msra.mxu0 0.0
  %3034 = vmatprep.subr.mxu0 0.0
  %3035 = vmatpush1.msra.mxu0 0.0
  %3036 = vmatprep.subr.mxu0 0.0
  %3037 = vmatpush1.msra.mxu0 0.0
  %3038 = vmatprep.subr.mxu0 0.0
  %3039 = vmatpush1.msra.mxu0 0.0
  %3040 = vmatprep.subr.mxu0 0.0
  %3041 = vmatpush1.msra.mxu0 0.0
  %3042 = vmatprep.subr.mxu0 0.0
  %3043 = vmatpush1.msra.mxu0 0.0
  %3044 = vmatprep.subr.mxu0 0.0
  %3045 = vmatpush1.msra.mxu0 0.0
  %3046 = vmatprep.subr.mxu0 0.0
  %3047 = vmatpush1.msra.mxu0 0.0
  %3048 = vmatprep.subr.mxu0 0.0
  %3049 = vmatpush1.msra.mxu0 0.0
  %3050 = vmatprep.subr.mxu0 0.0
  %3051 = vmatpush1.msra.mxu0 0.0
  %3052 = vmatprep.subr.mxu0 0.0
  %3053 = vmatpush1.msra.mxu0 0.0
  %3054 = vmatprep.subr.mxu0 0.0
  %3055 = vmatpush1.msra.mxu0 0.0
  %3056 = vmatprep.subr.mxu0 0.0
  %3057 = vmatpush1.msra.mxu0 0.0
  %3058 = vmatprep.subr.mxu0 0.0
  %3059 = vmatpush1.msra.mxu0 0.0
  %3060 = vmatprep.mubr.f32.mxu0 0.0
  %3061 = vmatmul.mubr.f32.gmra.mrb[0].mxu0 %v2855
  %v3062 = vpop.f32.mrb[0].mxu0
  %v3063 = vadd.f32 0.0, %v3062
  %v3064 = vpop.f32.mrb[0].mxu0
  %v3065 = vadd.f32 0.0, %v3064
  %3066 = vdwg.mxu0
  %v3067 = vadd.f32 %v2857, %v2992
  %v3068 = vadd.f32 %v2858, %v2994
  %v3069 = vadd.f32 %v2859, %v3063
  %v3070 = vadd.f32 %v2860, %v3065
  %v3071 = vxor.u32 %v3067, 2147483648
  %v3072 = vxor.u32 %v3068, 2147483648
  %v3073 = vmul.f32 %v3071, 1.442695
  %v3074 = vpow.pop %v3073
  %v3075 = vmul.f32 %v3072, 1.442695
  %v3076 = vpow.pop %v3075
  %v3077 = vadd.f32 %v3074, 1.0
  %v3078 = vadd.f32 %v3076, 1.0
  %v3079 = vrcp.pop %v3077
  %v3080 = vmul.f32 1.0, %v3079
  %v3081 = vrcp.pop %v3078
  %v3082 = vmul.f32 1.0, %v3081
  %v3083 = vxor.u32 %v3070, 2147483648
  %v3084 = vmul.f32 %v3083, 1.442695
  %v3085 = vpow.pop %v3084
  %v3086 = vadd.f32 %v3085, 1.0
  %v3087 = vrcp.pop %v3086
  %v3088 = vmul.f32 1.0, %v3087
  %v3089 = vtanh.pop %v3069
  %v3090 = vmul.f32 %v3082, %v2853
  %v3091 = vmul.f32 %v3080, %v3089
  %v3092 = vadd.f32 %v3090, %v3091
  %v3093 = vtanh.pop %v3092
  %v3094 = vmul.f32 %v3088, %v3093
  %3095 = vst [vmem:[#allocation3 + $0x50] sm:$0xff] %v3094
  %v3096 = vld [vmem:[#allocation2 + $0x160] sm:$0xff]
  %v3097 = vld [vmem:[#allocation2 + $0x168] sm:$0xff]
  %v3098 = vld [vmem:[#allocation2 + $0x170] sm:$0xff]
  %v3099 = vld [vmem:[#allocation2 + $0x178] sm:$0xff]
  %v3100 = vld [vmem:[%s3] sm:$0xff]
  %v3101 = vld [vmem:[%s3 + $0x8] sm:$0xff]
  %v3102 = vld [vmem:[%s3 + $0x10] sm:$0xff]
  %v3103 = vld [vmem:[%s3 + $0x18] sm:$0xff]
  %v3104 = vld [vmem:[%s3 + $0x20] sm:$0xff]
  %v3105 = vld [vmem:[%s3 + $0x28] sm:$0xff]
  %v3106 = vld [vmem:[%s3 + $0x30] sm:$0xff]
  %v3107 = vld [vmem:[%s3 + $0x38] sm:$0xff]
  %v3108 = vld [vmem:[%s3 + $0x40] sm:$0xff]
  %v3109 = vld [vmem:[%s3 + $0x48] sm:$0xff]
  %v3110 = vld [vmem:[%s3 + $0x50] sm:$0xff]
  %v3111 = vld [vmem:[%s3 + $0x58] sm:$0xff]
  %v3112 = vld [vmem:[%s3 + $0x60] sm:$0xff]
  %v3113 = vld [vmem:[%s3 + $0x68] sm:$0xff]
  %v3114 = vld [vmem:[%s3 + $0x70] sm:$0xff]
  %v3115 = vld [vmem:[%s3 + $0x78] sm:$0xff]
  %v3116 = vld [vmem:[%s3 + $0x80] sm:$0xff]
  %v3117 = vld [vmem:[%s3 + $0x88] sm:$0xff]
  %v3118 = vld [vmem:[%s3 + $0x90] sm:$0xff]
  %v3119 = vld [vmem:[%s3 + $0x98] sm:$0xff]
  %v3120 = vld [vmem:[%s3 + $0xa0] sm:$0xff]
  %v3121 = vld [vmem:[%s3 + $0xa8] sm:$0xff]
  %v3122 = vld [vmem:[%s3 + $0xb0] sm:$0xff]
  %v3123 = vld [vmem:[%s3 + $0xb8] sm:$0xff]
  %v3124 = vld [vmem:[%s3 + $0xc0] sm:$0xff]
  %v3125 = vld [vmem:[%s3 + $0xc8] sm:$0xff]
  %v3126 = vld [vmem:[%s3 + $0xd0] sm:$0xff]
  %v3127 = vld [vmem:[%s3 + $0xd8] sm:$0xff]
  %v3128 = vld [vmem:[%s3 + $0xe0] sm:$0xff]
  %v3129 = vld [vmem:[%s3 + $0xe8] sm:$0xff]
  %v3130 = vld [vmem:[%s3 + $0xf0] sm:$0xff]
  %v3131 = vld [vmem:[%s3 + $0xf8] sm:$0xff]
  %v3132 = vld [vmem:[%s3 + $0x100] sm:$0xff]
  %v3133 = vld [vmem:[%s3 + $0x108] sm:$0xff]
  %v3134 = vld [vmem:[%s3 + $0x110] sm:$0xff]
  %v3135 = vld [vmem:[%s3 + $0x118] sm:$0xff]
  %v3136 = vld [vmem:[%s3 + $0x120] sm:$0xff]
  %v3137 = vld [vmem:[%s3 + $0x128] sm:$0xff]
  %v3138 = vld [vmem:[%s3 + $0x130] sm:$0xff]
  %v3139 = vld [vmem:[%s3 + $0x138] sm:$0xff]
  %v3140 = vld [vmem:[%s3 + $0x140] sm:$0xff]
  %v3141 = vld [vmem:[%s3 + $0x148] sm:$0xff]
  %v3142 = vld [vmem:[%s3 + $0x150] sm:$0xff]
  %v3143 = vld [vmem:[%s3 + $0x158] sm:$0xff]
  %v3144 = vld [vmem:[%s3 + $0x160] sm:$0xff]
  %v3145 = vld [vmem:[%s3 + $0x168] sm:$0xff]
  %v3146 = vld [vmem:[%s3 + $0x170] sm:$0xff]
  %v3147 = vld [vmem:[%s3 + $0x178] sm:$0xff]
  %v3148 = vld [vmem:[%s3 + $0x180] sm:$0xff]
  %v3149 = vld [vmem:[%s3 + $0x188] sm:$0xff]
  %v3150 = vld [vmem:[%s3 + $0x190] sm:$0xff]
  %v3151 = vld [vmem:[%s3 + $0x198] sm:$0xff]
  %v3152 = vld [vmem:[%s3 + $0x1a0] sm:$0xff]
  %v3153 = vld [vmem:[%s3 + $0x1a8] sm:$0xff]
  %v3154 = vld [vmem:[%s3 + $0x1b0] sm:$0xff]
  %v3155 = vld [vmem:[%s3 + $0x1b8] sm:$0xff]
  %v3156 = vld [vmem:[%s3 + $0x1c0] sm:$0xff]
  %v3157 = vld [vmem:[%s3 + $0x1c8] sm:$0xff]
  %v3158 = vld [vmem:[%s3 + $0x1d0] sm:$0xff]
  %v3159 = vld [vmem:[%s3 + $0x1d8] sm:$0xff]
  %v3160 = vld [vmem:[%s3 + $0x1e0] sm:$0xff]
  %v3161 = vld [vmem:[%s3 + $0x1e8] sm:$0xff]
  %v3162 = vld [vmem:[%s3 + $0x1f0] sm:$0xff]
  %v3163 = vld [vmem:[%s3 + $0x1f8] sm:$0xff]
  %3164 = vmatprep.subr.mxu0 %v3101
  %3165 = vmatpush1.msra.mxu0 %v3100
  %3166 = vmatprep.subr.mxu0 %v3105
  %3167 = vmatpush1.msra.mxu0 %v3104
  %3168 = vmatprep.subr.mxu0 %v3109
  %3169 = vmatpush1.msra.mxu0 %v3108
  %3170 = vmatprep.subr.mxu0 %v3113
  %3171 = vmatpush1.msra.mxu0 %v3112
  %3172 = vmatprep.subr.mxu0 %v3117
  %3173 = vmatpush1.msra.mxu0 %v3116
  %3174 = vmatprep.subr.mxu0 %v3121
  %3175 = vmatpush1.msra.mxu0 %v3120
  %3176 = vmatprep.subr.mxu0 %v3125
  %3177 = vmatpush1.msra.mxu0 %v3124
  %3178 = vmatprep.subr.mxu0 %v3129
  %3179 = vmatpush1.msra.mxu0 %v3128
  %3180 = vmatprep.subr.mxu0 %v3133
  %3181 = vmatpush1.msra.mxu0 %v3132
  %3182 = vmatprep.subr.mxu0 %v3137
  %3183 = vmatpush1.msra.mxu0 %v3136
  %3184 = vmatprep.subr.mxu0 %v3141
  %3185 = vmatpush1.msra.mxu0 %v3140
  %3186 = vmatprep.subr.mxu0 %v3145
  %3187 = vmatpush1.msra.mxu0 %v3144
  %3188 = vmatprep.subr.mxu0 %v3149
  %3189 = vmatpush1.msra.mxu0 %v3148
  %3190 = vmatprep.subr.mxu0 %v3153
  %3191 = vmatpush1.msra.mxu0 %v3152
  %3192 = vmatprep.subr.mxu0 %v3157
  %3193 = vmatpush1.msra.mxu0 %v3156
  %3194 = vmatprep.subr.mxu0 %v3161
  %3195 = vmatpush1.msra.mxu0 %v3160
  %3196 = vmatprep.subr.mxu0 0.0
  %3197 = vmatpush1.msra.mxu0 0.0
  %3198 = vmatprep.subr.mxu0 0.0
  %3199 = vmatpush1.msra.mxu0 0.0
  %3200 = vmatprep.subr.mxu0 0.0
  %3201 = vmatpush1.msra.mxu0 0.0
  %3202 = vmatprep.subr.mxu0 0.0
  %3203 = vmatpush1.msra.mxu0 0.0
  %3204 = vmatprep.subr.mxu0 0.0
  %3205 = vmatpush1.msra.mxu0 0.0
  %3206 = vmatprep.subr.mxu0 0.0
  %3207 = vmatpush1.msra.mxu0 0.0
  %3208 = vmatprep.subr.mxu0 0.0
  %3209 = vmatpush1.msra.mxu0 0.0
  %3210 = vmatprep.subr.mxu0 0.0
  %3211 = vmatpush1.msra.mxu0 0.0
  %3212 = vmatprep.subr.mxu0 0.0
  %3213 = vmatpush1.msra.mxu0 0.0
  %3214 = vmatprep.subr.mxu0 0.0
  %3215 = vmatpush1.msra.mxu0 0.0
  %3216 = vmatprep.subr.mxu0 0.0
  %3217 = vmatpush1.msra.mxu0 0.0
  %3218 = vmatprep.subr.mxu0 0.0
  %3219 = vmatpush1.msra.mxu0 0.0
  %3220 = vmatprep.subr.mxu0 0.0
  %3221 = vmatpush1.msra.mxu0 0.0
  %3222 = vmatprep.subr.mxu0 0.0
  %3223 = vmatpush1.msra.mxu0 0.0
  %3224 = vmatprep.subr.mxu0 0.0
  %3225 = vmatpush1.msra.mxu0 0.0
  %3226 = vmatprep.subr.mxu0 0.0
  %3227 = vmatpush1.msra.mxu0 0.0
  %3228 = vmatprep.mubr.f32.mxu0 0.0
  %3229 = vmatmul.mubr.f32.gmra.mrb[0].mxu0 %v3094
  %v3230 = vpop.f32.mrb[0].mxu0
  %v3231 = vadd.f32 0.0, %v3230
  %v3232 = vpop.f32.mrb[0].mxu0
  %v3233 = vadd.f32 0.0, %v3232
  %3234 = vdwg.mxu0
  %3235 = vmatprep.subr.mxu0 %v3103
  %3236 = vmatpush1.msra.mxu0 %v3102
  %3237 = vmatprep.subr.mxu0 %v3107
  %3238 = vmatpush1.msra.mxu0 %v3106
  %3239 = vmatprep.subr.mxu0 %v3111
  %3240 = vmatpush1.msra.mxu0 %v3110
  %3241 = vmatprep.subr.mxu0 %v3115
  %3242 = vmatpush1.msra.mxu0 %v3114
  %3243 = vmatprep.subr.mxu0 %v3119
  %3244 = vmatpush1.msra.mxu0 %v3118
  %3245 = vmatprep.subr.mxu0 %v3123
  %3246 = vmatpush1.msra.mxu0 %v3122
  %3247 = vmatprep.subr.mxu0 %v3127
  %3248 = vmatpush1.msra.mxu0 %v3126
  %3249 = vmatprep.subr.mxu0 %v3131
  %3250 = vmatpush1.msra.mxu0 %v3130
  %3251 = vmatprep.subr.mxu0 %v3135
  %3252 = vmatpush1.msra.mxu0 %v3134
  %3253 = vmatprep.subr.mxu0 %v3139
  %3254 = vmatpush1.msra.mxu0 %v3138
  %3255 = vmatprep.subr.mxu0 %v3143
  %3256 = vmatpush1.msra.mxu0 %v3142
  %3257 = vmatprep.subr.mxu0 %v3147
  %3258 = vmatpush1.msra.mxu0 %v3146
  %3259 = vmatprep.subr.mxu0 %v3151
  %3260 = vmatpush1.msra.mxu0 %v3150
  %3261 = vmatprep.subr.mxu0 %v3155
  %3262 = vmatpush1.msra.mxu0 %v3154
  %3263 = vmatprep.subr.mxu0 %v3159
  %3264 = vmatpush1.msra.mxu0 %v3158
  %3265 = vmatprep.subr.mxu0 %v3163
  %3266 = vmatpush1.msra.mxu0 %v3162
  %3267 = vmatprep.subr.mxu0 0.0
  %3268 = vmatpush1.msra.mxu0 0.0
  %3269 = vmatprep.subr.mxu0 0.0
  %3270 = vmatpush1.msra.mxu0 0.0
  %3271 = vmatprep.subr.mxu0 0.0
  %3272 = vmatpush1.msra.mxu0 0.0
  %3273 = vmatprep.subr.mxu0 0.0
  %3274 = vmatpush1.msra.mxu0 0.0
  %3275 = vmatprep.subr.mxu0 0.0
  %3276 = vmatpush1.msra.mxu0 0.0
  %3277 = vmatprep.subr.mxu0 0.0
  %3278 = vmatpush1.msra.mxu0 0.0
  %3279 = vmatprep.subr.mxu0 0.0
  %3280 = vmatpush1.msra.mxu0 0.0
  %3281 = vmatprep.subr.mxu0 0.0
  %3282 = vmatpush1.msra.mxu0 0.0
  %3283 = vmatprep.subr.mxu0 0.0
  %3284 = vmatpush1.msra.mxu0 0.0
  %3285 = vmatprep.subr.mxu0 0.0
  %3286 = vmatpush1.msra.mxu0 0.0
  %3287 = vmatprep.subr.mxu0 0.0
  %3288 = vmatpush1.msra.mxu0 0.0
  %3289 = vmatprep.subr.mxu0 0.0
  %3290 = vmatpush1.msra.mxu0 0.0
  %3291 = vmatprep.subr.mxu0 0.0
  %3292 = vmatpush1.msra.mxu0 0.0
  %3293 = vmatprep.subr.mxu0 0.0
  %3294 = vmatpush1.msra.mxu0 0.0
  %3295 = vmatprep.subr.mxu0 0.0
  %3296 = vmatpush1.msra.mxu0 0.0
  %3297 = vmatprep.subr.mxu0 0.0
  %3298 = vmatpush1.msra.mxu0 0.0
  %3299 = vmatprep.mubr.f32.mxu0 0.0
  %3300 = vmatmul.mubr.f32.gmra.mrb[0].mxu0 %v3094
  %v3301 = vpop.f32.mrb[0].mxu0
  %v3302 = vadd.f32 0.0, %v3301
  %v3303 = vpop.f32.mrb[0].mxu0
  %v3304 = vadd.f32 0.0, %v3303
  %3305 = vdwg.mxu0
  %v3306 = vadd.f32 %v3096, %v3231
  %v3307 = vadd.f32 %v3097, %v3233
  %v3308 = vadd.f32 %v3098, %v3302
  %v3309 = vadd.f32 %v3099, %v3304
  %v3310 = vxor.u32 %v3306, 2147483648
  %v3311 = vxor.u32 %v3307, 2147483648
  %v3312 = vmul.f32 %v3310, 1.442695
  %v3313 = vpow.pop %v3312
  %v3314 = vmul.f32 %v3311, 1.442695
  %v3315 = vpow.pop %v3314
  %v3316 = vadd.f32 %v3313, 1.0
  %v3317 = vadd.f32 %v3315, 1.0
  %v3318 = vrcp.pop %v3316
  %v3319 = vmul.f32 1.0, %v3318
  %v3320 = vrcp.pop %v3317
  %v3321 = vmul.f32 1.0, %v3320
  %v3322 = vxor.u32 %v3309, 2147483648
  %v3323 = vmul.f32 %v3322, 1.442695
  %v3324 = vpow.pop %v3323
  %v3325 = vadd.f32 %v3324, 1.0
  %v3326 = vrcp.pop %v3325
  %v3327 = vmul.f32 1.0, %v3326
  %v3328 = vtanh.pop %v3308
  %v3329 = vmul.f32 %v3321, %v3092
  %v3330 = vmul.f32 %v3319, %v3328
  %v3331 = vadd.f32 %v3329, %v3330
  %v3332 = vtanh.pop %v3331
  %v3333 = vmul.f32 %v3327, %v3332
  %3334 = vst [vmem:[#allocation3 + $0x58] sm:$0xff] %v3333
  %v3335 = vld [vmem:[#allocation3] sm:$0xff]
  %v3336 = vld [vmem:[#allocation3 + $0x8] sm:$0xff]
  %v3337 = vld [vmem:[#allocation3 + $0x10] sm:$0xff]
  %v3338 = vld [vmem:[#allocation3 + $0x18] sm:$0xff]
  %v3339 = vld [vmem:[#allocation3 + $0x20] sm:$0xff]
  %v3340 = vld [vmem:[#allocation3 + $0x28] sm:$0xff]
  %v3341 = vld [vmem:[#allocation3 + $0x30] sm:$0xff]
  %v3342 = vld [vmem:[#allocation3 + $0x38] sm:$0xff]
  %v3343 = vld [vmem:[#allocation3 + $0x40] sm:$0xff]
  %v3344 = vld [vmem:[#allocation3 + $0x48] sm:$0xff]
  %v3345 = vld [vmem:[#allocation3 + $0x50] sm:$0xff]
  %v3346 = vld [vmem:[#allocation3 + $0x58] sm:$0xff]
  %v3347 = vld [vmem:[%s5] sm:$0xff]
  %v3348 = vld [vmem:[%s5 + $0x8] sm:$0xff]
  %v3349 = vld [vmem:[%s5 + $0x10] sm:$0xff]
  %v3350 = vld [vmem:[%s5 + $0x18] sm:$0xff]
  %v3351 = vld [vmem:[%s5 + $0x20] sm:$0xff]
  %v3352 = vld [vmem:[%s5 + $0x28] sm:$0xff]
  %v3353 = vld [vmem:[%s5 + $0x30] sm:$0xff]
  %v3354 = vld [vmem:[%s5 + $0x38] sm:$0xff]
  %v3355 = vld [vmem:[%s5 + $0x40] sm:$0xff]
  %v3356 = vld [vmem:[%s5 + $0x48] sm:$0xff]
  %v3357 = vld [vmem:[%s5 + $0x50] sm:$0xff]
  %v3358 = vld [vmem:[%s5 + $0x58] sm:$0xff]
  %v3359 = vld [vmem:[%s5 + $0x60] sm:$0xff]
  %v3360 = vld [vmem:[%s5 + $0x68] sm:$0xff]
  %v3361 = vld [vmem:[%s5 + $0x70] sm:$0xff]
  %v3362 = vld [vmem:[%s5 + $0x78] sm:$0xff]
  %v3363 = vld [vmem:[%s7] sm:$0x1]
  %v3365 = vlaneseq
  %v3366 = vshrl.u32 %v3365, 7
  %v3367 = vsub.s32 0, %v3366
  %v3368 = vrot.slane %v3363, %v3367
  %3370 = vmatprep.subr.mxu0 0.0
  %3371 = vmatpush1.msra.mxu0 %v3347
  %3372 = vmatprep.subr.mxu0 0.0
  %3373 = vmatpush1.msra.mxu0 %v3348
  %3374 = vmatprep.subr.mxu0 0.0
  %3375 = vmatpush1.msra.mxu0 %v3349
  %3376 = vmatprep.subr.mxu0 0.0
  %3377 = vmatpush1.msra.mxu0 %v3350
  %3378 = vmatprep.subr.mxu0 0.0
  %3379 = vmatpush1.msra.mxu0 %v3351
  %3380 = vmatprep.subr.mxu0 0.0
  %3381 = vmatpush1.msra.mxu0 %v3352
  %3382 = vmatprep.subr.mxu0 0.0
  %3383 = vmatpush1.msra.mxu0 %v3353
  %3384 = vmatprep.subr.mxu0 0.0
  %3385 = vmatpush1.msra.mxu0 %v3354
  %3386 = vmatprep.subr.mxu0 0.0
  %3387 = vmatpush1.msra.mxu0 %v3355
  %3388 = vmatprep.subr.mxu0 0.0
  %3389 = vmatpush1.msra.mxu0 %v3356
  %3390 = vmatprep.subr.mxu0 0.0
  %3391 = vmatpush1.msra.mxu0 %v3357
  %3392 = vmatprep.subr.mxu0 0.0
  %3393 = vmatpush1.msra.mxu0 %v3358
  %3394 = vmatprep.subr.mxu0 0.0
  %3395 = vmatpush1.msra.mxu0 %v3359
  %3396 = vmatprep.subr.mxu0 0.0
  %3397 = vmatpush1.msra.mxu0 %v3360
  %3398 = vmatprep.subr.mxu0 0.0
  %3399 = vmatpush1.msra.mxu0 %v3361
  %3400 = vmatprep.subr.mxu0 0.0
  %3401 = vmatpush1.msra.mxu0 %v3362
  %3402 = vmatprep.subr.mxu0 0.0
  %3403 = vmatpush1.msra.mxu0 0.0
  %3404 = vmatprep.subr.mxu0 0.0
  %3405 = vmatpush1.msra.mxu0 0.0
  %3406 = vmatprep.subr.mxu0 0.0
  %3407 = vmatpush1.msra.mxu0 0.0
  %3408 = vmatprep.subr.mxu0 0.0
  %3409 = vmatpush1.msra.mxu0 0.0
  %3410 = vmatprep.subr.mxu0 0.0
  %3411 = vmatpush1.msra.mxu0 0.0
  %3412 = vmatprep.subr.mxu0 0.0
  %3413 = vmatpush1.msra.mxu0 0.0
  %3414 = vmatprep.subr.mxu0 0.0
  %3415 = vmatpush1.msra.mxu0 0.0
  %3416 = vmatprep.subr.mxu0 0.0
  %3417 = vmatpush1.msra.mxu0 0.0
  %3418 = vmatprep.subr.mxu0 0.0
  %3419 = vmatpush1.msra.mxu0 0.0
  %3420 = vmatprep.subr.mxu0 0.0
  %3421 = vmatpush1.msra.mxu0 0.0
  %3422 = vmatprep.subr.mxu0 0.0
  %3423 = vmatpush1.msra.mxu0 0.0
  %3424 = vmatprep.subr.mxu0 0.0
  %3425 = vmatpush1.msra.mxu0 0.0
  %3426 = vmatprep.subr.mxu0 0.0
  %3427 = vmatpush1.msra.mxu0 0.0
  %3428 = vmatprep.subr.mxu0 0.0
  %3429 = vmatpush1.msra.mxu0 0.0
  %3430 = vmatprep.subr.mxu0 0.0
  %3431 = vmatpush1.msra.mxu0 0.0
  %3432 = vmatprep.subr.mxu0 0.0
  %3433 = vmatpush1.msra.mxu0 0.0
  %3434 = vmatprep.mubr.f32.mxu0 0.0
  %3435 = vmatmul.mubr.f32.gmra.mrb[0].mxu0 %v3335
  %v3436 = vpop.f32.mrb[0].mxu0
  %v3437 = vadd.f32 %v3368, %v3436
  %v3438 = vpop.f32.mrb[0].mxu0
  %3439 = vmatprep.mubr.f32.mxu0 0.0
  %3440 = vmatmul.mubr.f32.gmra.mrb[0].mxu0 %v3336
  %v3441 = vpop.f32.mrb[0].mxu0
  %v3442 = vadd.f32 %v3368, %v3441
  %v3443 = vpop.f32.mrb[0].mxu0
  %3444 = vmatprep.mubr.f32.mxu0 0.0
  %3445 = vmatmul.mubr.f32.gmra.mrb[0].mxu0 %v3337
  %v3446 = vpop.f32.mrb[0].mxu0
  %v3447 = vadd.f32 %v3368, %v3446
  %v3448 = vpop.f32.mrb[0].mxu0
  %3449 = vmatprep.mubr.f32.mxu0 0.0
  %3450 = vmatmul.mubr.f32.gmra.mrb[0].mxu0 %v3338
  %v3451 = vpop.f32.mrb[0].mxu0
  %v3452 = vadd.f32 %v3368, %v3451
  %v3453 = vpop.f32.mrb[0].mxu0
  %3454 = vmatprep.mubr.f32.mxu0 0.0
  %3455 = vmatmul.mubr.f32.gmra.mrb[0].mxu0 %v3339
  %v3456 = vpop.f32.mrb[0].mxu0
  %v3457 = vadd.f32 %v3368, %v3456
  %v3458 = vpop.f32.mrb[0].mxu0
  %3459 = vmatprep.mubr.f32.mxu0 0.0
  %3460 = vmatmul.mubr.f32.gmra.mrb[0].mxu0 %v3340
  %v3461 = vpop.f32.mrb[0].mxu0
  %v3462 = vadd.f32 %v3368, %v3461
  %v3463 = vpop.f32.mrb[0].mxu0
  %3464 = vmatprep.mubr.f32.mxu0 0.0
  %3465 = vmatmul.mubr.f32.gmra.mrb[0].mxu0 %v3341
  %v3466 = vpop.f32.mrb[0].mxu0
  %v3467 = vadd.f32 %v3368, %v3466
  %v3468 = vpop.f32.mrb[0].mxu0
  %3469 = vmatprep.mubr.f32.mxu0 0.0
  %3470 = vmatmul.mubr.f32.gmra.mrb[0].mxu0 %v3342
  %v3471 = vpop.f32.mrb[0].mxu0
  %v3472 = vadd.f32 %v3368, %v3471
  %v3473 = vpop.f32.mrb[0].mxu0
  %3474 = vmatprep.mubr.f32.mxu0 0.0
  %3475 = vmatmul.mubr.f32.gmra.mrb[0].mxu0 %v3343
  %v3476 = vpop.f32.mrb[0].mxu0
  %v3477 = vadd.f32 %v3368, %v3476
  %v3478 = vpop.f32.mrb[0].mxu0
  %3479 = vmatprep.mubr.f32.mxu0 0.0
  %3480 = vmatmul.mubr.f32.gmra.mrb[0].mxu0 %v3344
  %v3481 = vpop.f32.mrb[0].mxu0
  %v3482 = vadd.f32 %v3368, %v3481
  %v3483 = vpop.f32.mrb[0].mxu0
  %3484 = vmatprep.mubr.f32.mxu0 0.0
  %3485 = vmatmul.mubr.f32.gmra.mrb[0].mxu0 %v3345
  %v3486 = vpop.f32.mrb[0].mxu0
  %v3487 = vadd.f32 %v3368, %v3486
  %v3488 = vpop.f32.mrb[0].mxu0
  %3489 = vmatprep.mubr.f32.mxu0 0.0
  %3490 = vmatmul.mubr.f32.gmra.mrb[0].mxu0 %v3346
  %v3491 = vpop.f32.mrb[0].mxu0
  %v3492 = vadd.f32 %v3368, %v3491
  %v3493 = vpop.f32.mrb[0].mxu0
  %3494 = vdwg.mxu0
  %3495 = vst.msk [vmem:[#allocation4] sm:$0xff] %vm99, %v3437
  %3496 = vst.msk [vmem:[#allocation4 + $0x8] sm:$0xff] %vm99, %v3442
  %3497 = vst.msk [vmem:[#allocation4 + $0x10] sm:$0xff] %vm99, %v3447
  %3498 = vst.msk [vmem:[#allocation4 + $0x18] sm:$0xff] %vm99, %v3452
  %3499 = vst.msk [vmem:[#allocation4 + $0x20] sm:$0xff] %vm99, %v3457
  %3500 = vst.msk [vmem:[#allocation4 + $0x28] sm:$0xff] %vm99, %v3462
  %3501 = vst.msk [vmem:[#allocation4 + $0x30] sm:$0xff] %vm99, %v3467
  %3502 = vst.msk [vmem:[#allocation4 + $0x38] sm:$0xff] %vm99, %v3472
  %3503 = vst.msk [vmem:[#allocation4 + $0x40] sm:$0xff] %vm99, %v3477
  %3504 = vst.msk [vmem:[#allocation4 + $0x48] sm:$0xff] %vm99, %v3482
  %3505 = vst.msk [vmem:[#allocation4 + $0x50] sm:$0xff] %vm99, %v3487
  %3506 = vst.msk [vmem:[#allocation4 + $0x58] sm:$0xff] %vm99, %v3492
  %v3507 = vld [vmem:[%s6] sm:$0x1]
  %v3508 = vld [vmem:[%s8] sm:$0x1]
  %v3509 = vld [vmem:[%s10] sm:$0x1]
  %v3510 = vld [vmem:[#allocation4] sm:$0xff]
  %v3512 = vlaneseq
  %v3513 = vshrl.u32 %v3512, 7
  %v3514 = vsub.s32 0, %v3513
  %v3515 = vrot.slane %v3507, %v3514
  %v3517 = vmul.f32 %v3515, 0.0
  %v3518 = vadd.f32 %v3510, %v3517
  %v3519 = vxor.u32 %v3518, 2147483648
  %v3520 = vmul.f32 %v3519, 1.442695
  %v3521 = vpow.pop %v3520
  %v3522 = vadd.f32 %v3521, 1.0
  %v3523 = vrcp.pop %v3522
  %v3524 = vmul.f32 1.0, %v3523
  %v3525 = vtanh.pop %v3518
  %v3526 = vmul.f32 %v3524, 0.0
  %3528 = vrot.lane.b32.xlu0 %v3525, 126
  %v3529 = vpop.permute.xlu0 %3528
  %v3531 = vmul.f32 %v3524, %v3529
  %3533 = vrot.lane.b32.xlu0 %v3531, 1
  %v3534 = vpop.permute.xlu0 %3533
  %v3536 = vadd.f32 %v3526, %v3534
  %v3537 = vtanh.pop %v3536
  %3539 = vrot.lane.b32.xlu0 %v3537, 2
  %v3540 = vpop.permute.xlu0 %3539
  %v3542 = vmul.f32 %v3524, %v3540
  %v3543 = vmax.f32 %v3542, 0.0
  %3545 = vset.pattern.permute.xlu0 3
  %3546 = vperm.xlu0 %3545, %v3543
  %v3547 = vpop.permute.xlu0 %3546
  %v3550 = vlaneseq
  %v3551 = vshrl.u32 %v3550, 7
  %v3552 = vsub.s32 0, %v3551
  %v3553 = vrot.slane %v3508, %v3552
  %v3555 = vmul.f32 %v3547, %v3553
  %v3557 = vlaneseq
  %v3558 = vshrl.u32 %v3557, 7
  %v3559 = vsub.s32 0, %v3558
  %v3560 = vrot.slane %v3509, %v3559
  %v3562 = vadd.f32 %v3555, %v3560
  %3563 = vst [vmem:[#allocation5] sm:$0xff] %v3562
  %v3564 = vld [vmem:[#allocation4 + $0x8] sm:$0xff]
  %3566 = vset.pattern.permute.xlu0 3
  %3567 = vperm.xlu0 %3566, %v3542
  %v3568 = vpop.permute.xlu0 %3567
  %v3570 = vmul.f32 %v3568, %v3515
  %v3571 = vadd.f32 %v3564, %v3570
  %v3572 = vxor.u32 %v3571, 2147483648
  %v3573 = vmul.f32 %v3572, 1.442695
  %v3574 = vpow.pop %v3573
  %v3575 = vadd.f32 %v3574, 1.0
  %v3576 = vrcp.pop %v3575
  %v3577 = vmul.f32 1.0, %v3576
  %v3578 = vtanh.pop %v3571
  %v3579 = vmul.f32 %v3577, %v3536
  %3581 = vrot.lane.b32.xlu0 %v3578, 126
  %v3582 = vpop.permute.xlu0 %3581
  %v3584 = vmul.f32 %v3577, %v3582
  %3586 = vrot.lane.b32.xlu0 %v3584, 1
  %v3587 = vpop.permute.xlu0 %3586
  %v3589 = vadd.f32 %v3579, %v3587
  %v3590 = vtanh.pop %v3589
  %3592 = vrot.lane.b32.xlu0 %v3590, 2
  %v3593 = vpop.permute.xlu0 %3592
  %v3595 = vmul.f32 %v3577, %v3593
  %v3596 = vmax.f32 %v3595, 0.0
  %3598 = vset.pattern.permute.xlu0 3
  %3599 = vperm.xlu0 %3598, %v3596
  %v3600 = vpop.permute.xlu0 %3599
  %v3602 = vmul.f32 %v3600, %v3553
  %v3603 = vadd.f32 %v3602, %v3560
  %3604 = vst [vmem:[#allocation5 + $0x8] sm:$0xff] %v3603
  %v3605 = vld [vmem:[#allocation4 + $0x10] sm:$0xff]
  %3607 = vset.pattern.permute.xlu0 3
  %3608 = vperm.xlu0 %3607, %v3595
  %v3609 = vpop.permute.xlu0 %3608
  %v3611 = vmul.f32 %v3609, %v3515
  %v3612 = vadd.f32 %v3605, %v3611
  %v3613 = vxor.u32 %v3612, 2147483648
  %v3614 = vmul.f32 %v3613, 1.442695
  %v3615 = vpow.pop %v3614
  %v3616 = vadd.f32 %v3615, 1.0
  %v3617 = vrcp.pop %v3616
  %v3618 = vmul.f32 1.0, %v3617
  %v3619 = vtanh.pop %v3612
  %v3620 = vmul.f32 %v3618, %v3589
  %3622 = vrot.lane.b32.xlu0 %v3619, 126
  %v3623 = vpop.permute.xlu0 %3622
  %v3625 = vmul.f32 %v3618, %v3623
  %3627 = vrot.lane.b32.xlu0 %v3625, 1
  %v3628 = vpop.permute.xlu0 %3627
  %v3630 = vadd.f32 %v3620, %v3628
  %v3631 = vtanh.pop %v3630
  %3633 = vrot.lane.b32.xlu0 %v3631, 2
  %v3634 = vpop.permute.xlu0 %3633
  %v3636 = vmul.f32 %v3618, %v3634
  %v3637 = vmax.f32 %v3636, 0.0
  %3639 = vset.pattern.permute.xlu0 3
  %3640 = vperm.xlu0 %3639, %v3637
  %v3641 = vpop.permute.xlu0 %3640
  %v3643 = vmul.f32 %v3641, %v3553
  %v3644 = vadd.f32 %v3643, %v3560
  %3645 = vst [vmem:[#allocation5 + $0x10] sm:$0xff] %v3644
  %v3646 = vld [vmem:[#allocation4 + $0x18] sm:$0xff]
  %3648 = vset.pattern.permute.xlu0 3
  %3649 = vperm.xlu0 %3648, %v3636
  %v3650 = vpop.permute.xlu0 %3649
  %v3652 = vmul.f32 %v3650, %v3515
  %v3653 = vadd.f32 %v3646, %v3652
  %v3654 = vxor.u32 %v3653, 2147483648
  %v3655 = vmul.f32 %v3654, 1.442695
  %v3656 = vpow.pop %v3655
  %v3657 = vadd.f32 %v3656, 1.0
  %v3658 = vrcp.pop %v3657
  %v3659 = vmul.f32 1.0, %v3658
  %v3660 = vtanh.pop %v3653
  %v3661 = vmul.f32 %v3659, %v3630
  %3663 = vrot.lane.b32.xlu0 %v3660, 126
  %v3664 = vpop.permute.xlu0 %3663
  %v3666 = vmul.f32 %v3659, %v3664
  %3668 = vrot.lane.b32.xlu0 %v3666, 1
  %v3669 = vpop.permute.xlu0 %3668
  %v3671 = vadd.f32 %v3661, %v3669
  %v3672 = vtanh.pop %v3671
  %3674 = vrot.lane.b32.xlu0 %v3672, 2
  %v3675 = vpop.permute.xlu0 %3674
  %v3677 = vmul.f32 %v3659, %v3675
  %v3678 = vmax.f32 %v3677, 0.0
  %3680 = vset.pattern.permute.xlu0 3
  %3681 = vperm.xlu0 %3680, %v3678
  %v3682 = vpop.permute.xlu0 %3681
  %v3684 = vmul.f32 %v3682, %v3553
  %v3685 = vadd.f32 %v3684, %v3560
  %3686 = vst [vmem:[#allocation5 + $0x18] sm:$0xff] %v3685
  %v3687 = vld [vmem:[#allocation4 + $0x20] sm:$0xff]
  %3689 = vset.pattern.permute.xlu0 3
  %3690 = vperm.xlu0 %3689, %v3677
  %v3691 = vpop.permute.xlu0 %3690
  %v3693 = vmul.f32 %v3691, %v3515
  %v3694 = vadd.f32 %v3687, %v3693
  %v3695 = vxor.u32 %v3694, 2147483648
  %v3696 = vmul.f32 %v3695, 1.442695
  %v3697 = vpow.pop %v3696
  %v3698 = vadd.f32 %v3697, 1.0
  %v3699 = vrcp.pop %v3698
  %v3700 = vmul.f32 1.0, %v3699
  %v3701 = vtanh.pop %v3694
  %v3702 = vmul.f32 %v3700, %v3671
  %3704 = vrot.lane.b32.xlu0 %v3701, 126
  %v3705 = vpop.permute.xlu0 %3704
  %v3707 = vmul.f32 %v3700, %v3705
  %3709 = vrot.lane.b32.xlu0 %v3707, 1
  %v3710 = vpop.permute.xlu0 %3709
  %v3712 = vadd.f32 %v3702, %v3710
  %v3713 = vtanh.pop %v3712
  %3715 = vrot.lane.b32.xlu0 %v3713, 2
  %v3716 = vpop.permute.xlu0 %3715
  %v3718 = vmul.f32 %v3700, %v3716
  %v3719 = vmax.f32 %v3718, 0.0
  %3721 = vset.pattern.permute.xlu0 3
  %3722 = vperm.xlu0 %3721, %v3719
  %v3723 = vpop.permute.xlu0 %3722
  %v3725 = vmul.f32 %v3723, %v3553
  %v3726 = vadd.f32 %v3725, %v3560
  %3727 = vst [vmem:[#allocation5 + $0x20] sm:$0xff] %v3726
  %v3728 = vld [vmem:[#allocation4 + $0x28] sm:$0xff]
  %3730 = vset.pattern.permute.xlu0 3
  %3731 = vperm.xlu0 %3730, %v3718
  %v3732 = vpop.permute.xlu0 %3731
  %v3734 = vmul.f32 %v3732, %v3515
  %v3735 = vadd.f32 %v3728, %v3734
  %v3736 = vxor.u32 %v3735, 2147483648
  %v3737 = vmul.f32 %v3736, 1.442695
  %v3738 = vpow.pop %v3737
  %v3739 = vadd.f32 %v3738, 1.0
  %v3740 = vrcp.pop %v3739
  %v3741 = vmul.f32 1.0, %v3740
  %v3742 = vtanh.pop %v3735
  %v3743 = vmul.f32 %v3741, %v3712
  %3745 = vrot.lane.b32.xlu0 %v3742, 126
  %v3746 = vpop.permute.xlu0 %3745
  %v3748 = vmul.f32 %v3741, %v3746
  %3750 = vrot.lane.b32.xlu0 %v3748, 1
  %v3751 = vpop.permute.xlu0 %3750
  %v3753 = vadd.f32 %v3743, %v3751
  %v3754 = vtanh.pop %v3753
  %3756 = vrot.lane.b32.xlu0 %v3754, 2
  %v3757 = vpop.permute.xlu0 %3756
  %v3759 = vmul.f32 %v3741, %v3757
  %v3760 = vmax.f32 %v3759, 0.0
  %3762 = vset.pattern.permute.xlu0 3
  %3763 = vperm.xlu0 %3762, %v3760
  %v3764 = vpop.permute.xlu0 %3763
  %v3766 = vmul.f32 %v3764, %v3553
  %v3767 = vadd.f32 %v3766, %v3560
  %3768 = vst [vmem:[#allocation5 + $0x28] sm:$0xff] %v3767
  %v3769 = vld [vmem:[#allocation4 + $0x30] sm:$0xff]
  %3771 = vset.pattern.permute.xlu0 3
  %3772 = vperm.xlu0 %3771, %v3759
  %v3773 = vpop.permute.xlu0 %3772
  %v3775 = vmul.f32 %v3773, %v3515
  %v3776 = vadd.f32 %v3769, %v3775
  %v3777 = vxor.u32 %v3776, 2147483648
  %v3778 = vmul.f32 %v3777, 1.442695
  %v3779 = vpow.pop %v3778
  %v3780 = vadd.f32 %v3779, 1.0
  %v3781 = vrcp.pop %v3780
  %v3782 = vmul.f32 1.0, %v3781
  %v3783 = vtanh.pop %v3776
  %v3784 = vmul.f32 %v3782, %v3753
  %3786 = vrot.lane.b32.xlu0 %v3783, 126
  %v3787 = vpop.permute.xlu0 %3786
  %v3789 = vmul.f32 %v3782, %v3787
  %3791 = vrot.lane.b32.xlu0 %v3789, 1
  %v3792 = vpop.permute.xlu0 %3791
  %v3794 = vadd.f32 %v3784, %v3792
  %v3795 = vtanh.pop %v3794
  %3797 = vrot.lane.b32.xlu0 %v3795, 2
  %v3798 = vpop.permute.xlu0 %3797
  %v3800 = vmul.f32 %v3782, %v3798
  %v3801 = vmax.f32 %v3800, 0.0
  %3803 = vset.pattern.permute.xlu0 3
  %3804 = vperm.xlu0 %3803, %v3801
  %v3805 = vpop.permute.xlu0 %3804
  %v3807 = vmul.f32 %v3805, %v3553
  %v3808 = vadd.f32 %v3807, %v3560
  %3809 = vst [vmem:[#allocation5 + $0x30] sm:$0xff] %v3808
  %v3810 = vld [vmem:[#allocation4 + $0x38] sm:$0xff]
  %3812 = vset.pattern.permute.xlu0 3
  %3813 = vperm.xlu0 %3812, %v3800
  %v3814 = vpop.permute.xlu0 %3813
  %v3816 = vmul.f32 %v3814, %v3515
  %v3817 = vadd.f32 %v3810, %v3816
  %v3818 = vxor.u32 %v3817, 2147483648
  %v3819 = vmul.f32 %v3818, 1.442695
  %v3820 = vpow.pop %v3819
  %v3821 = vadd.f32 %v3820, 1.0
  %v3822 = vrcp.pop %v3821
  %v3823 = vmul.f32 1.0, %v3822
  %v3824 = vtanh.pop %v3817
  %v3825 = vmul.f32 %v3823, %v3794
  %3827 = vrot.lane.b32.xlu0 %v3824, 126
  %v3828 = vpop.permute.xlu0 %3827
  %v3830 = vmul.f32 %v3823, %v3828
  %3832 = vrot.lane.b32.xlu0 %v3830, 1
  %v3833 = vpop.permute.xlu0 %3832
  %v3835 = vadd.f32 %v3825, %v3833
  %v3836 = vtanh.pop %v3835
  %3838 = vrot.lane.b32.xlu0 %v3836, 2
  %v3839 = vpop.permute.xlu0 %3838
  %v3841 = vmul.f32 %v3823, %v3839
  %v3842 = vmax.f32 %v3841, 0.0
  %3844 = vset.pattern.permute.xlu0 3
  %3845 = vperm.xlu0 %3844, %v3842
  %v3846 = vpop.permute.xlu0 %3845
  %v3848 = vmul.f32 %v3846, %v3553
  %v3849 = vadd.f32 %v3848, %v3560
  %3850 = vst [vmem:[#allocation5 + $0x38] sm:$0xff] %v3849
  %v3851 = vld [vmem:[#allocation4 + $0x40] sm:$0xff]
  %3853 = vset.pattern.permute.xlu0 3
  %3854 = vperm.xlu0 %3853, %v3841
  %v3855 = vpop.permute.xlu0 %3854
  %v3857 = vmul.f32 %v3855, %v3515
  %v3858 = vadd.f32 %v3851, %v3857
  %v3859 = vxor.u32 %v3858, 2147483648
  %v3860 = vmul.f32 %v3859, 1.442695
  %v3861 = vpow.pop %v3860
  %v3862 = vadd.f32 %v3861, 1.0
  %v3863 = vrcp.pop %v3862
  %v3864 = vmul.f32 1.0, %v3863
  %v3865 = vtanh.pop %v3858
  %v3866 = vmul.f32 %v3864, %v3835
  %3868 = vrot.lane.b32.xlu0 %v3865, 126
  %v3869 = vpop.permute.xlu0 %3868
  %v3871 = vmul.f32 %v3864, %v3869
  %3873 = vrot.lane.b32.xlu0 %v3871, 1
  %v3874 = vpop.permute.xlu0 %3873
  %v3876 = vadd.f32 %v3866, %v3874
  %v3877 = vtanh.pop %v3876
  %3879 = vrot.lane.b32.xlu0 %v3877, 2
  %v3880 = vpop.permute.xlu0 %3879
  %v3882 = vmul.f32 %v3864, %v3880
  %v3883 = vmax.f32 %v3882, 0.0
  %3885 = vset.pattern.permute.xlu0 3
  %3886 = vperm.xlu0 %3885, %v3883
  %v3887 = vpop.permute.xlu0 %3886
  %v3889 = vmul.f32 %v3887, %v3553
  %v3890 = vadd.f32 %v3889, %v3560
  %3891 = vst [vmem:[#allocation5 + $0x40] sm:$0xff] %v3890
  %v3892 = vld [vmem:[#allocation4 + $0x48] sm:$0xff]
  %3894 = vset.pattern.permute.xlu0 3
  %3895 = vperm.xlu0 %3894, %v3882
  %v3896 = vpop.permute.xlu0 %3895
  %v3898 = vmul.f32 %v3896, %v3515
  %v3899 = vadd.f32 %v3892, %v3898
  %v3900 = vxor.u32 %v3899, 2147483648
  %v3901 = vmul.f32 %v3900, 1.442695
  %v3902 = vpow.pop %v3901
  %v3903 = vadd.f32 %v3902, 1.0
  %v3904 = vrcp.pop %v3903
  %v3905 = vmul.f32 1.0, %v3904
  %v3906 = vtanh.pop %v3899
  %v3907 = vmul.f32 %v3905, %v3876
  %3909 = vrot.lane.b32.xlu0 %v3906, 126
  %v3910 = vpop.permute.xlu0 %3909
  %v3912 = vmul.f32 %v3905, %v3910
  %3914 = vrot.lane.b32.xlu0 %v3912, 1
  %v3915 = vpop.permute.xlu0 %3914
  %v3917 = vadd.f32 %v3907, %v3915
  %v3918 = vtanh.pop %v3917
  %3920 = vrot.lane.b32.xlu0 %v3918, 2
  %v3921 = vpop.permute.xlu0 %3920
  %v3923 = vmul.f32 %v3905, %v3921
  %v3924 = vmax.f32 %v3923, 0.0
  %3926 = vset.pattern.permute.xlu0 3
  %3927 = vperm.xlu0 %3926, %v3924
  %v3928 = vpop.permute.xlu0 %3927
  %v3930 = vmul.f32 %v3928, %v3553
  %v3931 = vadd.f32 %v3930, %v3560
  %3932 = vst [vmem:[#allocation5 + $0x48] sm:$0xff] %v3931
  %v3933 = vld [vmem:[#allocation4 + $0x50] sm:$0xff]
  %3935 = vset.pattern.permute.xlu0 3
  %3936 = vperm.xlu0 %3935, %v3923
  %v3937 = vpop.permute.xlu0 %3936
  %v3939 = vmul.f32 %v3937, %v3515
  %v3940 = vadd.f32 %v3933, %v3939
  %v3941 = vxor.u32 %v3940, 2147483648
  %v3942 = vmul.f32 %v3941, 1.442695
  %v3943 = vpow.pop %v3942
  %v3944 = vadd.f32 %v3943, 1.0
  %v3945 = vrcp.pop %v3944
  %v3946 = vmul.f32 1.0, %v3945
  %v3947 = vtanh.pop %v3940
  %v3948 = vmul.f32 %v3946, %v3917
  %3950 = vrot.lane.b32.xlu0 %v3947, 126
  %v3951 = vpop.permute.xlu0 %3950
  %v3953 = vmul.f32 %v3946, %v3951
  %3955 = vrot.lane.b32.xlu0 %v3953, 1
  %v3956 = vpop.permute.xlu0 %3955
  %v3958 = vadd.f32 %v3948, %v3956
  %v3959 = vtanh.pop %v3958
  %3961 = vrot.lane.b32.xlu0 %v3959, 2
  %v3962 = vpop.permute.xlu0 %3961
  %v3964 = vmul.f32 %v3946, %v3962
  %v3965 = vmax.f32 %v3964, 0.0
  %3967 = vset.pattern.permute.xlu0 3
  %3968 = vperm.xlu0 %3967, %v3965
  %v3969 = vpop.permute.xlu0 %3968
  %v3971 = vmul.f32 %v3969, %v3553
  %v3972 = vadd.f32 %v3971, %v3560
  %3973 = vst [vmem:[#allocation5 + $0x50] sm:$0xff] %v3972
  %v3974 = vld [vmem:[#allocation4 + $0x58] sm:$0xff]
  %3976 = vset.pattern.permute.xlu0 3
  %3977 = vperm.xlu0 %3976, %v3964
  %v3978 = vpop.permute.xlu0 %3977
  %v3980 = vmul.f32 %v3978, %v3515
  %v3981 = vadd.f32 %v3974, %v3980
  %v3982 = vxor.u32 %v3981, 2147483648
  %v3983 = vmul.f32 %v3982, 1.442695
  %v3984 = vpow.pop %v3983
  %v3985 = vadd.f32 %v3984, 1.0
  %v3986 = vrcp.pop %v3985
  %v3987 = vmul.f32 1.0, %v3986
  %v3988 = vtanh.pop %v3981
  %v3989 = vmul.f32 %v3987, %v3958
  %3991 = vrot.lane.b32.xlu0 %v3988, 126
  %v3992 = vpop.permute.xlu0 %3991
  %v3994 = vmul.f32 %v3987, %v3992
  %3996 = vrot.lane.b32.xlu0 %v3994, 1
  %v3997 = vpop.permute.xlu0 %3996
  %v3999 = vadd.f32 %v3989, %v3997
  %v4000 = vtanh.pop %v3999
  %4002 = vrot.lane.b32.xlu0 %v4000, 2
  %v4003 = vpop.permute.xlu0 %4002
  %v4005 = vmul.f32 %v3987, %v4003
  %v4006 = vmax.f32 %v4005, 0.0
  %4008 = vset.pattern.permute.xlu0 3
  %4009 = vperm.xlu0 %4008, %v4006
  %v4010 = vpop.permute.xlu0 %4009
  %v4012 = vmul.f32 %v4010, %v3553
  %v4013 = vadd.f32 %v4012, %v3560
  %4014 = vst [vmem:[#allocation5 + $0x58] sm:$0xff] %v4013
  %v4015 = vld [vmem:[%s1] sm:$0xff]
  %v4016 = vld [vmem:[%s1 + $0x8] sm:$0xff]
  %v4017 = vld [vmem:[%s1 + $0x10] sm:$0xff]
  %v4018 = vld [vmem:[%s1 + $0x18] sm:$0xff]
  %4020 = vset.pattern.permute.xlu0 0
  %4021 = vperm.xlu0 %4020, %v4015
  %v4022 = vpop.permute.xlu0 %4021
  %4025 = vset.pattern.permute.xlu0 0
  %4026 = vperm.xlu0 %4025, %v4016
  %v4027 = vpop.permute.xlu0 %4026
  %4030 = vset.pattern.permute.xlu0 0
  %4031 = vperm.xlu0 %4030, %v4017
  %v4032 = vpop.permute.xlu0 %4031
  %4035 = vset.pattern.permute.xlu0 0
  %4036 = vperm.xlu0 %4035, %v4018
  %v4037 = vpop.permute.xlu0 %4036
  %v4039 = vmul.f32 %v4022, %v3553
  %v4040 = vmul.f32 %v4027, %v3553
  %v4041 = vmul.f32 %v4032, %v3553
  %v4042 = vmul.f32 %v4037, %v3553
  %v4043 = vadd.f32 %v4039, %v3560
  %v4044 = vadd.f32 %v4040, %v3560
  %v4045 = vadd.f32 %v4041, %v3560
  %v4046 = vadd.f32 %v4042, %v3560
  %4047 = vst [vmem:[#allocation5 + $0x60] sm:$0xff] %v4043
  %4048 = vst [vmem:[#allocation5 + $0x68] sm:$0xff] %v4044
  %4049 = vst [vmem:[#allocation5 + $0x70] sm:$0xff] %v4045
  %4050 = vst [vmem:[#allocation5 + $0x78] sm:$0xff] %v4046
  %v4051 = vld [vmem:[#allocation5] sm:$0xff]
  %v4052 = vld [vmem:[%s9] sm:$0xff]
  %v4053 = vld [vmem:[%s9 + $0x8] sm:$0xff]
  %v4054 = vld [vmem:[%s9 + $0x10] sm:$0xff]
  %v4055 = vld [vmem:[%s9 + $0x18] sm:$0xff]
  %vm4056 = vcmask 261120
  %v4058 = vsel %vm4056, 0.0, 0
  %4060 = vmatprep.subr.mxu0 0.0
  %4061 = vmatpush1.msra.mxu0 %v4052
  %4062 = vmatprep.subr.mxu0 0.0
  %4063 = vmatpush1.msra.mxu0 %v4053
  %4064 = vmatprep.subr.mxu0 0.0
  %4065 = vmatpush1.msra.mxu0 %v4054
  %4066 = vmatprep.subr.mxu0 0.0
  %4067 = vmatpush1.msra.mxu0 %v4055
  %4068 = vmatprep.subr.mxu0 0.0
  %4069 = vmatpush1.msra.mxu0 0.0
  %4070 = vmatprep.subr.mxu0 0.0
  %4071 = vmatpush1.msra.mxu0 0.0
  %4072 = vmatprep.subr.mxu0 0.0
  %4073 = vmatpush1.msra.mxu0 0.0
  %4074 = vmatprep.subr.mxu0 0.0
  %4075 = vmatpush1.msra.mxu0 0.0
  %4076 = vmatprep.subr.mxu0 0.0
  %4077 = vmatpush1.msra.mxu0 0.0
  %4078 = vmatprep.subr.mxu0 0.0
  %4079 = vmatpush1.msra.mxu0 0.0
  %4080 = vmatprep.subr.mxu0 0.0
  %4081 = vmatpush1.msra.mxu0 0.0
  %4082 = vmatprep.subr.mxu0 0.0
  %4083 = vmatpush1.msra.mxu0 0.0
  %4084 = vmatprep.subr.mxu0 0.0
  %4085 = vmatpush1.msra.mxu0 0.0
  %4086 = vmatprep.subr.mxu0 0.0
  %4087 = vmatpush1.msra.mxu0 0.0
  %4088 = vmatprep.subr.mxu0 0.0
  %4089 = vmatpush1.msra.mxu0 0.0
  %4090 = vmatprep.subr.mxu0 0.0
  %4091 = vmatpush1.msra.mxu0 0.0
  %4092 = vmatprep.subr.mxu0 0.0
  %4093 = vmatpush1.msra.mxu0 0.0
  %4094 = vmatprep.subr.mxu0 0.0
  %4095 = vmatpush1.msra.mxu0 0.0
  %4096 = vmatprep.subr.mxu0 0.0
  %4097 = vmatpush1.msra.mxu0 0.0
  %4098 = vmatprep.subr.mxu0 0.0
  %4099 = vmatpush1.msra.mxu0 0.0
  %4100 = vmatprep.subr.mxu0 0.0
  %4101 = vmatpush1.msra.mxu0 0.0
  %4102 = vmatprep.subr.mxu0 0.0
  %4103 = vmatpush1.msra.mxu0 0.0
  %4104 = vmatprep.subr.mxu0 0.0
  %4105 = vmatpush1.msra.mxu0 0.0
  %4106 = vmatprep.subr.mxu0 0.0
  %4107 = vmatpush1.msra.mxu0 0.0
  %4108 = vmatprep.subr.mxu0 0.0
  %4109 = vmatpush1.msra.mxu0 0.0
  %4110 = vmatprep.subr.mxu0 0.0
  %4111 = vmatpush1.msra.mxu0 0.0
  %4112 = vmatprep.subr.mxu0 0.0
  %4113 = vmatpush1.msra.mxu0 0.0
  %4114 = vmatprep.subr.mxu0 0.0
  %4115 = vmatpush1.msra.mxu0 0.0
  %4116 = vmatprep.subr.mxu0 0.0
  %4117 = vmatpush1.msra.mxu0 0.0
  %4118 = vmatprep.subr.mxu0 0.0
  %4119 = vmatpush1.msra.mxu0 0.0
  %4120 = vmatprep.subr.mxu0 0.0
  %4121 = vmatpush1.msra.mxu0 0.0
  %4122 = vmatprep.subr.mxu0 0.0
  %4123 = vmatpush1.msra.mxu0 0.0
  %4124 = vmatprep.mubr.f32.mxu0 0.0
  %4125 = vmatmul.mubr.f32.gmra.mrb[0].mxu0 %v4058
  %v4126 = vpop.f32.mrb[0].mxu0
  %v4127 = vadd.f32 0.0, %v4126
  %v4128 = vpop.f32.mrb[0].mxu0
  %4129 = vdwg.mxu0
  %v4130 = vadd.f32 %v4051, %v4127
  %v4131 = vxor.u32 %v4130, 2147483648
  %v4132 = vmul.f32 %v4131, 1.442695
  %v4133 = vpow.pop %v4132
  %v4134 = vadd.f32 %v4133, 1.0
  %v4135 = vrcp.pop %v4134
  %v4136 = vmul.f32 1.0, %v4135
  %v4137 = vtanh.pop %v4130
  %v4138 = vmul.f32 %v4136, 0.0
  %4140 = vrot.lane.b32.xlu0 %v4137, 64
  %v4141 = vpop.permute.xlu0 %4140
  %v4143 = vmul.f32 %v4136, %v4141
  %4145 = vrot.lane.b32.xlu0 %v4143, 32
  %v4146 = vpop.permute.xlu0 %4145
  %v4148 = vadd.f32 %v4138, %v4146
  %v4149 = vtanh.pop %v4148
  %4151 = vrot.lane.b32.xlu0 %v4149, 64
  %v4152 = vpop.permute.xlu0 %4151
  %v4154 = vmul.f32 %v4136, %v4152
  %4156 = vrot.lane.b32.xlu0 %v4154, 32
  %v4157 = vpop.permute.xlu0 %4156
  %4159 = vst.msk [vmem:[#allocation6] sm:$0xff] %vm4056, %v4157
  %v4160 = vld [vmem:[#allocation5 + $0x8] sm:$0xff]
  %v4161 = vld [vmem:[%s9] sm:$0xff]
  %v4162 = vld [vmem:[%s9 + $0x8] sm:$0xff]
  %v4163 = vld [vmem:[%s9 + $0x10] sm:$0xff]
  %v4164 = vld [vmem:[%s9 + $0x18] sm:$0xff]
  %v4165 = vsel %vm4056, %v4157, 0
  %4167 = vmatprep.subr.mxu0 0.0
  %4168 = vmatpush1.msra.mxu0 %v4161
  %4169 = vmatprep.subr.mxu0 0.0
  %4170 = vmatpush1.msra.mxu0 %v4162
  %4171 = vmatprep.subr.mxu0 0.0
  %4172 = vmatpush1.msra.mxu0 %v4163
  %4173 = vmatprep.subr.mxu0 0.0
  %4174 = vmatpush1.msra.mxu0 %v4164
  %4175 = vmatprep.subr.mxu0 0.0
  %4176 = vmatpush1.msra.mxu0 0.0
  %4177 = vmatprep.subr.mxu0 0.0
  %4178 = vmatpush1.msra.mxu0 0.0
  %4179 = vmatprep.subr.mxu0 0.0
  %4180 = vmatpush1.msra.mxu0 0.0
  %4181 = vmatprep.subr.mxu0 0.0
  %4182 = vmatpush1.msra.mxu0 0.0
  %4183 = vmatprep.subr.mxu0 0.0
  %4184 = vmatpush1.msra.mxu0 0.0
  %4185 = vmatprep.subr.mxu0 0.0
  %4186 = vmatpush1.msra.mxu0 0.0
  %4187 = vmatprep.subr.mxu0 0.0
  %4188 = vmatpush1.msra.mxu0 0.0
  %4189 = vmatprep.subr.mxu0 0.0
  %4190 = vmatpush1.msra.mxu0 0.0
  %4191 = vmatprep.subr.mxu0 0.0
  %4192 = vmatpush1.msra.mxu0 0.0
  %4193 = vmatprep.subr.mxu0 0.0
  %4194 = vmatpush1.msra.mxu0 0.0
  %4195 = vmatprep.subr.mxu0 0.0
  %4196 = vmatpush1.msra.mxu0 0.0
  %4197 = vmatprep.subr.mxu0 0.0
  %4198 = vmatpush1.msra.mxu0 0.0
  %4199 = vmatprep.subr.mxu0 0.0
  %4200 = vmatpush1.msra.mxu0 0.0
  %4201 = vmatprep.subr.mxu0 0.0
  %4202 = vmatpush1.msra.mxu0 0.0
  %4203 = vmatprep.subr.mxu0 0.0
  %4204 = vmatpush1.msra.mxu0 0.0
  %4205 = vmatprep.subr.mxu0 0.0
  %4206 = vmatpush1.msra.mxu0 0.0
  %4207 = vmatprep.subr.mxu0 0.0
  %4208 = vmatpush1.msra.mxu0 0.0
  %4209 = vmatprep.subr.mxu0 0.0
  %4210 = vmatpush1.msra.mxu0 0.0
  %4211 = vmatprep.subr.mxu0 0.0
  %4212 = vmatpush1.msra.mxu0 0.0
  %4213 = vmatprep.subr.mxu0 0.0
  %4214 = vmatpush1.msra.mxu0 0.0
  %4215 = vmatprep.subr.mxu0 0.0
  %4216 = vmatpush1.msra.mxu0 0.0
  %4217 = vmatprep.subr.mxu0 0.0
  %4218 = vmatpush1.msra.mxu0 0.0
  %4219 = vmatprep.subr.mxu0 0.0
  %4220 = vmatpush1.msra.mxu0 0.0
  %4221 = vmatprep.subr.mxu0 0.0
  %4222 = vmatpush1.msra.mxu0 0.0
  %4223 = vmatprep.subr.mxu0 0.0
  %4224 = vmatpush1.msra.mxu0 0.0
  %4225 = vmatprep.subr.mxu0 0.0
  %4226 = vmatpush1.msra.mxu0 0.0
  %4227 = vmatprep.subr.mxu0 0.0
  %4228 = vmatpush1.msra.mxu0 0.0
  %4229 = vmatprep.subr.mxu0 0.0
  %4230 = vmatpush1.msra.mxu0 0.0
  %4231 = vmatprep.mubr.f32.mxu0 0.0
  %4232 = vmatmul.mubr.f32.gmra.mrb[0].mxu0 %v4165
  %v4233 = vpop.f32.mrb[0].mxu0
  %v4234 = vadd.f32 0.0, %v4233
  %v4235 = vpop.f32.mrb[0].mxu0
  %4236 = vdwg.mxu0
  %v4237 = vadd.f32 %v4160, %v4234
  %v4238 = vxor.u32 %v4237, 2147483648
  %v4239 = vmul.f32 %v4238, 1.442695
  %v4240 = vpow.pop %v4239
  %v4241 = vadd.f32 %v4240, 1.0
  %v4242 = vrcp.pop %v4241
  %v4243 = vmul.f32 1.0, %v4242
  %v4244 = vtanh.pop %v4237
  %v4245 = vmul.f32 %v4243, %v4148
  %4247 = vrot.lane.b32.xlu0 %v4244, 64
  %v4248 = vpop.permute.xlu0 %4247
  %v4250 = vmul.f32 %v4243, %v4248
  %4252 = vrot.lane.b32.xlu0 %v4250, 32
  %v4253 = vpop.permute.xlu0 %4252
  %v4255 = vadd.f32 %v4245, %v4253
  %v4256 = vtanh.pop %v4255
  %4258 = vrot.lane.b32.xlu0 %v4256, 64
  %v4259 = vpop.permute.xlu0 %4258
  %v4261 = vmul.f32 %v4243, %v4259
  %4263 = vrot.lane.b32.xlu0 %v4261, 32
  %v4264 = vpop.permute.xlu0 %4263
  %4266 = vst.msk [vmem:[#allocation6 + $0x8] sm:$0xff] %vm4056, %v4264
  %v4267 = vld [vmem:[#allocation5 + $0x10] sm:$0xff]
  %v4268 = vld [vmem:[%s9] sm:$0xff]
  %v4269 = vld [vmem:[%s9 + $0x8] sm:$0xff]
  %v4270 = vld [vmem:[%s9 + $0x10] sm:$0xff]
  %v4271 = vld [vmem:[%s9 + $0x18] sm:$0xff]
  %v4272 = vsel %vm4056, %v4264, 0
  %4274 = vmatprep.subr.mxu0 0.0
  %4275 = vmatpush1.msra.mxu0 %v4268
  %4276 = vmatprep.subr.mxu0 0.0
  %4277 = vmatpush1.msra.mxu0 %v4269
  %4278 = vmatprep.subr.mxu0 0.0
  %4279 = vmatpush1.msra.mxu0 %v4270
  %4280 = vmatprep.subr.mxu0 0.0
  %4281 = vmatpush1.msra.mxu0 %v4271
  %4282 = vmatprep.subr.mxu0 0.0
  %4283 = vmatpush1.msra.mxu0 0.0
  %4284 = vmatprep.subr.mxu0 0.0
  %4285 = vmatpush1.msra.mxu0 0.0
  %4286 = vmatprep.subr.mxu0 0.0
  %4287 = vmatpush1.msra.mxu0 0.0
  %4288 = vmatprep.subr.mxu0 0.0
  %4289 = vmatpush1.msra.mxu0 0.0
  %4290 = vmatprep.subr.mxu0 0.0
  %4291 = vmatpush1.msra.mxu0 0.0
  %4292 = vmatprep.subr.mxu0 0.0
  %4293 = vmatpush1.msra.mxu0 0.0
  %4294 = vmatprep.subr.mxu0 0.0
  %4295 = vmatpush1.msra.mxu0 0.0
  %4296 = vmatprep.subr.mxu0 0.0
  %4297 = vmatpush1.msra.mxu0 0.0
  %4298 = vmatprep.subr.mxu0 0.0
  %4299 = vmatpush1.msra.mxu0 0.0
  %4300 = vmatprep.subr.mxu0 0.0
  %4301 = vmatpush1.msra.mxu0 0.0
  %4302 = vmatprep.subr.mxu0 0.0
  %4303 = vmatpush1.msra.mxu0 0.0
  %4304 = vmatprep.subr.mxu0 0.0
  %4305 = vmatpush1.msra.mxu0 0.0
  %4306 = vmatprep.subr.mxu0 0.0
  %4307 = vmatpush1.msra.mxu0 0.0
  %4308 = vmatprep.subr.mxu0 0.0
  %4309 = vmatpush1.msra.mxu0 0.0
  %4310 = vmatprep.subr.mxu0 0.0
  %4311 = vmatpush1.msra.mxu0 0.0
  %4312 = vmatprep.subr.mxu0 0.0
  %4313 = vmatpush1.msra.mxu0 0.0
  %4314 = vmatprep.subr.mxu0 0.0
  %4315 = vmatpush1.msra.mxu0 0.0
  %4316 = vmatprep.subr.mxu0 0.0
  %4317 = vmatpush1.msra.mxu0 0.0
  %4318 = vmatprep.subr.mxu0 0.0
  %4319 = vmatpush1.msra.mxu0 0.0
  %4320 = vmatprep.subr.mxu0 0.0
  %4321 = vmatpush1.msra.mxu0 0.0
  %4322 = vmatprep.subr.mxu0 0.0
  %4323 = vmatpush1.msra.mxu0 0.0
  %4324 = vmatprep.subr.mxu0 0.0
  %4325 = vmatpush1.msra.mxu0 0.0
  %4326 = vmatprep.subr.mxu0 0.0
  %4327 = vmatpush1.msra.mxu0 0.0
  %4328 = vmatprep.subr.mxu0 0.0
  %4329 = vmatpush1.msra.mxu0 0.0
  %4330 = vmatprep.subr.mxu0 0.0
  %4331 = vmatpush1.msra.mxu0 0.0
  %4332 = vmatprep.subr.mxu0 0.0
  %4333 = vmatpush1.msra.mxu0 0.0
  %4334 = vmatprep.subr.mxu0 0.0
  %4335 = vmatpush1.msra.mxu0 0.0
  %4336 = vmatprep.subr.mxu0 0.0
  %4337 = vmatpush1.msra.mxu0 0.0
  %4338 = vmatprep.mubr.f32.mxu0 0.0
  %4339 = vmatmul.mubr.f32.gmra.mrb[0].mxu0 %v4272
  %v4340 = vpop.f32.mrb[0].mxu0
  %v4341 = vadd.f32 0.0, %v4340
  %v4342 = vpop.f32.mrb[0].mxu0
  %4343 = vdwg.mxu0
  %v4344 = vadd.f32 %v4267, %v4341
  %v4345 = vxor.u32 %v4344, 2147483648
  %v4346 = vmul.f32 %v4345, 1.442695
  %v4347 = vpow.pop %v4346
  %v4348 = vadd.f32 %v4347, 1.0
  %v4349 = vrcp.pop %v4348
  %v4350 = vmul.f32 1.0, %v4349
  %v4351 = vtanh.pop %v4344
  %v4352 = vmul.f32 %v4350, %v4255
  %4354 = vrot.lane.b32.xlu0 %v4351, 64
  %v4355 = vpop.permute.xlu0 %4354
  %v4357 = vmul.f32 %v4350, %v4355
  %4359 = vrot.lane.b32.xlu0 %v4357, 32
  %v4360 = vpop.permute.xlu0 %4359
  %v4362 = vadd.f32 %v4352, %v4360
  %v4363 = vtanh.pop %v4362
  %4365 = vrot.lane.b32.xlu0 %v4363, 64
  %v4366 = vpop.permute.xlu0 %4365
  %v4368 = vmul.f32 %v4350, %v4366
  %4370 = vrot.lane.b32.xlu0 %v4368, 32
  %v4371 = vpop.permute.xlu0 %4370
  %4373 = vst.msk [vmem:[#allocation6 + $0x10] sm:$0xff] %vm4056, %v4371
  %v4374 = vld [vmem:[#allocation5 + $0x18] sm:$0xff]
  %v4375 = vld [vmem:[%s9] sm:$0xff]
  %v4376 = vld [vmem:[%s9 + $0x8] sm:$0xff]
  %v4377 = vld [vmem:[%s9 + $0x10] sm:$0xff]
  %v4378 = vld [vmem:[%s9 + $0x18] sm:$0xff]
  %v4379 = vsel %vm4056, %v4371, 0
  %4381 = vmatprep.subr.mxu0 0.0
  %4382 = vmatpush1.msra.mxu0 %v4375
  %4383 = vmatprep.subr.mxu0 0.0
  %4384 = vmatpush1.msra.mxu0 %v4376
  %4385 = vmatprep.subr.mxu0 0.0
  %4386 = vmatpush1.msra.mxu0 %v4377
  %4387 = vmatprep.subr.mxu0 0.0
  %4388 = vmatpush1.msra.mxu0 %v4378
  %4389 = vmatprep.subr.mxu0 0.0
  %4390 = vmatpush1.msra.mxu0 0.0
  %4391 = vmatprep.subr.mxu0 0.0
  %4392 = vmatpush1.msra.mxu0 0.0
  %4393 = vmatprep.subr.mxu0 0.0
  %4394 = vmatpush1.msra.mxu0 0.0
  %4395 = vmatprep.subr.mxu0 0.0
  %4396 = vmatpush1.msra.mxu0 0.0
  %4397 = vmatprep.subr.mxu0 0.0
  %4398 = vmatpush1.msra.mxu0 0.0
  %4399 = vmatprep.subr.mxu0 0.0
  %4400 = vmatpush1.msra.mxu0 0.0
  %4401 = vmatprep.subr.mxu0 0.0
  %4402 = vmatpush1.msra.mxu0 0.0
  %4403 = vmatprep.subr.mxu0 0.0
  %4404 = vmatpush1.msra.mxu0 0.0
  %4405 = vmatprep.subr.mxu0 0.0
  %4406 = vmatpush1.msra.mxu0 0.0
  %4407 = vmatprep.subr.mxu0 0.0
  %4408 = vmatpush1.msra.mxu0 0.0
  %4409 = vmatprep.subr.mxu0 0.0
  %4410 = vmatpush1.msra.mxu0 0.0
  %4411 = vmatprep.subr.mxu0 0.0
  %4412 = vmatpush1.msra.mxu0 0.0
  %4413 = vmatprep.subr.mxu0 0.0
  %4414 = vmatpush1.msra.mxu0 0.0
  %4415 = vmatprep.subr.mxu0 0.0
  %4416 = vmatpush1.msra.mxu0 0.0
  %4417 = vmatprep.subr.mxu0 0.0
  %4418 = vmatpush1.msra.mxu0 0.0
  %4419 = vmatprep.subr.mxu0 0.0
  %4420 = vmatpush1.msra.mxu0 0.0
  %4421 = vmatprep.subr.mxu0 0.0
  %4422 = vmatpush1.msra.mxu0 0.0
  %4423 = vmatprep.subr.mxu0 0.0
  %4424 = vmatpush1.msra.mxu0 0.0
  %4425 = vmatprep.subr.mxu0 0.0
  %4426 = vmatpush1.msra.mxu0 0.0
  %4427 = vmatprep.subr.mxu0 0.0
  %4428 = vmatpush1.msra.mxu0 0.0
  %4429 = vmatprep.subr.mxu0 0.0
  %4430 = vmatpush1.msra.mxu0 0.0
  %4431 = vmatprep.subr.mxu0 0.0
  %4432 = vmatpush1.msra.mxu0 0.0
  %4433 = vmatprep.subr.mxu0 0.0
  %4434 = vmatpush1.msra.mxu0 0.0
  %4435 = vmatprep.subr.mxu0 0.0
  %4436 = vmatpush1.msra.mxu0 0.0
  %4437 = vmatprep.subr.mxu0 0.0
  %4438 = vmatpush1.msra.mxu0 0.0
  %4439 = vmatprep.subr.mxu0 0.0
  %4440 = vmatpush1.msra.mxu0 0.0
  %4441 = vmatprep.subr.mxu0 0.0
  %4442 = vmatpush1.msra.mxu0 0.0
  %4443 = vmatprep.subr.mxu0 0.0
  %4444 = vmatpush1.msra.mxu0 0.0
  %4445 = vmatprep.mubr.f32.mxu0 0.0
  %4446 = vmatmul.mubr.f32.gmra.mrb[0].mxu0 %v4379
  %v4447 = vpop.f32.mrb[0].mxu0
  %v4448 = vadd.f32 0.0, %v4447
  %v4449 = vpop.f32.mrb[0].mxu0
  %4450 = vdwg.mxu0
  %v4451 = vadd.f32 %v4374, %v4448
  %v4452 = vxor.u32 %v4451, 2147483648
  %v4453 = vmul.f32 %v4452, 1.442695
  %v4454 = vpow.pop %v4453
  %v4455 = vadd.f32 %v4454, 1.0
  %v4456 = vrcp.pop %v4455
  %v4457 = vmul.f32 1.0, %v4456
  %v4458 = vtanh.pop %v4451
  %v4459 = vmul.f32 %v4457, %v4362
  %4461 = vrot.lane.b32.xlu0 %v4458, 64
  %v4462 = vpop.permute.xlu0 %4461
  %v4464 = vmul.f32 %v4457, %v4462
  %4466 = vrot.lane.b32.xlu0 %v4464, 32
  %v4467 = vpop.permute.xlu0 %4466
  %v4469 = vadd.f32 %v4459, %v4467
  %v4470 = vtanh.pop %v4469
  %4472 = vrot.lane.b32.xlu0 %v4470, 64
  %v4473 = vpop.permute.xlu0 %4472
  %v4475 = vmul.f32 %v4457, %v4473
  %4477 = vrot.lane.b32.xlu0 %v4475, 32
  %v4478 = vpop.permute.xlu0 %4477
  %4480 = vst.msk [vmem:[#allocation6 + $0x18] sm:$0xff] %vm4056, %v4478
  %v4481 = vld [vmem:[#allocation5 + $0x20] sm:$0xff]
  %v4482 = vld [vmem:[%s9] sm:$0xff]
  %v4483 = vld [vmem:[%s9 + $0x8] sm:$0xff]
  %v4484 = vld [vmem:[%s9 + $0x10] sm:$0xff]
  %v4485 = vld [vmem:[%s9 + $0x18] sm:$0xff]
  %v4486 = vsel %vm4056, %v4478, 0
  %4488 = vmatprep.subr.mxu0 0.0
  %4489 = vmatpush1.msra.mxu0 %v4482
  %4490 = vmatprep.subr.mxu0 0.0
  %4491 = vmatpush1.msra.mxu0 %v4483
  %4492 = vmatprep.subr.mxu0 0.0
  %4493 = vmatpush1.msra.mxu0 %v4484
  %4494 = vmatprep.subr.mxu0 0.0
  %4495 = vmatpush1.msra.mxu0 %v4485
  %4496 = vmatprep.subr.mxu0 0.0
  %4497 = vmatpush1.msra.mxu0 0.0
  %4498 = vmatprep.subr.mxu0 0.0
  %4499 = vmatpush1.msra.mxu0 0.0
  %4500 = vmatprep.subr.mxu0 0.0
  %4501 = vmatpush1.msra.mxu0 0.0
  %4502 = vmatprep.subr.mxu0 0.0
  %4503 = vmatpush1.msra.mxu0 0.0
  %4504 = vmatprep.subr.mxu0 0.0
  %4505 = vmatpush1.msra.mxu0 0.0
  %4506 = vmatprep.subr.mxu0 0.0
  %4507 = vmatpush1.msra.mxu0 0.0
  %4508 = vmatprep.subr.mxu0 0.0
  %4509 = vmatpush1.msra.mxu0 0.0
  %4510 = vmatprep.subr.mxu0 0.0
  %4511 = vmatpush1.msra.mxu0 0.0
  %4512 = vmatprep.subr.mxu0 0.0
  %4513 = vmatpush1.msra.mxu0 0.0
  %4514 = vmatprep.subr.mxu0 0.0
  %4515 = vmatpush1.msra.mxu0 0.0
  %4516 = vmatprep.subr.mxu0 0.0
  %4517 = vmatpush1.msra.mxu0 0.0
  %4518 = vmatprep.subr.mxu0 0.0
  %4519 = vmatpush1.msra.mxu0 0.0
  %4520 = vmatprep.subr.mxu0 0.0
  %4521 = vmatpush1.msra.mxu0 0.0
  %4522 = vmatprep.subr.mxu0 0.0
  %4523 = vmatpush1.msra.mxu0 0.0
  %4524 = vmatprep.subr.mxu0 0.0
  %4525 = vmatpush1.msra.mxu0 0.0
  %4526 = vmatprep.subr.mxu0 0.0
  %4527 = vmatpush1.msra.mxu0 0.0
  %4528 = vmatprep.subr.mxu0 0.0
  %4529 = vmatpush1.msra.mxu0 0.0
  %4530 = vmatprep.subr.mxu0 0.0
  %4531 = vmatpush1.msra.mxu0 0.0
  %4532 = vmatprep.subr.mxu0 0.0
  %4533 = vmatpush1.msra.mxu0 0.0
  %4534 = vmatprep.subr.mxu0 0.0
  %4535 = vmatpush1.msra.mxu0 0.0
  %4536 = vmatprep.subr.mxu0 0.0
  %4537 = vmatpush1.msra.mxu0 0.0
  %4538 = vmatprep.subr.mxu0 0.0
  %4539 = vmatpush1.msra.mxu0 0.0
  %4540 = vmatprep.subr.mxu0 0.0
  %4541 = vmatpush1.msra.mxu0 0.0
  %4542 = vmatprep.subr.mxu0 0.0
  %4543 = vmatpush1.msra.mxu0 0.0
  %4544 = vmatprep.subr.mxu0 0.0
  %4545 = vmatpush1.msra.mxu0 0.0
  %4546 = vmatprep.subr.mxu0 0.0
  %4547 = vmatpush1.msra.mxu0 0.0
  %4548 = vmatprep.subr.mxu0 0.0
  %4549 = vmatpush1.msra.mxu0 0.0
  %4550 = vmatprep.subr.mxu0 0.0
  %4551 = vmatpush1.msra.mxu0 0.0
  %4552 = vmatprep.mubr.f32.mxu0 0.0
  %4553 = vmatmul.mubr.f32.gmra.mrb[0].mxu0 %v4486
  %v4554 = vpop.f32.mrb[0].mxu0
  %v4555 = vadd.f32 0.0, %v4554
  %v4556 = vpop.f32.mrb[0].mxu0
  %4557 = vdwg.mxu0
  %v4558 = vadd.f32 %v4481, %v4555
  %v4559 = vxor.u32 %v4558, 2147483648
  %v4560 = vmul.f32 %v4559, 1.442695
  %v4561 = vpow.pop %v4560
  %v4562 = vadd.f32 %v4561, 1.0
  %v4563 = vrcp.pop %v4562
  %v4564 = vmul.f32 1.0, %v4563
  %v4565 = vtanh.pop %v4558
  %v4566 = vmul.f32 %v4564, %v4469
  %4568 = vrot.lane.b32.xlu0 %v4565, 64
  %v4569 = vpop.permute.xlu0 %4568
  %v4571 = vmul.f32 %v4564, %v4569
  %4573 = vrot.lane.b32.xlu0 %v4571, 32
  %v4574 = vpop.permute.xlu0 %4573
  %v4576 = vadd.f32 %v4566, %v4574
  %v4577 = vtanh.pop %v4576
  %4579 = vrot.lane.b32.xlu0 %v4577, 64
  %v4580 = vpop.permute.xlu0 %4579
  %v4582 = vmul.f32 %v4564, %v4580
  %4584 = vrot.lane.b32.xlu0 %v4582, 32
  %v4585 = vpop.permute.xlu0 %4584
  %4587 = vst.msk [vmem:[#allocation6 + $0x20] sm:$0xff] %vm4056, %v4585
  %v4588 = vld [vmem:[#allocation5 + $0x28] sm:$0xff]
  %v4589 = vld [vmem:[%s9] sm:$0xff]
  %v4590 = vld [vmem:[%s9 + $0x8] sm:$0xff]
  %v4591 = vld [vmem:[%s9 + $0x10] sm:$0xff]
  %v4592 = vld [vmem:[%s9 + $0x18] sm:$0xff]
  %v4593 = vsel %vm4056, %v4585, 0
  %4595 = vmatprep.subr.mxu0 0.0
  %4596 = vmatpush1.msra.mxu0 %v4589
  %4597 = vmatprep.subr.mxu0 0.0
  %4598 = vmatpush1.msra.mxu0 %v4590
  %4599 = vmatprep.subr.mxu0 0.0
  %4600 = vmatpush1.msra.mxu0 %v4591
  %4601 = vmatprep.subr.mxu0 0.0
  %4602 = vmatpush1.msra.mxu0 %v4592
  %4603 = vmatprep.subr.mxu0 0.0
  %4604 = vmatpush1.msra.mxu0 0.0
  %4605 = vmatprep.subr.mxu0 0.0
  %4606 = vmatpush1.msra.mxu0 0.0
  %4607 = vmatprep.subr.mxu0 0.0
  %4608 = vmatpush1.msra.mxu0 0.0
  %4609 = vmatprep.subr.mxu0 0.0
  %4610 = vmatpush1.msra.mxu0 0.0
  %4611 = vmatprep.subr.mxu0 0.0
  %4612 = vmatpush1.msra.mxu0 0.0
  %4613 = vmatprep.subr.mxu0 0.0
  %4614 = vmatpush1.msra.mxu0 0.0
  %4615 = vmatprep.subr.mxu0 0.0
  %4616 = vmatpush1.msra.mxu0 0.0
  %4617 = vmatprep.subr.mxu0 0.0
  %4618 = vmatpush1.msra.mxu0 0.0
  %4619 = vmatprep.subr.mxu0 0.0
  %4620 = vmatpush1.msra.mxu0 0.0
  %4621 = vmatprep.subr.mxu0 0.0
  %4622 = vmatpush1.msra.mxu0 0.0
  %4623 = vmatprep.subr.mxu0 0.0
  %4624 = vmatpush1.msra.mxu0 0.0
  %4625 = vmatprep.subr.mxu0 0.0
  %4626 = vmatpush1.msra.mxu0 0.0
  %4627 = vmatprep.subr.mxu0 0.0
  %4628 = vmatpush1.msra.mxu0 0.0
  %4629 = vmatprep.subr.mxu0 0.0
  %4630 = vmatpush1.msra.mxu0 0.0
  %4631 = vmatprep.subr.mxu0 0.0
  %4632 = vmatpush1.msra.mxu0 0.0
  %4633 = vmatprep.subr.mxu0 0.0
  %4634 = vmatpush1.msra.mxu0 0.0
  %4635 = vmatprep.subr.mxu0 0.0
  %4636 = vmatpush1.msra.mxu0 0.0
  %4637 = vmatprep.subr.mxu0 0.0
  %4638 = vmatpush1.msra.mxu0 0.0
  %4639 = vmatprep.subr.mxu0 0.0
  %4640 = vmatpush1.msra.mxu0 0.0
  %4641 = vmatprep.subr.mxu0 0.0
  %4642 = vmatpush1.msra.mxu0 0.0
  %4643 = vmatprep.subr.mxu0 0.0
  %4644 = vmatpush1.msra.mxu0 0.0
  %4645 = vmatprep.subr.mxu0 0.0
  %4646 = vmatpush1.msra.mxu0 0.0
  %4647 = vmatprep.subr.mxu0 0.0
  %4648 = vmatpush1.msra.mxu0 0.0
  %4649 = vmatprep.subr.mxu0 0.0
  %4650 = vmatpush1.msra.mxu0 0.0
  %4651 = vmatprep.subr.mxu0 0.0
  %4652 = vmatpush1.msra.mxu0 0.0
  %4653 = vmatprep.subr.mxu0 0.0
  %4654 = vmatpush1.msra.mxu0 0.0
  %4655 = vmatprep.subr.mxu0 0.0
  %4656 = vmatpush1.msra.mxu0 0.0
  %4657 = vmatprep.subr.mxu0 0.0
  %4658 = vmatpush1.msra.mxu0 0.0
  %4659 = vmatprep.mubr.f32.mxu0 0.0
  %4660 = vmatmul.mubr.f32.gmra.mrb[0].mxu0 %v4593
  %v4661 = vpop.f32.mrb[0].mxu0
  %v4662 = vadd.f32 0.0, %v4661
  %v4663 = vpop.f32.mrb[0].mxu0
  %4664 = vdwg.mxu0
  %v4665 = vadd.f32 %v4588, %v4662
  %v4666 = vxor.u32 %v4665, 2147483648
  %v4667 = vmul.f32 %v4666, 1.442695
  %v4668 = vpow.pop %v4667
  %v4669 = vadd.f32 %v4668, 1.0
  %v4670 = vrcp.pop %v4669
  %v4671 = vmul.f32 1.0, %v4670
  %v4672 = vtanh.pop %v4665
  %v4673 = vmul.f32 %v4671, %v4576
  %4675 = vrot.lane.b32.xlu0 %v4672, 64
  %v4676 = vpop.permute.xlu0 %4675
  %v4678 = vmul.f32 %v4671, %v4676
  %4680 = vrot.lane.b32.xlu0 %v4678, 32
  %v4681 = vpop.permute.xlu0 %4680
  %v4683 = vadd.f32 %v4673, %v4681
  %v4684 = vtanh.pop %v4683
  %4686 = vrot.lane.b32.xlu0 %v4684, 64
  %v4687 = vpop.permute.xlu0 %4686
  %v4689 = vmul.f32 %v4671, %v4687
  %4691 = vrot.lane.b32.xlu0 %v4689, 32
  %v4692 = vpop.permute.xlu0 %4691
  %4694 = vst.msk [vmem:[#allocation6 + $0x28] sm:$0xff] %vm4056, %v4692
  %v4695 = vld [vmem:[#allocation5 + $0x30] sm:$0xff]
  %v4696 = vld [vmem:[%s9] sm:$0xff]
  %v4697 = vld [vmem:[%s9 + $0x8] sm:$0xff]
  %v4698 = vld [vmem:[%s9 + $0x10] sm:$0xff]
  %v4699 = vld [vmem:[%s9 + $0x18] sm:$0xff]
  %v4700 = vsel %vm4056, %v4692, 0
  %4702 = vmatprep.subr.mxu0 0.0
  %4703 = vmatpush1.msra.mxu0 %v4696
  %4704 = vmatprep.subr.mxu0 0.0
  %4705 = vmatpush1.msra.mxu0 %v4697
  %4706 = vmatprep.subr.mxu0 0.0
  %4707 = vmatpush1.msra.mxu0 %v4698
  %4708 = vmatprep.subr.mxu0 0.0
  %4709 = vmatpush1.msra.mxu0 %v4699
  %4710 = vmatprep.subr.mxu0 0.0
  %4711 = vmatpush1.msra.mxu0 0.0
  %4712 = vmatprep.subr.mxu0 0.0
  %4713 = vmatpush1.msra.mxu0 0.0
  %4714 = vmatprep.subr.mxu0 0.0
  %4715 = vmatpush1.msra.mxu0 0.0
  %4716 = vmatprep.subr.mxu0 0.0
  %4717 = vmatpush1.msra.mxu0 0.0
  %4718 = vmatprep.subr.mxu0 0.0
  %4719 = vmatpush1.msra.mxu0 0.0
  %4720 = vmatprep.subr.mxu0 0.0
  %4721 = vmatpush1.msra.mxu0 0.0
  %4722 = vmatprep.subr.mxu0 0.0
  %4723 = vmatpush1.msra.mxu0 0.0
  %4724 = vmatprep.subr.mxu0 0.0
  %4725 = vmatpush1.msra.mxu0 0.0
  %4726 = vmatprep.subr.mxu0 0.0
  %4727 = vmatpush1.msra.mxu0 0.0
  %4728 = vmatprep.subr.mxu0 0.0
  %4729 = vmatpush1.msra.mxu0 0.0
  %4730 = vmatprep.subr.mxu0 0.0
  %4731 = vmatpush1.msra.mxu0 0.0
  %4732 = vmatprep.subr.mxu0 0.0
  %4733 = vmatpush1.msra.mxu0 0.0
  %4734 = vmatprep.subr.mxu0 0.0
  %4735 = vmatpush1.msra.mxu0 0.0
  %4736 = vmatprep.subr.mxu0 0.0
  %4737 = vmatpush1.msra.mxu0 0.0
  %4738 = vmatprep.subr.mxu0 0.0
  %4739 = vmatpush1.msra.mxu0 0.0
  %4740 = vmatprep.subr.mxu0 0.0
  %4741 = vmatpush1.msra.mxu0 0.0
  %4742 = vmatprep.subr.mxu0 0.0
  %4743 = vmatpush1.msra.mxu0 0.0
  %4744 = vmatprep.subr.mxu0 0.0
  %4745 = vmatpush1.msra.mxu0 0.0
  %4746 = vmatprep.subr.mxu0 0.0
  %4747 = vmatpush1.msra.mxu0 0.0
  %4748 = vmatprep.subr.mxu0 0.0
  %4749 = vmatpush1.msra.mxu0 0.0
  %4750 = vmatprep.subr.mxu0 0.0
  %4751 = vmatpush1.msra.mxu0 0.0
  %4752 = vmatprep.subr.mxu0 0.0
  %4753 = vmatpush1.msra.mxu0 0.0
  %4754 = vmatprep.subr.mxu0 0.0
  %4755 = vmatpush1.msra.mxu0 0.0
  %4756 = vmatprep.subr.mxu0 0.0
  %4757 = vmatpush1.msra.mxu0 0.0
  %4758 = vmatprep.subr.mxu0 0.0
  %4759 = vmatpush1.msra.mxu0 0.0
  %4760 = vmatprep.subr.mxu0 0.0
  %4761 = vmatpush1.msra.mxu0 0.0
  %4762 = vmatprep.subr.mxu0 0.0
  %4763 = vmatpush1.msra.mxu0 0.0
  %4764 = vmatprep.subr.mxu0 0.0
  %4765 = vmatpush1.msra.mxu0 0.0
  %4766 = vmatprep.mubr.f32.mxu0 0.0
  %4767 = vmatmul.mubr.f32.gmra.mrb[0].mxu0 %v4700
  %v4768 = vpop.f32.mrb[0].mxu0
  %v4769 = vadd.f32 0.0, %v4768
  %v4770 = vpop.f32.mrb[0].mxu0
  %4771 = vdwg.mxu0
  %v4772 = vadd.f32 %v4695, %v4769
  %v4773 = vxor.u32 %v4772, 2147483648
  %v4774 = vmul.f32 %v4773, 1.442695
  %v4775 = vpow.pop %v4774
  %v4776 = vadd.f32 %v4775, 1.0
  %v4777 = vrcp.pop %v4776
  %v4778 = vmul.f32 1.0, %v4777
  %v4779 = vtanh.pop %v4772
  %v4780 = vmul.f32 %v4778, %v4683
  %4782 = vrot.lane.b32.xlu0 %v4779, 64
  %v4783 = vpop.permute.xlu0 %4782
  %v4785 = vmul.f32 %v4778, %v4783
  %4787 = vrot.lane.b32.xlu0 %v4785, 32
  %v4788 = vpop.permute.xlu0 %4787
  %v4790 = vadd.f32 %v4780, %v4788
  %v4791 = vtanh.pop %v4790
  %4793 = vrot.lane.b32.xlu0 %v4791, 64
  %v4794 = vpop.permute.xlu0 %4793
  %v4796 = vmul.f32 %v4778, %v4794
  %4798 = vrot.lane.b32.xlu0 %v4796, 32
  %v4799 = vpop.permute.xlu0 %4798
  %4801 = vst.msk [vmem:[#allocation6 + $0x30] sm:$0xff] %vm4056, %v4799
  %v4802 = vld [vmem:[#allocation5 + $0x38] sm:$0xff]
  %v4803 = vld [vmem:[%s9] sm:$0xff]
  %v4804 = vld [vmem:[%s9 + $0x8] sm:$0xff]
  %v4805 = vld [vmem:[%s9 + $0x10] sm:$0xff]
  %v4806 = vld [vmem:[%s9 + $0x18] sm:$0xff]
  %v4807 = vsel %vm4056, %v4799, 0
  %4809 = vmatprep.subr.mxu0 0.0
  %4810 = vmatpush1.msra.mxu0 %v4803
  %4811 = vmatprep.subr.mxu0 0.0
  %4812 = vmatpush1.msra.mxu0 %v4804
  %4813 = vmatprep.subr.mxu0 0.0
  %4814 = vmatpush1.msra.mxu0 %v4805
  %4815 = vmatprep.subr.mxu0 0.0
  %4816 = vmatpush1.msra.mxu0 %v4806
  %4817 = vmatprep.subr.mxu0 0.0
  %4818 = vmatpush1.msra.mxu0 0.0
  %4819 = vmatprep.subr.mxu0 0.0
  %4820 = vmatpush1.msra.mxu0 0.0
  %4821 = vmatprep.subr.mxu0 0.0
  %4822 = vmatpush1.msra.mxu0 0.0
  %4823 = vmatprep.subr.mxu0 0.0
  %4824 = vmatpush1.msra.mxu0 0.0
  %4825 = vmatprep.subr.mxu0 0.0
  %4826 = vmatpush1.msra.mxu0 0.0
  %4827 = vmatprep.subr.mxu0 0.0
  %4828 = vmatpush1.msra.mxu0 0.0
  %4829 = vmatprep.subr.mxu0 0.0
  %4830 = vmatpush1.msra.mxu0 0.0
  %4831 = vmatprep.subr.mxu0 0.0
  %4832 = vmatpush1.msra.mxu0 0.0
  %4833 = vmatprep.subr.mxu0 0.0
  %4834 = vmatpush1.msra.mxu0 0.0
  %4835 = vmatprep.subr.mxu0 0.0
  %4836 = vmatpush1.msra.mxu0 0.0
  %4837 = vmatprep.subr.mxu0 0.0
  %4838 = vmatpush1.msra.mxu0 0.0
  %4839 = vmatprep.subr.mxu0 0.0
  %4840 = vmatpush1.msra.mxu0 0.0
  %4841 = vmatprep.subr.mxu0 0.0
  %4842 = vmatpush1.msra.mxu0 0.0
  %4843 = vmatprep.subr.mxu0 0.0
  %4844 = vmatpush1.msra.mxu0 0.0
  %4845 = vmatprep.subr.mxu0 0.0
  %4846 = vmatpush1.msra.mxu0 0.0
  %4847 = vmatprep.subr.mxu0 0.0
  %4848 = vmatpush1.msra.mxu0 0.0
  %4849 = vmatprep.subr.mxu0 0.0
  %4850 = vmatpush1.msra.mxu0 0.0
  %4851 = vmatprep.subr.mxu0 0.0
  %4852 = vmatpush1.msra.mxu0 0.0
  %4853 = vmatprep.subr.mxu0 0.0
  %4854 = vmatpush1.msra.mxu0 0.0
  %4855 = vmatprep.subr.mxu0 0.0
  %4856 = vmatpush1.msra.mxu0 0.0
  %4857 = vmatprep.subr.mxu0 0.0
  %4858 = vmatpush1.msra.mxu0 0.0
  %4859 = vmatprep.subr.mxu0 0.0
  %4860 = vmatpush1.msra.mxu0 0.0
  %4861 = vmatprep.subr.mxu0 0.0
  %4862 = vmatpush1.msra.mxu0 0.0
  %4863 = vmatprep.subr.mxu0 0.0
  %4864 = vmatpush1.msra.mxu0 0.0
  %4865 = vmatprep.subr.mxu0 0.0
  %4866 = vmatpush1.msra.mxu0 0.0
  %4867 = vmatprep.subr.mxu0 0.0
  %4868 = vmatpush1.msra.mxu0 0.0
  %4869 = vmatprep.subr.mxu0 0.0
  %4870 = vmatpush1.msra.mxu0 0.0
  %4871 = vmatprep.subr.mxu0 0.0
  %4872 = vmatpush1.msra.mxu0 0.0
  %4873 = vmatprep.mubr.f32.mxu0 0.0
  %4874 = vmatmul.mubr.f32.gmra.mrb[0].mxu0 %v4807
  %v4875 = vpop.f32.mrb[0].mxu0
  %v4876 = vadd.f32 0.0, %v4875
  %v4877 = vpop.f32.mrb[0].mxu0
  %4878 = vdwg.mxu0
  %v4879 = vadd.f32 %v4802, %v4876
  %v4880 = vxor.u32 %v4879, 2147483648
  %v4881 = vmul.f32 %v4880, 1.442695
  %v4882 = vpow.pop %v4881
  %v4883 = vadd.f32 %v4882, 1.0
  %v4884 = vrcp.pop %v4883
  %v4885 = vmul.f32 1.0, %v4884
  %v4886 = vtanh.pop %v4879
  %v4887 = vmul.f32 %v4885, %v4790
  %4889 = vrot.lane.b32.xlu0 %v4886, 64
  %v4890 = vpop.permute.xlu0 %4889
  %v4892 = vmul.f32 %v4885, %v4890
  %4894 = vrot.lane.b32.xlu0 %v4892, 32
  %v4895 = vpop.permute.xlu0 %4894
  %v4897 = vadd.f32 %v4887, %v4895
  %v4898 = vtanh.pop %v4897
  %4900 = vrot.lane.b32.xlu0 %v4898, 64
  %v4901 = vpop.permute.xlu0 %4900
  %v4903 = vmul.f32 %v4885, %v4901
  %4905 = vrot.lane.b32.xlu0 %v4903, 32
  %v4906 = vpop.permute.xlu0 %4905
  %4908 = vst.msk [vmem:[#allocation6 + $0x38] sm:$0xff] %vm4056, %v4906
  %v4909 = vld [vmem:[#allocation5 + $0x40] sm:$0xff]
  %v4910 = vld [vmem:[%s9] sm:$0xff]
  %v4911 = vld [vmem:[%s9 + $0x8] sm:$0xff]
  %v4912 = vld [vmem:[%s9 + $0x10] sm:$0xff]
  %v4913 = vld [vmem:[%s9 + $0x18] sm:$0xff]
  %v4914 = vsel %vm4056, %v4906, 0
  %4916 = vmatprep.subr.mxu0 0.0
  %4917 = vmatpush1.msra.mxu0 %v4910
  %4918 = vmatprep.subr.mxu0 0.0
  %4919 = vmatpush1.msra.mxu0 %v4911
  %4920 = vmatprep.subr.mxu0 0.0
  %4921 = vmatpush1.msra.mxu0 %v4912
  %4922 = vmatprep.subr.mxu0 0.0
  %4923 = vmatpush1.msra.mxu0 %v4913
  %4924 = vmatprep.subr.mxu0 0.0
  %4925 = vmatpush1.msra.mxu0 0.0
  %4926 = vmatprep.subr.mxu0 0.0
  %4927 = vmatpush1.msra.mxu0 0.0
  %4928 = vmatprep.subr.mxu0 0.0
  %4929 = vmatpush1.msra.mxu0 0.0
  %4930 = vmatprep.subr.mxu0 0.0
  %4931 = vmatpush1.msra.mxu0 0.0
  %4932 = vmatprep.subr.mxu0 0.0
  %4933 = vmatpush1.msra.mxu0 0.0
  %4934 = vmatprep.subr.mxu0 0.0
  %4935 = vmatpush1.msra.mxu0 0.0
  %4936 = vmatprep.subr.mxu0 0.0
  %4937 = vmatpush1.msra.mxu0 0.0
  %4938 = vmatprep.subr.mxu0 0.0
  %4939 = vmatpush1.msra.mxu0 0.0
  %4940 = vmatprep.subr.mxu0 0.0
  %4941 = vmatpush1.msra.mxu0 0.0
  %4942 = vmatprep.subr.mxu0 0.0
  %4943 = vmatpush1.msra.mxu0 0.0
  %4944 = vmatprep.subr.mxu0 0.0
  %4945 = vmatpush1.msra.mxu0 0.0
  %4946 = vmatprep.subr.mxu0 0.0
  %4947 = vmatpush1.msra.mxu0 0.0
  %4948 = vmatprep.subr.mxu0 0.0
  %4949 = vmatpush1.msra.mxu0 0.0
  %4950 = vmatprep.subr.mxu0 0.0
  %4951 = vmatpush1.msra.mxu0 0.0
  %4952 = vmatprep.subr.mxu0 0.0
  %4953 = vmatpush1.msra.mxu0 0.0
  %4954 = vmatprep.subr.mxu0 0.0
  %4955 = vmatpush1.msra.mxu0 0.0
  %4956 = vmatprep.subr.mxu0 0.0
  %4957 = vmatpush1.msra.mxu0 0.0
  %4958 = vmatprep.subr.mxu0 0.0
  %4959 = vmatpush1.msra.mxu0 0.0
  %4960 = vmatprep.subr.mxu0 0.0
  %4961 = vmatpush1.msra.mxu0 0.0
  %4962 = vmatprep.subr.mxu0 0.0
  %4963 = vmatpush1.msra.mxu0 0.0
  %4964 = vmatprep.subr.mxu0 0.0
  %4965 = vmatpush1.msra.mxu0 0.0
  %4966 = vmatprep.subr.mxu0 0.0
  %4967 = vmatpush1.msra.mxu0 0.0
  %4968 = vmatprep.subr.mxu0 0.0
  %4969 = vmatpush1.msra.mxu0 0.0
  %4970 = vmatprep.subr.mxu0 0.0
  %4971 = vmatpush1.msra.mxu0 0.0
  %4972 = vmatprep.subr.mxu0 0.0
  %4973 = vmatpush1.msra.mxu0 0.0
  %4974 = vmatprep.subr.mxu0 0.0
  %4975 = vmatpush1.msra.mxu0 0.0
  %4976 = vmatprep.subr.mxu0 0.0
  %4977 = vmatpush1.msra.mxu0 0.0
  %4978 = vmatprep.subr.mxu0 0.0
  %4979 = vmatpush1.msra.mxu0 0.0
  %4980 = vmatprep.mubr.f32.mxu0 0.0
  %4981 = vmatmul.mubr.f32.gmra.mrb[0].mxu0 %v4914
  %v4982 = vpop.f32.mrb[0].mxu0
  %v4983 = vadd.f32 0.0, %v4982
  %v4984 = vpop.f32.mrb[0].mxu0
  %4985 = vdwg.mxu0
  %v4986 = vadd.f32 %v4909, %v4983
  %v4987 = vxor.u32 %v4986, 2147483648
  %v4988 = vmul.f32 %v4987, 1.442695
  %v4989 = vpow.pop %v4988
  %v4990 = vadd.f32 %v4989, 1.0
  %v4991 = vrcp.pop %v4990
  %v4992 = vmul.f32 1.0, %v4991
  %v4993 = vtanh.pop %v4986
  %v4994 = vmul.f32 %v4992, %v4897
  %4996 = vrot.lane.b32.xlu0 %v4993, 64
  %v4997 = vpop.permute.xlu0 %4996
  %v4999 = vmul.f32 %v4992, %v4997
  %5001 = vrot.lane.b32.xlu0 %v4999, 32
  %v5002 = vpop.permute.xlu0 %5001
  %v5004 = vadd.f32 %v4994, %v5002
  %v5005 = vtanh.pop %v5004
  %5007 = vrot.lane.b32.xlu0 %v5005, 64
  %v5008 = vpop.permute.xlu0 %5007
  %v5010 = vmul.f32 %v4992, %v5008
  %5012 = vrot.lane.b32.xlu0 %v5010, 32
  %v5013 = vpop.permute.xlu0 %5012
  %5015 = vst.msk [vmem:[#allocation6 + $0x40] sm:$0xff] %vm4056, %v5013
  %v5016 = vld [vmem:[#allocation5 + $0x48] sm:$0xff]
  %v5017 = vld [vmem:[%s9] sm:$0xff]
  %v5018 = vld [vmem:[%s9 + $0x8] sm:$0xff]
  %v5019 = vld [vmem:[%s9 + $0x10] sm:$0xff]
  %v5020 = vld [vmem:[%s9 + $0x18] sm:$0xff]
  %v5021 = vsel %vm4056, %v5013, 0
  %5023 = vmatprep.subr.mxu0 0.0
  %5024 = vmatpush1.msra.mxu0 %v5017
  %5025 = vmatprep.subr.mxu0 0.0
  %5026 = vmatpush1.msra.mxu0 %v5018
  %5027 = vmatprep.subr.mxu0 0.0
  %5028 = vmatpush1.msra.mxu0 %v5019
  %5029 = vmatprep.subr.mxu0 0.0
  %5030 = vmatpush1.msra.mxu0 %v5020
  %5031 = vmatprep.subr.mxu0 0.0
  %5032 = vmatpush1.msra.mxu0 0.0
  %5033 = vmatprep.subr.mxu0 0.0
  %5034 = vmatpush1.msra.mxu0 0.0
  %5035 = vmatprep.subr.mxu0 0.0
  %5036 = vmatpush1.msra.mxu0 0.0
  %5037 = vmatprep.subr.mxu0 0.0
  %5038 = vmatpush1.msra.mxu0 0.0
  %5039 = vmatprep.subr.mxu0 0.0
  %5040 = vmatpush1.msra.mxu0 0.0
  %5041 = vmatprep.subr.mxu0 0.0
  %5042 = vmatpush1.msra.mxu0 0.0
  %5043 = vmatprep.subr.mxu0 0.0
  %5044 = vmatpush1.msra.mxu0 0.0
  %5045 = vmatprep.subr.mxu0 0.0
  %5046 = vmatpush1.msra.mxu0 0.0
  %5047 = vmatprep.subr.mxu0 0.0
  %5048 = vmatpush1.msra.mxu0 0.0
  %5049 = vmatprep.subr.mxu0 0.0
  %5050 = vmatpush1.msra.mxu0 0.0
  %5051 = vmatprep.subr.mxu0 0.0
  %5052 = vmatpush1.msra.mxu0 0.0
  %5053 = vmatprep.subr.mxu0 0.0
  %5054 = vmatpush1.msra.mxu0 0.0
  %5055 = vmatprep.subr.mxu0 0.0
  %5056 = vmatpush1.msra.mxu0 0.0
  %5057 = vmatprep.subr.mxu0 0.0
  %5058 = vmatpush1.msra.mxu0 0.0
  %5059 = vmatprep.subr.mxu0 0.0
  %5060 = vmatpush1.msra.mxu0 0.0
  %5061 = vmatprep.subr.mxu0 0.0
  %5062 = vmatpush1.msra.mxu0 0.0
  %5063 = vmatprep.subr.mxu0 0.0
  %5064 = vmatpush1.msra.mxu0 0.0
  %5065 = vmatprep.subr.mxu0 0.0
  %5066 = vmatpush1.msra.mxu0 0.0
  %5067 = vmatprep.subr.mxu0 0.0
  %5068 = vmatpush1.msra.mxu0 0.0
  %5069 = vmatprep.subr.mxu0 0.0
  %5070 = vmatpush1.msra.mxu0 0.0
  %5071 = vmatprep.subr.mxu0 0.0
  %5072 = vmatpush1.msra.mxu0 0.0
  %5073 = vmatprep.subr.mxu0 0.0
  %5074 = vmatpush1.msra.mxu0 0.0
  %5075 = vmatprep.subr.mxu0 0.0
  %5076 = vmatpush1.msra.mxu0 0.0
  %5077 = vmatprep.subr.mxu0 0.0
  %5078 = vmatpush1.msra.mxu0 0.0
  %5079 = vmatprep.subr.mxu0 0.0
  %5080 = vmatpush1.msra.mxu0 0.0
  %5081 = vmatprep.subr.mxu0 0.0
  %5082 = vmatpush1.msra.mxu0 0.0
  %5083 = vmatprep.subr.mxu0 0.0
  %5084 = vmatpush1.msra.mxu0 0.0
  %5085 = vmatprep.subr.mxu0 0.0
  %5086 = vmatpush1.msra.mxu0 0.0
  %5087 = vmatprep.mubr.f32.mxu0 0.0
  %5088 = vmatmul.mubr.f32.gmra.mrb[0].mxu0 %v5021
  %v5089 = vpop.f32.mrb[0].mxu0
  %v5090 = vadd.f32 0.0, %v5089
  %v5091 = vpop.f32.mrb[0].mxu0
  %5092 = vdwg.mxu0
  %v5093 = vadd.f32 %v5016, %v5090
  %v5094 = vxor.u32 %v5093, 2147483648
  %v5095 = vmul.f32 %v5094, 1.442695
  %v5096 = vpow.pop %v5095
  %v5097 = vadd.f32 %v5096, 1.0
  %v5098 = vrcp.pop %v5097
  %v5099 = vmul.f32 1.0, %v5098
  %v5100 = vtanh.pop %v5093
  %v5101 = vmul.f32 %v5099, %v5004
  %5103 = vrot.lane.b32.xlu0 %v5100, 64
  %v5104 = vpop.permute.xlu0 %5103
  %v5106 = vmul.f32 %v5099, %v5104
  %5108 = vrot.lane.b32.xlu0 %v5106, 32
  %v5109 = vpop.permute.xlu0 %5108
  %v5111 = vadd.f32 %v5101, %v5109
  %v5112 = vtanh.pop %v5111
  %5114 = vrot.lane.b32.xlu0 %v5112, 64
  %v5115 = vpop.permute.xlu0 %5114
  %v5117 = vmul.f32 %v5099, %v5115
  %5119 = vrot.lane.b32.xlu0 %v5117, 32
  %v5120 = vpop.permute.xlu0 %5119
  %5122 = vst.msk [vmem:[#allocation6 + $0x48] sm:$0xff] %vm4056, %v5120
  %v5123 = vld [vmem:[#allocation5 + $0x50] sm:$0xff]
  %v5124 = vld [vmem:[%s9] sm:$0xff]
  %v5125 = vld [vmem:[%s9 + $0x8] sm:$0xff]
  %v5126 = vld [vmem:[%s9 + $0x10] sm:$0xff]
  %v5127 = vld [vmem:[%s9 + $0x18] sm:$0xff]
  %v5128 = vsel %vm4056, %v5120, 0
  %5130 = vmatprep.subr.mxu0 0.0
  %5131 = vmatpush1.msra.mxu0 %v5124
  %5132 = vmatprep.subr.mxu0 0.0
  %5133 = vmatpush1.msra.mxu0 %v5125
  %5134 = vmatprep.subr.mxu0 0.0
  %5135 = vmatpush1.msra.mxu0 %v5126
  %5136 = vmatprep.subr.mxu0 0.0
  %5137 = vmatpush1.msra.mxu0 %v5127
  %5138 = vmatprep.subr.mxu0 0.0
  %5139 = vmatpush1.msra.mxu0 0.0
  %5140 = vmatprep.subr.mxu0 0.0
  %5141 = vmatpush1.msra.mxu0 0.0
  %5142 = vmatprep.subr.mxu0 0.0
  %5143 = vmatpush1.msra.mxu0 0.0
  %5144 = vmatprep.subr.mxu0 0.0
  %5145 = vmatpush1.msra.mxu0 0.0
  %5146 = vmatprep.subr.mxu0 0.0
  %5147 = vmatpush1.msra.mxu0 0.0
  %5148 = vmatprep.subr.mxu0 0.0
  %5149 = vmatpush1.msra.mxu0 0.0
  %5150 = vmatprep.subr.mxu0 0.0
  %5151 = vmatpush1.msra.mxu0 0.0
  %5152 = vmatprep.subr.mxu0 0.0
  %5153 = vmatpush1.msra.mxu0 0.0
  %5154 = vmatprep.subr.mxu0 0.0
  %5155 = vmatpush1.msra.mxu0 0.0
  %5156 = vmatprep.subr.mxu0 0.0
  %5157 = vmatpush1.msra.mxu0 0.0
  %5158 = vmatprep.subr.mxu0 0.0
  %5159 = vmatpush1.msra.mxu0 0.0
  %5160 = vmatprep.subr.mxu0 0.0
  %5161 = vmatpush1.msra.mxu0 0.0
  %5162 = vmatprep.subr.mxu0 0.0
  %5163 = vmatpush1.msra.mxu0 0.0
  %5164 = vmatprep.subr.mxu0 0.0
  %5165 = vmatpush1.msra.mxu0 0.0
  %5166 = vmatprep.subr.mxu0 0.0
  %5167 = vmatpush1.msra.mxu0 0.0
  %5168 = vmatprep.subr.mxu0 0.0
  %5169 = vmatpush1.msra.mxu0 0.0
  %5170 = vmatprep.subr.mxu0 0.0
  %5171 = vmatpush1.msra.mxu0 0.0
  %5172 = vmatprep.subr.mxu0 0.0
  %5173 = vmatpush1.msra.mxu0 0.0
  %5174 = vmatprep.subr.mxu0 0.0
  %5175 = vmatpush1.msra.mxu0 0.0
  %5176 = vmatprep.subr.mxu0 0.0
  %5177 = vmatpush1.msra.mxu0 0.0
  %5178 = vmatprep.subr.mxu0 0.0
  %5179 = vmatpush1.msra.mxu0 0.0
  %5180 = vmatprep.subr.mxu0 0.0
  %5181 = vmatpush1.msra.mxu0 0.0
  %5182 = vmatprep.subr.mxu0 0.0
  %5183 = vmatpush1.msra.mxu0 0.0
  %5184 = vmatprep.subr.mxu0 0.0
  %5185 = vmatpush1.msra.mxu0 0.0
  %5186 = vmatprep.subr.mxu0 0.0
  %5187 = vmatpush1.msra.mxu0 0.0
  %5188 = vmatprep.subr.mxu0 0.0
  %5189 = vmatpush1.msra.mxu0 0.0
  %5190 = vmatprep.subr.mxu0 0.0
  %5191 = vmatpush1.msra.mxu0 0.0
  %5192 = vmatprep.subr.mxu0 0.0
  %5193 = vmatpush1.msra.mxu0 0.0
  %5194 = vmatprep.mubr.f32.mxu0 0.0
  %5195 = vmatmul.mubr.f32.gmra.mrb[0].mxu0 %v5128
  %v5196 = vpop.f32.mrb[0].mxu0
  %v5197 = vadd.f32 0.0, %v5196
  %v5198 = vpop.f32.mrb[0].mxu0
  %5199 = vdwg.mxu0
  %v5200 = vadd.f32 %v5123, %v5197
  %v5201 = vxor.u32 %v5200, 2147483648
  %v5202 = vmul.f32 %v5201, 1.442695
  %v5203 = vpow.pop %v5202
  %v5204 = vadd.f32 %v5203, 1.0
  %v5205 = vrcp.pop %v5204
  %v5206 = vmul.f32 1.0, %v5205
  %v5207 = vtanh.pop %v5200
  %v5208 = vmul.f32 %v5206, %v5111
  %5210 = vrot.lane.b32.xlu0 %v5207, 64
  %v5211 = vpop.permute.xlu0 %5210
  %v5213 = vmul.f32 %v5206, %v5211
  %5215 = vrot.lane.b32.xlu0 %v5213, 32
  %v5216 = vpop.permute.xlu0 %5215
  %v5218 = vadd.f32 %v5208, %v5216
  %v5219 = vtanh.pop %v5218
  %5221 = vrot.lane.b32.xlu0 %v5219, 64
  %v5222 = vpop.permute.xlu0 %5221
  %v5224 = vmul.f32 %v5206, %v5222
  %5226 = vrot.lane.b32.xlu0 %v5224, 32
  %v5227 = vpop.permute.xlu0 %5226
  %5229 = vst.msk [vmem:[#allocation6 + $0x50] sm:$0xff] %vm4056, %v5227
  %v5230 = vld [vmem:[#allocation5 + $0x58] sm:$0xff]
  %v5231 = vld [vmem:[%s9] sm:$0xff]
  %v5232 = vld [vmem:[%s9 + $0x8] sm:$0xff]
  %v5233 = vld [vmem:[%s9 + $0x10] sm:$0xff]
  %v5234 = vld [vmem:[%s9 + $0x18] sm:$0xff]
  %v5235 = vsel %vm4056, %v5227, 0
  %5237 = vmatprep.subr.mxu0 0.0
  %5238 = vmatpush1.msra.mxu0 %v5231
  %5239 = vmatprep.subr.mxu0 0.0
  %5240 = vmatpush1.msra.mxu0 %v5232
  %5241 = vmatprep.subr.mxu0 0.0
  %5242 = vmatpush1.msra.mxu0 %v5233
  %5243 = vmatprep.subr.mxu0 0.0
  %5244 = vmatpush1.msra.mxu0 %v5234
  %5245 = vmatprep.subr.mxu0 0.0
  %5246 = vmatpush1.msra.mxu0 0.0
  %5247 = vmatprep.subr.mxu0 0.0
  %5248 = vmatpush1.msra.mxu0 0.0
  %5249 = vmatprep.subr.mxu0 0.0
  %5250 = vmatpush1.msra.mxu0 0.0
  %5251 = vmatprep.subr.mxu0 0.0
  %5252 = vmatpush1.msra.mxu0 0.0
  %5253 = vmatprep.subr.mxu0 0.0
  %5254 = vmatpush1.msra.mxu0 0.0
  %5255 = vmatprep.subr.mxu0 0.0
  %5256 = vmatpush1.msra.mxu0 0.0
  %5257 = vmatprep.subr.mxu0 0.0
  %5258 = vmatpush1.msra.mxu0 0.0
  %5259 = vmatprep.subr.mxu0 0.0
  %5260 = vmatpush1.msra.mxu0 0.0
  %5261 = vmatprep.subr.mxu0 0.0
  %5262 = vmatpush1.msra.mxu0 0.0
  %5263 = vmatprep.subr.mxu0 0.0
  %5264 = vmatpush1.msra.mxu0 0.0
  %5265 = vmatprep.subr.mxu0 0.0
  %5266 = vmatpush1.msra.mxu0 0.0
  %5267 = vmatprep.subr.mxu0 0.0
  %5268 = vmatpush1.msra.mxu0 0.0
  %5269 = vmatprep.subr.mxu0 0.0
  %5270 = vmatpush1.msra.mxu0 0.0
  %5271 = vmatprep.subr.mxu0 0.0
  %5272 = vmatpush1.msra.mxu0 0.0
  %5273 = vmatprep.subr.mxu0 0.0
  %5274 = vmatpush1.msra.mxu0 0.0
  %5275 = vmatprep.subr.mxu0 0.0
  %5276 = vmatpush1.msra.mxu0 0.0
  %5277 = vmatprep.subr.mxu0 0.0
  %5278 = vmatpush1.msra.mxu0 0.0
  %5279 = vmatprep.subr.mxu0 0.0
  %5280 = vmatpush1.msra.mxu0 0.0
  %5281 = vmatprep.subr.mxu0 0.0
  %5282 = vmatpush1.msra.mxu0 0.0
  %5283 = vmatprep.subr.mxu0 0.0
  %5284 = vmatpush1.msra.mxu0 0.0
  %5285 = vmatprep.subr.mxu0 0.0
  %5286 = vmatpush1.msra.mxu0 0.0
  %5287 = vmatprep.subr.mxu0 0.0
  %5288 = vmatpush1.msra.mxu0 0.0
  %5289 = vmatprep.subr.mxu0 0.0
  %5290 = vmatpush1.msra.mxu0 0.0
  %5291 = vmatprep.subr.mxu0 0.0
  %5292 = vmatpush1.msra.mxu0 0.0
  %5293 = vmatprep.subr.mxu0 0.0
  %5294 = vmatpush1.msra.mxu0 0.0
  %5295 = vmatprep.subr.mxu0 0.0
  %5296 = vmatpush1.msra.mxu0 0.0
  %5297 = vmatprep.subr.mxu0 0.0
  %5298 = vmatpush1.msra.mxu0 0.0
  %5299 = vmatprep.subr.mxu0 0.0
  %5300 = vmatpush1.msra.mxu0 0.0
  %5301 = vmatprep.mubr.f32.mxu0 0.0
  %5302 = vmatmul.mubr.f32.gmra.mrb[0].mxu0 %v5235
  %v5303 = vpop.f32.mrb[0].mxu0
  %v5304 = vadd.f32 0.0, %v5303
  %v5305 = vpop.f32.mrb[0].mxu0
  %5306 = vdwg.mxu0
  %v5307 = vadd.f32 %v5230, %v5304
  %v5308 = vxor.u32 %v5307, 2147483648
  %v5309 = vmul.f32 %v5308, 1.442695
  %v5310 = vpow.pop %v5309
  %v5311 = vadd.f32 %v5310, 1.0
  %v5312 = vrcp.pop %v5311
  %v5313 = vmul.f32 1.0, %v5312
  %v5314 = vtanh.pop %v5307
  %v5315 = vmul.f32 %v5313, %v5218
  %5317 = vrot.lane.b32.xlu0 %v5314, 64
  %v5318 = vpop.permute.xlu0 %5317
  %v5320 = vmul.f32 %v5313, %v5318
  %5322 = vrot.lane.b32.xlu0 %v5320, 32
  %v5323 = vpop.permute.xlu0 %5322
  %v5325 = vadd.f32 %v5315, %v5323
  %v5326 = vtanh.pop %v5325
  %5328 = vrot.lane.b32.xlu0 %v5326, 64
  %v5329 = vpop.permute.xlu0 %5328
  %v5331 = vmul.f32 %v5313, %v5329
  %5333 = vrot.lane.b32.xlu0 %v5331, 32
  %v5334 = vpop.permute.xlu0 %5333
  %5336 = vst.msk [vmem:[#allocation6 + $0x58] sm:$0xff] %vm4056, %v5334
  %v5337 = vld [vmem:[#allocation5 + $0x60] sm:$0xff]
  %v5338 = vld [vmem:[%s9] sm:$0xff]
  %v5339 = vld [vmem:[%s9 + $0x8] sm:$0xff]
  %v5340 = vld [vmem:[%s9 + $0x10] sm:$0xff]
  %v5341 = vld [vmem:[%s9 + $0x18] sm:$0xff]
  %v5342 = vsel %vm4056, %v5334, 0
  %5344 = vmatprep.subr.mxu0 0.0
  %5345 = vmatpush1.msra.mxu0 %v5338
  %5346 = vmatprep.subr.mxu0 0.0
  %5347 = vmatpush1.msra.mxu0 %v5339
  %5348 = vmatprep.subr.mxu0 0.0
  %5349 = vmatpush1.msra.mxu0 %v5340
  %5350 = vmatprep.subr.mxu0 0.0
  %5351 = vmatpush1.msra.mxu0 %v5341
  %5352 = vmatprep.subr.mxu0 0.0
  %5353 = vmatpush1.msra.mxu0 0.0
  %5354 = vmatprep.subr.mxu0 0.0
  %5355 = vmatpush1.msra.mxu0 0.0
  %5356 = vmatprep.subr.mxu0 0.0
  %5357 = vmatpush1.msra.mxu0 0.0
  %5358 = vmatprep.subr.mxu0 0.0
  %5359 = vmatpush1.msra.mxu0 0.0
  %5360 = vmatprep.subr.mxu0 0.0
  %5361 = vmatpush1.msra.mxu0 0.0
  %5362 = vmatprep.subr.mxu0 0.0
  %5363 = vmatpush1.msra.mxu0 0.0
  %5364 = vmatprep.subr.mxu0 0.0
  %5365 = vmatpush1.msra.mxu0 0.0
  %5366 = vmatprep.subr.mxu0 0.0
  %5367 = vmatpush1.msra.mxu0 0.0
  %5368 = vmatprep.subr.mxu0 0.0
  %5369 = vmatpush1.msra.mxu0 0.0
  %5370 = vmatprep.subr.mxu0 0.0
  %5371 = vmatpush1.msra.mxu0 0.0
  %5372 = vmatprep.subr.mxu0 0.0
  %5373 = vmatpush1.msra.mxu0 0.0
  %5374 = vmatprep.subr.mxu0 0.0
  %5375 = vmatpush1.msra.mxu0 0.0
  %5376 = vmatprep.subr.mxu0 0.0
  %5377 = vmatpush1.msra.mxu0 0.0
  %5378 = vmatprep.subr.mxu0 0.0
  %5379 = vmatpush1.msra.mxu0 0.0
  %5380 = vmatprep.subr.mxu0 0.0
  %5381 = vmatpush1.msra.mxu0 0.0
  %5382 = vmatprep.subr.mxu0 0.0
  %5383 = vmatpush1.msra.mxu0 0.0
  %5384 = vmatprep.subr.mxu0 0.0
  %5385 = vmatpush1.msra.mxu0 0.0
  %5386 = vmatprep.subr.mxu0 0.0
  %5387 = vmatpush1.msra.mxu0 0.0
  %5388 = vmatprep.subr.mxu0 0.0
  %5389 = vmatpush1.msra.mxu0 0.0
  %5390 = vmatprep.subr.mxu0 0.0
  %5391 = vmatpush1.msra.mxu0 0.0
  %5392 = vmatprep.subr.mxu0 0.0
  %5393 = vmatpush1.msra.mxu0 0.0
  %5394 = vmatprep.subr.mxu0 0.0
  %5395 = vmatpush1.msra.mxu0 0.0
  %5396 = vmatprep.subr.mxu0 0.0
  %5397 = vmatpush1.msra.mxu0 0.0
  %5398 = vmatprep.subr.mxu0 0.0
  %5399 = vmatpush1.msra.mxu0 0.0
  %5400 = vmatprep.subr.mxu0 0.0
  %5401 = vmatpush1.msra.mxu0 0.0
  %5402 = vmatprep.subr.mxu0 0.0
  %5403 = vmatpush1.msra.mxu0 0.0
  %5404 = vmatprep.subr.mxu0 0.0
  %5405 = vmatpush1.msra.mxu0 0.0
  %5406 = vmatprep.subr.mxu0 0.0
  %5407 = vmatpush1.msra.mxu0 0.0
  %5408 = vmatprep.mubr.f32.mxu0 0.0
  %5409 = vmatmul.mubr.f32.gmra.mrb[0].mxu0 %v5342
  %v5410 = vpop.f32.mrb[0].mxu0
  %v5411 = vadd.f32 0.0, %v5410
  %v5412 = vpop.f32.mrb[0].mxu0
  %5413 = vdwg.mxu0
  %v5414 = vadd.f32 %v5337, %v5411
  %v5415 = vxor.u32 %v5414, 2147483648
  %v5416 = vmul.f32 %v5415, 1.442695
  %v5417 = vpow.pop %v5416
  %v5418 = vadd.f32 %v5417, 1.0
  %v5419 = vrcp.pop %v5418
  %v5420 = vmul.f32 1.0, %v5419
  %v5421 = vtanh.pop %v5414
  %v5422 = vmul.f32 %v5420, %v5325
  %5424 = vrot.lane.b32.xlu0 %v5421, 64
  %v5425 = vpop.permute.xlu0 %5424
  %v5427 = vmul.f32 %v5420, %v5425
  %5429 = vrot.lane.b32.xlu0 %v5427, 32
  %v5430 = vpop.permute.xlu0 %5429
  %v5432 = vadd.f32 %v5422, %v5430
  %v5433 = vtanh.pop %v5432
  %5435 = vrot.lane.b32.xlu0 %v5433, 64
  %v5436 = vpop.permute.xlu0 %5435
  %v5438 = vmul.f32 %v5420, %v5436
  %5440 = vrot.lane.b32.xlu0 %v5438, 32
  %v5441 = vpop.permute.xlu0 %5440
  %5443 = vst.msk [vmem:[#allocation6 + $0x60] sm:$0xff] %vm4056, %v5441
  %v5444 = vld [vmem:[#allocation5 + $0x68] sm:$0xff]
  %v5445 = vld [vmem:[%s9] sm:$0xff]
  %v5446 = vld [vmem:[%s9 + $0x8] sm:$0xff]
  %v5447 = vld [vmem:[%s9 + $0x10] sm:$0xff]
  %v5448 = vld [vmem:[%s9 + $0x18] sm:$0xff]
  %v5449 = vsel %vm4056, %v5441, 0
  %5451 = vmatprep.subr.mxu0 0.0
  %5452 = vmatpush1.msra.mxu0 %v5445
  %5453 = vmatprep.subr.mxu0 0.0
  %5454 = vmatpush1.msra.mxu0 %v5446
  %5455 = vmatprep.subr.mxu0 0.0
  %5456 = vmatpush1.msra.mxu0 %v5447
  %5457 = vmatprep.subr.mxu0 0.0
  %5458 = vmatpush1.msra.mxu0 %v5448
  %5459 = vmatprep.subr.mxu0 0.0
  %5460 = vmatpush1.msra.mxu0 0.0
  %5461 = vmatprep.subr.mxu0 0.0
  %5462 = vmatpush1.msra.mxu0 0.0
  %5463 = vmatprep.subr.mxu0 0.0
  %5464 = vmatpush1.msra.mxu0 0.0
  %5465 = vmatprep.subr.mxu0 0.0
  %5466 = vmatpush1.msra.mxu0 0.0
  %5467 = vmatprep.subr.mxu0 0.0
  %5468 = vmatpush1.msra.mxu0 0.0
  %5469 = vmatprep.subr.mxu0 0.0
  %5470 = vmatpush1.msra.mxu0 0.0
  %5471 = vmatprep.subr.mxu0 0.0
  %5472 = vmatpush1.msra.mxu0 0.0
  %5473 = vmatprep.subr.mxu0 0.0
  %5474 = vmatpush1.msra.mxu0 0.0
  %5475 = vmatprep.subr.mxu0 0.0
  %5476 = vmatpush1.msra.mxu0 0.0
  %5477 = vmatprep.subr.mxu0 0.0
  %5478 = vmatpush1.msra.mxu0 0.0
  %5479 = vmatprep.subr.mxu0 0.0
  %5480 = vmatpush1.msra.mxu0 0.0
  %5481 = vmatprep.subr.mxu0 0.0
  %5482 = vmatpush1.msra.mxu0 0.0
  %5483 = vmatprep.subr.mxu0 0.0
  %5484 = vmatpush1.msra.mxu0 0.0
  %5485 = vmatprep.subr.mxu0 0.0
  %5486 = vmatpush1.msra.mxu0 0.0
  %5487 = vmatprep.subr.mxu0 0.0
  %5488 = vmatpush1.msra.mxu0 0.0
  %5489 = vmatprep.subr.mxu0 0.0
  %5490 = vmatpush1.msra.mxu0 0.0
  %5491 = vmatprep.subr.mxu0 0.0
  %5492 = vmatpush1.msra.mxu0 0.0
  %5493 = vmatprep.subr.mxu0 0.0
  %5494 = vmatpush1.msra.mxu0 0.0
  %5495 = vmatprep.subr.mxu0 0.0
  %5496 = vmatpush1.msra.mxu0 0.0
  %5497 = vmatprep.subr.mxu0 0.0
  %5498 = vmatpush1.msra.mxu0 0.0
  %5499 = vmatprep.subr.mxu0 0.0
  %5500 = vmatpush1.msra.mxu0 0.0
  %5501 = vmatprep.subr.mxu0 0.0
  %5502 = vmatpush1.msra.mxu0 0.0
  %5503 = vmatprep.subr.mxu0 0.0
  %5504 = vmatpush1.msra.mxu0 0.0
  %5505 = vmatprep.subr.mxu0 0.0
  %5506 = vmatpush1.msra.mxu0 0.0
  %5507 = vmatprep.subr.mxu0 0.0
  %5508 = vmatpush1.msra.mxu0 0.0
  %5509 = vmatprep.subr.mxu0 0.0
  %5510 = vmatpush1.msra.mxu0 0.0
  %5511 = vmatprep.subr.mxu0 0.0
  %5512 = vmatpush1.msra.mxu0 0.0
  %5513 = vmatprep.subr.mxu0 0.0
  %5514 = vmatpush1.msra.mxu0 0.0
  %5515 = vmatprep.mubr.f32.mxu0 0.0
  %5516 = vmatmul.mubr.f32.gmra.mrb[0].mxu0 %v5449
  %v5517 = vpop.f32.mrb[0].mxu0
  %v5518 = vadd.f32 0.0, %v5517
  %v5519 = vpop.f32.mrb[0].mxu0
  %5520 = vdwg.mxu0
  %v5521 = vadd.f32 %v5444, %v5518
  %v5522 = vxor.u32 %v5521, 2147483648
  %v5523 = vmul.f32 %v5522, 1.442695
  %v5524 = vpow.pop %v5523
  %v5525 = vadd.f32 %v5524, 1.0
  %v5526 = vrcp.pop %v5525
  %v5527 = vmul.f32 1.0, %v5526
  %v5528 = vtanh.pop %v5521
  %v5529 = vmul.f32 %v5527, %v5432
  %5531 = vrot.lane.b32.xlu0 %v5528, 64
  %v5532 = vpop.permute.xlu0 %5531
  %v5534 = vmul.f32 %v5527, %v5532
  %5536 = vrot.lane.b32.xlu0 %v5534, 32
  %v5537 = vpop.permute.xlu0 %5536
  %v5539 = vadd.f32 %v5529, %v5537
  %v5540 = vtanh.pop %v5539
  %5542 = vrot.lane.b32.xlu0 %v5540, 64
  %v5543 = vpop.permute.xlu0 %5542
  %v5545 = vmul.f32 %v5527, %v5543
  %5547 = vrot.lane.b32.xlu0 %v5545, 32
  %v5548 = vpop.permute.xlu0 %5547
  %5550 = vst.msk [vmem:[#allocation6 + $0x68] sm:$0xff] %vm4056, %v5548
  %v5551 = vld [vmem:[#allocation5 + $0x70] sm:$0xff]
  %v5552 = vld [vmem:[%s9] sm:$0xff]
  %v5553 = vld [vmem:[%s9 + $0x8] sm:$0xff]
  %v5554 = vld [vmem:[%s9 + $0x10] sm:$0xff]
  %v5555 = vld [vmem:[%s9 + $0x18] sm:$0xff]
  %v5556 = vsel %vm4056, %v5548, 0
  %5558 = vmatprep.subr.mxu0 0.0
  %5559 = vmatpush1.msra.mxu0 %v5552
  %5560 = vmatprep.subr.mxu0 0.0
  %5561 = vmatpush1.msra.mxu0 %v5553
  %5562 = vmatprep.subr.mxu0 0.0
  %5563 = vmatpush1.msra.mxu0 %v5554
  %5564 = vmatprep.subr.mxu0 0.0
  %5565 = vmatpush1.msra.mxu0 %v5555
  %5566 = vmatprep.subr.mxu0 0.0
  %5567 = vmatpush1.msra.mxu0 0.0
  %5568 = vmatprep.subr.mxu0 0.0
  %5569 = vmatpush1.msra.mxu0 0.0
  %5570 = vmatprep.subr.mxu0 0.0
  %5571 = vmatpush1.msra.mxu0 0.0
  %5572 = vmatprep.subr.mxu0 0.0
  %5573 = vmatpush1.msra.mxu0 0.0
  %5574 = vmatprep.subr.mxu0 0.0
  %5575 = vmatpush1.msra.mxu0 0.0
  %5576 = vmatprep.subr.mxu0 0.0
  %5577 = vmatpush1.msra.mxu0 0.0
  %5578 = vmatprep.subr.mxu0 0.0
  %5579 = vmatpush1.msra.mxu0 0.0
  %5580 = vmatprep.subr.mxu0 0.0
  %5581 = vmatpush1.msra.mxu0 0.0
  %5582 = vmatprep.subr.mxu0 0.0
  %5583 = vmatpush1.msra.mxu0 0.0
  %5584 = vmatprep.subr.mxu0 0.0
  %5585 = vmatpush1.msra.mxu0 0.0
  %5586 = vmatprep.subr.mxu0 0.0
  %5587 = vmatpush1.msra.mxu0 0.0
  %5588 = vmatprep.subr.mxu0 0.0
  %5589 = vmatpush1.msra.mxu0 0.0
  %5590 = vmatprep.subr.mxu0 0.0
  %5591 = vmatpush1.msra.mxu0 0.0
  %5592 = vmatprep.subr.mxu0 0.0
  %5593 = vmatpush1.msra.mxu0 0.0
  %5594 = vmatprep.subr.mxu0 0.0
  %5595 = vmatpush1.msra.mxu0 0.0
  %5596 = vmatprep.subr.mxu0 0.0
  %5597 = vmatpush1.msra.mxu0 0.0
  %5598 = vmatprep.subr.mxu0 0.0
  %5599 = vmatpush1.msra.mxu0 0.0
  %5600 = vmatprep.subr.mxu0 0.0
  %5601 = vmatpush1.msra.mxu0 0.0
  %5602 = vmatprep.subr.mxu0 0.0
  %5603 = vmatpush1.msra.mxu0 0.0
  %5604 = vmatprep.subr.mxu0 0.0
  %5605 = vmatpush1.msra.mxu0 0.0
  %5606 = vmatprep.subr.mxu0 0.0
  %5607 = vmatpush1.msra.mxu0 0.0
  %5608 = vmatprep.subr.mxu0 0.0
  %5609 = vmatpush1.msra.mxu0 0.0
  %5610 = vmatprep.subr.mxu0 0.0
  %5611 = vmatpush1.msra.mxu0 0.0
  %5612 = vmatprep.subr.mxu0 0.0
  %5613 = vmatpush1.msra.mxu0 0.0
  %5614 = vmatprep.subr.mxu0 0.0
  %5615 = vmatpush1.msra.mxu0 0.0
  %5616 = vmatprep.subr.mxu0 0.0
  %5617 = vmatpush1.msra.mxu0 0.0
  %5618 = vmatprep.subr.mxu0 0.0
  %5619 = vmatpush1.msra.mxu0 0.0
  %5620 = vmatprep.subr.mxu0 0.0
  %5621 = vmatpush1.msra.mxu0 0.0
  %5622 = vmatprep.mubr.f32.mxu0 0.0
  %5623 = vmatmul.mubr.f32.gmra.mrb[0].mxu0 %v5556
  %v5624 = vpop.f32.mrb[0].mxu0
  %v5625 = vadd.f32 0.0, %v5624
  %v5626 = vpop.f32.mrb[0].mxu0
  %5627 = vdwg.mxu0
  %v5628 = vadd.f32 %v5551, %v5625
  %v5629 = vxor.u32 %v5628, 2147483648
  %v5630 = vmul.f32 %v5629, 1.442695
  %v5631 = vpow.pop %v5630
  %v5632 = vadd.f32 %v5631, 1.0
  %v5633 = vrcp.pop %v5632
  %v5634 = vmul.f32 1.0, %v5633
  %v5635 = vtanh.pop %v5628
  %v5636 = vmul.f32 %v5634, %v5539
  %5638 = vrot.lane.b32.xlu0 %v5635, 64
  %v5639 = vpop.permute.xlu0 %5638
  %v5641 = vmul.f32 %v5634, %v5639
  %5643 = vrot.lane.b32.xlu0 %v5641, 32
  %v5644 = vpop.permute.xlu0 %5643
  %v5646 = vadd.f32 %v5636, %v5644
  %v5647 = vtanh.pop %v5646
  %5649 = vrot.lane.b32.xlu0 %v5647, 64
  %v5650 = vpop.permute.xlu0 %5649
  %v5652 = vmul.f32 %v5634, %v5650
  %5654 = vrot.lane.b32.xlu0 %v5652, 32
  %v5655 = vpop.permute.xlu0 %5654
  %5657 = vst.msk [vmem:[#allocation6 + $0x70] sm:$0xff] %vm4056, %v5655
  %v5658 = vld [vmem:[#allocation5 + $0x78] sm:$0xff]
  %v5659 = vld [vmem:[%s9] sm:$0xff]
  %v5660 = vld [vmem:[%s9 + $0x8] sm:$0xff]
  %v5661 = vld [vmem:[%s9 + $0x10] sm:$0xff]
  %v5662 = vld [vmem:[%s9 + $0x18] sm:$0xff]
  %v5663 = vsel %vm4056, %v5655, 0
  %5665 = vmatprep.subr.mxu0 0.0
  %5666 = vmatpush1.msra.mxu0 %v5659
  %5667 = vmatprep.subr.mxu0 0.0
  %5668 = vmatpush1.msra.mxu0 %v5660
  %5669 = vmatprep.subr.mxu0 0.0
  %5670 = vmatpush1.msra.mxu0 %v5661
  %5671 = vmatprep.subr.mxu0 0.0
  %5672 = vmatpush1.msra.mxu0 %v5662
  %5673 = vmatprep.subr.mxu0 0.0
  %5674 = vmatpush1.msra.mxu0 0.0
  %5675 = vmatprep.subr.mxu0 0.0
  %5676 = vmatpush1.msra.mxu0 0.0
  %5677 = vmatprep.subr.mxu0 0.0
  %5678 = vmatpush1.msra.mxu0 0.0
  %5679 = vmatprep.subr.mxu0 0.0
  %5680 = vmatpush1.msra.mxu0 0.0
  %5681 = vmatprep.subr.mxu0 0.0
  %5682 = vmatpush1.msra.mxu0 0.0
  %5683 = vmatprep.subr.mxu0 0.0
  %5684 = vmatpush1.msra.mxu0 0.0
  %5685 = vmatprep.subr.mxu0 0.0
  %5686 = vmatpush1.msra.mxu0 0.0
  %5687 = vmatprep.subr.mxu0 0.0
  %5688 = vmatpush1.msra.mxu0 0.0
  %5689 = vmatprep.subr.mxu0 0.0
  %5690 = vmatpush1.msra.mxu0 0.0
  %5691 = vmatprep.subr.mxu0 0.0
  %5692 = vmatpush1.msra.mxu0 0.0
  %5693 = vmatprep.subr.mxu0 0.0
  %5694 = vmatpush1.msra.mxu0 0.0
  %5695 = vmatprep.subr.mxu0 0.0
  %5696 = vmatpush1.msra.mxu0 0.0
  %5697 = vmatprep.subr.mxu0 0.0
  %5698 = vmatpush1.msra.mxu0 0.0
  %5699 = vmatprep.subr.mxu0 0.0
  %5700 = vmatpush1.msra.mxu0 0.0
  %5701 = vmatprep.subr.mxu0 0.0
  %5702 = vmatpush1.msra.mxu0 0.0
  %5703 = vmatprep.subr.mxu0 0.0
  %5704 = vmatpush1.msra.mxu0 0.0
  %5705 = vmatprep.subr.mxu0 0.0
  %5706 = vmatpush1.msra.mxu0 0.0
  %5707 = vmatprep.subr.mxu0 0.0
  %5708 = vmatpush1.msra.mxu0 0.0
  %5709 = vmatprep.subr.mxu0 0.0
  %5710 = vmatpush1.msra.mxu0 0.0
  %5711 = vmatprep.subr.mxu0 0.0
  %5712 = vmatpush1.msra.mxu0 0.0
  %5713 = vmatprep.subr.mxu0 0.0
  %5714 = vmatpush1.msra.mxu0 0.0
  %5715 = vmatprep.subr.mxu0 0.0
  %5716 = vmatpush1.msra.mxu0 0.0
  %5717 = vmatprep.subr.mxu0 0.0
  %5718 = vmatpush1.msra.mxu0 0.0
  %5719 = vmatprep.subr.mxu0 0.0
  %5720 = vmatpush1.msra.mxu0 0.0
  %5721 = vmatprep.subr.mxu0 0.0
  %5722 = vmatpush1.msra.mxu0 0.0
  %5723 = vmatprep.subr.mxu0 0.0
  %5724 = vmatpush1.msra.mxu0 0.0
  %5725 = vmatprep.subr.mxu0 0.0
  %5726 = vmatpush1.msra.mxu0 0.0
  %5727 = vmatprep.subr.mxu0 0.0
  %5728 = vmatpush1.msra.mxu0 0.0
  %5729 = vmatprep.mubr.f32.mxu0 0.0
  %5730 = vmatmul.mubr.f32.gmra.mrb[0].mxu0 %v5663
  %v5731 = vpop.f32.mrb[0].mxu0
  %v5732 = vadd.f32 0.0, %v5731
  %v5733 = vpop.f32.mrb[0].mxu0
  %5734 = vdwg.mxu0
  %v5735 = vadd.f32 %v5658, %v5732
  %v5736 = vxor.u32 %v5735, 2147483648
  %v5737 = vmul.f32 %v5736, 1.442695
  %v5738 = vpow.pop %v5737
  %v5739 = vadd.f32 %v5738, 1.0
  %v5740 = vrcp.pop %v5739
  %v5741 = vmul.f32 1.0, %v5740
  %v5742 = vtanh.pop %v5735
  %v5743 = vmul.f32 %v5741, %v5646
  %5745 = vrot.lane.b32.xlu0 %v5742, 64
  %v5746 = vpop.permute.xlu0 %5745
  %v5748 = vmul.f32 %v5741, %v5746
  %5750 = vrot.lane.b32.xlu0 %v5748, 32
  %v5751 = vpop.permute.xlu0 %5750
  %v5753 = vadd.f32 %v5743, %v5751
  %v5754 = vtanh.pop %v5753
  %5756 = vrot.lane.b32.xlu0 %v5754, 64
  %v5757 = vpop.permute.xlu0 %5756
  %v5759 = vmul.f32 %v5741, %v5757
  %5761 = vrot.lane.b32.xlu0 %v5759, 32
  %v5762 = vpop.permute.xlu0 %5761
  %5764 = vst.msk [vmem:[#allocation6 + $0x78] sm:$0xff] %vm4056, %v5762
  %v5765 = vld [vmem:[#allocation6] sm:$0xff]
  %v5766 = vld [vmem:[#allocation6 + $0x8] sm:$0xff]
  %v5767 = vld [vmem:[#allocation6 + $0x10] sm:$0xff]
  %v5768 = vld [vmem:[#allocation6 + $0x18] sm:$0xff]
  %v5769 = vld [vmem:[#allocation6 + $0x20] sm:$0xff]
  %v5770 = vld [vmem:[#allocation6 + $0x28] sm:$0xff]
  %v5771 = vld [vmem:[#allocation6 + $0x30] sm:$0xff]
  %v5772 = vld [vmem:[#allocation6 + $0x38] sm:$0xff]
  %v5773 = vld [vmem:[#allocation6 + $0x40] sm:$0xff]
  %v5774 = vld [vmem:[#allocation6 + $0x48] sm:$0xff]
  %v5775 = vld [vmem:[#allocation6 + $0x50] sm:$0xff]
  %v5776 = vld [vmem:[#allocation6 + $0x58] sm:$0xff]
  %v5777 = vld [vmem:[#allocation6 + $0x60] sm:$0xff]
  %v5778 = vld [vmem:[#allocation6 + $0x68] sm:$0xff]
  %v5779 = vld [vmem:[#allocation6 + $0x70] sm:$0xff]
  %v5780 = vld [vmem:[#allocation6 + $0x78] sm:$0xff]
  %v5781 = vld [vmem:[%s11] sm:$0xff]
  %v5782 = vld [vmem:[%s11 + $0x8] sm:$0xff]
  %v5783 = vld [vmem:[%s11 + $0x10] sm:$0xff]
  %v5784 = vld [vmem:[%s11 + $0x18] sm:$0xff]
  %v5785 = vld [vmem:[%s13] sm:$0x1]
  %v5787 = vlaneseq
  %v5788 = vshrl.u32 %v5787, 7
  %v5789 = vsub.s32 0, %v5788
  %v5790 = vrot.slane %v5785, %v5789
  %v5793 = vsel %vm4056, %v5765, 0
  %v5796 = vsel %vm4056, %v5766, 0
  %v5799 = vsel %vm4056, %v5767, 0
  %v5802 = vsel %vm4056, %v5768, 0
  %v5805 = vsel %vm4056, %v5769, 0
  %v5808 = vsel %vm4056, %v5770, 0
  %v5811 = vsel %vm4056, %v5771, 0
  %v5814 = vsel %vm4056, %v5772, 0
  %v5817 = vsel %vm4056, %v5773, 0
  %v5820 = vsel %vm4056, %v5774, 0
  %v5823 = vsel %vm4056, %v5775, 0
  %v5826 = vsel %vm4056, %v5776, 0
  %v5829 = vsel %vm4056, %v5777, 0
  %v5832 = vsel %vm4056, %v5778, 0
  %v5835 = vsel %vm4056, %v5779, 0
  %v5838 = vsel %vm4056, %v5780, 0
  %5840 = vmatprep.subr.mxu0 0.0
  %5841 = vmatpush1.msra.mxu0 %v5781
  %5842 = vmatprep.subr.mxu0 0.0
  %5843 = vmatpush1.msra.mxu0 %v5782
  %5844 = vmatprep.subr.mxu0 0.0
  %5845 = vmatpush1.msra.mxu0 %v5783
  %5846 = vmatprep.subr.mxu0 0.0
  %5847 = vmatpush1.msra.mxu0 %v5784
  %5848 = vmatprep.subr.mxu0 0.0
  %5849 = vmatpush1.msra.mxu0 0.0
  %5850 = vmatprep.subr.mxu0 0.0
  %5851 = vmatpush1.msra.mxu0 0.0
  %5852 = vmatprep.subr.mxu0 0.0
  %5853 = vmatpush1.msra.mxu0 0.0
  %5854 = vmatprep.subr.mxu0 0.0
  %5855 = vmatpush1.msra.mxu0 0.0
  %5856 = vmatprep.subr.mxu0 0.0
  %5857 = vmatpush1.msra.mxu0 0.0
  %5858 = vmatprep.subr.mxu0 0.0
  %5859 = vmatpush1.msra.mxu0 0.0
  %5860 = vmatprep.subr.mxu0 0.0
  %5861 = vmatpush1.msra.mxu0 0.0
  %5862 = vmatprep.subr.mxu0 0.0
  %5863 = vmatpush1.msra.mxu0 0.0
  %5864 = vmatprep.subr.mxu0 0.0
  %5865 = vmatpush1.msra.mxu0 0.0
  %5866 = vmatprep.subr.mxu0 0.0
  %5867 = vmatpush1.msra.mxu0 0.0
  %5868 = vmatprep.subr.mxu0 0.0
  %5869 = vmatpush1.msra.mxu0 0.0
  %5870 = vmatprep.subr.mxu0 0.0
  %5871 = vmatpush1.msra.mxu0 0.0
  %5872 = vmatprep.subr.mxu0 0.0
  %5873 = vmatpush1.msra.mxu0 0.0
  %5874 = vmatprep.subr.mxu0 0.0
  %5875 = vmatpush1.msra.mxu0 0.0
  %5876 = vmatprep.subr.mxu0 0.0
  %5877 = vmatpush1.msra.mxu0 0.0
  %5878 = vmatprep.subr.mxu0 0.0
  %5879 = vmatpush1.msra.mxu0 0.0
  %5880 = vmatprep.subr.mxu0 0.0
  %5881 = vmatpush1.msra.mxu0 0.0
  %5882 = vmatprep.subr.mxu0 0.0
  %5883 = vmatpush1.msra.mxu0 0.0
  %5884 = vmatprep.subr.mxu0 0.0
  %5885 = vmatpush1.msra.mxu0 0.0
  %5886 = vmatprep.subr.mxu0 0.0
  %5887 = vmatpush1.msra.mxu0 0.0
  %5888 = vmatprep.subr.mxu0 0.0
  %5889 = vmatpush1.msra.mxu0 0.0
  %5890 = vmatprep.subr.mxu0 0.0
  %5891 = vmatpush1.msra.mxu0 0.0
  %5892 = vmatprep.subr.mxu0 0.0
  %5893 = vmatpush1.msra.mxu0 0.0
  %5894 = vmatprep.subr.mxu0 0.0
  %5895 = vmatpush1.msra.mxu0 0.0
  %5896 = vmatprep.subr.mxu0 0.0
  %5897 = vmatpush1.msra.mxu0 0.0
  %5898 = vmatprep.subr.mxu0 0.0
  %5899 = vmatpush1.msra.mxu0 0.0
  %5900 = vmatprep.subr.mxu0 0.0
  %5901 = vmatpush1.msra.mxu0 0.0
  %5902 = vmatprep.subr.mxu0 0.0
  %5903 = vmatpush1.msra.mxu0 0.0
  %5904 = vmatprep.mubr.f32.mxu0 0.0
  %5905 = vmatmul.mubr.f32.gmra.mrb[0].mxu0 %v5793
  %v5906 = vpop.f32.mrb[0].mxu0
  %v5907 = vadd.f32 %v5790, %v5906
  %v5908 = vpop.f32.mrb[0].mxu0
  %5909 = vmatprep.mubr.f32.mxu0 0.0
  %5910 = vmatmul.mubr.f32.gmra.mrb[0].mxu0 %v5796
  %v5911 = vpop.f32.mrb[0].mxu0
  %v5912 = vadd.f32 %v5790, %v5911
  %v5913 = vpop.f32.mrb[0].mxu0
  %5914 = vmatprep.mubr.f32.mxu0 0.0
  %5915 = vmatmul.mubr.f32.gmra.mrb[0].mxu0 %v5799
  %v5916 = vpop.f32.mrb[0].mxu0
  %v5917 = vadd.f32 %v5790, %v5916
  %v5918 = vpop.f32.mrb[0].mxu0
  %5919 = vmatprep.mubr.f32.mxu0 0.0
  %5920 = vmatmul.mubr.f32.gmra.mrb[0].mxu0 %v5802
  %v5921 = vpop.f32.mrb[0].mxu0
  %v5922 = vadd.f32 %v5790, %v5921
  %v5923 = vpop.f32.mrb[0].mxu0
  %5924 = vmatprep.mubr.f32.mxu0 0.0
  %5925 = vmatmul.mubr.f32.gmra.mrb[0].mxu0 %v5805
  %v5926 = vpop.f32.mrb[0].mxu0
  %v5927 = vadd.f32 %v5790, %v5926
  %v5928 = vpop.f32.mrb[0].mxu0
  %5929 = vmatprep.mubr.f32.mxu0 0.0
  %5930 = vmatmul.mubr.f32.gmra.mrb[0].mxu0 %v5808
  %v5931 = vpop.f32.mrb[0].mxu0
  %v5932 = vadd.f32 %v5790, %v5931
  %v5933 = vpop.f32.mrb[0].mxu0
  %5934 = vmatprep.mubr.f32.mxu0 0.0
  %5935 = vmatmul.mubr.f32.gmra.mrb[0].mxu0 %v5811
  %v5936 = vpop.f32.mrb[0].mxu0
  %v5937 = vadd.f32 %v5790, %v5936
  %v5938 = vpop.f32.mrb[0].mxu0
  %5939 = vmatprep.mubr.f32.mxu0 0.0
  %5940 = vmatmul.mubr.f32.gmra.mrb[0].mxu0 %v5814
  %v5941 = vpop.f32.mrb[0].mxu0
  %v5942 = vadd.f32 %v5790, %v5941
  %v5943 = vpop.f32.mrb[0].mxu0
  %5944 = vmatprep.mubr.f32.mxu0 0.0
  %5945 = vmatmul.mubr.f32.gmra.mrb[0].mxu0 %v5817
  %v5946 = vpop.f32.mrb[0].mxu0
  %v5947 = vadd.f32 %v5790, %v5946
  %v5948 = vpop.f32.mrb[0].mxu0
  %5949 = vmatprep.mubr.f32.mxu0 0.0
  %5950 = vmatmul.mubr.f32.gmra.mrb[0].mxu0 %v5820
  %v5951 = vpop.f32.mrb[0].mxu0
  %v5952 = vadd.f32 %v5790, %v5951
  %v5953 = vpop.f32.mrb[0].mxu0
  %5954 = vmatprep.mubr.f32.mxu0 0.0
  %5955 = vmatmul.mubr.f32.gmra.mrb[0].mxu0 %v5823
  %v5956 = vpop.f32.mrb[0].mxu0
  %v5957 = vadd.f32 %v5790, %v5956
  %v5958 = vpop.f32.mrb[0].mxu0
  %5959 = vmatprep.mubr.f32.mxu0 0.0
  %5960 = vmatmul.mubr.f32.gmra.mrb[0].mxu0 %v5826
  %v5961 = vpop.f32.mrb[0].mxu0
  %v5962 = vadd.f32 %v5790, %v5961
  %v5963 = vpop.f32.mrb[0].mxu0
  %5964 = vmatprep.mubr.f32.mxu0 0.0
  %5965 = vmatmul.mubr.f32.gmra.mrb[0].mxu0 %v5829
  %v5966 = vpop.f32.mrb[0].mxu0
  %v5967 = vadd.f32 %v5790, %v5966
  %v5968 = vpop.f32.mrb[0].mxu0
  %5969 = vmatprep.mubr.f32.mxu0 0.0
  %5970 = vmatmul.mubr.f32.gmra.mrb[0].mxu0 %v5832
  %v5971 = vpop.f32.mrb[0].mxu0
  %v5972 = vadd.f32 %v5790, %v5971
  %v5973 = vpop.f32.mrb[0].mxu0
  %5974 = vmatprep.mubr.f32.mxu0 0.0
  %5975 = vmatmul.mubr.f32.gmra.mrb[0].mxu0 %v5835
  %v5976 = vpop.f32.mrb[0].mxu0
  %v5977 = vadd.f32 %v5790, %v5976
  %v5978 = vpop.f32.mrb[0].mxu0
  %5979 = vmatprep.mubr.f32.mxu0 0.0
  %5980 = vmatmul.mubr.f32.gmra.mrb[0].mxu0 %v5838
  %v5981 = vpop.f32.mrb[0].mxu0
  %v5982 = vadd.f32 %v5790, %v5981
  %v5983 = vpop.f32.mrb[0].mxu0
  %5984 = vdwg.mxu0
  %5985 = vst.msk [vmem:[#allocation7] sm:$0xff] %vm99, %v5907
  %5986 = vst.msk [vmem:[#allocation7 + $0x8] sm:$0xff] %vm99, %v5912
  %5987 = vst.msk [vmem:[#allocation7 + $0x10] sm:$0xff] %vm99, %v5917
  %5988 = vst.msk [vmem:[#allocation7 + $0x18] sm:$0xff] %vm99, %v5922
  %5989 = vst.msk [vmem:[#allocation7 + $0x20] sm:$0xff] %vm99, %v5927
  %5990 = vst.msk [vmem:[#allocation7 + $0x28] sm:$0xff] %vm99, %v5932
  %5991 = vst.msk [vmem:[#allocation7 + $0x30] sm:$0xff] %vm99, %v5937
  %5992 = vst.msk [vmem:[#allocation7 + $0x38] sm:$0xff] %vm99, %v5942
  %5993 = vst.msk [vmem:[#allocation7 + $0x40] sm:$0xff] %vm99, %v5947
  %5994 = vst.msk [vmem:[#allocation7 + $0x48] sm:$0xff] %vm99, %v5952
  %5995 = vst.msk [vmem:[#allocation7 + $0x50] sm:$0xff] %vm99, %v5957
  %5996 = vst.msk [vmem:[#allocation7 + $0x58] sm:$0xff] %vm99, %v5962
  %5997 = vst.msk [vmem:[#allocation7 + $0x60] sm:$0xff] %vm99, %v5967
  %5998 = vst.msk [vmem:[#allocation7 + $0x68] sm:$0xff] %vm99, %v5972
  %5999 = vst.msk [vmem:[#allocation7 + $0x70] sm:$0xff] %vm99, %v5977
  %6000 = vst.msk [vmem:[#allocation7 + $0x78] sm:$0xff] %vm99, %v5982
  %v6001 = vld [vmem:[%s12] sm:$0x1]
  %v6002 = vld [vmem:[#allocation7] sm:$0xff]
  %v6004 = vlaneseq
  %v6005 = vshrl.u32 %v6004, 7
  %v6006 = vsub.s32 0, %v6005
  %v6007 = vrot.slane %v6001, %v6006
  %v6009 = vmul.f32 %v6007, 0.0
  %v6010 = vadd.f32 %v6002, %v6009
  %v6011 = vxor.u32 %v6010, 2147483648
  %v6012 = vmul.f32 %v6011, 1.442695
  %v6013 = vpow.pop %v6012
  %v6014 = vadd.f32 %v6013, 1.0
  %v6015 = vrcp.pop %v6014
  %v6016 = vmul.f32 1.0, %v6015
  %v6017 = vtanh.pop %v6010
  %v6018 = vmul.f32 %v6016, 0.0
  %6020 = vrot.lane.b32.xlu0 %v6017, 126
  %v6021 = vpop.permute.xlu0 %6020
  %v6023 = vmul.f32 %v6016, %v6021
  %6025 = vrot.lane.b32.xlu0 %v6023, 1
  %v6026 = vpop.permute.xlu0 %6025
  %v6028 = vadd.f32 %v6018, %v6026
  %v6029 = vtanh.pop %v6028
  %6031 = vrot.lane.b32.xlu0 %v6029, 2
  %v6032 = vpop.permute.xlu0 %6031
  %v6034 = vmul.f32 %v6016, %v6032
  %v6035 = vld [vmem:[#allocation7 + $0x8] sm:$0xff]
  %6037 = vset.pattern.permute.xlu0 3
  %6038 = vperm.xlu0 %6037, %v6034
  %v6039 = vpop.permute.xlu0 %6038
  %v6041 = vmul.f32 %v6039, %v6007
  %v6042 = vadd.f32 %v6035, %v6041
  %v6043 = vxor.u32 %v6042, 2147483648
  %v6044 = vmul.f32 %v6043, 1.442695
  %v6045 = vpow.pop %v6044
  %v6046 = vadd.f32 %v6045, 1.0
  %v6047 = vrcp.pop %v6046
  %v6048 = vmul.f32 1.0, %v6047
  %v6049 = vtanh.pop %v6042
  %v6050 = vmul.f32 %v6048, %v6028
  %6052 = vrot.lane.b32.xlu0 %v6049, 126
  %v6053 = vpop.permute.xlu0 %6052
  %v6055 = vmul.f32 %v6048, %v6053
  %6057 = vrot.lane.b32.xlu0 %v6055, 1
  %v6058 = vpop.permute.xlu0 %6057
  %v6060 = vadd.f32 %v6050, %v6058
  %v6061 = vtanh.pop %v6060
  %6063 = vrot.lane.b32.xlu0 %v6061, 2
  %v6064 = vpop.permute.xlu0 %6063
  %v6066 = vmul.f32 %v6048, %v6064
  %v6067 = vld [vmem:[#allocation7 + $0x10] sm:$0xff]
  %6069 = vset.pattern.permute.xlu0 3
  %6070 = vperm.xlu0 %6069, %v6066
  %v6071 = vpop.permute.xlu0 %6070
  %v6073 = vmul.f32 %v6071, %v6007
  %v6074 = vadd.f32 %v6067, %v6073
  %v6075 = vxor.u32 %v6074, 2147483648
  %v6076 = vmul.f32 %v6075, 1.442695
  %v6077 = vpow.pop %v6076
  %v6078 = vadd.f32 %v6077, 1.0
  %v6079 = vrcp.pop %v6078
  %v6080 = vmul.f32 1.0, %v6079
  %v6081 = vtanh.pop %v6074
  %v6082 = vmul.f32 %v6080, %v6060
  %6084 = vrot.lane.b32.xlu0 %v6081, 126
  %v6085 = vpop.permute.xlu0 %6084
  %v6087 = vmul.f32 %v6080, %v6085
  %6089 = vrot.lane.b32.xlu0 %v6087, 1
  %v6090 = vpop.permute.xlu0 %6089
  %v6092 = vadd.f32 %v6082, %v6090
  %v6093 = vtanh.pop %v6092
  %6095 = vrot.lane.b32.xlu0 %v6093, 2
  %v6096 = vpop.permute.xlu0 %6095
  %v6098 = vmul.f32 %v6080, %v6096
  %v6099 = vld [vmem:[#allocation7 + $0x18] sm:$0xff]
  %6101 = vset.pattern.permute.xlu0 3
  %6102 = vperm.xlu0 %6101, %v6098
  %v6103 = vpop.permute.xlu0 %6102
  %v6105 = vmul.f32 %v6103, %v6007
  %v6106 = vadd.f32 %v6099, %v6105
  %v6107 = vxor.u32 %v6106, 2147483648
  %v6108 = vmul.f32 %v6107, 1.442695
  %v6109 = vpow.pop %v6108
  %v6110 = vadd.f32 %v6109, 1.0
  %v6111 = vrcp.pop %v6110
  %v6112 = vmul.f32 1.0, %v6111
  %v6113 = vtanh.pop %v6106
  %v6114 = vmul.f32 %v6112, %v6092
  %6116 = vrot.lane.b32.xlu0 %v6113, 126
  %v6117 = vpop.permute.xlu0 %6116
  %v6119 = vmul.f32 %v6112, %v6117
  %6121 = vrot.lane.b32.xlu0 %v6119, 1
  %v6122 = vpop.permute.xlu0 %6121
  %v6124 = vadd.f32 %v6114, %v6122
  %v6125 = vtanh.pop %v6124
  %6127 = vrot.lane.b32.xlu0 %v6125, 2
  %v6128 = vpop.permute.xlu0 %6127
  %v6130 = vmul.f32 %v6112, %v6128
  %v6131 = vld [vmem:[#allocation7 + $0x20] sm:$0xff]
  %6133 = vset.pattern.permute.xlu0 3
  %6134 = vperm.xlu0 %6133, %v6130
  %v6135 = vpop.permute.xlu0 %6134
  %v6137 = vmul.f32 %v6135, %v6007
  %v6138 = vadd.f32 %v6131, %v6137
  %v6139 = vxor.u32 %v6138, 2147483648
  %v6140 = vmul.f32 %v6139, 1.442695
  %v6141 = vpow.pop %v6140
  %v6142 = vadd.f32 %v6141, 1.0
  %v6143 = vrcp.pop %v6142
  %v6144 = vmul.f32 1.0, %v6143
  %v6145 = vtanh.pop %v6138
  %v6146 = vmul.f32 %v6144, %v6124
  %6148 = vrot.lane.b32.xlu0 %v6145, 126
  %v6149 = vpop.permute.xlu0 %6148
  %v6151 = vmul.f32 %v6144, %v6149
  %6153 = vrot.lane.b32.xlu0 %v6151, 1
  %v6154 = vpop.permute.xlu0 %6153
  %v6156 = vadd.f32 %v6146, %v6154
  %v6157 = vtanh.pop %v6156
  %6159 = vrot.lane.b32.xlu0 %v6157, 2
  %v6160 = vpop.permute.xlu0 %6159
  %v6162 = vmul.f32 %v6144, %v6160
  %v6163 = vld [vmem:[#allocation7 + $0x28] sm:$0xff]
  %6165 = vset.pattern.permute.xlu0 3
  %6166 = vperm.xlu0 %6165, %v6162
  %v6167 = vpop.permute.xlu0 %6166
  %v6169 = vmul.f32 %v6167, %v6007
  %v6170 = vadd.f32 %v6163, %v6169
  %v6171 = vxor.u32 %v6170, 2147483648
  %v6172 = vmul.f32 %v6171, 1.442695
  %v6173 = vpow.pop %v6172
  %v6174 = vadd.f32 %v6173, 1.0
  %v6175 = vrcp.pop %v6174
  %v6176 = vmul.f32 1.0, %v6175
  %v6177 = vtanh.pop %v6170
  %v6178 = vmul.f32 %v6176, %v6156
  %6180 = vrot.lane.b32.xlu0 %v6177, 126
  %v6181 = vpop.permute.xlu0 %6180
  %v6183 = vmul.f32 %v6176, %v6181
  %6185 = vrot.lane.b32.xlu0 %v6183, 1
  %v6186 = vpop.permute.xlu0 %6185
  %v6188 = vadd.f32 %v6178, %v6186
  %v6189 = vtanh.pop %v6188
  %6191 = vrot.lane.b32.xlu0 %v6189, 2
  %v6192 = vpop.permute.xlu0 %6191
  %v6194 = vmul.f32 %v6176, %v6192
  %v6195 = vld [vmem:[#allocation7 + $0x30] sm:$0xff]
  %6197 = vset.pattern.permute.xlu0 3
  %6198 = vperm.xlu0 %6197, %v6194
  %v6199 = vpop.permute.xlu0 %6198
  %v6201 = vmul.f32 %v6199, %v6007
  %v6202 = vadd.f32 %v6195, %v6201
  %v6203 = vxor.u32 %v6202, 2147483648
  %v6204 = vmul.f32 %v6203, 1.442695
  %v6205 = vpow.pop %v6204
  %v6206 = vadd.f32 %v6205, 1.0
  %v6207 = vrcp.pop %v6206
  %v6208 = vmul.f32 1.0, %v6207
  %v6209 = vtanh.pop %v6202
  %v6210 = vmul.f32 %v6208, %v6188
  %6212 = vrot.lane.b32.xlu0 %v6209, 126
  %v6213 = vpop.permute.xlu0 %6212
  %v6215 = vmul.f32 %v6208, %v6213
  %6217 = vrot.lane.b32.xlu0 %v6215, 1
  %v6218 = vpop.permute.xlu0 %6217
  %v6220 = vadd.f32 %v6210, %v6218
  %v6221 = vtanh.pop %v6220
  %6223 = vrot.lane.b32.xlu0 %v6221, 2
  %v6224 = vpop.permute.xlu0 %6223
  %v6226 = vmul.f32 %v6208, %v6224
  %v6227 = vld [vmem:[#allocation7 + $0x38] sm:$0xff]
  %6229 = vset.pattern.permute.xlu0 3
  %6230 = vperm.xlu0 %6229, %v6226
  %v6231 = vpop.permute.xlu0 %6230
  %v6233 = vmul.f32 %v6231, %v6007
  %v6234 = vadd.f32 %v6227, %v6233
  %v6235 = vxor.u32 %v6234, 2147483648
  %v6236 = vmul.f32 %v6235, 1.442695
  %v6237 = vpow.pop %v6236
  %v6238 = vadd.f32 %v6237, 1.0
  %v6239 = vrcp.pop %v6238
  %v6240 = vmul.f32 1.0, %v6239
  %v6241 = vtanh.pop %v6234
  %v6242 = vmul.f32 %v6240, %v6220
  %6244 = vrot.lane.b32.xlu0 %v6241, 126
  %v6245 = vpop.permute.xlu0 %6244
  %v6247 = vmul.f32 %v6240, %v6245
  %6249 = vrot.lane.b32.xlu0 %v6247, 1
  %v6250 = vpop.permute.xlu0 %6249
  %v6252 = vadd.f32 %v6242, %v6250
  %v6253 = vtanh.pop %v6252
  %6255 = vrot.lane.b32.xlu0 %v6253, 2
  %v6256 = vpop.permute.xlu0 %6255
  %v6258 = vmul.f32 %v6240, %v6256
  %v6259 = vld [vmem:[#allocation7 + $0x40] sm:$0xff]
  %6261 = vset.pattern.permute.xlu0 3
  %6262 = vperm.xlu0 %6261, %v6258
  %v6263 = vpop.permute.xlu0 %6262
  %v6265 = vmul.f32 %v6263, %v6007
  %v6266 = vadd.f32 %v6259, %v6265
  %v6267 = vxor.u32 %v6266, 2147483648
  %v6268 = vmul.f32 %v6267, 1.442695
  %v6269 = vpow.pop %v6268
  %v6270 = vadd.f32 %v6269, 1.0
  %v6271 = vrcp.pop %v6270
  %v6272 = vmul.f32 1.0, %v6271
  %v6273 = vtanh.pop %v6266
  %v6274 = vmul.f32 %v6272, %v6252
  %6276 = vrot.lane.b32.xlu0 %v6273, 126
  %v6277 = vpop.permute.xlu0 %6276
  %v6279 = vmul.f32 %v6272, %v6277
  %6281 = vrot.lane.b32.xlu0 %v6279, 1
  %v6282 = vpop.permute.xlu0 %6281
  %v6284 = vadd.f32 %v6274, %v6282
  %v6285 = vtanh.pop %v6284
  %6287 = vrot.lane.b32.xlu0 %v6285, 2
  %v6288 = vpop.permute.xlu0 %6287
  %v6290 = vmul.f32 %v6272, %v6288
  %v6291 = vld [vmem:[#allocation7 + $0x48] sm:$0xff]
  %6293 = vset.pattern.permute.xlu0 3
  %6294 = vperm.xlu0 %6293, %v6290
  %v6295 = vpop.permute.xlu0 %6294
  %v6297 = vmul.f32 %v6295, %v6007
  %v6298 = vadd.f32 %v6291, %v6297
  %v6299 = vxor.u32 %v6298, 2147483648
  %v6300 = vmul.f32 %v6299, 1.442695
  %v6301 = vpow.pop %v6300
  %v6302 = vadd.f32 %v6301, 1.0
  %v6303 = vrcp.pop %v6302
  %v6304 = vmul.f32 1.0, %v6303
  %v6305 = vtanh.pop %v6298
  %v6306 = vmul.f32 %v6304, %v6284
  %6308 = vrot.lane.b32.xlu0 %v6305, 126
  %v6309 = vpop.permute.xlu0 %6308
  %v6311 = vmul.f32 %v6304, %v6309
  %6313 = vrot.lane.b32.xlu0 %v6311, 1
  %v6314 = vpop.permute.xlu0 %6313
  %v6316 = vadd.f32 %v6306, %v6314
  %v6317 = vtanh.pop %v6316
  %6319 = vrot.lane.b32.xlu0 %v6317, 2
  %v6320 = vpop.permute.xlu0 %6319
  %v6322 = vmul.f32 %v6304, %v6320
  %v6323 = vld [vmem:[#allocation7 + $0x50] sm:$0xff]
  %6325 = vset.pattern.permute.xlu0 3
  %6326 = vperm.xlu0 %6325, %v6322
  %v6327 = vpop.permute.xlu0 %6326
  %v6329 = vmul.f32 %v6327, %v6007
  %v6330 = vadd.f32 %v6323, %v6329
  %v6331 = vxor.u32 %v6330, 2147483648
  %v6332 = vmul.f32 %v6331, 1.442695
  %v6333 = vpow.pop %v6332
  %v6334 = vadd.f32 %v6333, 1.0
  %v6335 = vrcp.pop %v6334
  %v6336 = vmul.f32 1.0, %v6335
  %v6337 = vtanh.pop %v6330
  %v6338 = vmul.f32 %v6336, %v6316
  %6340 = vrot.lane.b32.xlu0 %v6337, 126
  %v6341 = vpop.permute.xlu0 %6340
  %v6343 = vmul.f32 %v6336, %v6341
  %6345 = vrot.lane.b32.xlu0 %v6343, 1
  %v6346 = vpop.permute.xlu0 %6345
  %v6348 = vadd.f32 %v6338, %v6346
  %v6349 = vtanh.pop %v6348
  %6351 = vrot.lane.b32.xlu0 %v6349, 2
  %v6352 = vpop.permute.xlu0 %6351
  %v6354 = vmul.f32 %v6336, %v6352
  %v6355 = vld [vmem:[#allocation7 + $0x58] sm:$0xff]
  %6357 = vset.pattern.permute.xlu0 3
  %6358 = vperm.xlu0 %6357, %v6354
  %v6359 = vpop.permute.xlu0 %6358
  %v6361 = vmul.f32 %v6359, %v6007
  %v6362 = vadd.f32 %v6355, %v6361
  %v6363 = vxor.u32 %v6362, 2147483648
  %v6364 = vmul.f32 %v6363, 1.442695
  %v6365 = vpow.pop %v6364
  %v6366 = vadd.f32 %v6365, 1.0
  %v6367 = vrcp.pop %v6366
  %v6368 = vmul.f32 1.0, %v6367
  %v6369 = vtanh.pop %v6362
  %v6370 = vmul.f32 %v6368, %v6348
  %6372 = vrot.lane.b32.xlu0 %v6369, 126
  %v6373 = vpop.permute.xlu0 %6372
  %v6375 = vmul.f32 %v6368, %v6373
  %6377 = vrot.lane.b32.xlu0 %v6375, 1
  %v6378 = vpop.permute.xlu0 %6377
  %v6380 = vadd.f32 %v6370, %v6378
  %v6381 = vtanh.pop %v6380
  %6383 = vrot.lane.b32.xlu0 %v6381, 2
  %v6384 = vpop.permute.xlu0 %6383
  %v6386 = vmul.f32 %v6368, %v6384
  %v6387 = vld [vmem:[#allocation7 + $0x60] sm:$0xff]
  %6389 = vset.pattern.permute.xlu0 3
  %6390 = vperm.xlu0 %6389, %v6386
  %v6391 = vpop.permute.xlu0 %6390
  %v6393 = vmul.f32 %v6391, %v6007
  %v6394 = vadd.f32 %v6387, %v6393
  %v6395 = vxor.u32 %v6394, 2147483648
  %v6396 = vmul.f32 %v6395, 1.442695
  %v6397 = vpow.pop %v6396
  %v6398 = vadd.f32 %v6397, 1.0
  %v6399 = vrcp.pop %v6398
  %v6400 = vmul.f32 1.0, %v6399
  %v6401 = vtanh.pop %v6394
  %v6402 = vmul.f32 %v6400, %v6380
  %6404 = vrot.lane.b32.xlu0 %v6401, 126
  %v6405 = vpop.permute.xlu0 %6404
  %v6407 = vmul.f32 %v6400, %v6405
  %6409 = vrot.lane.b32.xlu0 %v6407, 1
  %v6410 = vpop.permute.xlu0 %6409
  %v6412 = vadd.f32 %v6402, %v6410
  %v6413 = vtanh.pop %v6412
  %6415 = vrot.lane.b32.xlu0 %v6413, 2
  %v6416 = vpop.permute.xlu0 %6415
  %v6418 = vmul.f32 %v6400, %v6416
  %v6419 = vld [vmem:[#allocation7 + $0x68] sm:$0xff]
  %6421 = vset.pattern.permute.xlu0 3
  %6422 = vperm.xlu0 %6421, %v6418
  %v6423 = vpop.permute.xlu0 %6422
  %v6425 = vmul.f32 %v6423, %v6007
  %v6426 = vadd.f32 %v6419, %v6425
  %v6427 = vxor.u32 %v6426, 2147483648
  %v6428 = vmul.f32 %v6427, 1.442695
  %v6429 = vpow.pop %v6428
  %v6430 = vadd.f32 %v6429, 1.0
  %v6431 = vrcp.pop %v6430
  %v6432 = vmul.f32 1.0, %v6431
  %v6433 = vtanh.pop %v6426
  %v6434 = vmul.f32 %v6432, %v6412
  %6436 = vrot.lane.b32.xlu0 %v6433, 126
  %v6437 = vpop.permute.xlu0 %6436
  %v6439 = vmul.f32 %v6432, %v6437
  %6441 = vrot.lane.b32.xlu0 %v6439, 1
  %v6442 = vpop.permute.xlu0 %6441
  %v6444 = vadd.f32 %v6434, %v6442
  %v6445 = vtanh.pop %v6444
  %6447 = vrot.lane.b32.xlu0 %v6445, 2
  %v6448 = vpop.permute.xlu0 %6447
  %v6450 = vmul.f32 %v6432, %v6448
  %v6451 = vld [vmem:[#allocation7 + $0x70] sm:$0xff]
  %6453 = vset.pattern.permute.xlu0 3
  %6454 = vperm.xlu0 %6453, %v6450
  %v6455 = vpop.permute.xlu0 %6454
  %v6457 = vmul.f32 %v6455, %v6007
  %v6458 = vadd.f32 %v6451, %v6457
  %v6459 = vxor.u32 %v6458, 2147483648
  %v6460 = vmul.f32 %v6459, 1.442695
  %v6461 = vpow.pop %v6460
  %v6462 = vadd.f32 %v6461, 1.0
  %v6463 = vrcp.pop %v6462
  %v6464 = vmul.f32 1.0, %v6463
  %v6465 = vtanh.pop %v6458
  %v6466 = vmul.f32 %v6464, %v6444
  %6468 = vrot.lane.b32.xlu0 %v6465, 126
  %v6469 = vpop.permute.xlu0 %6468
  %v6471 = vmul.f32 %v6464, %v6469
  %6473 = vrot.lane.b32.xlu0 %v6471, 1
  %v6474 = vpop.permute.xlu0 %6473
  %v6476 = vadd.f32 %v6466, %v6474
  %v6477 = vtanh.pop %v6476
  %6479 = vrot.lane.b32.xlu0 %v6477, 2
  %v6480 = vpop.permute.xlu0 %6479
  %v6482 = vmul.f32 %v6464, %v6480
  %v6483 = vld [vmem:[#allocation7 + $0x78] sm:$0xff]
  %6485 = vset.pattern.permute.xlu0 3
  %6486 = vperm.xlu0 %6485, %v6482
  %v6487 = vpop.permute.xlu0 %6486
  %v6489 = vmul.f32 %v6487, %v6007
  %v6490 = vadd.f32 %v6483, %v6489
  %v6491 = vxor.u32 %v6490, 2147483648
  %v6492 = vmul.f32 %v6491, 1.442695
  %v6493 = vpow.pop %v6492
  %v6494 = vadd.f32 %v6493, 1.0
  %v6495 = vrcp.pop %v6494
  %v6496 = vmul.f32 1.0, %v6495
  %v6497 = vtanh.pop %v6490
  %v6498 = vmul.f32 %v6496, %v6476
  %6500 = vrot.lane.b32.xlu0 %v6497, 126
  %v6501 = vpop.permute.xlu0 %6500
  %v6503 = vmul.f32 %v6496, %v6501
  %6505 = vrot.lane.b32.xlu0 %v6503, 1
  %v6506 = vpop.permute.xlu0 %6505
  %v6508 = vadd.f32 %v6498, %v6506
  %v6509 = vtanh.pop %v6508
  %6511 = vrot.lane.b32.xlu0 %v6509, 2
  %v6512 = vpop.permute.xlu0 %6511
  %v6514 = vmul.f32 %v6496, %v6512
  %6515 = vrot.lane.b32.xlu0 %v6034, 125
  %v6516 = vpop.permute.xlu0 %6515
  %6518 = vrot.lane.b32.xlu0 %v6066, 126
  %v6519 = vpop.permute.xlu0 %6518
  %6521 = vrot.lane.b32.xlu0 %v6098, 127
  %v6522 = vpop.permute.xlu0 %6521
  %6524 = vrot.lane.b32.xlu0 %v6162, 1
  %v6525 = vpop.permute.xlu0 %6524
  %6527 = vrot.lane.b32.xlu0 %v6194, 2
  %v6528 = vpop.permute.xlu0 %6527
  %6530 = vrot.lane.b32.xlu0 %v6226, 3
  %v6531 = vpop.permute.xlu0 %6530
  %6533 = vrot.lane.b32.xlu0 %v6258, 4
  %v6534 = vpop.permute.xlu0 %6533
  %6536 = vrot.lane.b32.xlu0 %v6290, 5
  %v6537 = vpop.permute.xlu0 %6536
  %6539 = vrot.lane.b32.xlu0 %v6322, 6
  %v6540 = vpop.permute.xlu0 %6539
  %6542 = vrot.lane.b32.xlu0 %v6354, 7
  %v6543 = vpop.permute.xlu0 %6542
  %6545 = vrot.lane.b32.xlu0 %v6386, 8
  %v6546 = vpop.permute.xlu0 %6545
  %6548 = vrot.lane.b32.xlu0 %v6418, 9
  %v6549 = vpop.permute.xlu0 %6548
  %6551 = vrot.lane.b32.xlu0 %v6450, 10
  %v6552 = vpop.permute.xlu0 %6551
  %6554 = vrot.lane.b32.xlu0 %v6482, 11
  %v6555 = vpop.permute.xlu0 %6554
  %6558 = vrot.lane.b32.xlu0 %v6514, 12
  %v6559 = vpop.permute.xlu0 %6558
  %vm6561 = vcmask 7168
  %v6562 = vsel %vm6561, %v6516, %v6519
  %vm6563 = vcmask 15360
  %v6564 = vsel %vm6563, %v6562, %v6522
  %vm6565 = vcmask 23552
  %v6566 = vsel %vm6565, %v6564, %v6130
  %v6567 = vsel %vm99, %v6566, %v6525
  %vm6568 = vcmask 39936
  %v6569 = vsel %vm6568, %v6567, %v6528
  %vm6570 = vcmask 48128
  %v6571 = vsel %vm6570, %v6569, %v6531
  %vm6572 = vcmask 56320
  %v6573 = vsel %vm6572, %v6571, %v6534
  %vm6574 = vcmask 64512
  %v6575 = vsel %vm6574, %v6573, %v6537
  %vm6576 = vcmask 72704
  %v6577 = vsel %vm6576, %v6575, %v6540
  %vm6578 = vcmask 80896
  %v6579 = vsel %vm6578, %v6577, %v6543
  %vm6580 = vcmask 89088
  %v6581 = vsel %vm6580, %v6579, %v6546
  %vm6582 = vcmask 97280
  %v6583 = vsel %vm6582, %v6581, %v6549
  %vm6584 = vcmask 105472
  %v6585 = vsel %vm6584, %v6583, %v6552
  %vm6586 = vcmask 113664
  %v6587 = vsel %vm6586, %v6585, %v6555
  %vm6588 = vcmask 121856
  %v6589 = vsel %vm6588, %v6587, %v6559
  %v6590 = vld [vmem:[%s14] sm:$0xff]
  %v6591 = vld [vmem:[%s14 + $0x8] sm:$0xff]
  %v6592 = vld [vmem:[%s15] sm:$0x1]
  %v6594 = vlaneseq
  %v6595 = vshrl.u32 %v6594, 7
  %v6596 = vsub.s32 0, %v6595
  %v6597 = vrot.slane %v6592, %v6596
  %vm6599 = vcmask 130048
  %v6601 = vsel %vm6599, %v6589, 0
  %6603 = vmatprep.subr.mxu0 0.0
  %6604 = vmatpush1.msra.mxu0 %v6590
  %6605 = vmatprep.subr.mxu0 0.0
  %6606 = vmatpush1.msra.mxu0 %v6591
  %6607 = vmatprep.subr.mxu0 0.0
  %6608 = vmatpush1.msra.mxu0 0.0
  %6609 = vmatprep.subr.mxu0 0.0
  %6610 = vmatpush1.msra.mxu0 0.0
  %6611 = vmatprep.subr.mxu0 0.0
  %6612 = vmatpush1.msra.mxu0 0.0
  %6613 = vmatprep.subr.mxu0 0.0
  %6614 = vmatpush1.msra.mxu0 0.0
  %6615 = vmatprep.subr.mxu0 0.0
  %6616 = vmatpush1.msra.mxu0 0.0
  %6617 = vmatprep.subr.mxu0 0.0
  %6618 = vmatpush1.msra.mxu0 0.0
  %6619 = vmatprep.subr.mxu0 0.0
  %6620 = vmatpush1.msra.mxu0 0.0
  %6621 = vmatprep.subr.mxu0 0.0
  %6622 = vmatpush1.msra.mxu0 0.0
  %6623 = vmatprep.subr.mxu0 0.0
  %6624 = vmatpush1.msra.mxu0 0.0
  %6625 = vmatprep.subr.mxu0 0.0
  %6626 = vmatpush1.msra.mxu0 0.0
  %6627 = vmatprep.subr.mxu0 0.0
  %6628 = vmatpush1.msra.mxu0 0.0
  %6629 = vmatprep.subr.mxu0 0.0
  %6630 = vmatpush1.msra.mxu0 0.0
  %6631 = vmatprep.subr.mxu0 0.0
  %6632 = vmatpush1.msra.mxu0 0.0
  %6633 = vmatprep.subr.mxu0 0.0
  %6634 = vmatpush1.msra.mxu0 0.0
  %6635 = vmatprep.subr.mxu0 0.0
  %6636 = vmatpush1.msra.mxu0 0.0
  %6637 = vmatprep.subr.mxu0 0.0
  %6638 = vmatpush1.msra.mxu0 0.0
  %6639 = vmatprep.subr.mxu0 0.0
  %6640 = vmatpush1.msra.mxu0 0.0
  %6641 = vmatprep.subr.mxu0 0.0
  %6642 = vmatpush1.msra.mxu0 0.0
  %6643 = vmatprep.subr.mxu0 0.0
  %6644 = vmatpush1.msra.mxu0 0.0
  %6645 = vmatprep.subr.mxu0 0.0
  %6646 = vmatpush1.msra.mxu0 0.0
  %6647 = vmatprep.subr.mxu0 0.0
  %6648 = vmatpush1.msra.mxu0 0.0
  %6649 = vmatprep.subr.mxu0 0.0
  %6650 = vmatpush1.msra.mxu0 0.0
  %6651 = vmatprep.subr.mxu0 0.0
  %6652 = vmatpush1.msra.mxu0 0.0
  %6653 = vmatprep.subr.mxu0 0.0
  %6654 = vmatpush1.msra.mxu0 0.0
  %6655 = vmatprep.subr.mxu0 0.0
  %6656 = vmatpush1.msra.mxu0 0.0
  %6657 = vmatprep.subr.mxu0 0.0
  %6658 = vmatpush1.msra.mxu0 0.0
  %6659 = vmatprep.subr.mxu0 0.0
  %6660 = vmatpush1.msra.mxu0 0.0
  %6661 = vmatprep.subr.mxu0 0.0
  %6662 = vmatpush1.msra.mxu0 0.0
  %6663 = vmatprep.subr.mxu0 0.0
  %6664 = vmatpush1.msra.mxu0 0.0
  %6665 = vmatprep.subr.mxu0 0.0
  %6666 = vmatpush1.msra.mxu0 0.0
  %6667 = vmatprep.mubr.f32.mxu0 0.0
  %6668 = vmatmul.mubr.f32.gmra.mrb[0].mxu0 %v6601
  %v6669 = vpop.f32.mrb[0].mxu0
  %v6670 = vadd.f32 %v6597, %v6669
  %v6671 = vpop.f32.mrb[0].mxu0
  %6672 = vdwg.mxu0
  %v6673 = vld [vmem:[%s16] sm:$0xff]
  %v6674 = vld [vmem:[%s16 + $0x8] sm:$0xff]
  %v6675 = vld [vmem:[%s16 + $0x10] sm:$0xff]
  %v6676 = vld [vmem:[%s16 + $0x18] sm:$0xff]
  %v6677 = vld [vmem:[%s17] sm:$0x1]
  %v6679 = vlaneseq
  %v6680 = vshrl.u32 %v6679, 7
  %v6681 = vsub.s32 0, %v6680
  %v6682 = vrot.slane %v6677, %v6681
  %v6685 = vsel %vm4056, %v6670, 0
  %6687 = vmatprep.subr.mxu0 0.0
  %6688 = vmatpush1.msra.mxu0 %v6673
  %6689 = vmatprep.subr.mxu0 0.0
  %6690 = vmatpush1.msra.mxu0 %v6674
  %6691 = vmatprep.subr.mxu0 0.0
  %6692 = vmatpush1.msra.mxu0 %v6675
  %6693 = vmatprep.subr.mxu0 0.0
  %6694 = vmatpush1.msra.mxu0 %v6676
  %6695 = vmatprep.subr.mxu0 0.0
  %6696 = vmatpush1.msra.mxu0 0.0
  %6697 = vmatprep.subr.mxu0 0.0
  %6698 = vmatpush1.msra.mxu0 0.0
  %6699 = vmatprep.subr.mxu0 0.0
  %6700 = vmatpush1.msra.mxu0 0.0
  %6701 = vmatprep.subr.mxu0 0.0
  %6702 = vmatpush1.msra.mxu0 0.0
  %6703 = vmatprep.subr.mxu0 0.0
  %6704 = vmatpush1.msra.mxu0 0.0
  %6705 = vmatprep.subr.mxu0 0.0
  %6706 = vmatpush1.msra.mxu0 0.0
  %6707 = vmatprep.subr.mxu0 0.0
  %6708 = vmatpush1.msra.mxu0 0.0
  %6709 = vmatprep.subr.mxu0 0.0
  %6710 = vmatpush1.msra.mxu0 0.0
  %6711 = vmatprep.subr.mxu0 0.0
  %6712 = vmatpush1.msra.mxu0 0.0
  %6713 = vmatprep.subr.mxu0 0.0
  %6714 = vmatpush1.msra.mxu0 0.0
  %6715 = vmatprep.subr.mxu0 0.0
  %6716 = vmatpush1.msra.mxu0 0.0
  %6717 = vmatprep.subr.mxu0 0.0
  %6718 = vmatpush1.msra.mxu0 0.0
  %6719 = vmatprep.subr.mxu0 0.0
  %6720 = vmatpush1.msra.mxu0 0.0
  %6721 = vmatprep.subr.mxu0 0.0
  %6722 = vmatpush1.msra.mxu0 0.0
  %6723 = vmatprep.subr.mxu0 0.0
  %6724 = vmatpush1.msra.mxu0 0.0
  %6725 = vmatprep.subr.mxu0 0.0
  %6726 = vmatpush1.msra.mxu0 0.0
  %6727 = vmatprep.subr.mxu0 0.0
  %6728 = vmatpush1.msra.mxu0 0.0
  %6729 = vmatprep.subr.mxu0 0.0
  %6730 = vmatpush1.msra.mxu0 0.0
  %6731 = vmatprep.subr.mxu0 0.0
  %6732 = vmatpush1.msra.mxu0 0.0
  %6733 = vmatprep.subr.mxu0 0.0
  %6734 = vmatpush1.msra.mxu0 0.0
  %6735 = vmatprep.subr.mxu0 0.0
  %6736 = vmatpush1.msra.mxu0 0.0
  %6737 = vmatprep.subr.mxu0 0.0
  %6738 = vmatpush1.msra.mxu0 0.0
  %6739 = vmatprep.subr.mxu0 0.0
  %6740 = vmatpush1.msra.mxu0 0.0
  %6741 = vmatprep.subr.mxu0 0.0
  %6742 = vmatpush1.msra.mxu0 0.0
  %6743 = vmatprep.subr.mxu0 0.0
  %6744 = vmatpush1.msra.mxu0 0.0
  %6745 = vmatprep.subr.mxu0 0.0
  %6746 = vmatpush1.msra.mxu0 0.0
  %6747 = vmatprep.subr.mxu0 0.0
  %6748 = vmatpush1.msra.mxu0 0.0
  %6749 = vmatprep.subr.mxu0 0.0
  %6750 = vmatpush1.msra.mxu0 0.0
  %6751 = vmatprep.mubr.f32.mxu0 0.0
  %6752 = vmatmul.mubr.f32.gmra.mrb[0].mxu0 %v6685
  %v6753 = vpop.f32.mrb[0].mxu0
  %v6754 = vadd.f32 %v6682, %v6753
  %v6755 = vpop.f32.mrb[0].mxu0
  %6756 = vdwg.mxu0
  %6757 = vst.msk [vmem:[%s18] sm:$0xff] %vm99, %v6754
  // Predicated region
  $region74: #{vd_encoder_decoder_forward.1} parent=0 // pred_check
    _
  $region75: #{vd_encoder_decoder_forward.1} parent=0 // pred_check_branch
    %6759 = sbr.rel (0) target = $region77
  $region76: #{vd_encoder_decoder_forward.1} parent=0 // pred_region
    _
  $region77: #{vd_encoder_decoder_forward.1} parent=0 // pred_fallthru
    _
  // Predicated region
  $region78: #{vd_encoder_decoder_forward.1} parent=0 // pred_check
    _
  $region79: #{vd_encoder_decoder_forward.1} parent=0 // pred_check_branch
    %6761 = sbr.rel (0) target = $region81
  $region80: #{vd_encoder_decoder_forward.1} parent=0 // pred_region
    _
  $region81: #{vd_encoder_decoder_forward.1} parent=0 // pred_fallthru
    _

</llo_original>
